<compile_context>
chip_gen: v6e
topology: v6e:2x2x1
jax: 0.10.0
libtpu: 0.0.40
codegen_flags: <defaults>
</compile_context>

<pallas_src>
import numpy as np
import jax
import jax.numpy as jnp
from jax.experimental import pallas as pl
from jax.experimental.pallas import tpu as pltpu

jax.config.update("jax_default_matmul_precision", "highest")

CHANNELS = 5        # EEG channels   -> conv "height" (kernels are (1,3): width-only)
BANDS = 7           # frequency bands -> conv "width"
LATENT_DIM = 64
C1, C2 = 16, 32     # encoder conv channel counts
D1C = 16            # first deconv output channels
OUT_LANES = 128     # single packed lane-dense output row per sample
BIAS_LANES = 288    # widest packed bias row (b_cat)
MAX_B_TILE = 512    # batch rows per grid step


# ---------------------------------------------------------------------------
# Kernel: the whole forward pass as a short chain of matmuls + elementwise ops.
# ---------------------------------------------------------------------------
def eeg_autoencoder_kernel(x_ref, a1e_ref, a1o_ref, a2e_ref, a2o_ref,
                           wcat_ref, d2_ref, bias_ref, out_ref):
    f32 = jnp.float32
    x = x_ref[...]                                               # (Bt, 35)
    b = bias_ref[...]                                            # (8, 288)

    # conv1 (1x3, pad 1) with maxpool(1,2) folded in (even/odd column variants).
    n1 = a1e_ref.shape[1]                                        # 240
    p1 = jnp.maximum(jnp.dot(x, a1e_ref[...], preferred_element_type=f32),
                     jnp.dot(x, a1o_ref[...], preferred_element_type=f32))
    p1 = jnp.maximum(p1 + b[0:1, 0:n1], 0.0)                     # (Bt, 16*5*3)

    # conv2 (1x3, pad 1) with maxpool(1,2) folded in -> torch-Flatten column order.
    n2 = a2e_ref.shape[1]                                        # 160
    p2 = jnp.maximum(jnp.dot(p1, a2e_ref[...], preferred_element_type=f32),
                     jnp.dot(p1, a2o_ref[...], preferred_element_type=f32))
    p2 = jnp.maximum(p2 + b[1:2, 0:n2], 0.0)                     # (Bt, 160)

    # fc1 || (fc1 -> fc2 -> deconv1) fused into one MXU pass.
    nz = wcat_ref.shape[1]                                       # 288
    z = jnp.dot(p2, wcat_ref[...], preferred_element_type=f32) + b[2:3, 0:nz]

    lat_pad = z[:, 0:OUT_LANES]          # lanes 0:64 latent, lanes 64:128 exactly 0
    t1 = jnp.maximum(z[:, OUT_LANES:nz], 0.0)                    # (Bt, 16*5*2)

    # deconv2 (columns host-shifted to lanes 64:84) + sigmoid + lane mask.
    logits = jnp.dot(t1, d2_ref[...], preferred_element_type=f32) + b[3:4, 0:OUT_LANES]
    recon = b[4:5, 0:OUT_LANES] * (1.0 / (1.0 + jnp.exp(-logits)))

    # Single full-lane unmasked store per sample.
    out_ref[...] = lat_pad + recon


# ---------------------------------------------------------------------------
# Wrapper (hot path): input reshape/pad, pallas_call with a batch grid, split.
# ---------------------------------------------------------------------------
def _batch_tile(B):
    if B >= MAX_B_TILE:
        return MAX_B_TILE
    return max(8, ((B + 7) // 8) * 8)


def eeg_autoencoder_forward(x, prep):
    """x: (B, channels, bands) f32 -> (recon (B, channels, 4*(bands//4)), latent (B, 64))."""
    B, H, W = x.shape
    HW = H * W
    x0 = x.reshape(B, HW)

    bt = _batch_tile(B)
    n_blk = pl.cdiv(B, bt)
    Bp = n_blk * bt
    if Bp != B:
        x0 = jnp.pad(x0, ((0, Bp - B), (0, 0)))

    w_out = ((W // 2) // 2) * 4                                  # 4
    R = H * w_out                                                # 20

    mats = ("A1E", "A1O", "A2E", "A2O", "Wcat", "D2")
    flops = 2 * Bp * sum(prep[m].shape[0] * prep[m].shape[1] for m in mats)
    bytes_accessed = 4 * (int(x0.size) + sum(int(prep[m].size) for m in mats)
                          + int(prep["bias"].size) + Bp * OUT_LANES)

    const2 = lambda i: (0, 0)
    out = pl.pallas_call(
        eeg_autoencoder_kernel,
        out_shape=jax.ShapeDtypeStruct((Bp, OUT_LANES), jnp.float32),
        grid=(n_blk,),
        in_specs=[pl.BlockSpec((bt, HW), lambda i: (i, 0))]
                 + [pl.BlockSpec(prep[m].shape, const2) for m in mats]
                 + [pl.BlockSpec(prep["bias"].shape, const2)],
        out_specs=pl.BlockSpec((bt, OUT_LANES), lambda i: (i, 0)),
        compiler_params=pltpu.CompilerParams(dimension_semantics=("parallel",)),
        cost_estimate=pl.CostEstimate(flops=flops,
                                      transcendentals=Bp * OUT_LANES,
                                      bytes_accessed=bytes_accessed),
    )(x0, prep["A1E"], prep["A1O"], prep["A2E"], prep["A2O"],
      prep["Wcat"], prep["D2"], prep["bias"])

    latent = out[:B, 0:LATENT_DIM]
    recon = out[:B, LATENT_DIM:LATENT_DIM + R].reshape(B, H, w_out)
    return recon, latent


# ---------------------------------------------------------------------------
# One-time host-side preparation of the kernel-layout parameters.
# ---------------------------------------------------------------------------
def prepare_params(p, H=CHANNELS, W=BANDS):
    conv1_w = np.asarray(p["conv1_w"], np.float32)   # (16, 1, 1, 3)
    conv1_b = np.asarray(p["conv1_b"], np.float32)
    conv2_w = np.asarray(p["conv2_w"], np.float32)   # (32, 16, 1, 3)
    conv2_b = np.asarray(p["conv2_b"], np.float32)
    fc1_w = np.asarray(p["fc1_w"], np.float32)       # (64, 160)
    fc1_b = np.asarray(p["fc1_b"], np.float32)
    fc2_w = np.asarray(p["fc2_w"], np.float32)       # (160, 64)
    fc2_b = np.asarray(p["fc2_b"], np.float32)
    dec1_w = np.asarray(p["dec1_w"], np.float32)     # (32, 16, 1, 2)
    dec1_b = np.asarray(p["dec1_b"], np.float32)
    dec2_w = np.asarray(p["dec2_w"], np.float32)     # (16, 1, 1, 2)
    dec2_b = np.asarray(p["dec2_b"], np.float32)

    Wp = W // 2                                      # width after pool1 (=3)

    # conv1 as a (H*W) -> (C1*H*W) linear map; column order (o, h, w).
    A1 = np.zeros((H * W, C1 * H * W), np.float32)
    b1e = np.zeros((C1 * H * W,), np.float32)
    for o in range(C1):
        for h in range(H):
            for wo in range(W):
                col = o * H * W + h * W + wo
                b1e[col] = conv1_b[o]
                for k in range(3):
                    wi = wo + k - 1
                    if 0 <= wi < W:
                        A1[h * W + wi, col] += conv1_w[o, 0, 0, k]

    # maxpool1 as two 0/1 column selections (folded into A1 below).
    SelE1 = np.zeros((C1 * H * W, C1 * H * Wp), np.float32)
    SelO1 = np.zeros_like(SelE1)
    for o in range(C1):
        for h in range(H):
            for wp in range(Wp):
                col = o * H * Wp + h * Wp + wp
                SelE1[o * H * W + h * W + 2 * wp, col] = 1.0
                SelO1[o * H * W + h * W + 2 * wp + 1, col] = 1.0

    # conv2 as a (C1*H*Wp) -> (C2*H*Wp) linear map.
    A2 = np.zeros((C1 * H * Wp, C2 * H * Wp), np.float32)
    b2e = np.zeros((C2 * H * Wp,), np.float32)
    for o in range(C2):
        for h in range(H):
            for wo in range(Wp):
                col = o * H * Wp + h * Wp + wo
                b2e[col] = conv2_b[o]
                for i in range(C1):
                    for k in range(3):
                        wi = wo + k - 1
                        if 0 <= wi < Wp:
                            A2[i * H * Wp + h * Wp + wi, col] += conv2_w[o, i, 0, k]

    # maxpool2 -> (C2*H); column order (c, h) == torch Flatten of (B, 32, 5, 1).
    SelE2 = np.zeros((C2 * H * Wp, C2 * H), np.float32)
    SelO2 = np.zeros_like(SelE2)
    for o in range(C2):
        for h in range(H):
            col = o * H + h
            SelE2[o * H * Wp + h * Wp + 0, col] = 1.0
            SelO2[o * H * Wp + h * Wp + 1, col] = 1.0

    # Fold the pools into the conv matrices (exact: pure column selection,
    # relu/max commute, even/odd biases identical per pooled column).
    A1E = A1 @ SelE1                                 # (35, 240)
    A1O = A1 @ SelO1
    b1_sel = b1e @ SelE1                             # (240,)
    A2E = A2 @ SelE2                                 # (240, 160)
    A2O = A2 @ SelO2
    b2_sel = b2e @ SelE2                             # (160,)

    Wfc1T = fc1_w.T.copy()                           # (160, 64)

    # deconv1 (kernel (1,2), stride (1,2), input width 1) as a linear map on the
    # fc2 output in its view(-1, 32, 5, 1) layout; output column order (o, h, w).
    Dd1 = np.zeros((C2 * H, D1C * H * 2), np.float32)
    bd1 = np.zeros((D1C * H * 2,), np.float32)
    for i in range(C2):
        for o in range(D1C):
            for h in range(H):
                for k in range(2):
                    col = o * H * 2 + h * 2 + k
                    Dd1[i * H + h, col] = dec1_w[i, o, 0, k]
                    bd1[col] = dec1_b[o]

    # Fuse fc2 with deconv1, then fold fc1 into that (all linear, no nonlin between).
    M2 = (fc2_w.T.astype(np.float64) @ Dd1.astype(np.float64))            # (64, 160)
    bm2 = (fc2_b.astype(np.float64) @ Dd1.astype(np.float64)
           + bd1.astype(np.float64))                                      # (160,)
    Wdec = (Wfc1T.astype(np.float64) @ M2).astype(np.float32)             # (160, 160)
    bdec = (fc1_b.astype(np.float64) @ M2 + bm2).astype(np.float32)       # (160,)

    # Concatenated bottleneck matrix: lanes 0:64 -> latent (exact fc1),
    # lanes 64:128 -> exactly zero, lanes 128:288 -> deconv1 pre-activation.
    Wcat = np.zeros((C2 * H, BIAS_LANES), np.float32)                     # (160, 288)
    Wcat[:, 0:LATENT_DIM] = Wfc1T
    Wcat[:, OUT_LANES:OUT_LANES + Wdec.shape[1]] = Wdec
    b_cat = np.zeros((BIAS_LANES,), np.float32)
    b_cat[0:LATENT_DIM] = fc1_b
    b_cat[OUT_LANES:OUT_LANES + bdec.size] = bdec

    # deconv2 (kernel (1,2), stride (1,2), input width 2); output columns (h, w)
    # are host-shifted to lanes 64:84 of a 128-lane-wide output.
    R = H * 4
    D2core = np.zeros((D1C * H * 2, R), np.float32)
    for i in range(D1C):
        for h in range(H):
            for wp in range(2):
                for k in range(2):
                    D2core[i * H * 2 + h * 2 + wp, h * 4 + 2 * wp + k] = dec2_w[i, 0, 0, k]
    D2 = np.zeros((D1C * H * 2, OUT_LANES), np.float32)                   # (160, 128)
    D2[:, LATENT_DIM:LATENT_DIM + R] = D2core
    bd2_pad = np.zeros((OUT_LANES,), np.float32)
    bd2_pad[LATENT_DIM:LATENT_DIM + R] = float(dec2_b[0])
    mask = np.zeros((OUT_LANES,), np.float32)
    mask[LATENT_DIM:LATENT_DIM + R] = 1.0

    # Pack the bias vectors + mask into one lane-padded array (one DMA, not six).
    bias = np.zeros((8, BIAS_LANES), np.float32)
    bias[0, :b1_sel.size] = b1_sel
    bias[1, :b2_sel.size] = b2_sel
    bias[2, :b_cat.size] = b_cat
    bias[3, :bd2_pad.size] = bd2_pad
    bias[4, :mask.size] = mask

    np_prep = dict(A1E=A1E, A1O=A1O, A2E=A2E, A2O=A2O, Wcat=Wcat, D2=D2, bias=bias)
    return {k: jnp.asarray(v) for k, v in np_prep.items()}


# ---------------------------------------------------------------------------
# Deterministic PyTorch-style parameter init and a plain-JAX reference forward.
# ---------------------------------------------------------------------------
def make_params(key, channels=CHANNELS, bands=BANDS, latent_dim=LATENT_DIM):
    flat = channels * ((bands // 2) // 2) * C2       # 160
    ks = jax.random.split(key, 12)

    def u(k, shape, fan_in):
        b = 1.0 / np.sqrt(fan_in)
        return jax.random.uniform(k, shape, jnp.float32, -b, b)

    return dict(
        conv1_w=u(ks[0], (C1, 1, 1, 3), 1 * 3),   conv1_b=u(ks[1], (C1,), 1 * 3),
        conv2_w=u(ks[2], (C2, C1, 1, 3), C1 * 3), conv2_b=u(ks[3], (C2,), C1 * 3),
        fc1_w=u(ks[4], (latent_dim, flat), flat), fc1_b=u(ks[5], (latent_dim,), flat),
        fc2_w=u(ks[6], (flat, latent_dim), latent_dim),
        fc2_b=u(ks[7], (flat,), latent_dim),
        dec1_w=u(ks[8], (C2, D1C, 1, 2), D1C * 2), dec1_b=u(ks[9], (D1C,), D1C * 2),
        dec2_w=u(ks[10], (D1C, 1, 1, 2), 1 * 2),   dec2_b=u(ks[11], (1,), 1 * 2),
    )


def reference_forward(x, p):
    """Plain-JAX mirror of EEGAutoencoder.forward, layer by layer."""
    B = x.shape[0]
    hp = jax.lax.Precision.HIGHEST

    def conv2d_1x3_p1(inp, w, b):                 # Conv2d kernel (1,3), padding (0,1)
        win = inp.shape[-1]
        ip = jnp.pad(inp, ((0, 0), (0, 0), (0, 0), (1, 1)))
        out = sum(jnp.einsum("bihw,oi->bohw", ip[..., k:k + win], w[:, :, 0, k],
                             precision=hp) for k in range(3))
        return out + b[None, :, None, None]

    def maxpool_1x2(inp):                         # MaxPool2d kernel (1,2)
        n = inp.shape[-1] // 2
        return jnp.maximum(inp[..., 0:2 * n:2], inp[..., 1:2 * n:2])

    def deconv_1x2_s2(inp, w, b):                 # ConvTranspose2d kernel (1,2), stride (1,2)
        e0 = jnp.einsum("bihw,io->bohw", inp, w[:, :, 0, 0], precision=hp)
        e1 = jnp.einsum("bihw,io->bohw", inp, w[:, :, 0, 1], precision=hp)
        out = jnp.stack([e0, e1], axis=-1)
        out = out.reshape(out.shape[0], out.shape[1], out.shape[2], -1)
        return out + b[None, :, None, None]

    h = x[:, None, :, :]                          # unsqueeze(1)
    h = jnp.maximum(conv2d_1x3_p1(h, p["conv1_w"], p["conv1_b"]), 0.0)
    h = maxpool_1x2(h)
    h = jnp.maximum(conv2d_1x3_p1(h, p["conv2_w"], p["conv2_b"]), 0.0)
    h = maxpool_1x2(h)                            # (B, 32, 5, 1)
    flat = h.reshape(B, -1)                       # (B, 160)
    latent = flat @ p["fc1_w"].T + p["fc1_b"]     # (B, 64)
    d = latent @ p["fc2_w"].T + p["fc2_b"]        # (B, 160)
    d = d.reshape(B, C2, CHANNELS, 1)
    d = jnp.maximum(deconv_1x2_s2(d, p["dec1_w"], p["dec1_b"]), 0.0)
    d = jax.nn.sigmoid(deconv_1x2_s2(d, p["dec2_w"], p["dec2_b"]))   # (B, 1, 5, 4)
    return d[:, 0], latent                        # squeeze(1)


if __name__ == "__main__":
    key = jax.random.PRNGKey(0)
    kp, kx = jax.random.split(key)

    raw = make_params(kp)
    prep = prepare_params(raw)           # one-time host-side layout work

    B = 2
    x = jax.random.uniform(kx, (B, CHANNELS, BANDS), jnp.float32)

    recon, latent = eeg_autoencoder_forward(x, prep)
    recon = jax.block_until_ready(recon)
    latent = jax.block_until_ready(latent)

    ref_recon, ref_latent = reference_forward(x, raw)
    np.testing.assert_allclose(np.asarray(latent), np.asarray(ref_latent),
                               rtol=1e-4, atol=1e-5)
    np.testing.assert_allclose(np.asarray(recon), np.asarray(ref_recon),
                               rtol=1e-4, atol=1e-5)

    assert recon.shape == (B, CHANNELS, 4)
    assert latent.shape == (B, LATENT_DIM)
    print("KERNEL_OK")
</pallas_src>

<mosaic_0001>
module attributes {stable_mosaic.version = 11 : i64} {
  func.func @eeg_autoencoder_kernel(%arg0: i32, %arg1: memref<8x35xf32, #tpu.memory_space<vmem>>, %arg2: memref<35x240xf32, #tpu.memory_space<vmem>>, %arg3: memref<35x240xf32, #tpu.memory_space<vmem>>, %arg4: memref<240x160xf32, #tpu.memory_space<vmem>>, %arg5: memref<240x160xf32, #tpu.memory_space<vmem>>, %arg6: memref<160x288xf32, #tpu.memory_space<vmem>>, %arg7: memref<160x128xf32, #tpu.memory_space<vmem>>, %arg8: memref<8x288xf32, #tpu.memory_space<vmem>>, %arg9: memref<8x128xf32, #tpu.memory_space<vmem>>) attributes {dimension_semantics = [#tpu.dimension_semantics<parallel>], iteration_bounds = array<i64: 1>, scalar_prefetch = 0 : i64, scratch_operands = 0 : i64, tpu.core_type = #tpu.core_type<tc>, window_params = [{transform_indices = @transform_0, window_bounds = array<i64: 8, 35>}, {pipeline_mode = #tpu.pipeline_mode<synchronous>, transform_indices = @transform_1, window_bounds = array<i64: 35, 240>}, {pipeline_mode = #tpu.pipeline_mode<synchronous>, transform_indices = @transform_2, window_bounds = array<i64: 35, 240>}, {pipeline_mode = #tpu.pipeline_mode<synchronous>, transform_indices = @transform_3, window_bounds = array<i64: 240, 160>}, {pipeline_mode = #tpu.pipeline_mode<synchronous>, transform_indices = @transform_4, window_bounds = array<i64: 240, 160>}, {pipeline_mode = #tpu.pipeline_mode<synchronous>, transform_indices = @transform_5, window_bounds = array<i64: 160, 288>}, {pipeline_mode = #tpu.pipeline_mode<synchronous>, transform_indices = @transform_6, window_bounds = array<i64: 160, 128>}, {pipeline_mode = #tpu.pipeline_mode<synchronous>, transform_indices = @transform_7, window_bounds = array<i64: 8, 288>}, {transform_indices = @transform_8, window_bounds = array<i64: 8, 128>}]} {
    %c0 = arith.constant 0 : index
    %c0_0 = arith.constant 0 : index
    %0 = vector.load %arg1[%c0, %c0_0] : memref<8x35xf32, #tpu.memory_space<vmem>>, vector<8x35xf32>
    %c0_1 = arith.constant 0 : index
    %c0_2 = arith.constant 0 : index
    %1 = vector.load %arg8[%c0_1, %c0_2] : memref<8x288xf32, #tpu.memory_space<vmem>>, vector<8x288xf32>
    %c0_3 = arith.constant 0 : index
    %c0_4 = arith.constant 0 : index
    %2 = vector.load %arg2[%c0_3, %c0_4] : memref<35x240xf32, #tpu.memory_space<vmem>>, vector<35x240xf32>
    %cst = arith.constant dense<0.000000e+00> : vector<8x240xf32>
    %3 = tpu.matmul %0, %2, %cst {dimension_numbers = #tpu.dot_dimension_numbers<[1], [0], [0], [1], [0, 0, 1, 1], [], []>, precision = #tpu.contract_precision<fp32>} : vector<8x35xf32>, vector<35x240xf32>, vector<8x240xf32> -> vector<8x240xf32>
    %c0_5 = arith.constant 0 : index
    %c0_6 = arith.constant 0 : index
    %4 = vector.load %arg3[%c0_5, %c0_6] : memref<35x240xf32, #tpu.memory_space<vmem>>, vector<35x240xf32>
    %cst_7 = arith.constant dense<0.000000e+00> : vector<8x240xf32>
    %5 = tpu.matmul %0, %4, %cst_7 {dimension_numbers = #tpu.dot_dimension_numbers<[1], [0], [0], [1], [0, 0, 1, 1], [], []>, precision = #tpu.contract_precision<fp32>} : vector<8x35xf32>, vector<35x240xf32>, vector<8x240xf32> -> vector<8x240xf32>
    %6 = arith.maximumf %3, %5 : vector<8x240xf32>
    %7 = vector.extract_strided_slice %1 {offsets = [0, 0], sizes = [1, 240], strides = [1, 1]} : vector<8x288xf32> to vector<1x240xf32>
    %8 = vector.broadcast %7 : vector<1x240xf32> to vector<8x240xf32>
    %9 = arith.addf %6, %8 : vector<8x240xf32>
    %cst_8 = arith.constant 0.000000e+00 : f32
    %10 = vector.broadcast %cst_8 : f32 to vector<8x240xf32>
    %11 = arith.maximumf %9, %10 : vector<8x240xf32>
    %c0_9 = arith.constant 0 : index
    %c0_10 = arith.constant 0 : index
    %12 = vector.load %arg4[%c0_9, %c0_10] : memref<240x160xf32, #tpu.memory_space<vmem>>, vector<240x160xf32>
    %cst_11 = arith.constant dense<0.000000e+00> : vector<8x160xf32>
    %13 = tpu.matmul %11, %12, %cst_11 {dimension_numbers = #tpu.dot_dimension_numbers<[1], [0], [0], [1], [0, 0, 1, 1], [], []>, precision = #tpu.contract_precision<fp32>} : vector<8x240xf32>, vector<240x160xf32>, vector<8x160xf32> -> vector<8x160xf32>
    %c0_12 = arith.constant 0 : index
    %c0_13 = arith.constant 0 : index
    %14 = vector.load %arg5[%c0_12, %c0_13] : memref<240x160xf32, #tpu.memory_space<vmem>>, vector<240x160xf32>
    %cst_14 = arith.constant dense<0.000000e+00> : vector<8x160xf32>
    %15 = tpu.matmul %11, %14, %cst_14 {dimension_numbers = #tpu.dot_dimension_numbers<[1], [0], [0], [1], [0, 0, 1, 1], [], []>, precision = #tpu.contract_precision<fp32>} : vector<8x240xf32>, vector<240x160xf32>, vector<8x160xf32> -> vector<8x160xf32>
    %16 = arith.maximumf %13, %15 : vector<8x160xf32>
    %17 = vector.extract_strided_slice %1 {offsets = [1, 0], sizes = [1, 160], strides = [1, 1]} : vector<8x288xf32> to vector<1x160xf32>
    %18 = vector.broadcast %17 : vector<1x160xf32> to vector<8x160xf32>
    %19 = arith.addf %16, %18 : vector<8x160xf32>
    %cst_15 = arith.constant 0.000000e+00 : f32
    %20 = vector.broadcast %cst_15 : f32 to vector<8x160xf32>
    %21 = arith.maximumf %19, %20 : vector<8x160xf32>
    %c0_16 = arith.constant 0 : index
    %c0_17 = arith.constant 0 : index
    %22 = vector.load %arg6[%c0_16, %c0_17] : memref<160x288xf32, #tpu.memory_space<vmem>>, vector<160x288xf32>
    %cst_18 = arith.constant dense<0.000000e+00> : vector<8x288xf32>
    %23 = tpu.matmul %21, %22, %cst_18 {dimension_numbers = #tpu.dot_dimension_numbers<[1], [0], [0], [1], [0, 0, 1, 1], [], []>, precision = #tpu.contract_precision<fp32>} : vector<8x160xf32>, vector<160x288xf32>, vector<8x288xf32> -> vector<8x288xf32>
    %24 = vector.extract_strided_slice %1 {offsets = [2, 0], sizes = [1, 288], strides = [1, 1]} : vector<8x288xf32> to vector<1x288xf32>
    %25 = vector.broadcast %24 : vector<1x288xf32> to vector<8x288xf32>
    %26 = arith.addf %23, %25 : vector<8x288xf32>
    %27 = vector.extract_strided_slice %26 {offsets = [0, 0], sizes = [8, 128], strides = [1, 1]} : vector<8x288xf32> to vector<8x128xf32>
    %28 = vector.extract_strided_slice %26 {offsets = [0, 128], sizes = [8, 160], strides = [1, 1]} : vector<8x288xf32> to vector<8x160xf32>
    %cst_19 = arith.constant 0.000000e+00 : f32
    %29 = vector.broadcast %cst_19 : f32 to vector<8x160xf32>
    %30 = arith.maximumf %28, %29 : vector<8x160xf32>
    %c0_20 = arith.constant 0 : index
    %c0_21 = arith.constant 0 : index
    %31 = vector.load %arg7[%c0_20, %c0_21] : memref<160x128xf32, #tpu.memory_space<vmem>>, vector<160x128xf32>
    %cst_22 = arith.constant dense<0.000000e+00> : vector<8x128xf32>
    %32 = tpu.matmul %30, %31, %cst_22 {dimension_numbers = #tpu.dot_dimension_numbers<[1], [0], [0], [1], [0, 0, 1, 1], [], []>, precision = #tpu.contract_precision<fp32>} : vector<8x160xf32>, vector<160x128xf32>, vector<8x128xf32> -> vector<8x128xf32>
    %33 = vector.extract_strided_slice %1 {offsets = [3, 0], sizes = [1, 128], strides = [1, 1]} : vector<8x288xf32> to vector<1x128xf32>
    %34 = vector.broadcast %33 : vector<1x128xf32> to vector<8x128xf32>
    %35 = arith.addf %32, %34 : vector<8x128xf32>
    %36 = vector.extract_strided_slice %1 {offsets = [4, 0], sizes = [1, 128], strides = [1, 1]} : vector<8x288xf32> to vector<1x128xf32>
    %cst_23 = arith.constant 0.000000e+00 : f32
    %37 = vector.broadcast %cst_23 : f32 to vector<8x128xf32>
    %38 = arith.subf %37, %35 : vector<8x128xf32>
    %39 = math.exp %38 : vector<8x128xf32>
    %cst_24 = arith.constant 1.000000e+00 : f32
    %40 = vector.broadcast %cst_24 : f32 to vector<8x128xf32>
    %41 = arith.addf %40, %39 : vector<8x128xf32>
    %cst_25 = arith.constant 1.000000e+00 : f32
    %42 = vector.broadcast %cst_25 : f32 to vector<8x128xf32>
    %43 = arith.divf %42, %41 : vector<8x128xf32>
    %44 = vector.broadcast %36 : vector<1x128xf32> to vector<8x128xf32>
    %45 = arith.mulf %44, %43 : vector<8x128xf32>
    %46 = arith.addf %27, %45 : vector<8x128xf32>
    %c0_26 = arith.constant 0 : index
    %c0_27 = arith.constant 0 : index
    %47 = vector.load %arg9[%c0_26, %c0_27] : memref<8x128xf32, #tpu.memory_space<vmem>>, vector<8x128xf32>
    tpu.vector_store %arg9[%c0_26, %c0_27], %46 {strides = array<i32>} : memref<8x128xf32, #tpu.memory_space<vmem>>, vector<8x128xf32>,
    return
  }
  func.func @transform_0(%arg0: i32) -> (i32, i32) {
    %c0_i32 = arith.constant 0 : i32
    %c0_i32_0 = arith.constant 0 : i32
    return %arg0, %c0_i32 : i32, i32
  }
  func.func @transform_1(%arg0: i32) -> (i32, i32) {
    %c0_i32 = arith.constant 0 : i32
    %c0_i32_0 = arith.constant 0 : i32
    %c0_i32_1 = arith.constant 0 : i32
    return %c0_i32, %c0_i32_0 : i32, i32
  }
  func.func @transform_2(%arg0: i32) -> (i32, i32) {
    %c0_i32 = arith.constant 0 : i32
    %c0_i32_0 = arith.constant 0 : i32
    %c0_i32_1 = arith.constant 0 : i32
    return %c0_i32, %c0_i32_0 : i32, i32
  }
  func.func @transform_3(%arg0: i32) -> (i32, i32) {
    %c0_i32 = arith.constant 0 : i32
    %c0_i32_0 = arith.constant 0 : i32
    %c0_i32_1 = arith.constant 0 : i32
    return %c0_i32, %c0_i32_0 : i32, i32
  }
  func.func @transform_4(%arg0: i32) -> (i32, i32) {
    %c0_i32 = arith.constant 0 : i32
    %c0_i32_0 = arith.constant 0 : i32
    %c0_i32_1 = arith.constant 0 : i32
    return %c0_i32, %c0_i32_0 : i32, i32
  }
  func.func @transform_5(%arg0: i32) -> (i32, i32) {
    %c0_i32 = arith.constant 0 : i32
    %c0_i32_0 = arith.constant 0 : i32
    %c0_i32_1 = arith.constant 0 : i32
    return %c0_i32, %c0_i32_0 : i32, i32
  }
  func.func @transform_6(%arg0: i32) -> (i32, i32) {
    %c0_i32 = arith.constant 0 : i32
    %c0_i32_0 = arith.constant 0 : i32
    %c0_i32_1 = arith.constant 0 : i32
    return %c0_i32, %c0_i32_0 : i32, i32
  }
  func.func @transform_7(%arg0: i32) -> (i32, i32) {
    %c0_i32 = arith.constant 0 : i32
    %c0_i32_0 = arith.constant 0 : i32
    %c0_i32_1 = arith.constant 0 : i32
    return %c0_i32, %c0_i32_0 : i32, i32
  }
  func.func @transform_8(%arg0: i32) -> (i32, i32) {
    %c0_i32 = arith.constant 0 : i32
    %c0_i32_0 = arith.constant 0 : i32
    return %arg0, %c0_i32 : i32, i32
  }
}

</mosaic_0001>

<llo_original>
// kernel: tpu_custom_call.1
$region0: #{tpu_custom_call.1}
  #allocation0 [shape = 'u32[]', space=smem, size = 0x4, offset = 0x4, fixed_abs, tag = 'smem constant byte address 0x4 - core index']
  #allocation1 [shape = 'u32[144,128]{1,0:T(1,128)}', space=vmem, size = 0x12000, scoped, tag = 'internal scratch']
  %s0 = inlined_call_operand.vmem [shape: f32[8,35], index: 0, kind: input, shape index: {}]
  %s1 = inlined_call_operand.vmem [shape: f32[35,240], index: 1, kind: input, shape index: {}]
  %s2 = inlined_call_operand.vmem [shape: f32[35,240], index: 2, kind: input, shape index: {}]
  %s3 = inlined_call_operand.vmem [shape: f32[240,160], index: 3, kind: input, shape index: {}]
  %s4 = inlined_call_operand.vmem [shape: f32[240,160], index: 4, kind: input, shape index: {}]
  %s5 = inlined_call_operand.vmem [shape: f32[160,288], index: 5, kind: input, shape index: {}]
  %s6 = inlined_call_operand.vmem [shape: f32[160,128], index: 6, kind: input, shape index: {}]
  %s7 = inlined_call_operand.vmem [shape: f32[8,288], index: 7, kind: input, shape index: {}]
  %s8 = inlined_call_operand.hbm [shape: f32[8,128], index: 8, kind: output, shape index: {}]
  %s9 = sld [smem:[#allocation0]]
  $region42: #{tpu_custom_call.1} parent=0
    _
  %s11 = ssub.s32 1, %s9
  %s12 = scalar_select 0, %s11, %s9
  $region1: #{tpu_custom_call.1} parent=0
    #allocation2 [shape = 'u8[4096]{0}', space=vmem, size = 0x1000, scoped, tag = 'output window, operand 0, single buffered']
    #allocation3 [shape = 's32[1]{0}', space=sflag, size = 0x4, scoped, tag = 'scoped memory for tpu_custom_call.1']
    %13 = vsyncpa [#allocation3], 0
    // Predicated region
    $region2: #{tpu_custom_call.1} parent=1 // pred_check
      _
    $region3: #{tpu_custom_call.1} parent=1 // pred_check_branch
      %15 = sbr.rel (0) target = $region5
    $region4: #{tpu_custom_call.1} parent=1 // pred_region
      _
    $region5: #{tpu_custom_call.1} parent=1 // pred_fallthru
      _
    // Predicated region
    $region6: #{tpu_custom_call.1} parent=1 // pred_check
      _
    $region7: #{tpu_custom_call.1} parent=1 // pred_check_branch
      %17 = sbr.rel (0) target = $region9
    $region8: #{tpu_custom_call.1} parent=1 // pred_region
      _
    $region9: #{tpu_custom_call.1} parent=1 // pred_fallthru
      _
    // Predicated region
    $region10: #{tpu_custom_call.1} parent=1 // pred_check
      _
    $region11: #{tpu_custom_call.1} parent=1 // pred_check_branch
      %19 = sbr.rel (0) target = $region13
    $region12: #{tpu_custom_call.1} parent=1 // pred_region
      _
    $region13: #{tpu_custom_call.1} parent=1 // pred_fallthru
      _
    // Predicated region
    $region14: #{tpu_custom_call.1} parent=1 // pred_check
      _
    $region15: #{tpu_custom_call.1} parent=1 // pred_check_branch
      %21 = sbr.rel (0) target = $region17
    $region16: #{tpu_custom_call.1} parent=1 // pred_region
      _
    $region17: #{tpu_custom_call.1} parent=1 // pred_fallthru
      _
    // Predicated region
    $region18: #{tpu_custom_call.1} parent=1 // pred_check
      _
    $region19: #{tpu_custom_call.1} parent=1 // pred_check_branch
      %23 = sbr.rel (0) target = $region21
    $region20: #{tpu_custom_call.1} parent=1 // pred_region
      _
    $region21: #{tpu_custom_call.1} parent=1 // pred_fallthru
      _
    // Predicated region
    $region22: #{tpu_custom_call.1} parent=1 // pred_check
      _
    $region23: #{tpu_custom_call.1} parent=1 // pred_check_branch
      %25 = sbr.rel (0) target = $region25
    $region24: #{tpu_custom_call.1} parent=1 // pred_region
      _
    $region25: #{tpu_custom_call.1} parent=1 // pred_fallthru
      _
    // Predicated region
    $region26: #{tpu_custom_call.1} parent=1 // pred_check
      _
    $region27: #{tpu_custom_call.1} parent=1 // pred_check_branch
      %27 = sbr.rel (0) target = $region29
    $region28: #{tpu_custom_call.1} parent=1 // pred_region
      _
    $region29: #{tpu_custom_call.1} parent=1 // pred_fallthru
      _
    // Predicated region
    $region30: #{tpu_custom_call.1} parent=1 // pred_check
      _
    $region31: #{tpu_custom_call.1} parent=1 // pred_check_branch
      %29 = sbr.rel (0) target = $region33
    $region32: #{tpu_custom_call.1} parent=1 // pred_region
      _
    $region33: #{tpu_custom_call.1} parent=1 // pred_fallthru
      _
    %v30 = vld [vmem:[%s0] sm:$0xff]
    %v31 = vld [vmem:[%s7] sm:$0xff]
    %v32 = vld [vmem:[%s7 + $0x8] sm:$0xff]
    %v33 = vld [vmem:[%s7 + $0x10] sm:$0xff]
    %v34 = vld [vmem:[%s1] sm:$0xff]
    %v35 = vld [vmem:[%s1 + $0x8] sm:$0xff]
    %v36 = vld [vmem:[%s1 + $0x10] sm:$0xff]
    %v37 = vld [vmem:[%s1 + $0x18] sm:$0xff]
    %v38 = vld [vmem:[%s1 + $0x20] sm:$0xff]
    %v39 = vld [vmem:[%s1 + $0x28] sm:$0xff]
    %v40 = vld [vmem:[%s1 + $0x30] sm:$0xff]
    %v41 = vld [vmem:[%s1 + $0x38] sm:$0xff]
    %v42 = vld [vmem:[%s1 + $0x40] sm:$0x7]
    %v43 = vld [vmem:[%s1 + $0x48] sm:$0x7]
    %vm44 = vcmask 285696
    %v46 = vsel %vm44, %v30, 0
    %vm48 = vcmask 1042432
    %v50 = vsel %vm48, %v42, 0
    %v53 = vsel %vm48, %v43, 0
    %55 = vmatprep.subr.mxu0 0.0
    %56 = vmatpush1.msra.mxu0 0.0
    %57 = vmatprep.subr.mxu0 0.0
    %58 = vmatpush1.msra.mxu0 0.0
    %59 = vmatprep.subr.mxu0 0.0
    %60 = vmatpush1.msra.mxu0 0.0
    %61 = vmatprep.subr.mxu0 0.0
    %62 = vmatpush1.msra.mxu0 0.0
    %63 = vmatprep.subr.mxu0 0.0
    %64 = vmatpush1.msra.mxu0 0.0
    %65 = vmatprep.subr.mxu0 0.0
    %66 = vmatpush1.msra.mxu0 0.0
    %67 = vmatprep.subr.mxu0 0.0
    %68 = vmatpush1.msra.mxu0 0.0
    %69 = vmatprep.subr.mxu0 0.0
    %70 = vmatpush1.msra.mxu0 0.0
    %71 = vmatprep.subr.mxu0 0.0
    %72 = vmatpush1.msra.mxu0 0.0
    %73 = vmatprep.subr.mxu0 0.0
    %74 = vmatpush1.msra.mxu0 0.0
    %75 = vmatprep.subr.mxu0 0.0
    %76 = vmatpush1.msra.mxu0 0.0
    %v77 = vand.u32 %v53, 4294901760
    %78 = vmatprep.subr.mxu0 %v77
    %v79 = vand.u32 %v50, 4294901760
    %80 = vmatpush1.msra.mxu0 %v79
    %v81 = vand.u32 %v41, 4294901760
    %82 = vmatprep.subr.mxu0 %v81
    %v83 = vand.u32 %v40, 4294901760
    %84 = vmatpush1.msra.mxu0 %v83
    %v85 = vand.u32 %v39, 4294901760
    %86 = vmatprep.subr.mxu0 %v85
    %v87 = vand.u32 %v38, 4294901760
    %88 = vmatpush1.msra.mxu0 %v87
    %v89 = vand.u32 %v37, 4294901760
    %90 = vmatprep.subr.mxu0 %v89
    %v91 = vand.u32 %v36, 4294901760
    %92 = vmatpush1.msra.mxu0 %v91
    %v93 = vand.u32 %v35, 4294901760
    %94 = vmatprep.subr.mxu0 %v93
    %v95 = vand.u32 %v34, 4294901760
    %96 = vmatpush1.msra.mxu0 %v95
    %97 = vmatprep.subr.mxu0 0.0
    %98 = vmatpush2.msra.mxu0 0.0
    %99 = vmatprep.subr.mxu0 0.0
    %100 = vmatpush2.msra.mxu0 0.0
    %101 = vmatprep.subr.mxu0 0.0
    %102 = vmatpush2.msra.mxu0 0.0
    %103 = vmatprep.subr.mxu0 0.0
    %104 = vmatpush2.msra.mxu0 0.0
    %105 = vmatprep.subr.mxu0 0.0
    %106 = vmatpush2.msra.mxu0 0.0
    %107 = vmatprep.subr.mxu0 0.0
    %108 = vmatpush2.msra.mxu0 0.0
    %109 = vmatprep.subr.mxu0 0.0
    %110 = vmatpush2.msra.mxu0 0.0
    %111 = vmatprep.subr.mxu0 0.0
    %112 = vmatpush2.msra.mxu0 0.0
    %113 = vmatprep.subr.mxu0 0.0
    %114 = vmatpush2.msra.mxu0 0.0
    %115 = vmatprep.subr.mxu0 0.0
    %116 = vmatpush2.msra.mxu0 0.0
    %117 = vmatprep.subr.mxu0 0.0
    %118 = vmatpush2.msra.mxu0 0.0
    %119 = vmatprep.subr.mxu0 0.0
    %120 = vmatpush2.msra.mxu0 0.0
    %121 = vmatprep.subr.mxu0 0.0
    %122 = vmatpush2.msra.mxu0 0.0
    %123 = vmatprep.subr.mxu0 0.0
    %124 = vmatpush2.msra.mxu0 0.0
    %125 = vmatprep.subr.mxu0 0.0
    %126 = vmatpush2.msra.mxu0 0.0
    %127 = vmatprep.subr.mxu0 0.0
    %128 = vmatpush2.msra.mxu0 0.0
    %129 = vmatprep.mubr.f32.mxu0 0.0
    %v130 = vand.u32 %v46, 4294901760
    %v131 = vsub.f32 %v46, %v130
    %v132 = vand.u32 %v131, 4294901760
    %v133 = vsub.f32 %v131, %v132
    %v134 = vand.u32 %v133, 4294901760
    %135 = vmatmul.mubr.f32.gmra.mxu0 %v134
    %v136 = vpop.f32.mrf.mxu0
    %v137 = vadd.f32 0.0, %v136
    %v138 = vpop.f32.mrf.mxu0
    %v139 = vadd.f32 0.0, %v138
    %140 = vdwg.mxu0
    %141 = vmatprep.subr.mxu0 0.0
    %142 = vmatpush1.msra.mxu0 0.0
    %143 = vmatprep.subr.mxu0 0.0
    %144 = vmatpush1.msra.mxu0 0.0
    %145 = vmatprep.subr.mxu0 0.0
    %146 = vmatpush1.msra.mxu0 0.0
    %147 = vmatprep.subr.mxu0 0.0
    %148 = vmatpush1.msra.mxu0 0.0
    %149 = vmatprep.subr.mxu0 0.0
    %150 = vmatpush1.msra.mxu0 0.0
    %151 = vmatprep.subr.mxu0 0.0
    %152 = vmatpush1.msra.mxu0 0.0
    %153 = vmatprep.subr.mxu0 0.0
    %154 = vmatpush1.msra.mxu0 0.0
    %155 = vmatprep.subr.mxu0 0.0
    %156 = vmatpush1.msra.mxu0 0.0
    %157 = vmatprep.subr.mxu0 0.0
    %158 = vmatpush1.msra.mxu0 0.0
    %159 = vmatprep.subr.mxu0 0.0
    %160 = vmatpush1.msra.mxu0 0.0
    %161 = vmatprep.subr.mxu0 0.0
    %162 = vmatpush1.msra.mxu0 0.0
    %v163 = vand.u32 %v53, 4294901760
    %v164 = vsub.f32 %v53, %v163
    %v165 = vand.u32 %v164, 4294901760
    %v166 = vsub.f32 %v164, %v165
    %v167 = vand.u32 %v166, 4294901760
    %168 = vmatprep.subr.mxu0 %v167
    %v169 = vand.u32 %v50, 4294901760
    %v170 = vsub.f32 %v50, %v169
    %v171 = vand.u32 %v170, 4294901760
    %v172 = vsub.f32 %v170, %v171
    %v173 = vand.u32 %v172, 4294901760
    %174 = vmatpush1.msra.mxu0 %v173
    %v175 = vand.u32 %v41, 4294901760
    %v176 = vsub.f32 %v41, %v175
    %v177 = vand.u32 %v176, 4294901760
    %v178 = vsub.f32 %v176, %v177
    %v179 = vand.u32 %v178, 4294901760
    %180 = vmatprep.subr.mxu0 %v179
    %v181 = vand.u32 %v40, 4294901760
    %v182 = vsub.f32 %v40, %v181
    %v183 = vand.u32 %v182, 4294901760
    %v184 = vsub.f32 %v182, %v183
    %v185 = vand.u32 %v184, 4294901760
    %186 = vmatpush1.msra.mxu0 %v185
    %v187 = vand.u32 %v39, 4294901760
    %v188 = vsub.f32 %v39, %v187
    %v189 = vand.u32 %v188, 4294901760
    %v190 = vsub.f32 %v188, %v189
    %v191 = vand.u32 %v190, 4294901760
    %192 = vmatprep.subr.mxu0 %v191
    %v193 = vand.u32 %v38, 4294901760
    %v194 = vsub.f32 %v38, %v193
    %v195 = vand.u32 %v194, 4294901760
    %v196 = vsub.f32 %v194, %v195
    %v197 = vand.u32 %v196, 4294901760
    %198 = vmatpush1.msra.mxu0 %v197
    %v199 = vand.u32 %v37, 4294901760
    %v200 = vsub.f32 %v37, %v199
    %v201 = vand.u32 %v200, 4294901760
    %v202 = vsub.f32 %v200, %v201
    %v203 = vand.u32 %v202, 4294901760
    %204 = vmatprep.subr.mxu0 %v203
    %v205 = vand.u32 %v36, 4294901760
    %v206 = vsub.f32 %v36, %v205
    %v207 = vand.u32 %v206, 4294901760
    %v208 = vsub.f32 %v206, %v207
    %v209 = vand.u32 %v208, 4294901760
    %210 = vmatpush1.msra.mxu0 %v209
    %v211 = vand.u32 %v35, 4294901760
    %v212 = vsub.f32 %v35, %v211
    %v213 = vand.u32 %v212, 4294901760
    %v214 = vsub.f32 %v212, %v213
    %v215 = vand.u32 %v214, 4294901760
    %216 = vmatprep.subr.mxu0 %v215
    %v217 = vand.u32 %v34, 4294901760
    %v218 = vsub.f32 %v34, %v217
    %v219 = vand.u32 %v218, 4294901760
    %v220 = vsub.f32 %v218, %v219
    %v221 = vand.u32 %v220, 4294901760
    %222 = vmatpush1.msra.mxu0 %v221
    %223 = vmatprep.subr.mxu0 0.0
    %224 = vmatpush2.msra.mxu0 0.0
    %225 = vmatprep.subr.mxu0 0.0
    %226 = vmatpush2.msra.mxu0 0.0
    %227 = vmatprep.subr.mxu0 0.0
    %228 = vmatpush2.msra.mxu0 0.0
    %229 = vmatprep.subr.mxu0 0.0
    %230 = vmatpush2.msra.mxu0 0.0
    %231 = vmatprep.subr.mxu0 0.0
    %232 = vmatpush2.msra.mxu0 0.0
    %233 = vmatprep.subr.mxu0 0.0
    %234 = vmatpush2.msra.mxu0 0.0
    %235 = vmatprep.subr.mxu0 0.0
    %236 = vmatpush2.msra.mxu0 0.0
    %237 = vmatprep.subr.mxu0 0.0
    %238 = vmatpush2.msra.mxu0 0.0
    %239 = vmatprep.subr.mxu0 0.0
    %240 = vmatpush2.msra.mxu0 0.0
    %241 = vmatprep.subr.mxu0 0.0
    %242 = vmatpush2.msra.mxu0 0.0
    %243 = vmatprep.subr.mxu0 0.0
    %244 = vmatpush2.msra.mxu0 0.0
    %245 = vmatprep.subr.mxu0 0.0
    %246 = vmatpush2.msra.mxu0 0.0
    %247 = vmatprep.subr.mxu0 0.0
    %248 = vmatpush2.msra.mxu0 0.0
    %249 = vmatprep.subr.mxu0 0.0
    %250 = vmatpush2.msra.mxu0 0.0
    %251 = vmatprep.subr.mxu0 0.0
    %252 = vmatpush2.msra.mxu0 0.0
    %253 = vmatprep.subr.mxu0 0.0
    %254 = vmatpush2.msra.mxu0 0.0
    %255 = vmatprep.mubr.f32.mxu0 0.0
    %v256 = vand.u32 %v46, 4294901760
    %257 = vmatmul.mubr.f32.gmra.mxu0 %v256
    %v258 = vpop.f32.mrf.mxu0
    %v259 = vadd.f32 %v137, %v258
    %v260 = vpop.f32.mrf.mxu0
    %v261 = vadd.f32 %v139, %v260
    %262 = vdwg.mxu0
    %263 = vmatprep.subr.mxu0 0.0
    %264 = vmatpush1.msra.mxu0 0.0
    %265 = vmatprep.subr.mxu0 0.0
    %266 = vmatpush1.msra.mxu0 0.0
    %267 = vmatprep.subr.mxu0 0.0
    %268 = vmatpush1.msra.mxu0 0.0
    %269 = vmatprep.subr.mxu0 0.0
    %270 = vmatpush1.msra.mxu0 0.0
    %271 = vmatprep.subr.mxu0 0.0
    %272 = vmatpush1.msra.mxu0 0.0
    %273 = vmatprep.subr.mxu0 0.0
    %274 = vmatpush1.msra.mxu0 0.0
    %275 = vmatprep.subr.mxu0 0.0
    %276 = vmatpush1.msra.mxu0 0.0
    %277 = vmatprep.subr.mxu0 0.0
    %278 = vmatpush1.msra.mxu0 0.0
    %279 = vmatprep.subr.mxu0 0.0
    %280 = vmatpush1.msra.mxu0 0.0
    %281 = vmatprep.subr.mxu0 0.0
    %282 = vmatpush1.msra.mxu0 0.0
    %283 = vmatprep.subr.mxu0 0.0
    %284 = vmatpush1.msra.mxu0 0.0
    %v285 = vand.u32 %v53, 4294901760
    %v286 = vsub.f32 %v53, %v285
    %287 = vmatprep.subr.mxu0 %v286
    %v288 = vand.u32 %v50, 4294901760
    %v289 = vsub.f32 %v50, %v288
    %290 = vmatpush1.msra.mxu0 %v289
    %v291 = vand.u32 %v41, 4294901760
    %v292 = vsub.f32 %v41, %v291
    %293 = vmatprep.subr.mxu0 %v292
    %v294 = vand.u32 %v40, 4294901760
    %v295 = vsub.f32 %v40, %v294
    %296 = vmatpush1.msra.mxu0 %v295
    %v297 = vand.u32 %v39, 4294901760
    %v298 = vsub.f32 %v39, %v297
    %299 = vmatprep.subr.mxu0 %v298
    %v300 = vand.u32 %v38, 4294901760
    %v301 = vsub.f32 %v38, %v300
    %302 = vmatpush1.msra.mxu0 %v301
    %v303 = vand.u32 %v37, 4294901760
    %v304 = vsub.f32 %v37, %v303
    %305 = vmatprep.subr.mxu0 %v304
    %v306 = vand.u32 %v36, 4294901760
    %v307 = vsub.f32 %v36, %v306
    %308 = vmatpush1.msra.mxu0 %v307
    %v309 = vand.u32 %v35, 4294901760
    %v310 = vsub.f32 %v35, %v309
    %311 = vmatprep.subr.mxu0 %v310
    %v312 = vand.u32 %v34, 4294901760
    %v313 = vsub.f32 %v34, %v312
    %314 = vmatpush1.msra.mxu0 %v313
    %315 = vmatprep.subr.mxu0 0.0
    %316 = vmatpush2.msra.mxu0 0.0
    %317 = vmatprep.subr.mxu0 0.0
    %318 = vmatpush2.msra.mxu0 0.0
    %319 = vmatprep.subr.mxu0 0.0
    %320 = vmatpush2.msra.mxu0 0.0
    %321 = vmatprep.subr.mxu0 0.0
    %322 = vmatpush2.msra.mxu0 0.0
    %323 = vmatprep.subr.mxu0 0.0
    %324 = vmatpush2.msra.mxu0 0.0
    %325 = vmatprep.subr.mxu0 0.0
    %326 = vmatpush2.msra.mxu0 0.0
    %327 = vmatprep.subr.mxu0 0.0
    %328 = vmatpush2.msra.mxu0 0.0
    %329 = vmatprep.subr.mxu0 0.0
    %330 = vmatpush2.msra.mxu0 0.0
    %331 = vmatprep.subr.mxu0 0.0
    %332 = vmatpush2.msra.mxu0 0.0
    %333 = vmatprep.subr.mxu0 0.0
    %334 = vmatpush2.msra.mxu0 0.0
    %335 = vmatprep.subr.mxu0 0.0
    %336 = vmatpush2.msra.mxu0 0.0
    %337 = vmatprep.subr.mxu0 0.0
    %338 = vmatpush2.msra.mxu0 0.0
    %339 = vmatprep.subr.mxu0 0.0
    %340 = vmatpush2.msra.mxu0 0.0
    %341 = vmatprep.subr.mxu0 0.0
    %342 = vmatpush2.msra.mxu0 0.0
    %343 = vmatprep.subr.mxu0 0.0
    %344 = vmatpush2.msra.mxu0 0.0
    %345 = vmatprep.subr.mxu0 0.0
    %346 = vmatpush2.msra.mxu0 0.0
    %347 = vmatprep.mubr.f32.mxu0 0.0
    %v348 = vand.u32 %v46, 4294901760
    %v349 = vsub.f32 %v46, %v348
    %350 = vmatmul.mubr.f32.gmra.mxu0 %v349
    %v351 = vpop.f32.mrf.mxu0
    %v352 = vadd.f32 %v259, %v351
    %v353 = vpop.f32.mrf.mxu0
    %v354 = vadd.f32 %v261, %v353
    %355 = vdwg.mxu0
    %356 = vmatprep.subr.mxu0 0.0
    %357 = vmatpush1.msra.mxu0 0.0
    %358 = vmatprep.subr.mxu0 0.0
    %359 = vmatpush1.msra.mxu0 0.0
    %360 = vmatprep.subr.mxu0 0.0
    %361 = vmatpush1.msra.mxu0 0.0
    %362 = vmatprep.subr.mxu0 0.0
    %363 = vmatpush1.msra.mxu0 0.0
    %364 = vmatprep.subr.mxu0 0.0
    %365 = vmatpush1.msra.mxu0 0.0
    %366 = vmatprep.subr.mxu0 0.0
    %367 = vmatpush1.msra.mxu0 0.0
    %368 = vmatprep.subr.mxu0 0.0
    %369 = vmatpush1.msra.mxu0 0.0
    %370 = vmatprep.subr.mxu0 0.0
    %371 = vmatpush1.msra.mxu0 0.0
    %372 = vmatprep.subr.mxu0 0.0
    %373 = vmatpush1.msra.mxu0 0.0
    %374 = vmatprep.subr.mxu0 0.0
    %375 = vmatpush1.msra.mxu0 0.0
    %376 = vmatprep.subr.mxu0 0.0
    %377 = vmatpush1.msra.mxu0 0.0
    %v378 = vand.u32 %v53, 4294901760
    %379 = vmatprep.subr.mxu0 %v378
    %v380 = vand.u32 %v50, 4294901760
    %381 = vmatpush1.msra.mxu0 %v380
    %v382 = vand.u32 %v41, 4294901760
    %383 = vmatprep.subr.mxu0 %v382
    %v384 = vand.u32 %v40, 4294901760
    %385 = vmatpush1.msra.mxu0 %v384
    %v386 = vand.u32 %v39, 4294901760
    %387 = vmatprep.subr.mxu0 %v386
    %v388 = vand.u32 %v38, 4294901760
    %389 = vmatpush1.msra.mxu0 %v388
    %v390 = vand.u32 %v37, 4294901760
    %391 = vmatprep.subr.mxu0 %v390
    %v392 = vand.u32 %v36, 4294901760
    %393 = vmatpush1.msra.mxu0 %v392
    %v394 = vand.u32 %v35, 4294901760
    %395 = vmatprep.subr.mxu0 %v394
    %v396 = vand.u32 %v34, 4294901760
    %397 = vmatpush1.msra.mxu0 %v396
    %398 = vmatprep.subr.mxu0 0.0
    %399 = vmatpush2.msra.mxu0 0.0
    %400 = vmatprep.subr.mxu0 0.0
    %401 = vmatpush2.msra.mxu0 0.0
    %402 = vmatprep.subr.mxu0 0.0
    %403 = vmatpush2.msra.mxu0 0.0
    %404 = vmatprep.subr.mxu0 0.0
    %405 = vmatpush2.msra.mxu0 0.0
    %406 = vmatprep.subr.mxu0 0.0
    %407 = vmatpush2.msra.mxu0 0.0
    %408 = vmatprep.subr.mxu0 0.0
    %409 = vmatpush2.msra.mxu0 0.0
    %410 = vmatprep.subr.mxu0 0.0
    %411 = vmatpush2.msra.mxu0 0.0
    %412 = vmatprep.subr.mxu0 0.0
    %413 = vmatpush2.msra.mxu0 0.0
    %414 = vmatprep.subr.mxu0 0.0
    %415 = vmatpush2.msra.mxu0 0.0
    %416 = vmatprep.subr.mxu0 0.0
    %417 = vmatpush2.msra.mxu0 0.0
    %418 = vmatprep.subr.mxu0 0.0
    %419 = vmatpush2.msra.mxu0 0.0
    %420 = vmatprep.subr.mxu0 0.0
    %421 = vmatpush2.msra.mxu0 0.0
    %422 = vmatprep.subr.mxu0 0.0
    %423 = vmatpush2.msra.mxu0 0.0
    %424 = vmatprep.subr.mxu0 0.0
    %425 = vmatpush2.msra.mxu0 0.0
    %426 = vmatprep.subr.mxu0 0.0
    %427 = vmatpush2.msra.mxu0 0.0
    %428 = vmatprep.subr.mxu0 0.0
    %429 = vmatpush2.msra.mxu0 0.0
    %430 = vmatprep.mubr.f32.mxu0 0.0
    %v431 = vand.u32 %v46, 4294901760
    %v432 = vsub.f32 %v46, %v431
    %v433 = vand.u32 %v432, 4294901760
    %434 = vmatmul.mubr.f32.gmra.mxu0 %v433
    %v435 = vpop.f32.mrf.mxu0
    %v436 = vadd.f32 %v352, %v435
    %v437 = vpop.f32.mrf.mxu0
    %v438 = vadd.f32 %v354, %v437
    %439 = vdwg.mxu0
    %440 = vmatprep.subr.mxu0 0.0
    %441 = vmatpush1.msra.mxu0 0.0
    %442 = vmatprep.subr.mxu0 0.0
    %443 = vmatpush1.msra.mxu0 0.0
    %444 = vmatprep.subr.mxu0 0.0
    %445 = vmatpush1.msra.mxu0 0.0
    %446 = vmatprep.subr.mxu0 0.0
    %447 = vmatpush1.msra.mxu0 0.0
    %448 = vmatprep.subr.mxu0 0.0
    %449 = vmatpush1.msra.mxu0 0.0
    %450 = vmatprep.subr.mxu0 0.0
    %451 = vmatpush1.msra.mxu0 0.0
    %452 = vmatprep.subr.mxu0 0.0
    %453 = vmatpush1.msra.mxu0 0.0
    %454 = vmatprep.subr.mxu0 0.0
    %455 = vmatpush1.msra.mxu0 0.0
    %456 = vmatprep.subr.mxu0 0.0
    %457 = vmatpush1.msra.mxu0 0.0
    %458 = vmatprep.subr.mxu0 0.0
    %459 = vmatpush1.msra.mxu0 0.0
    %460 = vmatprep.subr.mxu0 0.0
    %461 = vmatpush1.msra.mxu0 0.0
    %v462 = vand.u32 %v53, 4294901760
    %v463 = vsub.f32 %v53, %v462
    %v464 = vand.u32 %v463, 4294901760
    %465 = vmatprep.subr.mxu0 %v464
    %v466 = vand.u32 %v50, 4294901760
    %v467 = vsub.f32 %v50, %v466
    %v468 = vand.u32 %v467, 4294901760
    %469 = vmatpush1.msra.mxu0 %v468
    %v470 = vand.u32 %v41, 4294901760
    %v471 = vsub.f32 %v41, %v470
    %v472 = vand.u32 %v471, 4294901760
    %473 = vmatprep.subr.mxu0 %v472
    %v474 = vand.u32 %v40, 4294901760
    %v475 = vsub.f32 %v40, %v474
    %v476 = vand.u32 %v475, 4294901760
    %477 = vmatpush1.msra.mxu0 %v476
    %v478 = vand.u32 %v39, 4294901760
    %v479 = vsub.f32 %v39, %v478
    %v480 = vand.u32 %v479, 4294901760
    %481 = vmatprep.subr.mxu0 %v480
    %v482 = vand.u32 %v38, 4294901760
    %v483 = vsub.f32 %v38, %v482
    %v484 = vand.u32 %v483, 4294901760
    %485 = vmatpush1.msra.mxu0 %v484
    %v486 = vand.u32 %v37, 4294901760
    %v487 = vsub.f32 %v37, %v486
    %v488 = vand.u32 %v487, 4294901760
    %489 = vmatprep.subr.mxu0 %v488
    %v490 = vand.u32 %v36, 4294901760
    %v491 = vsub.f32 %v36, %v490
    %v492 = vand.u32 %v491, 4294901760
    %493 = vmatpush1.msra.mxu0 %v492
    %v494 = vand.u32 %v35, 4294901760
    %v495 = vsub.f32 %v35, %v494
    %v496 = vand.u32 %v495, 4294901760
    %497 = vmatprep.subr.mxu0 %v496
    %v498 = vand.u32 %v34, 4294901760
    %v499 = vsub.f32 %v34, %v498
    %v500 = vand.u32 %v499, 4294901760
    %501 = vmatpush1.msra.mxu0 %v500
    %502 = vmatprep.subr.mxu0 0.0
    %503 = vmatpush2.msra.mxu0 0.0
    %504 = vmatprep.subr.mxu0 0.0
    %505 = vmatpush2.msra.mxu0 0.0
    %506 = vmatprep.subr.mxu0 0.0
    %507 = vmatpush2.msra.mxu0 0.0
    %508 = vmatprep.subr.mxu0 0.0
    %509 = vmatpush2.msra.mxu0 0.0
    %510 = vmatprep.subr.mxu0 0.0
    %511 = vmatpush2.msra.mxu0 0.0
    %512 = vmatprep.subr.mxu0 0.0
    %513 = vmatpush2.msra.mxu0 0.0
    %514 = vmatprep.subr.mxu0 0.0
    %515 = vmatpush2.msra.mxu0 0.0
    %516 = vmatprep.subr.mxu0 0.0
    %517 = vmatpush2.msra.mxu0 0.0
    %518 = vmatprep.subr.mxu0 0.0
    %519 = vmatpush2.msra.mxu0 0.0
    %520 = vmatprep.subr.mxu0 0.0
    %521 = vmatpush2.msra.mxu0 0.0
    %522 = vmatprep.subr.mxu0 0.0
    %523 = vmatpush2.msra.mxu0 0.0
    %524 = vmatprep.subr.mxu0 0.0
    %525 = vmatpush2.msra.mxu0 0.0
    %526 = vmatprep.subr.mxu0 0.0
    %527 = vmatpush2.msra.mxu0 0.0
    %528 = vmatprep.subr.mxu0 0.0
    %529 = vmatpush2.msra.mxu0 0.0
    %530 = vmatprep.subr.mxu0 0.0
    %531 = vmatpush2.msra.mxu0 0.0
    %532 = vmatprep.subr.mxu0 0.0
    %533 = vmatpush2.msra.mxu0 0.0
    %534 = vmatprep.mubr.f32.mxu0 0.0
    %v535 = vand.u32 %v46, 4294901760
    %536 = vmatmul.mubr.f32.gmra.mxu0 %v535
    %v537 = vpop.f32.mrf.mxu0
    %v538 = vadd.f32 %v436, %v537
    %v539 = vpop.f32.mrf.mxu0
    %v540 = vadd.f32 %v438, %v539
    %541 = vdwg.mxu0
    %542 = vmatprep.subr.mxu0 0.0
    %543 = vmatpush1.msra.mxu0 0.0
    %544 = vmatprep.subr.mxu0 0.0
    %545 = vmatpush1.msra.mxu0 0.0
    %546 = vmatprep.subr.mxu0 0.0
    %547 = vmatpush1.msra.mxu0 0.0
    %548 = vmatprep.subr.mxu0 0.0
    %549 = vmatpush1.msra.mxu0 0.0
    %550 = vmatprep.subr.mxu0 0.0
    %551 = vmatpush1.msra.mxu0 0.0
    %552 = vmatprep.subr.mxu0 0.0
    %553 = vmatpush1.msra.mxu0 0.0
    %554 = vmatprep.subr.mxu0 0.0
    %555 = vmatpush1.msra.mxu0 0.0
    %556 = vmatprep.subr.mxu0 0.0
    %557 = vmatpush1.msra.mxu0 0.0
    %558 = vmatprep.subr.mxu0 0.0
    %559 = vmatpush1.msra.mxu0 0.0
    %560 = vmatprep.subr.mxu0 0.0
    %561 = vmatpush1.msra.mxu0 0.0
    %562 = vmatprep.subr.mxu0 0.0
    %563 = vmatpush1.msra.mxu0 0.0
    %v564 = vand.u32 %v53, 4294901760
    %565 = vmatprep.subr.mxu0 %v564
    %v566 = vand.u32 %v50, 4294901760
    %567 = vmatpush1.msra.mxu0 %v566
    %v568 = vand.u32 %v41, 4294901760
    %569 = vmatprep.subr.mxu0 %v568
    %v570 = vand.u32 %v40, 4294901760
    %571 = vmatpush1.msra.mxu0 %v570
    %v572 = vand.u32 %v39, 4294901760
    %573 = vmatprep.subr.mxu0 %v572
    %v574 = vand.u32 %v38, 4294901760
    %575 = vmatpush1.msra.mxu0 %v574
    %v576 = vand.u32 %v37, 4294901760
    %577 = vmatprep.subr.mxu0 %v576
    %v578 = vand.u32 %v36, 4294901760
    %579 = vmatpush1.msra.mxu0 %v578
    %v580 = vand.u32 %v35, 4294901760
    %581 = vmatprep.subr.mxu0 %v580
    %v582 = vand.u32 %v34, 4294901760
    %583 = vmatpush1.msra.mxu0 %v582
    %584 = vmatprep.subr.mxu0 0.0
    %585 = vmatpush2.msra.mxu0 0.0
    %586 = vmatprep.subr.mxu0 0.0
    %587 = vmatpush2.msra.mxu0 0.0
    %588 = vmatprep.subr.mxu0 0.0
    %589 = vmatpush2.msra.mxu0 0.0
    %590 = vmatprep.subr.mxu0 0.0
    %591 = vmatpush2.msra.mxu0 0.0
    %592 = vmatprep.subr.mxu0 0.0
    %593 = vmatpush2.msra.mxu0 0.0
    %594 = vmatprep.subr.mxu0 0.0
    %595 = vmatpush2.msra.mxu0 0.0
    %596 = vmatprep.subr.mxu0 0.0
    %597 = vmatpush2.msra.mxu0 0.0
    %598 = vmatprep.subr.mxu0 0.0
    %599 = vmatpush2.msra.mxu0 0.0
    %600 = vmatprep.subr.mxu0 0.0
    %601 = vmatpush2.msra.mxu0 0.0
    %602 = vmatprep.subr.mxu0 0.0
    %603 = vmatpush2.msra.mxu0 0.0
    %604 = vmatprep.subr.mxu0 0.0
    %605 = vmatpush2.msra.mxu0 0.0
    %606 = vmatprep.subr.mxu0 0.0
    %607 = vmatpush2.msra.mxu0 0.0
    %608 = vmatprep.subr.mxu0 0.0
    %609 = vmatpush2.msra.mxu0 0.0
    %610 = vmatprep.subr.mxu0 0.0
    %611 = vmatpush2.msra.mxu0 0.0
    %612 = vmatprep.subr.mxu0 0.0
    %613 = vmatpush2.msra.mxu0 0.0
    %614 = vmatprep.subr.mxu0 0.0
    %615 = vmatpush2.msra.mxu0 0.0
    %616 = vmatprep.mubr.f32.mxu0 0.0
    %v617 = vand.u32 %v46, 4294901760
    %618 = vmatmul.mubr.f32.gmra.mxu0 %v617
    %v619 = vpop.f32.mrf.mxu0
    %v620 = vadd.f32 %v538, %v619
    %v621 = vpop.f32.mrf.mxu0
    %v622 = vadd.f32 %v540, %v621
    %623 = vdwg.mxu0
    %v624 = vld [vmem:[%s2] sm:$0xff]
    %v625 = vld [vmem:[%s2 + $0x8] sm:$0xff]
    %v626 = vld [vmem:[%s2 + $0x10] sm:$0xff]
    %v627 = vld [vmem:[%s2 + $0x18] sm:$0xff]
    %v628 = vld [vmem:[%s2 + $0x20] sm:$0xff]
    %v629 = vld [vmem:[%s2 + $0x28] sm:$0xff]
    %v630 = vld [vmem:[%s2 + $0x30] sm:$0xff]
    %v631 = vld [vmem:[%s2 + $0x38] sm:$0xff]
    %v632 = vld [vmem:[%s2 + $0x40] sm:$0x7]
    %v633 = vld [vmem:[%s2 + $0x48] sm:$0x7]
    %v635 = vsel %vm48, %v632, 0
    %v638 = vsel %vm48, %v633, 0
    %640 = vmatprep.subr.mxu0 0.0
    %641 = vmatpush1.msra.mxu0 0.0
    %642 = vmatprep.subr.mxu0 0.0
    %643 = vmatpush1.msra.mxu0 0.0
    %644 = vmatprep.subr.mxu0 0.0
    %645 = vmatpush1.msra.mxu0 0.0
    %646 = vmatprep.subr.mxu0 0.0
    %647 = vmatpush1.msra.mxu0 0.0
    %648 = vmatprep.subr.mxu0 0.0
    %649 = vmatpush1.msra.mxu0 0.0
    %650 = vmatprep.subr.mxu0 0.0
    %651 = vmatpush1.msra.mxu0 0.0
    %652 = vmatprep.subr.mxu0 0.0
    %653 = vmatpush1.msra.mxu0 0.0
    %654 = vmatprep.subr.mxu0 0.0
    %655 = vmatpush1.msra.mxu0 0.0
    %656 = vmatprep.subr.mxu0 0.0
    %657 = vmatpush1.msra.mxu0 0.0
    %658 = vmatprep.subr.mxu0 0.0
    %659 = vmatpush1.msra.mxu0 0.0
    %660 = vmatprep.subr.mxu0 0.0
    %661 = vmatpush1.msra.mxu0 0.0
    %v662 = vand.u32 %v638, 4294901760
    %663 = vmatprep.subr.mxu0 %v662
    %v664 = vand.u32 %v635, 4294901760
    %665 = vmatpush1.msra.mxu0 %v664
    %v666 = vand.u32 %v631, 4294901760
    %667 = vmatprep.subr.mxu0 %v666
    %v668 = vand.u32 %v630, 4294901760
    %669 = vmatpush1.msra.mxu0 %v668
    %v670 = vand.u32 %v629, 4294901760
    %671 = vmatprep.subr.mxu0 %v670
    %v672 = vand.u32 %v628, 4294901760
    %673 = vmatpush1.msra.mxu0 %v672
    %v674 = vand.u32 %v627, 4294901760
    %675 = vmatprep.subr.mxu0 %v674
    %v676 = vand.u32 %v626, 4294901760
    %677 = vmatpush1.msra.mxu0 %v676
    %v678 = vand.u32 %v625, 4294901760
    %679 = vmatprep.subr.mxu0 %v678
    %v680 = vand.u32 %v624, 4294901760
    %681 = vmatpush1.msra.mxu0 %v680
    %682 = vmatprep.subr.mxu0 0.0
    %683 = vmatpush2.msra.mxu0 0.0
    %684 = vmatprep.subr.mxu0 0.0
    %685 = vmatpush2.msra.mxu0 0.0
    %686 = vmatprep.subr.mxu0 0.0
    %687 = vmatpush2.msra.mxu0 0.0
    %688 = vmatprep.subr.mxu0 0.0
    %689 = vmatpush2.msra.mxu0 0.0
    %690 = vmatprep.subr.mxu0 0.0
    %691 = vmatpush2.msra.mxu0 0.0
    %692 = vmatprep.subr.mxu0 0.0
    %693 = vmatpush2.msra.mxu0 0.0
    %694 = vmatprep.subr.mxu0 0.0
    %695 = vmatpush2.msra.mxu0 0.0
    %696 = vmatprep.subr.mxu0 0.0
    %697 = vmatpush2.msra.mxu0 0.0
    %698 = vmatprep.subr.mxu0 0.0
    %699 = vmatpush2.msra.mxu0 0.0
    %700 = vmatprep.subr.mxu0 0.0
    %701 = vmatpush2.msra.mxu0 0.0
    %702 = vmatprep.subr.mxu0 0.0
    %703 = vmatpush2.msra.mxu0 0.0
    %704 = vmatprep.subr.mxu0 0.0
    %705 = vmatpush2.msra.mxu0 0.0
    %706 = vmatprep.subr.mxu0 0.0
    %707 = vmatpush2.msra.mxu0 0.0
    %708 = vmatprep.subr.mxu0 0.0
    %709 = vmatpush2.msra.mxu0 0.0
    %710 = vmatprep.subr.mxu0 0.0
    %711 = vmatpush2.msra.mxu0 0.0
    %712 = vmatprep.subr.mxu0 0.0
    %713 = vmatpush2.msra.mxu0 0.0
    %714 = vmatprep.mubr.f32.mxu0 0.0
    %v715 = vand.u32 %v46, 4294901760
    %v716 = vsub.f32 %v46, %v715
    %v717 = vand.u32 %v716, 4294901760
    %v718 = vsub.f32 %v716, %v717
    %v719 = vand.u32 %v718, 4294901760
    %720 = vmatmul.mubr.f32.gmra.mxu0 %v719
    %v721 = vpop.f32.mrf.mxu0
    %v722 = vadd.f32 0.0, %v721
    %v723 = vpop.f32.mrf.mxu0
    %v724 = vadd.f32 0.0, %v723
    %725 = vdwg.mxu0
    %726 = vmatprep.subr.mxu0 0.0
    %727 = vmatpush1.msra.mxu0 0.0
    %728 = vmatprep.subr.mxu0 0.0
    %729 = vmatpush1.msra.mxu0 0.0
    %730 = vmatprep.subr.mxu0 0.0
    %731 = vmatpush1.msra.mxu0 0.0
    %732 = vmatprep.subr.mxu0 0.0
    %733 = vmatpush1.msra.mxu0 0.0
    %734 = vmatprep.subr.mxu0 0.0
    %735 = vmatpush1.msra.mxu0 0.0
    %736 = vmatprep.subr.mxu0 0.0
    %737 = vmatpush1.msra.mxu0 0.0
    %738 = vmatprep.subr.mxu0 0.0
    %739 = vmatpush1.msra.mxu0 0.0
    %740 = vmatprep.subr.mxu0 0.0
    %741 = vmatpush1.msra.mxu0 0.0
    %742 = vmatprep.subr.mxu0 0.0
    %743 = vmatpush1.msra.mxu0 0.0
    %744 = vmatprep.subr.mxu0 0.0
    %745 = vmatpush1.msra.mxu0 0.0
    %746 = vmatprep.subr.mxu0 0.0
    %747 = vmatpush1.msra.mxu0 0.0
    %v748 = vand.u32 %v638, 4294901760
    %v749 = vsub.f32 %v638, %v748
    %v750 = vand.u32 %v749, 4294901760
    %v751 = vsub.f32 %v749, %v750
    %v752 = vand.u32 %v751, 4294901760
    %753 = vmatprep.subr.mxu0 %v752
    %v754 = vand.u32 %v635, 4294901760
    %v755 = vsub.f32 %v635, %v754
    %v756 = vand.u32 %v755, 4294901760
    %v757 = vsub.f32 %v755, %v756
    %v758 = vand.u32 %v757, 4294901760
    %759 = vmatpush1.msra.mxu0 %v758
    %v760 = vand.u32 %v631, 4294901760
    %v761 = vsub.f32 %v631, %v760
    %v762 = vand.u32 %v761, 4294901760
    %v763 = vsub.f32 %v761, %v762
    %v764 = vand.u32 %v763, 4294901760
    %765 = vmatprep.subr.mxu0 %v764
    %v766 = vand.u32 %v630, 4294901760
    %v767 = vsub.f32 %v630, %v766
    %v768 = vand.u32 %v767, 4294901760
    %v769 = vsub.f32 %v767, %v768
    %v770 = vand.u32 %v769, 4294901760
    %771 = vmatpush1.msra.mxu0 %v770
    %v772 = vand.u32 %v629, 4294901760
    %v773 = vsub.f32 %v629, %v772
    %v774 = vand.u32 %v773, 4294901760
    %v775 = vsub.f32 %v773, %v774
    %v776 = vand.u32 %v775, 4294901760
    %777 = vmatprep.subr.mxu0 %v776
    %v778 = vand.u32 %v628, 4294901760
    %v779 = vsub.f32 %v628, %v778
    %v780 = vand.u32 %v779, 4294901760
    %v781 = vsub.f32 %v779, %v780
    %v782 = vand.u32 %v781, 4294901760
    %783 = vmatpush1.msra.mxu0 %v782
    %v784 = vand.u32 %v627, 4294901760
    %v785 = vsub.f32 %v627, %v784
    %v786 = vand.u32 %v785, 4294901760
    %v787 = vsub.f32 %v785, %v786
    %v788 = vand.u32 %v787, 4294901760
    %789 = vmatprep.subr.mxu0 %v788
    %v790 = vand.u32 %v626, 4294901760
    %v791 = vsub.f32 %v626, %v790
    %v792 = vand.u32 %v791, 4294901760
    %v793 = vsub.f32 %v791, %v792
    %v794 = vand.u32 %v793, 4294901760
    %795 = vmatpush1.msra.mxu0 %v794
    %v796 = vand.u32 %v625, 4294901760
    %v797 = vsub.f32 %v625, %v796
    %v798 = vand.u32 %v797, 4294901760
    %v799 = vsub.f32 %v797, %v798
    %v800 = vand.u32 %v799, 4294901760
    %801 = vmatprep.subr.mxu0 %v800
    %v802 = vand.u32 %v624, 4294901760
    %v803 = vsub.f32 %v624, %v802
    %v804 = vand.u32 %v803, 4294901760
    %v805 = vsub.f32 %v803, %v804
    %v806 = vand.u32 %v805, 4294901760
    %807 = vmatpush1.msra.mxu0 %v806
    %808 = vmatprep.subr.mxu0 0.0
    %809 = vmatpush2.msra.mxu0 0.0
    %810 = vmatprep.subr.mxu0 0.0
    %811 = vmatpush2.msra.mxu0 0.0
    %812 = vmatprep.subr.mxu0 0.0
    %813 = vmatpush2.msra.mxu0 0.0
    %814 = vmatprep.subr.mxu0 0.0
    %815 = vmatpush2.msra.mxu0 0.0
    %816 = vmatprep.subr.mxu0 0.0
    %817 = vmatpush2.msra.mxu0 0.0
    %818 = vmatprep.subr.mxu0 0.0
    %819 = vmatpush2.msra.mxu0 0.0
    %820 = vmatprep.subr.mxu0 0.0
    %821 = vmatpush2.msra.mxu0 0.0
    %822 = vmatprep.subr.mxu0 0.0
    %823 = vmatpush2.msra.mxu0 0.0
    %824 = vmatprep.subr.mxu0 0.0
    %825 = vmatpush2.msra.mxu0 0.0
    %826 = vmatprep.subr.mxu0 0.0
    %827 = vmatpush2.msra.mxu0 0.0
    %828 = vmatprep.subr.mxu0 0.0
    %829 = vmatpush2.msra.mxu0 0.0
    %830 = vmatprep.subr.mxu0 0.0
    %831 = vmatpush2.msra.mxu0 0.0
    %832 = vmatprep.subr.mxu0 0.0
    %833 = vmatpush2.msra.mxu0 0.0
    %834 = vmatprep.subr.mxu0 0.0
    %835 = vmatpush2.msra.mxu0 0.0
    %836 = vmatprep.subr.mxu0 0.0
    %837 = vmatpush2.msra.mxu0 0.0
    %838 = vmatprep.subr.mxu0 0.0
    %839 = vmatpush2.msra.mxu0 0.0
    %840 = vmatprep.mubr.f32.mxu0 0.0
    %v841 = vand.u32 %v46, 4294901760
    %842 = vmatmul.mubr.f32.gmra.mxu0 %v841
    %v843 = vpop.f32.mrf.mxu0
    %v844 = vadd.f32 %v722, %v843
    %v845 = vpop.f32.mrf.mxu0
    %v846 = vadd.f32 %v724, %v845
    %847 = vdwg.mxu0
    %848 = vmatprep.subr.mxu0 0.0
    %849 = vmatpush1.msra.mxu0 0.0
    %850 = vmatprep.subr.mxu0 0.0
    %851 = vmatpush1.msra.mxu0 0.0
    %852 = vmatprep.subr.mxu0 0.0
    %853 = vmatpush1.msra.mxu0 0.0
    %854 = vmatprep.subr.mxu0 0.0
    %855 = vmatpush1.msra.mxu0 0.0
    %856 = vmatprep.subr.mxu0 0.0
    %857 = vmatpush1.msra.mxu0 0.0
    %858 = vmatprep.subr.mxu0 0.0
    %859 = vmatpush1.msra.mxu0 0.0
    %860 = vmatprep.subr.mxu0 0.0
    %861 = vmatpush1.msra.mxu0 0.0
    %862 = vmatprep.subr.mxu0 0.0
    %863 = vmatpush1.msra.mxu0 0.0
    %864 = vmatprep.subr.mxu0 0.0
    %865 = vmatpush1.msra.mxu0 0.0
    %866 = vmatprep.subr.mxu0 0.0
    %867 = vmatpush1.msra.mxu0 0.0
    %868 = vmatprep.subr.mxu0 0.0
    %869 = vmatpush1.msra.mxu0 0.0
    %v870 = vand.u32 %v638, 4294901760
    %v871 = vsub.f32 %v638, %v870
    %872 = vmatprep.subr.mxu0 %v871
    %v873 = vand.u32 %v635, 4294901760
    %v874 = vsub.f32 %v635, %v873
    %875 = vmatpush1.msra.mxu0 %v874
    %v876 = vand.u32 %v631, 4294901760
    %v877 = vsub.f32 %v631, %v876
    %878 = vmatprep.subr.mxu0 %v877
    %v879 = vand.u32 %v630, 4294901760
    %v880 = vsub.f32 %v630, %v879
    %881 = vmatpush1.msra.mxu0 %v880
    %v882 = vand.u32 %v629, 4294901760
    %v883 = vsub.f32 %v629, %v882
    %884 = vmatprep.subr.mxu0 %v883
    %v885 = vand.u32 %v628, 4294901760
    %v886 = vsub.f32 %v628, %v885
    %887 = vmatpush1.msra.mxu0 %v886
    %v888 = vand.u32 %v627, 4294901760
    %v889 = vsub.f32 %v627, %v888
    %890 = vmatprep.subr.mxu0 %v889
    %v891 = vand.u32 %v626, 4294901760
    %v892 = vsub.f32 %v626, %v891
    %893 = vmatpush1.msra.mxu0 %v892
    %v894 = vand.u32 %v625, 4294901760
    %v895 = vsub.f32 %v625, %v894
    %896 = vmatprep.subr.mxu0 %v895
    %v897 = vand.u32 %v624, 4294901760
    %v898 = vsub.f32 %v624, %v897
    %899 = vmatpush1.msra.mxu0 %v898
    %900 = vmatprep.subr.mxu0 0.0
    %901 = vmatpush2.msra.mxu0 0.0
    %902 = vmatprep.subr.mxu0 0.0
    %903 = vmatpush2.msra.mxu0 0.0
    %904 = vmatprep.subr.mxu0 0.0
    %905 = vmatpush2.msra.mxu0 0.0
    %906 = vmatprep.subr.mxu0 0.0
    %907 = vmatpush2.msra.mxu0 0.0
    %908 = vmatprep.subr.mxu0 0.0
    %909 = vmatpush2.msra.mxu0 0.0
    %910 = vmatprep.subr.mxu0 0.0
    %911 = vmatpush2.msra.mxu0 0.0
    %912 = vmatprep.subr.mxu0 0.0
    %913 = vmatpush2.msra.mxu0 0.0
    %914 = vmatprep.subr.mxu0 0.0
    %915 = vmatpush2.msra.mxu0 0.0
    %916 = vmatprep.subr.mxu0 0.0
    %917 = vmatpush2.msra.mxu0 0.0
    %918 = vmatprep.subr.mxu0 0.0
    %919 = vmatpush2.msra.mxu0 0.0
    %920 = vmatprep.subr.mxu0 0.0
    %921 = vmatpush2.msra.mxu0 0.0
    %922 = vmatprep.subr.mxu0 0.0
    %923 = vmatpush2.msra.mxu0 0.0
    %924 = vmatprep.subr.mxu0 0.0
    %925 = vmatpush2.msra.mxu0 0.0
    %926 = vmatprep.subr.mxu0 0.0
    %927 = vmatpush2.msra.mxu0 0.0
    %928 = vmatprep.subr.mxu0 0.0
    %929 = vmatpush2.msra.mxu0 0.0
    %930 = vmatprep.subr.mxu0 0.0
    %931 = vmatpush2.msra.mxu0 0.0
    %932 = vmatprep.mubr.f32.mxu0 0.0
    %v933 = vand.u32 %v46, 4294901760
    %v934 = vsub.f32 %v46, %v933
    %935 = vmatmul.mubr.f32.gmra.mxu0 %v934
    %v936 = vpop.f32.mrf.mxu0
    %v937 = vadd.f32 %v844, %v936
    %v938 = vpop.f32.mrf.mxu0
    %v939 = vadd.f32 %v846, %v938
    %940 = vdwg.mxu0
    %941 = vmatprep.subr.mxu0 0.0
    %942 = vmatpush1.msra.mxu0 0.0
    %943 = vmatprep.subr.mxu0 0.0
    %944 = vmatpush1.msra.mxu0 0.0
    %945 = vmatprep.subr.mxu0 0.0
    %946 = vmatpush1.msra.mxu0 0.0
    %947 = vmatprep.subr.mxu0 0.0
    %948 = vmatpush1.msra.mxu0 0.0
    %949 = vmatprep.subr.mxu0 0.0
    %950 = vmatpush1.msra.mxu0 0.0
    %951 = vmatprep.subr.mxu0 0.0
    %952 = vmatpush1.msra.mxu0 0.0
    %953 = vmatprep.subr.mxu0 0.0
    %954 = vmatpush1.msra.mxu0 0.0
    %955 = vmatprep.subr.mxu0 0.0
    %956 = vmatpush1.msra.mxu0 0.0
    %957 = vmatprep.subr.mxu0 0.0
    %958 = vmatpush1.msra.mxu0 0.0
    %959 = vmatprep.subr.mxu0 0.0
    %960 = vmatpush1.msra.mxu0 0.0
    %961 = vmatprep.subr.mxu0 0.0
    %962 = vmatpush1.msra.mxu0 0.0
    %v963 = vand.u32 %v638, 4294901760
    %964 = vmatprep.subr.mxu0 %v963
    %v965 = vand.u32 %v635, 4294901760
    %966 = vmatpush1.msra.mxu0 %v965
    %v967 = vand.u32 %v631, 4294901760
    %968 = vmatprep.subr.mxu0 %v967
    %v969 = vand.u32 %v630, 4294901760
    %970 = vmatpush1.msra.mxu0 %v969
    %v971 = vand.u32 %v629, 4294901760
    %972 = vmatprep.subr.mxu0 %v971
    %v973 = vand.u32 %v628, 4294901760
    %974 = vmatpush1.msra.mxu0 %v973
    %v975 = vand.u32 %v627, 4294901760
    %976 = vmatprep.subr.mxu0 %v975
    %v977 = vand.u32 %v626, 4294901760
    %978 = vmatpush1.msra.mxu0 %v977
    %v979 = vand.u32 %v625, 4294901760
    %980 = vmatprep.subr.mxu0 %v979
    %v981 = vand.u32 %v624, 4294901760
    %982 = vmatpush1.msra.mxu0 %v981
    %983 = vmatprep.subr.mxu0 0.0
    %984 = vmatpush2.msra.mxu0 0.0
    %985 = vmatprep.subr.mxu0 0.0
    %986 = vmatpush2.msra.mxu0 0.0
    %987 = vmatprep.subr.mxu0 0.0
    %988 = vmatpush2.msra.mxu0 0.0
    %989 = vmatprep.subr.mxu0 0.0
    %990 = vmatpush2.msra.mxu0 0.0
    %991 = vmatprep.subr.mxu0 0.0
    %992 = vmatpush2.msra.mxu0 0.0
    %993 = vmatprep.subr.mxu0 0.0
    %994 = vmatpush2.msra.mxu0 0.0
    %995 = vmatprep.subr.mxu0 0.0
    %996 = vmatpush2.msra.mxu0 0.0
    %997 = vmatprep.subr.mxu0 0.0
    %998 = vmatpush2.msra.mxu0 0.0
    %999 = vmatprep.subr.mxu0 0.0
    %1000 = vmatpush2.msra.mxu0 0.0
    %1001 = vmatprep.subr.mxu0 0.0
    %1002 = vmatpush2.msra.mxu0 0.0
    %1003 = vmatprep.subr.mxu0 0.0
    %1004 = vmatpush2.msra.mxu0 0.0
    %1005 = vmatprep.subr.mxu0 0.0
    %1006 = vmatpush2.msra.mxu0 0.0
    %1007 = vmatprep.subr.mxu0 0.0
    %1008 = vmatpush2.msra.mxu0 0.0
    %1009 = vmatprep.subr.mxu0 0.0
    %1010 = vmatpush2.msra.mxu0 0.0
    %1011 = vmatprep.subr.mxu0 0.0
    %1012 = vmatpush2.msra.mxu0 0.0
    %1013 = vmatprep.subr.mxu0 0.0
    %1014 = vmatpush2.msra.mxu0 0.0
    %1015 = vmatprep.mubr.f32.mxu0 0.0
    %v1016 = vand.u32 %v46, 4294901760
    %v1017 = vsub.f32 %v46, %v1016
    %v1018 = vand.u32 %v1017, 4294901760
    %1019 = vmatmul.mubr.f32.gmra.mxu0 %v1018
    %v1020 = vpop.f32.mrf.mxu0
    %v1021 = vadd.f32 %v937, %v1020
    %v1022 = vpop.f32.mrf.mxu0
    %v1023 = vadd.f32 %v939, %v1022
    %1024 = vdwg.mxu0
    %1025 = vmatprep.subr.mxu0 0.0
    %1026 = vmatpush1.msra.mxu0 0.0
    %1027 = vmatprep.subr.mxu0 0.0
    %1028 = vmatpush1.msra.mxu0 0.0
    %1029 = vmatprep.subr.mxu0 0.0
    %1030 = vmatpush1.msra.mxu0 0.0
    %1031 = vmatprep.subr.mxu0 0.0
    %1032 = vmatpush1.msra.mxu0 0.0
    %1033 = vmatprep.subr.mxu0 0.0
    %1034 = vmatpush1.msra.mxu0 0.0
    %1035 = vmatprep.subr.mxu0 0.0
    %1036 = vmatpush1.msra.mxu0 0.0
    %1037 = vmatprep.subr.mxu0 0.0
    %1038 = vmatpush1.msra.mxu0 0.0
    %1039 = vmatprep.subr.mxu0 0.0
    %1040 = vmatpush1.msra.mxu0 0.0
    %1041 = vmatprep.subr.mxu0 0.0
    %1042 = vmatpush1.msra.mxu0 0.0
    %1043 = vmatprep.subr.mxu0 0.0
    %1044 = vmatpush1.msra.mxu0 0.0
    %1045 = vmatprep.subr.mxu0 0.0
    %1046 = vmatpush1.msra.mxu0 0.0
    %v1047 = vand.u32 %v638, 4294901760
    %v1048 = vsub.f32 %v638, %v1047
    %v1049 = vand.u32 %v1048, 4294901760
    %1050 = vmatprep.subr.mxu0 %v1049
    %v1051 = vand.u32 %v635, 4294901760
    %v1052 = vsub.f32 %v635, %v1051
    %v1053 = vand.u32 %v1052, 4294901760
    %1054 = vmatpush1.msra.mxu0 %v1053
    %v1055 = vand.u32 %v631, 4294901760
    %v1056 = vsub.f32 %v631, %v1055
    %v1057 = vand.u32 %v1056, 4294901760
    %1058 = vmatprep.subr.mxu0 %v1057
    %v1059 = vand.u32 %v630, 4294901760
    %v1060 = vsub.f32 %v630, %v1059
    %v1061 = vand.u32 %v1060, 4294901760
    %1062 = vmatpush1.msra.mxu0 %v1061
    %v1063 = vand.u32 %v629, 4294901760
    %v1064 = vsub.f32 %v629, %v1063
    %v1065 = vand.u32 %v1064, 4294901760
    %1066 = vmatprep.subr.mxu0 %v1065
    %v1067 = vand.u32 %v628, 4294901760
    %v1068 = vsub.f32 %v628, %v1067
    %v1069 = vand.u32 %v1068, 4294901760
    %1070 = vmatpush1.msra.mxu0 %v1069
    %v1071 = vand.u32 %v627, 4294901760
    %v1072 = vsub.f32 %v627, %v1071
    %v1073 = vand.u32 %v1072, 4294901760
    %1074 = vmatprep.subr.mxu0 %v1073
    %v1075 = vand.u32 %v626, 4294901760
    %v1076 = vsub.f32 %v626, %v1075
    %v1077 = vand.u32 %v1076, 4294901760
    %1078 = vmatpush1.msra.mxu0 %v1077
    %v1079 = vand.u32 %v625, 4294901760
    %v1080 = vsub.f32 %v625, %v1079
    %v1081 = vand.u32 %v1080, 4294901760
    %1082 = vmatprep.subr.mxu0 %v1081
    %v1083 = vand.u32 %v624, 4294901760
    %v1084 = vsub.f32 %v624, %v1083
    %v1085 = vand.u32 %v1084, 4294901760
    %1086 = vmatpush1.msra.mxu0 %v1085
    %1087 = vmatprep.subr.mxu0 0.0
    %1088 = vmatpush2.msra.mxu0 0.0
    %1089 = vmatprep.subr.mxu0 0.0
    %1090 = vmatpush2.msra.mxu0 0.0
    %1091 = vmatprep.subr.mxu0 0.0
    %1092 = vmatpush2.msra.mxu0 0.0
    %1093 = vmatprep.subr.mxu0 0.0
    %1094 = vmatpush2.msra.mxu0 0.0
    %1095 = vmatprep.subr.mxu0 0.0
    %1096 = vmatpush2.msra.mxu0 0.0
    %1097 = vmatprep.subr.mxu0 0.0
    %1098 = vmatpush2.msra.mxu0 0.0
    %1099 = vmatprep.subr.mxu0 0.0
    %1100 = vmatpush2.msra.mxu0 0.0
    %1101 = vmatprep.subr.mxu0 0.0
    %1102 = vmatpush2.msra.mxu0 0.0
    %1103 = vmatprep.subr.mxu0 0.0
    %1104 = vmatpush2.msra.mxu0 0.0
    %1105 = vmatprep.subr.mxu0 0.0
    %1106 = vmatpush2.msra.mxu0 0.0
    %1107 = vmatprep.subr.mxu0 0.0
    %1108 = vmatpush2.msra.mxu0 0.0
    %1109 = vmatprep.subr.mxu0 0.0
    %1110 = vmatpush2.msra.mxu0 0.0
    %1111 = vmatprep.subr.mxu0 0.0
    %1112 = vmatpush2.msra.mxu0 0.0
    %1113 = vmatprep.subr.mxu0 0.0
    %1114 = vmatpush2.msra.mxu0 0.0
    %1115 = vmatprep.subr.mxu0 0.0
    %1116 = vmatpush2.msra.mxu0 0.0
    %1117 = vmatprep.subr.mxu0 0.0
    %1118 = vmatpush2.msra.mxu0 0.0
    %1119 = vmatprep.mubr.f32.mxu0 0.0
    %v1120 = vand.u32 %v46, 4294901760
    %1121 = vmatmul.mubr.f32.gmra.mxu0 %v1120
    %v1122 = vpop.f32.mrf.mxu0
    %v1123 = vadd.f32 %v1021, %v1122
    %v1124 = vpop.f32.mrf.mxu0
    %v1125 = vadd.f32 %v1023, %v1124
    %1126 = vdwg.mxu0
    %1127 = vmatprep.subr.mxu0 0.0
    %1128 = vmatpush1.msra.mxu0 0.0
    %1129 = vmatprep.subr.mxu0 0.0
    %1130 = vmatpush1.msra.mxu0 0.0
    %1131 = vmatprep.subr.mxu0 0.0
    %1132 = vmatpush1.msra.mxu0 0.0
    %1133 = vmatprep.subr.mxu0 0.0
    %1134 = vmatpush1.msra.mxu0 0.0
    %1135 = vmatprep.subr.mxu0 0.0
    %1136 = vmatpush1.msra.mxu0 0.0
    %1137 = vmatprep.subr.mxu0 0.0
    %1138 = vmatpush1.msra.mxu0 0.0
    %1139 = vmatprep.subr.mxu0 0.0
    %1140 = vmatpush1.msra.mxu0 0.0
    %1141 = vmatprep.subr.mxu0 0.0
    %1142 = vmatpush1.msra.mxu0 0.0
    %1143 = vmatprep.subr.mxu0 0.0
    %1144 = vmatpush1.msra.mxu0 0.0
    %1145 = vmatprep.subr.mxu0 0.0
    %1146 = vmatpush1.msra.mxu0 0.0
    %1147 = vmatprep.subr.mxu0 0.0
    %1148 = vmatpush1.msra.mxu0 0.0
    %v1149 = vand.u32 %v638, 4294901760
    %1150 = vmatprep.subr.mxu0 %v1149
    %v1151 = vand.u32 %v635, 4294901760
    %1152 = vmatpush1.msra.mxu0 %v1151
    %v1153 = vand.u32 %v631, 4294901760
    %1154 = vmatprep.subr.mxu0 %v1153
    %v1155 = vand.u32 %v630, 4294901760
    %1156 = vmatpush1.msra.mxu0 %v1155
    %v1157 = vand.u32 %v629, 4294901760
    %1158 = vmatprep.subr.mxu0 %v1157
    %v1159 = vand.u32 %v628, 4294901760
    %1160 = vmatpush1.msra.mxu0 %v1159
    %v1161 = vand.u32 %v627, 4294901760
    %1162 = vmatprep.subr.mxu0 %v1161
    %v1163 = vand.u32 %v626, 4294901760
    %1164 = vmatpush1.msra.mxu0 %v1163
    %v1165 = vand.u32 %v625, 4294901760
    %1166 = vmatprep.subr.mxu0 %v1165
    %v1167 = vand.u32 %v624, 4294901760
    %1168 = vmatpush1.msra.mxu0 %v1167
    %1169 = vmatprep.subr.mxu0 0.0
    %1170 = vmatpush2.msra.mxu0 0.0
    %1171 = vmatprep.subr.mxu0 0.0
    %1172 = vmatpush2.msra.mxu0 0.0
    %1173 = vmatprep.subr.mxu0 0.0
    %1174 = vmatpush2.msra.mxu0 0.0
    %1175 = vmatprep.subr.mxu0 0.0
    %1176 = vmatpush2.msra.mxu0 0.0
    %1177 = vmatprep.subr.mxu0 0.0
    %1178 = vmatpush2.msra.mxu0 0.0
    %1179 = vmatprep.subr.mxu0 0.0
    %1180 = vmatpush2.msra.mxu0 0.0
    %1181 = vmatprep.subr.mxu0 0.0
    %1182 = vmatpush2.msra.mxu0 0.0
    %1183 = vmatprep.subr.mxu0 0.0
    %1184 = vmatpush2.msra.mxu0 0.0
    %1185 = vmatprep.subr.mxu0 0.0
    %1186 = vmatpush2.msra.mxu0 0.0
    %1187 = vmatprep.subr.mxu0 0.0
    %1188 = vmatpush2.msra.mxu0 0.0
    %1189 = vmatprep.subr.mxu0 0.0
    %1190 = vmatpush2.msra.mxu0 0.0
    %1191 = vmatprep.subr.mxu0 0.0
    %1192 = vmatpush2.msra.mxu0 0.0
    %1193 = vmatprep.subr.mxu0 0.0
    %1194 = vmatpush2.msra.mxu0 0.0
    %1195 = vmatprep.subr.mxu0 0.0
    %1196 = vmatpush2.msra.mxu0 0.0
    %1197 = vmatprep.subr.mxu0 0.0
    %1198 = vmatpush2.msra.mxu0 0.0
    %1199 = vmatprep.subr.mxu0 0.0
    %1200 = vmatpush2.msra.mxu0 0.0
    %1201 = vmatprep.mubr.f32.mxu0 0.0
    %v1202 = vand.u32 %v46, 4294901760
    %1203 = vmatmul.mubr.f32.gmra.mxu0 %v1202
    %v1204 = vpop.f32.mrf.mxu0
    %v1205 = vadd.f32 %v1123, %v1204
    %v1206 = vpop.f32.mrf.mxu0
    %v1207 = vadd.f32 %v1125, %v1206
    %1208 = vdwg.mxu0
    %v1209 = vmax.f32 %v620, %v1205
    %v1210 = vmax.f32 %v622, %v1207
    %v1211 = vlaneseq
    %v1212 = vshrl.u32 %v1211, 7
    %v1213 = vsub.s32 0, %v1212
    %v1214 = vrot.slane %v31, %v1213
    %v1215 = vlaneseq
    %v1216 = vshrl.u32 %v1215, 7
    %v1217 = vsub.s32 0, %v1216
    %v1218 = vrot.slane %v32, %v1217
    %v1219 = vadd.f32 %v1209, %v1214
    %v1220 = vadd.f32 %v1210, %v1218
    %v1221 = vmax.f32 %v1219, 0.0
    %v1222 = vmax.f32 %v1220, 0.0
    %v1223 = vld [vmem:[%s3] sm:$0xff]
    %v1224 = vld [vmem:[%s3 + $0x8] sm:$0xff]
    %v1225 = vld [vmem:[%s3 + $0x10] sm:$0xff]
    %v1226 = vld [vmem:[%s3 + $0x18] sm:$0xff]
    %v1227 = vld [vmem:[%s3 + $0x20] sm:$0xff]
    %v1228 = vld [vmem:[%s3 + $0x28] sm:$0xff]
    %v1229 = vld [vmem:[%s3 + $0x30] sm:$0xff]
    %v1230 = vld [vmem:[%s3 + $0x38] sm:$0xff]
    %v1231 = vld [vmem:[%s3 + $0x40] sm:$0xff]
    %v1232 = vld [vmem:[%s3 + $0x48] sm:$0xff]
    %v1233 = vld [vmem:[%s3 + $0x50] sm:$0xff]
    %v1234 = vld [vmem:[%s3 + $0x58] sm:$0xff]
    %v1235 = vld [vmem:[%s3 + $0x60] sm:$0xff]
    %v1236 = vld [vmem:[%s3 + $0x68] sm:$0xff]
    %v1237 = vld [vmem:[%s3 + $0x70] sm:$0xff]
    %v1238 = vld [vmem:[%s3 + $0x78] sm:$0xff]
    %v1239 = vld [vmem:[%s3 + $0x80] sm:$0xff]
    %v1240 = vld [vmem:[%s3 + $0x88] sm:$0xff]
    %v1241 = vld [vmem:[%s3 + $0x90] sm:$0xff]
    %v1242 = vld [vmem:[%s3 + $0x98] sm:$0xff]
    %v1243 = vld [vmem:[%s3 + $0xa0] sm:$0xff]
    %v1244 = vld [vmem:[%s3 + $0xa8] sm:$0xff]
    %v1245 = vld [vmem:[%s3 + $0xb0] sm:$0xff]
    %v1246 = vld [vmem:[%s3 + $0xb8] sm:$0xff]
    %v1247 = vld [vmem:[%s3 + $0xc0] sm:$0xff]
    %v1248 = vld [vmem:[%s3 + $0xc8] sm:$0xff]
    %v1249 = vld [vmem:[%s3 + $0xd0] sm:$0xff]
    %v1250 = vld [vmem:[%s3 + $0xd8] sm:$0xff]
    %v1251 = vld [vmem:[%s3 + $0xe0] sm:$0xff]
    %v1252 = vld [vmem:[%s3 + $0xe8] sm:$0xff]
    %v1253 = vld [vmem:[%s3 + $0xf0] sm:$0xff]
    %v1254 = vld [vmem:[%s3 + $0xf8] sm:$0xff]
    %v1255 = vld [vmem:[%s3 + $0x100] sm:$0xff]
    %v1256 = vld [vmem:[%s3 + $0x108] sm:$0xff]
    %v1257 = vld [vmem:[%s3 + $0x110] sm:$0xff]
    %v1258 = vld [vmem:[%s3 + $0x118] sm:$0xff]
    %v1259 = vld [vmem:[%s3 + $0x120] sm:$0xff]
    %v1260 = vld [vmem:[%s3 + $0x128] sm:$0xff]
    %v1261 = vld [vmem:[%s3 + $0x130] sm:$0xff]
    %v1262 = vld [vmem:[%s3 + $0x138] sm:$0xff]
    %v1263 = vld [vmem:[%s3 + $0x140] sm:$0xff]
    %v1264 = vld [vmem:[%s3 + $0x148] sm:$0xff]
    %v1265 = vld [vmem:[%s3 + $0x150] sm:$0xff]
    %v1266 = vld [vmem:[%s3 + $0x158] sm:$0xff]
    %v1267 = vld [vmem:[%s3 + $0x160] sm:$0xff]
    %v1268 = vld [vmem:[%s3 + $0x168] sm:$0xff]
    %v1269 = vld [vmem:[%s3 + $0x170] sm:$0xff]
    %v1270 = vld [vmem:[%s3 + $0x178] sm:$0xff]
    %v1271 = vld [vmem:[%s3 + $0x180] sm:$0xff]
    %v1272 = vld [vmem:[%s3 + $0x188] sm:$0xff]
    %v1273 = vld [vmem:[%s3 + $0x190] sm:$0xff]
    %v1274 = vld [vmem:[%s3 + $0x198] sm:$0xff]
    %v1275 = vld [vmem:[%s3 + $0x1a0] sm:$0xff]
    %v1276 = vld [vmem:[%s3 + $0x1a8] sm:$0xff]
    %v1277 = vld [vmem:[%s3 + $0x1b0] sm:$0xff]
    %v1278 = vld [vmem:[%s3 + $0x1b8] sm:$0xff]
    %v1279 = vld [vmem:[%s3 + $0x1c0] sm:$0xff]
    %v1280 = vld [vmem:[%s3 + $0x1c8] sm:$0xff]
    %v1281 = vld [vmem:[%s3 + $0x1d0] sm:$0xff]
    %v1282 = vld [vmem:[%s3 + $0x1d8] sm:$0xff]
    %vm1283 = vcmask 916480
    %v1285 = vsel %vm1283, %v1222, 0
    %v1287 = vand.u32 %v1254, 4294901760
    %1288 = vmatprep.subr.mxu0 %v1287
    %v1289 = vand.u32 %v1253, 4294901760
    %1290 = vmatpush1.msra.mxu0 %v1289
    %v1291 = vand.u32 %v1252, 4294901760
    %1292 = vmatprep.subr.mxu0 %v1291
    %v1293 = vand.u32 %v1251, 4294901760
    %1294 = vmatpush1.msra.mxu0 %v1293
    %v1295 = vand.u32 %v1250, 4294901760
    %1296 = vmatprep.subr.mxu0 %v1295
    %v1297 = vand.u32 %v1249, 4294901760
    %1298 = vmatpush1.msra.mxu0 %v1297
    %v1299 = vand.u32 %v1248, 4294901760
    %1300 = vmatprep.subr.mxu0 %v1299
    %v1301 = vand.u32 %v1247, 4294901760
    %1302 = vmatpush1.msra.mxu0 %v1301
    %v1303 = vand.u32 %v1246, 4294901760
    %1304 = vmatprep.subr.mxu0 %v1303
    %v1305 = vand.u32 %v1245, 4294901760
    %1306 = vmatpush1.msra.mxu0 %v1305
    %v1307 = vand.u32 %v1244, 4294901760
    %1308 = vmatprep.subr.mxu0 %v1307
    %v1309 = vand.u32 %v1243, 4294901760
    %1310 = vmatpush1.msra.mxu0 %v1309
    %v1311 = vand.u32 %v1242, 4294901760
    %1312 = vmatprep.subr.mxu0 %v1311
    %v1313 = vand.u32 %v1241, 4294901760
    %1314 = vmatpush1.msra.mxu0 %v1313
    %v1315 = vand.u32 %v1240, 4294901760
    %1316 = vmatprep.subr.mxu0 %v1315
    %v1317 = vand.u32 %v1239, 4294901760
    %1318 = vmatpush1.msra.mxu0 %v1317
    %v1319 = vand.u32 %v1238, 4294901760
    %1320 = vmatprep.subr.mxu0 %v1319
    %v1321 = vand.u32 %v1237, 4294901760
    %1322 = vmatpush1.msra.mxu0 %v1321
    %v1323 = vand.u32 %v1236, 4294901760
    %1324 = vmatprep.subr.mxu0 %v1323
    %v1325 = vand.u32 %v1235, 4294901760
    %1326 = vmatpush1.msra.mxu0 %v1325
    %v1327 = vand.u32 %v1234, 4294901760
    %1328 = vmatprep.subr.mxu0 %v1327
    %v1329 = vand.u32 %v1233, 4294901760
    %1330 = vmatpush1.msra.mxu0 %v1329
    %v1331 = vand.u32 %v1232, 4294901760
    %1332 = vmatprep.subr.mxu0 %v1331
    %v1333 = vand.u32 %v1231, 4294901760
    %1334 = vmatpush1.msra.mxu0 %v1333
    %v1335 = vand.u32 %v1230, 4294901760
    %1336 = vmatprep.subr.mxu0 %v1335
    %v1337 = vand.u32 %v1229, 4294901760
    %1338 = vmatpush1.msra.mxu0 %v1337
    %v1339 = vand.u32 %v1228, 4294901760
    %1340 = vmatprep.subr.mxu0 %v1339
    %v1341 = vand.u32 %v1227, 4294901760
    %1342 = vmatpush1.msra.mxu0 %v1341
    %v1343 = vand.u32 %v1226, 4294901760
    %1344 = vmatprep.subr.mxu0 %v1343
    %v1345 = vand.u32 %v1225, 4294901760
    %1346 = vmatpush1.msra.mxu0 %v1345
    %v1347 = vand.u32 %v1224, 4294901760
    %1348 = vmatprep.subr.mxu0 %v1347
    %v1349 = vand.u32 %v1223, 4294901760
    %1350 = vmatpush1.msra.mxu0 %v1349
    %1351 = vmatprep.subr.mxu0 0.0
    %1352 = vmatpush2.msra.mxu0 0.0
    %1353 = vmatprep.subr.mxu0 0.0
    %1354 = vmatpush2.msra.mxu0 0.0
    %v1355 = vand.u32 %v1282, 4294901760
    %1356 = vmatprep.subr.mxu0 %v1355
    %v1357 = vand.u32 %v1281, 4294901760
    %1358 = vmatpush2.msra.mxu0 %v1357
    %v1359 = vand.u32 %v1280, 4294901760
    %1360 = vmatprep.subr.mxu0 %v1359
    %v1361 = vand.u32 %v1279, 4294901760
    %1362 = vmatpush2.msra.mxu0 %v1361
    %v1363 = vand.u32 %v1278, 4294901760
    %1364 = vmatprep.subr.mxu0 %v1363
    %v1365 = vand.u32 %v1277, 4294901760
    %1366 = vmatpush2.msra.mxu0 %v1365
    %v1367 = vand.u32 %v1276, 4294901760
    %1368 = vmatprep.subr.mxu0 %v1367
    %v1369 = vand.u32 %v1275, 4294901760
    %1370 = vmatpush2.msra.mxu0 %v1369
    %v1371 = vand.u32 %v1274, 4294901760
    %1372 = vmatprep.subr.mxu0 %v1371
    %v1373 = vand.u32 %v1273, 4294901760
    %1374 = vmatpush2.msra.mxu0 %v1373
    %v1375 = vand.u32 %v1272, 4294901760
    %1376 = vmatprep.subr.mxu0 %v1375
    %v1377 = vand.u32 %v1271, 4294901760
    %1378 = vmatpush2.msra.mxu0 %v1377
    %v1379 = vand.u32 %v1270, 4294901760
    %1380 = vmatprep.subr.mxu0 %v1379
    %v1381 = vand.u32 %v1269, 4294901760
    %1382 = vmatpush2.msra.mxu0 %v1381
    %v1383 = vand.u32 %v1268, 4294901760
    %1384 = vmatprep.subr.mxu0 %v1383
    %v1385 = vand.u32 %v1267, 4294901760
    %1386 = vmatpush2.msra.mxu0 %v1385
    %v1387 = vand.u32 %v1266, 4294901760
    %1388 = vmatprep.subr.mxu0 %v1387
    %v1389 = vand.u32 %v1265, 4294901760
    %1390 = vmatpush2.msra.mxu0 %v1389
    %v1391 = vand.u32 %v1264, 4294901760
    %1392 = vmatprep.subr.mxu0 %v1391
    %v1393 = vand.u32 %v1263, 4294901760
    %1394 = vmatpush2.msra.mxu0 %v1393
    %v1395 = vand.u32 %v1262, 4294901760
    %1396 = vmatprep.subr.mxu0 %v1395
    %v1397 = vand.u32 %v1261, 4294901760
    %1398 = vmatpush2.msra.mxu0 %v1397
    %v1399 = vand.u32 %v1260, 4294901760
    %1400 = vmatprep.subr.mxu0 %v1399
    %v1401 = vand.u32 %v1259, 4294901760
    %1402 = vmatpush2.msra.mxu0 %v1401
    %v1403 = vand.u32 %v1258, 4294901760
    %1404 = vmatprep.subr.mxu0 %v1403
    %v1405 = vand.u32 %v1257, 4294901760
    %1406 = vmatpush2.msra.mxu0 %v1405
    %v1407 = vand.u32 %v1256, 4294901760
    %1408 = vmatprep.subr.mxu0 %v1407
    %v1409 = vand.u32 %v1255, 4294901760
    %1410 = vmatpush2.msra.mxu0 %v1409
    %v1411 = vand.u32 %v1285, 4294901760
    %v1412 = vsub.f32 %v1285, %v1411
    %v1413 = vand.u32 %v1412, 4294901760
    %v1414 = vsub.f32 %v1412, %v1413
    %v1415 = vand.u32 %v1414, 4294901760
    %1416 = vmatprep.mubr.f32.mxu0 %v1415
    %v1417 = vand.u32 %v1221, 4294901760
    %v1418 = vsub.f32 %v1221, %v1417
    %v1419 = vand.u32 %v1418, 4294901760
    %v1420 = vsub.f32 %v1418, %v1419
    %v1421 = vand.u32 %v1420, 4294901760
    %1422 = vmatmul.mubr.f32.gmra.mxu0 %v1421
    %v1423 = vpop.f32.mrf.mxu0
    %v1424 = vadd.f32 0.0, %v1423
    %v1425 = vpop.f32.mrf.mxu0
    %v1426 = vadd.f32 0.0, %v1425
    %1427 = vdwg.mxu0
    %v1428 = vand.u32 %v1254, 4294901760
    %v1429 = vsub.f32 %v1254, %v1428
    %v1430 = vand.u32 %v1429, 4294901760
    %v1431 = vsub.f32 %v1429, %v1430
    %v1432 = vand.u32 %v1431, 4294901760
    %1433 = vmatprep.subr.mxu0 %v1432
    %v1434 = vand.u32 %v1253, 4294901760
    %v1435 = vsub.f32 %v1253, %v1434
    %v1436 = vand.u32 %v1435, 4294901760
    %v1437 = vsub.f32 %v1435, %v1436
    %v1438 = vand.u32 %v1437, 4294901760
    %1439 = vmatpush1.msra.mxu0 %v1438
    %v1440 = vand.u32 %v1252, 4294901760
    %v1441 = vsub.f32 %v1252, %v1440
    %v1442 = vand.u32 %v1441, 4294901760
    %v1443 = vsub.f32 %v1441, %v1442
    %v1444 = vand.u32 %v1443, 4294901760
    %1445 = vmatprep.subr.mxu0 %v1444
    %v1446 = vand.u32 %v1251, 4294901760
    %v1447 = vsub.f32 %v1251, %v1446
    %v1448 = vand.u32 %v1447, 4294901760
    %v1449 = vsub.f32 %v1447, %v1448
    %v1450 = vand.u32 %v1449, 4294901760
    %1451 = vmatpush1.msra.mxu0 %v1450
    %v1452 = vand.u32 %v1250, 4294901760
    %v1453 = vsub.f32 %v1250, %v1452
    %v1454 = vand.u32 %v1453, 4294901760
    %v1455 = vsub.f32 %v1453, %v1454
    %v1456 = vand.u32 %v1455, 4294901760
    %1457 = vmatprep.subr.mxu0 %v1456
    %v1458 = vand.u32 %v1249, 4294901760
    %v1459 = vsub.f32 %v1249, %v1458
    %v1460 = vand.u32 %v1459, 4294901760
    %v1461 = vsub.f32 %v1459, %v1460
    %v1462 = vand.u32 %v1461, 4294901760
    %1463 = vmatpush1.msra.mxu0 %v1462
    %v1464 = vand.u32 %v1248, 4294901760
    %v1465 = vsub.f32 %v1248, %v1464
    %v1466 = vand.u32 %v1465, 4294901760
    %v1467 = vsub.f32 %v1465, %v1466
    %v1468 = vand.u32 %v1467, 4294901760
    %1469 = vmatprep.subr.mxu0 %v1468
    %v1470 = vand.u32 %v1247, 4294901760
    %v1471 = vsub.f32 %v1247, %v1470
    %v1472 = vand.u32 %v1471, 4294901760
    %v1473 = vsub.f32 %v1471, %v1472
    %v1474 = vand.u32 %v1473, 4294901760
    %1475 = vmatpush1.msra.mxu0 %v1474
    %v1476 = vand.u32 %v1246, 4294901760
    %v1477 = vsub.f32 %v1246, %v1476
    %v1478 = vand.u32 %v1477, 4294901760
    %v1479 = vsub.f32 %v1477, %v1478
    %v1480 = vand.u32 %v1479, 4294901760
    %1481 = vmatprep.subr.mxu0 %v1480
    %v1482 = vand.u32 %v1245, 4294901760
    %v1483 = vsub.f32 %v1245, %v1482
    %v1484 = vand.u32 %v1483, 4294901760
    %v1485 = vsub.f32 %v1483, %v1484
    %v1486 = vand.u32 %v1485, 4294901760
    %1487 = vmatpush1.msra.mxu0 %v1486
    %v1488 = vand.u32 %v1244, 4294901760
    %v1489 = vsub.f32 %v1244, %v1488
    %v1490 = vand.u32 %v1489, 4294901760
    %v1491 = vsub.f32 %v1489, %v1490
    %v1492 = vand.u32 %v1491, 4294901760
    %1493 = vmatprep.subr.mxu0 %v1492
    %v1494 = vand.u32 %v1243, 4294901760
    %v1495 = vsub.f32 %v1243, %v1494
    %v1496 = vand.u32 %v1495, 4294901760
    %v1497 = vsub.f32 %v1495, %v1496
    %v1498 = vand.u32 %v1497, 4294901760
    %1499 = vmatpush1.msra.mxu0 %v1498
    %v1500 = vand.u32 %v1242, 4294901760
    %v1501 = vsub.f32 %v1242, %v1500
    %v1502 = vand.u32 %v1501, 4294901760
    %v1503 = vsub.f32 %v1501, %v1502
    %v1504 = vand.u32 %v1503, 4294901760
    %1505 = vmatprep.subr.mxu0 %v1504
    %v1506 = vand.u32 %v1241, 4294901760
    %v1507 = vsub.f32 %v1241, %v1506
    %v1508 = vand.u32 %v1507, 4294901760
    %v1509 = vsub.f32 %v1507, %v1508
    %v1510 = vand.u32 %v1509, 4294901760
    %1511 = vmatpush1.msra.mxu0 %v1510
    %v1512 = vand.u32 %v1240, 4294901760
    %v1513 = vsub.f32 %v1240, %v1512
    %v1514 = vand.u32 %v1513, 4294901760
    %v1515 = vsub.f32 %v1513, %v1514
    %v1516 = vand.u32 %v1515, 4294901760
    %1517 = vmatprep.subr.mxu0 %v1516
    %v1518 = vand.u32 %v1239, 4294901760
    %v1519 = vsub.f32 %v1239, %v1518
    %v1520 = vand.u32 %v1519, 4294901760
    %v1521 = vsub.f32 %v1519, %v1520
    %v1522 = vand.u32 %v1521, 4294901760
    %1523 = vmatpush1.msra.mxu0 %v1522
    %v1524 = vand.u32 %v1238, 4294901760
    %v1525 = vsub.f32 %v1238, %v1524
    %v1526 = vand.u32 %v1525, 4294901760
    %v1527 = vsub.f32 %v1525, %v1526
    %v1528 = vand.u32 %v1527, 4294901760
    %1529 = vmatprep.subr.mxu0 %v1528
    %v1530 = vand.u32 %v1237, 4294901760
    %v1531 = vsub.f32 %v1237, %v1530
    %v1532 = vand.u32 %v1531, 4294901760
    %v1533 = vsub.f32 %v1531, %v1532
    %v1534 = vand.u32 %v1533, 4294901760
    %1535 = vmatpush1.msra.mxu0 %v1534
    %v1536 = vand.u32 %v1236, 4294901760
    %v1537 = vsub.f32 %v1236, %v1536
    %v1538 = vand.u32 %v1537, 4294901760
    %v1539 = vsub.f32 %v1537, %v1538
    %v1540 = vand.u32 %v1539, 4294901760
    %1541 = vmatprep.subr.mxu0 %v1540
    %v1542 = vand.u32 %v1235, 4294901760
    %v1543 = vsub.f32 %v1235, %v1542
    %v1544 = vand.u32 %v1543, 4294901760
    %v1545 = vsub.f32 %v1543, %v1544
    %v1546 = vand.u32 %v1545, 4294901760
    %1547 = vmatpush1.msra.mxu0 %v1546
    %v1548 = vand.u32 %v1234, 4294901760
    %v1549 = vsub.f32 %v1234, %v1548
    %v1550 = vand.u32 %v1549, 4294901760
    %v1551 = vsub.f32 %v1549, %v1550
    %v1552 = vand.u32 %v1551, 4294901760
    %1553 = vmatprep.subr.mxu0 %v1552
    %v1554 = vand.u32 %v1233, 4294901760
    %v1555 = vsub.f32 %v1233, %v1554
    %v1556 = vand.u32 %v1555, 4294901760
    %v1557 = vsub.f32 %v1555, %v1556
    %v1558 = vand.u32 %v1557, 4294901760
    %1559 = vmatpush1.msra.mxu0 %v1558
    %v1560 = vand.u32 %v1232, 4294901760
    %v1561 = vsub.f32 %v1232, %v1560
    %v1562 = vand.u32 %v1561, 4294901760
    %v1563 = vsub.f32 %v1561, %v1562
    %v1564 = vand.u32 %v1563, 4294901760
    %1565 = vmatprep.subr.mxu0 %v1564
    %v1566 = vand.u32 %v1231, 4294901760
    %v1567 = vsub.f32 %v1231, %v1566
    %v1568 = vand.u32 %v1567, 4294901760
    %v1569 = vsub.f32 %v1567, %v1568
    %v1570 = vand.u32 %v1569, 4294901760
    %1571 = vmatpush1.msra.mxu0 %v1570
    %v1572 = vand.u32 %v1230, 4294901760
    %v1573 = vsub.f32 %v1230, %v1572
    %v1574 = vand.u32 %v1573, 4294901760
    %v1575 = vsub.f32 %v1573, %v1574
    %v1576 = vand.u32 %v1575, 4294901760
    %1577 = vmatprep.subr.mxu0 %v1576
    %v1578 = vand.u32 %v1229, 4294901760
    %v1579 = vsub.f32 %v1229, %v1578
    %v1580 = vand.u32 %v1579, 4294901760
    %v1581 = vsub.f32 %v1579, %v1580
    %v1582 = vand.u32 %v1581, 4294901760
    %1583 = vmatpush1.msra.mxu0 %v1582
    %v1584 = vand.u32 %v1228, 4294901760
    %v1585 = vsub.f32 %v1228, %v1584
    %v1586 = vand.u32 %v1585, 4294901760
    %v1587 = vsub.f32 %v1585, %v1586
    %v1588 = vand.u32 %v1587, 4294901760
    %1589 = vmatprep.subr.mxu0 %v1588
    %v1590 = vand.u32 %v1227, 4294901760
    %v1591 = vsub.f32 %v1227, %v1590
    %v1592 = vand.u32 %v1591, 4294901760
    %v1593 = vsub.f32 %v1591, %v1592
    %v1594 = vand.u32 %v1593, 4294901760
    %1595 = vmatpush1.msra.mxu0 %v1594
    %v1596 = vand.u32 %v1226, 4294901760
    %v1597 = vsub.f32 %v1226, %v1596
    %v1598 = vand.u32 %v1597, 4294901760
    %v1599 = vsub.f32 %v1597, %v1598
    %v1600 = vand.u32 %v1599, 4294901760
    %1601 = vmatprep.subr.mxu0 %v1600
    %v1602 = vand.u32 %v1225, 4294901760
    %v1603 = vsub.f32 %v1225, %v1602
    %v1604 = vand.u32 %v1603, 4294901760
    %v1605 = vsub.f32 %v1603, %v1604
    %v1606 = vand.u32 %v1605, 4294901760
    %1607 = vmatpush1.msra.mxu0 %v1606
    %v1608 = vand.u32 %v1224, 4294901760
    %v1609 = vsub.f32 %v1224, %v1608
    %v1610 = vand.u32 %v1609, 4294901760
    %v1611 = vsub.f32 %v1609, %v1610
    %v1612 = vand.u32 %v1611, 4294901760
    %1613 = vmatprep.subr.mxu0 %v1612
    %v1614 = vand.u32 %v1223, 4294901760
    %v1615 = vsub.f32 %v1223, %v1614
    %v1616 = vand.u32 %v1615, 4294901760
    %v1617 = vsub.f32 %v1615, %v1616
    %v1618 = vand.u32 %v1617, 4294901760
    %1619 = vmatpush1.msra.mxu0 %v1618
    %1620 = vmatprep.subr.mxu0 0.0
    %1621 = vmatpush2.msra.mxu0 0.0
    %1622 = vmatprep.subr.mxu0 0.0
    %1623 = vmatpush2.msra.mxu0 0.0
    %v1624 = vand.u32 %v1282, 4294901760
    %v1625 = vsub.f32 %v1282, %v1624
    %v1626 = vand.u32 %v1625, 4294901760
    %v1627 = vsub.f32 %v1625, %v1626
    %v1628 = vand.u32 %v1627, 4294901760
    %1629 = vmatprep.subr.mxu0 %v1628
    %v1630 = vand.u32 %v1281, 4294901760
    %v1631 = vsub.f32 %v1281, %v1630
    %v1632 = vand.u32 %v1631, 4294901760
    %v1633 = vsub.f32 %v1631, %v1632
    %v1634 = vand.u32 %v1633, 4294901760
    %1635 = vmatpush2.msra.mxu0 %v1634
    %v1636 = vand.u32 %v1280, 4294901760
    %v1637 = vsub.f32 %v1280, %v1636
    %v1638 = vand.u32 %v1637, 4294901760
    %v1639 = vsub.f32 %v1637, %v1638
    %v1640 = vand.u32 %v1639, 4294901760
    %1641 = vmatprep.subr.mxu0 %v1640
    %v1642 = vand.u32 %v1279, 4294901760
    %v1643 = vsub.f32 %v1279, %v1642
    %v1644 = vand.u32 %v1643, 4294901760
    %v1645 = vsub.f32 %v1643, %v1644
    %v1646 = vand.u32 %v1645, 4294901760
    %1647 = vmatpush2.msra.mxu0 %v1646
    %v1648 = vand.u32 %v1278, 4294901760
    %v1649 = vsub.f32 %v1278, %v1648
    %v1650 = vand.u32 %v1649, 4294901760
    %v1651 = vsub.f32 %v1649, %v1650
    %v1652 = vand.u32 %v1651, 4294901760
    %1653 = vmatprep.subr.mxu0 %v1652
    %v1654 = vand.u32 %v1277, 4294901760
    %v1655 = vsub.f32 %v1277, %v1654
    %v1656 = vand.u32 %v1655, 4294901760
    %v1657 = vsub.f32 %v1655, %v1656
    %v1658 = vand.u32 %v1657, 4294901760
    %1659 = vmatpush2.msra.mxu0 %v1658
    %v1660 = vand.u32 %v1276, 4294901760
    %v1661 = vsub.f32 %v1276, %v1660
    %v1662 = vand.u32 %v1661, 4294901760
    %v1663 = vsub.f32 %v1661, %v1662
    %v1664 = vand.u32 %v1663, 4294901760
    %1665 = vmatprep.subr.mxu0 %v1664
    %v1666 = vand.u32 %v1275, 4294901760
    %v1667 = vsub.f32 %v1275, %v1666
    %v1668 = vand.u32 %v1667, 4294901760
    %v1669 = vsub.f32 %v1667, %v1668
    %v1670 = vand.u32 %v1669, 4294901760
    %1671 = vmatpush2.msra.mxu0 %v1670
    %v1672 = vand.u32 %v1274, 4294901760
    %v1673 = vsub.f32 %v1274, %v1672
    %v1674 = vand.u32 %v1673, 4294901760
    %v1675 = vsub.f32 %v1673, %v1674
    %v1676 = vand.u32 %v1675, 4294901760
    %1677 = vmatprep.subr.mxu0 %v1676
    %v1678 = vand.u32 %v1273, 4294901760
    %v1679 = vsub.f32 %v1273, %v1678
    %v1680 = vand.u32 %v1679, 4294901760
    %v1681 = vsub.f32 %v1679, %v1680
    %v1682 = vand.u32 %v1681, 4294901760
    %1683 = vmatpush2.msra.mxu0 %v1682
    %v1684 = vand.u32 %v1272, 4294901760
    %v1685 = vsub.f32 %v1272, %v1684
    %v1686 = vand.u32 %v1685, 4294901760
    %v1687 = vsub.f32 %v1685, %v1686
    %v1688 = vand.u32 %v1687, 4294901760
    %1689 = vmatprep.subr.mxu0 %v1688
    %v1690 = vand.u32 %v1271, 4294901760
    %v1691 = vsub.f32 %v1271, %v1690
    %v1692 = vand.u32 %v1691, 4294901760
    %v1693 = vsub.f32 %v1691, %v1692
    %v1694 = vand.u32 %v1693, 4294901760
    %1695 = vmatpush2.msra.mxu0 %v1694
    %v1696 = vand.u32 %v1270, 4294901760
    %v1697 = vsub.f32 %v1270, %v1696
    %v1698 = vand.u32 %v1697, 4294901760
    %v1699 = vsub.f32 %v1697, %v1698
    %v1700 = vand.u32 %v1699, 4294901760
    %1701 = vmatprep.subr.mxu0 %v1700
    %v1702 = vand.u32 %v1269, 4294901760
    %v1703 = vsub.f32 %v1269, %v1702
    %v1704 = vand.u32 %v1703, 4294901760
    %v1705 = vsub.f32 %v1703, %v1704
    %v1706 = vand.u32 %v1705, 4294901760
    %1707 = vmatpush2.msra.mxu0 %v1706
    %v1708 = vand.u32 %v1268, 4294901760
    %v1709 = vsub.f32 %v1268, %v1708
    %v1710 = vand.u32 %v1709, 4294901760
    %v1711 = vsub.f32 %v1709, %v1710
    %v1712 = vand.u32 %v1711, 4294901760
    %1713 = vmatprep.subr.mxu0 %v1712
    %v1714 = vand.u32 %v1267, 4294901760
    %v1715 = vsub.f32 %v1267, %v1714
    %v1716 = vand.u32 %v1715, 4294901760
    %v1717 = vsub.f32 %v1715, %v1716
    %v1718 = vand.u32 %v1717, 4294901760
    %1719 = vmatpush2.msra.mxu0 %v1718
    %v1720 = vand.u32 %v1266, 4294901760
    %v1721 = vsub.f32 %v1266, %v1720
    %v1722 = vand.u32 %v1721, 4294901760
    %v1723 = vsub.f32 %v1721, %v1722
    %v1724 = vand.u32 %v1723, 4294901760
    %1725 = vmatprep.subr.mxu0 %v1724
    %v1726 = vand.u32 %v1265, 4294901760
    %v1727 = vsub.f32 %v1265, %v1726
    %v1728 = vand.u32 %v1727, 4294901760
    %v1729 = vsub.f32 %v1727, %v1728
    %v1730 = vand.u32 %v1729, 4294901760
    %1731 = vmatpush2.msra.mxu0 %v1730
    %v1732 = vand.u32 %v1264, 4294901760
    %v1733 = vsub.f32 %v1264, %v1732
    %v1734 = vand.u32 %v1733, 4294901760
    %v1735 = vsub.f32 %v1733, %v1734
    %v1736 = vand.u32 %v1735, 4294901760
    %1737 = vmatprep.subr.mxu0 %v1736
    %v1738 = vand.u32 %v1263, 4294901760
    %v1739 = vsub.f32 %v1263, %v1738
    %v1740 = vand.u32 %v1739, 4294901760
    %v1741 = vsub.f32 %v1739, %v1740
    %v1742 = vand.u32 %v1741, 4294901760
    %1743 = vmatpush2.msra.mxu0 %v1742
    %v1744 = vand.u32 %v1262, 4294901760
    %v1745 = vsub.f32 %v1262, %v1744
    %v1746 = vand.u32 %v1745, 4294901760
    %v1747 = vsub.f32 %v1745, %v1746
    %v1748 = vand.u32 %v1747, 4294901760
    %1749 = vmatprep.subr.mxu0 %v1748
    %v1750 = vand.u32 %v1261, 4294901760
    %v1751 = vsub.f32 %v1261, %v1750
    %v1752 = vand.u32 %v1751, 4294901760
    %v1753 = vsub.f32 %v1751, %v1752
    %v1754 = vand.u32 %v1753, 4294901760
    %1755 = vmatpush2.msra.mxu0 %v1754
    %v1756 = vand.u32 %v1260, 4294901760
    %v1757 = vsub.f32 %v1260, %v1756
    %v1758 = vand.u32 %v1757, 4294901760
    %v1759 = vsub.f32 %v1757, %v1758
    %v1760 = vand.u32 %v1759, 4294901760
    %1761 = vmatprep.subr.mxu0 %v1760
    %v1762 = vand.u32 %v1259, 4294901760
    %v1763 = vsub.f32 %v1259, %v1762
    %v1764 = vand.u32 %v1763, 4294901760
    %v1765 = vsub.f32 %v1763, %v1764
    %v1766 = vand.u32 %v1765, 4294901760
    %1767 = vmatpush2.msra.mxu0 %v1766
    %v1768 = vand.u32 %v1258, 4294901760
    %v1769 = vsub.f32 %v1258, %v1768
    %v1770 = vand.u32 %v1769, 4294901760
    %v1771 = vsub.f32 %v1769, %v1770
    %v1772 = vand.u32 %v1771, 4294901760
    %1773 = vmatprep.subr.mxu0 %v1772
    %v1774 = vand.u32 %v1257, 4294901760
    %v1775 = vsub.f32 %v1257, %v1774
    %v1776 = vand.u32 %v1775, 4294901760
    %v1777 = vsub.f32 %v1775, %v1776
    %v1778 = vand.u32 %v1777, 4294901760
    %1779 = vmatpush2.msra.mxu0 %v1778
    %v1780 = vand.u32 %v1256, 4294901760
    %v1781 = vsub.f32 %v1256, %v1780
    %v1782 = vand.u32 %v1781, 4294901760
    %v1783 = vsub.f32 %v1781, %v1782
    %v1784 = vand.u32 %v1783, 4294901760
    %1785 = vmatprep.subr.mxu0 %v1784
    %v1786 = vand.u32 %v1255, 4294901760
    %v1787 = vsub.f32 %v1255, %v1786
    %v1788 = vand.u32 %v1787, 4294901760
    %v1789 = vsub.f32 %v1787, %v1788
    %v1790 = vand.u32 %v1789, 4294901760
    %1791 = vmatpush2.msra.mxu0 %v1790
    %v1792 = vand.u32 %v1285, 4294901760
    %1793 = vmatprep.mubr.f32.mxu0 %v1792
    %v1794 = vand.u32 %v1221, 4294901760
    %1795 = vmatmul.mubr.f32.gmra.mxu0 %v1794
    %v1796 = vpop.f32.mrf.mxu0
    %v1797 = vadd.f32 %v1424, %v1796
    %v1798 = vpop.f32.mrf.mxu0
    %v1799 = vadd.f32 %v1426, %v1798
    %1800 = vdwg.mxu0
    %v1801 = vand.u32 %v1254, 4294901760
    %v1802 = vsub.f32 %v1254, %v1801
    %1803 = vmatprep.subr.mxu0 %v1802
    %v1804 = vand.u32 %v1253, 4294901760
    %v1805 = vsub.f32 %v1253, %v1804
    %1806 = vmatpush1.msra.mxu0 %v1805
    %v1807 = vand.u32 %v1252, 4294901760
    %v1808 = vsub.f32 %v1252, %v1807
    %1809 = vmatprep.subr.mxu0 %v1808
    %v1810 = vand.u32 %v1251, 4294901760
    %v1811 = vsub.f32 %v1251, %v1810
    %1812 = vmatpush1.msra.mxu0 %v1811
    %v1813 = vand.u32 %v1250, 4294901760
    %v1814 = vsub.f32 %v1250, %v1813
    %1815 = vmatprep.subr.mxu0 %v1814
    %v1816 = vand.u32 %v1249, 4294901760
    %v1817 = vsub.f32 %v1249, %v1816
    %1818 = vmatpush1.msra.mxu0 %v1817
    %v1819 = vand.u32 %v1248, 4294901760
    %v1820 = vsub.f32 %v1248, %v1819
    %1821 = vmatprep.subr.mxu0 %v1820
    %v1822 = vand.u32 %v1247, 4294901760
    %v1823 = vsub.f32 %v1247, %v1822
    %1824 = vmatpush1.msra.mxu0 %v1823
    %v1825 = vand.u32 %v1246, 4294901760
    %v1826 = vsub.f32 %v1246, %v1825
    %1827 = vmatprep.subr.mxu0 %v1826
    %v1828 = vand.u32 %v1245, 4294901760
    %v1829 = vsub.f32 %v1245, %v1828
    %1830 = vmatpush1.msra.mxu0 %v1829
    %v1831 = vand.u32 %v1244, 4294901760
    %v1832 = vsub.f32 %v1244, %v1831
    %1833 = vmatprep.subr.mxu0 %v1832
    %v1834 = vand.u32 %v1243, 4294901760
    %v1835 = vsub.f32 %v1243, %v1834
    %1836 = vmatpush1.msra.mxu0 %v1835
    %v1837 = vand.u32 %v1242, 4294901760
    %v1838 = vsub.f32 %v1242, %v1837
    %1839 = vmatprep.subr.mxu0 %v1838
    %v1840 = vand.u32 %v1241, 4294901760
    %v1841 = vsub.f32 %v1241, %v1840
    %1842 = vmatpush1.msra.mxu0 %v1841
    %v1843 = vand.u32 %v1240, 4294901760
    %v1844 = vsub.f32 %v1240, %v1843
    %1845 = vmatprep.subr.mxu0 %v1844
    %v1846 = vand.u32 %v1239, 4294901760
    %v1847 = vsub.f32 %v1239, %v1846
    %1848 = vmatpush1.msra.mxu0 %v1847
    %v1849 = vand.u32 %v1238, 4294901760
    %v1850 = vsub.f32 %v1238, %v1849
    %1851 = vmatprep.subr.mxu0 %v1850
    %v1852 = vand.u32 %v1237, 4294901760
    %v1853 = vsub.f32 %v1237, %v1852
    %1854 = vmatpush1.msra.mxu0 %v1853
    %v1855 = vand.u32 %v1236, 4294901760
    %v1856 = vsub.f32 %v1236, %v1855
    %1857 = vmatprep.subr.mxu0 %v1856
    %v1858 = vand.u32 %v1235, 4294901760
    %v1859 = vsub.f32 %v1235, %v1858
    %1860 = vmatpush1.msra.mxu0 %v1859
    %v1861 = vand.u32 %v1234, 4294901760
    %v1862 = vsub.f32 %v1234, %v1861
    %1863 = vmatprep.subr.mxu0 %v1862
    %v1864 = vand.u32 %v1233, 4294901760
    %v1865 = vsub.f32 %v1233, %v1864
    %1866 = vmatpush1.msra.mxu0 %v1865
    %v1867 = vand.u32 %v1232, 4294901760
    %v1868 = vsub.f32 %v1232, %v1867
    %1869 = vmatprep.subr.mxu0 %v1868
    %v1870 = vand.u32 %v1231, 4294901760
    %v1871 = vsub.f32 %v1231, %v1870
    %1872 = vmatpush1.msra.mxu0 %v1871
    %v1873 = vand.u32 %v1230, 4294901760
    %v1874 = vsub.f32 %v1230, %v1873
    %1875 = vmatprep.subr.mxu0 %v1874
    %v1876 = vand.u32 %v1229, 4294901760
    %v1877 = vsub.f32 %v1229, %v1876
    %1878 = vmatpush1.msra.mxu0 %v1877
    %v1879 = vand.u32 %v1228, 4294901760
    %v1880 = vsub.f32 %v1228, %v1879
    %1881 = vmatprep.subr.mxu0 %v1880
    %v1882 = vand.u32 %v1227, 4294901760
    %v1883 = vsub.f32 %v1227, %v1882
    %1884 = vmatpush1.msra.mxu0 %v1883
    %v1885 = vand.u32 %v1226, 4294901760
    %v1886 = vsub.f32 %v1226, %v1885
    %1887 = vmatprep.subr.mxu0 %v1886
    %v1888 = vand.u32 %v1225, 4294901760
    %v1889 = vsub.f32 %v1225, %v1888
    %1890 = vmatpush1.msra.mxu0 %v1889
    %v1891 = vand.u32 %v1224, 4294901760
    %v1892 = vsub.f32 %v1224, %v1891
    %1893 = vmatprep.subr.mxu0 %v1892
    %v1894 = vand.u32 %v1223, 4294901760
    %v1895 = vsub.f32 %v1223, %v1894
    %1896 = vmatpush1.msra.mxu0 %v1895
    %1897 = vmatprep.subr.mxu0 0.0
    %1898 = vmatpush2.msra.mxu0 0.0
    %1899 = vmatprep.subr.mxu0 0.0
    %1900 = vmatpush2.msra.mxu0 0.0
    %v1901 = vand.u32 %v1282, 4294901760
    %v1902 = vsub.f32 %v1282, %v1901
    %1903 = vmatprep.subr.mxu0 %v1902
    %v1904 = vand.u32 %v1281, 4294901760
    %v1905 = vsub.f32 %v1281, %v1904
    %1906 = vmatpush2.msra.mxu0 %v1905
    %v1907 = vand.u32 %v1280, 4294901760
    %v1908 = vsub.f32 %v1280, %v1907
    %1909 = vmatprep.subr.mxu0 %v1908
    %v1910 = vand.u32 %v1279, 4294901760
    %v1911 = vsub.f32 %v1279, %v1910
    %1912 = vmatpush2.msra.mxu0 %v1911
    %v1913 = vand.u32 %v1278, 4294901760
    %v1914 = vsub.f32 %v1278, %v1913
    %1915 = vmatprep.subr.mxu0 %v1914
    %v1916 = vand.u32 %v1277, 4294901760
    %v1917 = vsub.f32 %v1277, %v1916
    %1918 = vmatpush2.msra.mxu0 %v1917
    %v1919 = vand.u32 %v1276, 4294901760
    %v1920 = vsub.f32 %v1276, %v1919
    %1921 = vmatprep.subr.mxu0 %v1920
    %v1922 = vand.u32 %v1275, 4294901760
    %v1923 = vsub.f32 %v1275, %v1922
    %1924 = vmatpush2.msra.mxu0 %v1923
    %v1925 = vand.u32 %v1274, 4294901760
    %v1926 = vsub.f32 %v1274, %v1925
    %1927 = vmatprep.subr.mxu0 %v1926
    %v1928 = vand.u32 %v1273, 4294901760
    %v1929 = vsub.f32 %v1273, %v1928
    %1930 = vmatpush2.msra.mxu0 %v1929
    %v1931 = vand.u32 %v1272, 4294901760
    %v1932 = vsub.f32 %v1272, %v1931
    %1933 = vmatprep.subr.mxu0 %v1932
    %v1934 = vand.u32 %v1271, 4294901760
    %v1935 = vsub.f32 %v1271, %v1934
    %1936 = vmatpush2.msra.mxu0 %v1935
    %v1937 = vand.u32 %v1270, 4294901760
    %v1938 = vsub.f32 %v1270, %v1937
    %1939 = vmatprep.subr.mxu0 %v1938
    %v1940 = vand.u32 %v1269, 4294901760
    %v1941 = vsub.f32 %v1269, %v1940
    %1942 = vmatpush2.msra.mxu0 %v1941
    %v1943 = vand.u32 %v1268, 4294901760
    %v1944 = vsub.f32 %v1268, %v1943
    %1945 = vmatprep.subr.mxu0 %v1944
    %v1946 = vand.u32 %v1267, 4294901760
    %v1947 = vsub.f32 %v1267, %v1946
    %1948 = vmatpush2.msra.mxu0 %v1947
    %v1949 = vand.u32 %v1266, 4294901760
    %v1950 = vsub.f32 %v1266, %v1949
    %1951 = vmatprep.subr.mxu0 %v1950
    %v1952 = vand.u32 %v1265, 4294901760
    %v1953 = vsub.f32 %v1265, %v1952
    %1954 = vmatpush2.msra.mxu0 %v1953
    %v1955 = vand.u32 %v1264, 4294901760
    %v1956 = vsub.f32 %v1264, %v1955
    %1957 = vmatprep.subr.mxu0 %v1956
    %v1958 = vand.u32 %v1263, 4294901760
    %v1959 = vsub.f32 %v1263, %v1958
    %1960 = vmatpush2.msra.mxu0 %v1959
    %v1961 = vand.u32 %v1262, 4294901760
    %v1962 = vsub.f32 %v1262, %v1961
    %1963 = vmatprep.subr.mxu0 %v1962
    %v1964 = vand.u32 %v1261, 4294901760
    %v1965 = vsub.f32 %v1261, %v1964
    %1966 = vmatpush2.msra.mxu0 %v1965
    %v1967 = vand.u32 %v1260, 4294901760
    %v1968 = vsub.f32 %v1260, %v1967
    %1969 = vmatprep.subr.mxu0 %v1968
    %v1970 = vand.u32 %v1259, 4294901760
    %v1971 = vsub.f32 %v1259, %v1970
    %1972 = vmatpush2.msra.mxu0 %v1971
    %v1973 = vand.u32 %v1258, 4294901760
    %v1974 = vsub.f32 %v1258, %v1973
    %1975 = vmatprep.subr.mxu0 %v1974
    %v1976 = vand.u32 %v1257, 4294901760
    %v1977 = vsub.f32 %v1257, %v1976
    %1978 = vmatpush2.msra.mxu0 %v1977
    %v1979 = vand.u32 %v1256, 4294901760
    %v1980 = vsub.f32 %v1256, %v1979
    %1981 = vmatprep.subr.mxu0 %v1980
    %v1982 = vand.u32 %v1255, 4294901760
    %v1983 = vsub.f32 %v1255, %v1982
    %1984 = vmatpush2.msra.mxu0 %v1983
    %v1985 = vand.u32 %v1285, 4294901760
    %v1986 = vsub.f32 %v1285, %v1985
    %1987 = vmatprep.mubr.f32.mxu0 %v1986
    %v1988 = vand.u32 %v1221, 4294901760
    %v1989 = vsub.f32 %v1221, %v1988
    %1990 = vmatmul.mubr.f32.gmra.mxu0 %v1989
    %v1991 = vpop.f32.mrf.mxu0
    %v1992 = vadd.f32 %v1797, %v1991
    %v1993 = vpop.f32.mrf.mxu0
    %v1994 = vadd.f32 %v1799, %v1993
    %1995 = vdwg.mxu0
    %v1996 = vand.u32 %v1254, 4294901760
    %1997 = vmatprep.subr.mxu0 %v1996
    %v1998 = vand.u32 %v1253, 4294901760
    %1999 = vmatpush1.msra.mxu0 %v1998
    %v2000 = vand.u32 %v1252, 4294901760
    %2001 = vmatprep.subr.mxu0 %v2000
    %v2002 = vand.u32 %v1251, 4294901760
    %2003 = vmatpush1.msra.mxu0 %v2002
    %v2004 = vand.u32 %v1250, 4294901760
    %2005 = vmatprep.subr.mxu0 %v2004
    %v2006 = vand.u32 %v1249, 4294901760
    %2007 = vmatpush1.msra.mxu0 %v2006
    %v2008 = vand.u32 %v1248, 4294901760
    %2009 = vmatprep.subr.mxu0 %v2008
    %v2010 = vand.u32 %v1247, 4294901760
    %2011 = vmatpush1.msra.mxu0 %v2010
    %v2012 = vand.u32 %v1246, 4294901760
    %2013 = vmatprep.subr.mxu0 %v2012
    %v2014 = vand.u32 %v1245, 4294901760
    %2015 = vmatpush1.msra.mxu0 %v2014
    %v2016 = vand.u32 %v1244, 4294901760
    %2017 = vmatprep.subr.mxu0 %v2016
    %v2018 = vand.u32 %v1243, 4294901760
    %2019 = vmatpush1.msra.mxu0 %v2018
    %v2020 = vand.u32 %v1242, 4294901760
    %2021 = vmatprep.subr.mxu0 %v2020
    %v2022 = vand.u32 %v1241, 4294901760
    %2023 = vmatpush1.msra.mxu0 %v2022
    %v2024 = vand.u32 %v1240, 4294901760
    %2025 = vmatprep.subr.mxu0 %v2024
    %v2026 = vand.u32 %v1239, 4294901760
    %2027 = vmatpush1.msra.mxu0 %v2026
    %v2028 = vand.u32 %v1238, 4294901760
    %2029 = vmatprep.subr.mxu0 %v2028
    %v2030 = vand.u32 %v1237, 4294901760
    %2031 = vmatpush1.msra.mxu0 %v2030
    %v2032 = vand.u32 %v1236, 4294901760
    %2033 = vmatprep.subr.mxu0 %v2032
    %v2034 = vand.u32 %v1235, 4294901760
    %2035 = vmatpush1.msra.mxu0 %v2034
    %v2036 = vand.u32 %v1234, 4294901760
    %2037 = vmatprep.subr.mxu0 %v2036
    %v2038 = vand.u32 %v1233, 4294901760
    %2039 = vmatpush1.msra.mxu0 %v2038
    %v2040 = vand.u32 %v1232, 4294901760
    %2041 = vmatprep.subr.mxu0 %v2040
    %v2042 = vand.u32 %v1231, 4294901760
    %2043 = vmatpush1.msra.mxu0 %v2042
    %v2044 = vand.u32 %v1230, 4294901760
    %2045 = vmatprep.subr.mxu0 %v2044
    %v2046 = vand.u32 %v1229, 4294901760
    %2047 = vmatpush1.msra.mxu0 %v2046
    %v2048 = vand.u32 %v1228, 4294901760
    %2049 = vmatprep.subr.mxu0 %v2048
    %v2050 = vand.u32 %v1227, 4294901760
    %2051 = vmatpush1.msra.mxu0 %v2050
    %v2052 = vand.u32 %v1226, 4294901760
    %2053 = vmatprep.subr.mxu0 %v2052
    %v2054 = vand.u32 %v1225, 4294901760
    %2055 = vmatpush1.msra.mxu0 %v2054
    %v2056 = vand.u32 %v1224, 4294901760
    %2057 = vmatprep.subr.mxu0 %v2056
    %v2058 = vand.u32 %v1223, 4294901760
    %2059 = vmatpush1.msra.mxu0 %v2058
    %2060 = vmatprep.subr.mxu0 0.0
    %2061 = vmatpush2.msra.mxu0 0.0
    %2062 = vmatprep.subr.mxu0 0.0
    %2063 = vmatpush2.msra.mxu0 0.0
    %v2064 = vand.u32 %v1282, 4294901760
    %2065 = vmatprep.subr.mxu0 %v2064
    %v2066 = vand.u32 %v1281, 4294901760
    %2067 = vmatpush2.msra.mxu0 %v2066
    %v2068 = vand.u32 %v1280, 4294901760
    %2069 = vmatprep.subr.mxu0 %v2068
    %v2070 = vand.u32 %v1279, 4294901760
    %2071 = vmatpush2.msra.mxu0 %v2070
    %v2072 = vand.u32 %v1278, 4294901760
    %2073 = vmatprep.subr.mxu0 %v2072
    %v2074 = vand.u32 %v1277, 4294901760
    %2075 = vmatpush2.msra.mxu0 %v2074
    %v2076 = vand.u32 %v1276, 4294901760
    %2077 = vmatprep.subr.mxu0 %v2076
    %v2078 = vand.u32 %v1275, 4294901760
    %2079 = vmatpush2.msra.mxu0 %v2078
    %v2080 = vand.u32 %v1274, 4294901760
    %2081 = vmatprep.subr.mxu0 %v2080
    %v2082 = vand.u32 %v1273, 4294901760
    %2083 = vmatpush2.msra.mxu0 %v2082
    %v2084 = vand.u32 %v1272, 4294901760
    %2085 = vmatprep.subr.mxu0 %v2084
    %v2086 = vand.u32 %v1271, 4294901760
    %2087 = vmatpush2.msra.mxu0 %v2086
    %v2088 = vand.u32 %v1270, 4294901760
    %2089 = vmatprep.subr.mxu0 %v2088
    %v2090 = vand.u32 %v1269, 4294901760
    %2091 = vmatpush2.msra.mxu0 %v2090
    %v2092 = vand.u32 %v1268, 4294901760
    %2093 = vmatprep.subr.mxu0 %v2092
    %v2094 = vand.u32 %v1267, 4294901760
    %2095 = vmatpush2.msra.mxu0 %v2094
    %v2096 = vand.u32 %v1266, 4294901760
    %2097 = vmatprep.subr.mxu0 %v2096
    %v2098 = vand.u32 %v1265, 4294901760
    %2099 = vmatpush2.msra.mxu0 %v2098
    %v2100 = vand.u32 %v1264, 4294901760
    %2101 = vmatprep.subr.mxu0 %v2100
    %v2102 = vand.u32 %v1263, 4294901760
    %2103 = vmatpush2.msra.mxu0 %v2102
    %v2104 = vand.u32 %v1262, 4294901760
    %2105 = vmatprep.subr.mxu0 %v2104
    %v2106 = vand.u32 %v1261, 4294901760
    %2107 = vmatpush2.msra.mxu0 %v2106
    %v2108 = vand.u32 %v1260, 4294901760
    %2109 = vmatprep.subr.mxu0 %v2108
    %v2110 = vand.u32 %v1259, 4294901760
    %2111 = vmatpush2.msra.mxu0 %v2110
    %v2112 = vand.u32 %v1258, 4294901760
    %2113 = vmatprep.subr.mxu0 %v2112
    %v2114 = vand.u32 %v1257, 4294901760
    %2115 = vmatpush2.msra.mxu0 %v2114
    %v2116 = vand.u32 %v1256, 4294901760
    %2117 = vmatprep.subr.mxu0 %v2116
    %v2118 = vand.u32 %v1255, 4294901760
    %2119 = vmatpush2.msra.mxu0 %v2118
    %v2120 = vand.u32 %v1285, 4294901760
    %v2121 = vsub.f32 %v1285, %v2120
    %v2122 = vand.u32 %v2121, 4294901760
    %2123 = vmatprep.mubr.f32.mxu0 %v2122
    %v2124 = vand.u32 %v1221, 4294901760
    %v2125 = vsub.f32 %v1221, %v2124
    %v2126 = vand.u32 %v2125, 4294901760
    %2127 = vmatmul.mubr.f32.gmra.mxu0 %v2126
    %v2128 = vpop.f32.mrf.mxu0
    %v2129 = vadd.f32 %v1992, %v2128
    %v2130 = vpop.f32.mrf.mxu0
    %v2131 = vadd.f32 %v1994, %v2130
    %2132 = vdwg.mxu0
    %v2133 = vand.u32 %v1254, 4294901760
    %v2134 = vsub.f32 %v1254, %v2133
    %v2135 = vand.u32 %v2134, 4294901760
    %2136 = vmatprep.subr.mxu0 %v2135
    %v2137 = vand.u32 %v1253, 4294901760
    %v2138 = vsub.f32 %v1253, %v2137
    %v2139 = vand.u32 %v2138, 4294901760
    %2140 = vmatpush1.msra.mxu0 %v2139
    %v2141 = vand.u32 %v1252, 4294901760
    %v2142 = vsub.f32 %v1252, %v2141
    %v2143 = vand.u32 %v2142, 4294901760
    %2144 = vmatprep.subr.mxu0 %v2143
    %v2145 = vand.u32 %v1251, 4294901760
    %v2146 = vsub.f32 %v1251, %v2145
    %v2147 = vand.u32 %v2146, 4294901760
    %2148 = vmatpush1.msra.mxu0 %v2147
    %v2149 = vand.u32 %v1250, 4294901760
    %v2150 = vsub.f32 %v1250, %v2149
    %v2151 = vand.u32 %v2150, 4294901760
    %2152 = vmatprep.subr.mxu0 %v2151
    %v2153 = vand.u32 %v1249, 4294901760
    %v2154 = vsub.f32 %v1249, %v2153
    %v2155 = vand.u32 %v2154, 4294901760
    %2156 = vmatpush1.msra.mxu0 %v2155
    %v2157 = vand.u32 %v1248, 4294901760
    %v2158 = vsub.f32 %v1248, %v2157
    %v2159 = vand.u32 %v2158, 4294901760
    %2160 = vmatprep.subr.mxu0 %v2159
    %v2161 = vand.u32 %v1247, 4294901760
    %v2162 = vsub.f32 %v1247, %v2161
    %v2163 = vand.u32 %v2162, 4294901760
    %2164 = vmatpush1.msra.mxu0 %v2163
    %v2165 = vand.u32 %v1246, 4294901760
    %v2166 = vsub.f32 %v1246, %v2165
    %v2167 = vand.u32 %v2166, 4294901760
    %2168 = vmatprep.subr.mxu0 %v2167
    %v2169 = vand.u32 %v1245, 4294901760
    %v2170 = vsub.f32 %v1245, %v2169
    %v2171 = vand.u32 %v2170, 4294901760
    %2172 = vmatpush1.msra.mxu0 %v2171
    %v2173 = vand.u32 %v1244, 4294901760
    %v2174 = vsub.f32 %v1244, %v2173
    %v2175 = vand.u32 %v2174, 4294901760
    %2176 = vmatprep.subr.mxu0 %v2175
    %v2177 = vand.u32 %v1243, 4294901760
    %v2178 = vsub.f32 %v1243, %v2177
    %v2179 = vand.u32 %v2178, 4294901760
    %2180 = vmatpush1.msra.mxu0 %v2179
    %v2181 = vand.u32 %v1242, 4294901760
    %v2182 = vsub.f32 %v1242, %v2181
    %v2183 = vand.u32 %v2182, 4294901760
    %2184 = vmatprep.subr.mxu0 %v2183
    %v2185 = vand.u32 %v1241, 4294901760
    %v2186 = vsub.f32 %v1241, %v2185
    %v2187 = vand.u32 %v2186, 4294901760
    %2188 = vmatpush1.msra.mxu0 %v2187
    %v2189 = vand.u32 %v1240, 4294901760
    %v2190 = vsub.f32 %v1240, %v2189
    %v2191 = vand.u32 %v2190, 4294901760
    %2192 = vmatprep.subr.mxu0 %v2191
    %v2193 = vand.u32 %v1239, 4294901760
    %v2194 = vsub.f32 %v1239, %v2193
    %v2195 = vand.u32 %v2194, 4294901760
    %2196 = vmatpush1.msra.mxu0 %v2195
    %v2197 = vand.u32 %v1238, 4294901760
    %v2198 = vsub.f32 %v1238, %v2197
    %v2199 = vand.u32 %v2198, 4294901760
    %2200 = vmatprep.subr.mxu0 %v2199
    %v2201 = vand.u32 %v1237, 4294901760
    %v2202 = vsub.f32 %v1237, %v2201
    %v2203 = vand.u32 %v2202, 4294901760
    %2204 = vmatpush1.msra.mxu0 %v2203
    %v2205 = vand.u32 %v1236, 4294901760
    %v2206 = vsub.f32 %v1236, %v2205
    %v2207 = vand.u32 %v2206, 4294901760
    %2208 = vmatprep.subr.mxu0 %v2207
    %v2209 = vand.u32 %v1235, 4294901760
    %v2210 = vsub.f32 %v1235, %v2209
    %v2211 = vand.u32 %v2210, 4294901760
    %2212 = vmatpush1.msra.mxu0 %v2211
    %v2213 = vand.u32 %v1234, 4294901760
    %v2214 = vsub.f32 %v1234, %v2213
    %v2215 = vand.u32 %v2214, 4294901760
    %2216 = vmatprep.subr.mxu0 %v2215
    %v2217 = vand.u32 %v1233, 4294901760
    %v2218 = vsub.f32 %v1233, %v2217
    %v2219 = vand.u32 %v2218, 4294901760
    %2220 = vmatpush1.msra.mxu0 %v2219
    %v2221 = vand.u32 %v1232, 4294901760
    %v2222 = vsub.f32 %v1232, %v2221
    %v2223 = vand.u32 %v2222, 4294901760
    %2224 = vmatprep.subr.mxu0 %v2223
    %v2225 = vand.u32 %v1231, 4294901760
    %v2226 = vsub.f32 %v1231, %v2225
    %v2227 = vand.u32 %v2226, 4294901760
    %2228 = vmatpush1.msra.mxu0 %v2227
    %v2229 = vand.u32 %v1230, 4294901760
    %v2230 = vsub.f32 %v1230, %v2229
    %v2231 = vand.u32 %v2230, 4294901760
    %2232 = vmatprep.subr.mxu0 %v2231
    %v2233 = vand.u32 %v1229, 4294901760
    %v2234 = vsub.f32 %v1229, %v2233
    %v2235 = vand.u32 %v2234, 4294901760
    %2236 = vmatpush1.msra.mxu0 %v2235
    %v2237 = vand.u32 %v1228, 4294901760
    %v2238 = vsub.f32 %v1228, %v2237
    %v2239 = vand.u32 %v2238, 4294901760
    %2240 = vmatprep.subr.mxu0 %v2239
    %v2241 = vand.u32 %v1227, 4294901760
    %v2242 = vsub.f32 %v1227, %v2241
    %v2243 = vand.u32 %v2242, 4294901760
    %2244 = vmatpush1.msra.mxu0 %v2243
    %v2245 = vand.u32 %v1226, 4294901760
    %v2246 = vsub.f32 %v1226, %v2245
    %v2247 = vand.u32 %v2246, 4294901760
    %2248 = vmatprep.subr.mxu0 %v2247
    %v2249 = vand.u32 %v1225, 4294901760
    %v2250 = vsub.f32 %v1225, %v2249
    %v2251 = vand.u32 %v2250, 4294901760
    %2252 = vmatpush1.msra.mxu0 %v2251
    %v2253 = vand.u32 %v1224, 4294901760
    %v2254 = vsub.f32 %v1224, %v2253
    %v2255 = vand.u32 %v2254, 4294901760
    %2256 = vmatprep.subr.mxu0 %v2255
    %v2257 = vand.u32 %v1223, 4294901760
    %v2258 = vsub.f32 %v1223, %v2257
    %v2259 = vand.u32 %v2258, 4294901760
    %2260 = vmatpush1.msra.mxu0 %v2259
    %2261 = vmatprep.subr.mxu0 0.0
    %2262 = vmatpush2.msra.mxu0 0.0
    %2263 = vmatprep.subr.mxu0 0.0
    %2264 = vmatpush2.msra.mxu0 0.0
    %v2265 = vand.u32 %v1282, 4294901760
    %v2266 = vsub.f32 %v1282, %v2265
    %v2267 = vand.u32 %v2266, 4294901760
    %2268 = vmatprep.subr.mxu0 %v2267
    %v2269 = vand.u32 %v1281, 4294901760
    %v2270 = vsub.f32 %v1281, %v2269
    %v2271 = vand.u32 %v2270, 4294901760
    %2272 = vmatpush2.msra.mxu0 %v2271
    %v2273 = vand.u32 %v1280, 4294901760
    %v2274 = vsub.f32 %v1280, %v2273
    %v2275 = vand.u32 %v2274, 4294901760
    %2276 = vmatprep.subr.mxu0 %v2275
    %v2277 = vand.u32 %v1279, 4294901760
    %v2278 = vsub.f32 %v1279, %v2277
    %v2279 = vand.u32 %v2278, 4294901760
    %2280 = vmatpush2.msra.mxu0 %v2279
    %v2281 = vand.u32 %v1278, 4294901760
    %v2282 = vsub.f32 %v1278, %v2281
    %v2283 = vand.u32 %v2282, 4294901760
    %2284 = vmatprep.subr.mxu0 %v2283
    %v2285 = vand.u32 %v1277, 4294901760
    %v2286 = vsub.f32 %v1277, %v2285
    %v2287 = vand.u32 %v2286, 4294901760
    %2288 = vmatpush2.msra.mxu0 %v2287
    %v2289 = vand.u32 %v1276, 4294901760
    %v2290 = vsub.f32 %v1276, %v2289
    %v2291 = vand.u32 %v2290, 4294901760
    %2292 = vmatprep.subr.mxu0 %v2291
    %v2293 = vand.u32 %v1275, 4294901760
    %v2294 = vsub.f32 %v1275, %v2293
    %v2295 = vand.u32 %v2294, 4294901760
    %2296 = vmatpush2.msra.mxu0 %v2295
    %v2297 = vand.u32 %v1274, 4294901760
    %v2298 = vsub.f32 %v1274, %v2297
    %v2299 = vand.u32 %v2298, 4294901760
    %2300 = vmatprep.subr.mxu0 %v2299
    %v2301 = vand.u32 %v1273, 4294901760
    %v2302 = vsub.f32 %v1273, %v2301
    %v2303 = vand.u32 %v2302, 4294901760
    %2304 = vmatpush2.msra.mxu0 %v2303
    %v2305 = vand.u32 %v1272, 4294901760
    %v2306 = vsub.f32 %v1272, %v2305
    %v2307 = vand.u32 %v2306, 4294901760
    %2308 = vmatprep.subr.mxu0 %v2307
    %v2309 = vand.u32 %v1271, 4294901760
    %v2310 = vsub.f32 %v1271, %v2309
    %v2311 = vand.u32 %v2310, 4294901760
    %2312 = vmatpush2.msra.mxu0 %v2311
    %v2313 = vand.u32 %v1270, 4294901760
    %v2314 = vsub.f32 %v1270, %v2313
    %v2315 = vand.u32 %v2314, 4294901760
    %2316 = vmatprep.subr.mxu0 %v2315
    %v2317 = vand.u32 %v1269, 4294901760
    %v2318 = vsub.f32 %v1269, %v2317
    %v2319 = vand.u32 %v2318, 4294901760
    %2320 = vmatpush2.msra.mxu0 %v2319
    %v2321 = vand.u32 %v1268, 4294901760
    %v2322 = vsub.f32 %v1268, %v2321
    %v2323 = vand.u32 %v2322, 4294901760
    %2324 = vmatprep.subr.mxu0 %v2323
    %v2325 = vand.u32 %v1267, 4294901760
    %v2326 = vsub.f32 %v1267, %v2325
    %v2327 = vand.u32 %v2326, 4294901760
    %2328 = vmatpush2.msra.mxu0 %v2327
    %v2329 = vand.u32 %v1266, 4294901760
    %v2330 = vsub.f32 %v1266, %v2329
    %v2331 = vand.u32 %v2330, 4294901760
    %2332 = vmatprep.subr.mxu0 %v2331
    %v2333 = vand.u32 %v1265, 4294901760
    %v2334 = vsub.f32 %v1265, %v2333
    %v2335 = vand.u32 %v2334, 4294901760
    %2336 = vmatpush2.msra.mxu0 %v2335
    %v2337 = vand.u32 %v1264, 4294901760
    %v2338 = vsub.f32 %v1264, %v2337
    %v2339 = vand.u32 %v2338, 4294901760
    %2340 = vmatprep.subr.mxu0 %v2339
    %v2341 = vand.u32 %v1263, 4294901760
    %v2342 = vsub.f32 %v1263, %v2341
    %v2343 = vand.u32 %v2342, 4294901760
    %2344 = vmatpush2.msra.mxu0 %v2343
    %v2345 = vand.u32 %v1262, 4294901760
    %v2346 = vsub.f32 %v1262, %v2345
    %v2347 = vand.u32 %v2346, 4294901760
    %2348 = vmatprep.subr.mxu0 %v2347
    %v2349 = vand.u32 %v1261, 4294901760
    %v2350 = vsub.f32 %v1261, %v2349
    %v2351 = vand.u32 %v2350, 4294901760
    %2352 = vmatpush2.msra.mxu0 %v2351
    %v2353 = vand.u32 %v1260, 4294901760
    %v2354 = vsub.f32 %v1260, %v2353
    %v2355 = vand.u32 %v2354, 4294901760
    %2356 = vmatprep.subr.mxu0 %v2355
    %v2357 = vand.u32 %v1259, 4294901760
    %v2358 = vsub.f32 %v1259, %v2357
    %v2359 = vand.u32 %v2358, 4294901760
    %2360 = vmatpush2.msra.mxu0 %v2359
    %v2361 = vand.u32 %v1258, 4294901760
    %v2362 = vsub.f32 %v1258, %v2361
    %v2363 = vand.u32 %v2362, 4294901760
    %2364 = vmatprep.subr.mxu0 %v2363
    %v2365 = vand.u32 %v1257, 4294901760
    %v2366 = vsub.f32 %v1257, %v2365
    %v2367 = vand.u32 %v2366, 4294901760
    %2368 = vmatpush2.msra.mxu0 %v2367
    %v2369 = vand.u32 %v1256, 4294901760
    %v2370 = vsub.f32 %v1256, %v2369
    %v2371 = vand.u32 %v2370, 4294901760
    %2372 = vmatprep.subr.mxu0 %v2371
    %v2373 = vand.u32 %v1255, 4294901760
    %v2374 = vsub.f32 %v1255, %v2373
    %v2375 = vand.u32 %v2374, 4294901760
    %2376 = vmatpush2.msra.mxu0 %v2375
    %v2377 = vand.u32 %v1285, 4294901760
    %2378 = vmatprep.mubr.f32.mxu0 %v2377
    %v2379 = vand.u32 %v1221, 4294901760
    %2380 = vmatmul.mubr.f32.gmra.mxu0 %v2379
    %v2381 = vpop.f32.mrf.mxu0
    %v2382 = vadd.f32 %v2129, %v2381
    %v2383 = vpop.f32.mrf.mxu0
    %v2384 = vadd.f32 %v2131, %v2383
    %2385 = vdwg.mxu0
    %v2386 = vand.u32 %v1254, 4294901760
    %2387 = vmatprep.subr.mxu0 %v2386
    %v2388 = vand.u32 %v1253, 4294901760
    %2389 = vmatpush1.msra.mxu0 %v2388
    %v2390 = vand.u32 %v1252, 4294901760
    %2391 = vmatprep.subr.mxu0 %v2390
    %v2392 = vand.u32 %v1251, 4294901760
    %2393 = vmatpush1.msra.mxu0 %v2392
    %v2394 = vand.u32 %v1250, 4294901760
    %2395 = vmatprep.subr.mxu0 %v2394
    %v2396 = vand.u32 %v1249, 4294901760
    %2397 = vmatpush1.msra.mxu0 %v2396
    %v2398 = vand.u32 %v1248, 4294901760
    %2399 = vmatprep.subr.mxu0 %v2398
    %v2400 = vand.u32 %v1247, 4294901760
    %2401 = vmatpush1.msra.mxu0 %v2400
    %v2402 = vand.u32 %v1246, 4294901760
    %2403 = vmatprep.subr.mxu0 %v2402
    %v2404 = vand.u32 %v1245, 4294901760
    %2405 = vmatpush1.msra.mxu0 %v2404
    %v2406 = vand.u32 %v1244, 4294901760
    %2407 = vmatprep.subr.mxu0 %v2406
    %v2408 = vand.u32 %v1243, 4294901760
    %2409 = vmatpush1.msra.mxu0 %v2408
    %v2410 = vand.u32 %v1242, 4294901760
    %2411 = vmatprep.subr.mxu0 %v2410
    %v2412 = vand.u32 %v1241, 4294901760
    %2413 = vmatpush1.msra.mxu0 %v2412
    %v2414 = vand.u32 %v1240, 4294901760
    %2415 = vmatprep.subr.mxu0 %v2414
    %v2416 = vand.u32 %v1239, 4294901760
    %2417 = vmatpush1.msra.mxu0 %v2416
    %v2418 = vand.u32 %v1238, 4294901760
    %2419 = vmatprep.subr.mxu0 %v2418
    %v2420 = vand.u32 %v1237, 4294901760
    %2421 = vmatpush1.msra.mxu0 %v2420
    %v2422 = vand.u32 %v1236, 4294901760
    %2423 = vmatprep.subr.mxu0 %v2422
    %v2424 = vand.u32 %v1235, 4294901760
    %2425 = vmatpush1.msra.mxu0 %v2424
    %v2426 = vand.u32 %v1234, 4294901760
    %2427 = vmatprep.subr.mxu0 %v2426
    %v2428 = vand.u32 %v1233, 4294901760
    %2429 = vmatpush1.msra.mxu0 %v2428
    %v2430 = vand.u32 %v1232, 4294901760
    %2431 = vmatprep.subr.mxu0 %v2430
    %v2432 = vand.u32 %v1231, 4294901760
    %2433 = vmatpush1.msra.mxu0 %v2432
    %v2434 = vand.u32 %v1230, 4294901760
    %2435 = vmatprep.subr.mxu0 %v2434
    %v2436 = vand.u32 %v1229, 4294901760
    %2437 = vmatpush1.msra.mxu0 %v2436
    %v2438 = vand.u32 %v1228, 4294901760
    %2439 = vmatprep.subr.mxu0 %v2438
    %v2440 = vand.u32 %v1227, 4294901760
    %2441 = vmatpush1.msra.mxu0 %v2440
    %v2442 = vand.u32 %v1226, 4294901760
    %2443 = vmatprep.subr.mxu0 %v2442
    %v2444 = vand.u32 %v1225, 4294901760
    %2445 = vmatpush1.msra.mxu0 %v2444
    %v2446 = vand.u32 %v1224, 4294901760
    %2447 = vmatprep.subr.mxu0 %v2446
    %v2448 = vand.u32 %v1223, 4294901760
    %2449 = vmatpush1.msra.mxu0 %v2448
    %2450 = vmatprep.subr.mxu0 0.0
    %2451 = vmatpush2.msra.mxu0 0.0
    %2452 = vmatprep.subr.mxu0 0.0
    %2453 = vmatpush2.msra.mxu0 0.0
    %v2454 = vand.u32 %v1282, 4294901760
    %2455 = vmatprep.subr.mxu0 %v2454
    %v2456 = vand.u32 %v1281, 4294901760
    %2457 = vmatpush2.msra.mxu0 %v2456
    %v2458 = vand.u32 %v1280, 4294901760
    %2459 = vmatprep.subr.mxu0 %v2458
    %v2460 = vand.u32 %v1279, 4294901760
    %2461 = vmatpush2.msra.mxu0 %v2460
    %v2462 = vand.u32 %v1278, 4294901760
    %2463 = vmatprep.subr.mxu0 %v2462
    %v2464 = vand.u32 %v1277, 4294901760
    %2465 = vmatpush2.msra.mxu0 %v2464
    %v2466 = vand.u32 %v1276, 4294901760
    %2467 = vmatprep.subr.mxu0 %v2466
    %v2468 = vand.u32 %v1275, 4294901760
    %2469 = vmatpush2.msra.mxu0 %v2468
    %v2470 = vand.u32 %v1274, 4294901760
    %2471 = vmatprep.subr.mxu0 %v2470
    %v2472 = vand.u32 %v1273, 4294901760
    %2473 = vmatpush2.msra.mxu0 %v2472
    %v2474 = vand.u32 %v1272, 4294901760
    %2475 = vmatprep.subr.mxu0 %v2474
    %v2476 = vand.u32 %v1271, 4294901760
    %2477 = vmatpush2.msra.mxu0 %v2476
    %v2478 = vand.u32 %v1270, 4294901760
    %2479 = vmatprep.subr.mxu0 %v2478
    %v2480 = vand.u32 %v1269, 4294901760
    %2481 = vmatpush2.msra.mxu0 %v2480
    %v2482 = vand.u32 %v1268, 4294901760
    %2483 = vmatprep.subr.mxu0 %v2482
    %v2484 = vand.u32 %v1267, 4294901760
    %2485 = vmatpush2.msra.mxu0 %v2484
    %v2486 = vand.u32 %v1266, 4294901760
    %2487 = vmatprep.subr.mxu0 %v2486
    %v2488 = vand.u32 %v1265, 4294901760
    %2489 = vmatpush2.msra.mxu0 %v2488
    %v2490 = vand.u32 %v1264, 4294901760
    %2491 = vmatprep.subr.mxu0 %v2490
    %v2492 = vand.u32 %v1263, 4294901760
    %2493 = vmatpush2.msra.mxu0 %v2492
    %v2494 = vand.u32 %v1262, 4294901760
    %2495 = vmatprep.subr.mxu0 %v2494
    %v2496 = vand.u32 %v1261, 4294901760
    %2497 = vmatpush2.msra.mxu0 %v2496
    %v2498 = vand.u32 %v1260, 4294901760
    %2499 = vmatprep.subr.mxu0 %v2498
    %v2500 = vand.u32 %v1259, 4294901760
    %2501 = vmatpush2.msra.mxu0 %v2500
    %v2502 = vand.u32 %v1258, 4294901760
    %2503 = vmatprep.subr.mxu0 %v2502
    %v2504 = vand.u32 %v1257, 4294901760
    %2505 = vmatpush2.msra.mxu0 %v2504
    %v2506 = vand.u32 %v1256, 4294901760
    %2507 = vmatprep.subr.mxu0 %v2506
    %v2508 = vand.u32 %v1255, 4294901760
    %2509 = vmatpush2.msra.mxu0 %v2508
    %v2510 = vand.u32 %v1285, 4294901760
    %2511 = vmatprep.mubr.f32.mxu0 %v2510
    %v2512 = vand.u32 %v1221, 4294901760
    %2513 = vmatmul.mubr.f32.gmra.mxu0 %v2512
    %v2514 = vpop.f32.mrf.mxu0
    %v2515 = vadd.f32 %v2382, %v2514
    %v2516 = vpop.f32.mrf.mxu0
    %v2517 = vadd.f32 %v2384, %v2516
    %2518 = vdwg.mxu0
    %v2519 = vld [vmem:[%s4] sm:$0xff]
    %v2520 = vld [vmem:[%s4 + $0x8] sm:$0xff]
    %v2521 = vld [vmem:[%s4 + $0x10] sm:$0xff]
    %v2522 = vld [vmem:[%s4 + $0x18] sm:$0xff]
    %v2523 = vld [vmem:[%s4 + $0x20] sm:$0xff]
    %v2524 = vld [vmem:[%s4 + $0x28] sm:$0xff]
    %v2525 = vld [vmem:[%s4 + $0x30] sm:$0xff]
    %v2526 = vld [vmem:[%s4 + $0x38] sm:$0xff]
    %v2527 = vld [vmem:[%s4 + $0x40] sm:$0xff]
    %v2528 = vld [vmem:[%s4 + $0x48] sm:$0xff]
    %v2529 = vld [vmem:[%s4 + $0x50] sm:$0xff]
    %v2530 = vld [vmem:[%s4 + $0x58] sm:$0xff]
    %v2531 = vld [vmem:[%s4 + $0x60] sm:$0xff]
    %v2532 = vld [vmem:[%s4 + $0x68] sm:$0xff]
    %v2533 = vld [vmem:[%s4 + $0x70] sm:$0xff]
    %v2534 = vld [vmem:[%s4 + $0x78] sm:$0xff]
    %v2535 = vld [vmem:[%s4 + $0x80] sm:$0xff]
    %v2536 = vld [vmem:[%s4 + $0x88] sm:$0xff]
    %v2537 = vld [vmem:[%s4 + $0x90] sm:$0xff]
    %v2538 = vld [vmem:[%s4 + $0x98] sm:$0xff]
    %v2539 = vld [vmem:[%s4 + $0xa0] sm:$0xff]
    %v2540 = vld [vmem:[%s4 + $0xa8] sm:$0xff]
    %v2541 = vld [vmem:[%s4 + $0xb0] sm:$0xff]
    %v2542 = vld [vmem:[%s4 + $0xb8] sm:$0xff]
    %v2543 = vld [vmem:[%s4 + $0xc0] sm:$0xff]
    %v2544 = vld [vmem:[%s4 + $0xc8] sm:$0xff]
    %v2545 = vld [vmem:[%s4 + $0xd0] sm:$0xff]
    %v2546 = vld [vmem:[%s4 + $0xd8] sm:$0xff]
    %v2547 = vld [vmem:[%s4 + $0xe0] sm:$0xff]
    %v2548 = vld [vmem:[%s4 + $0xe8] sm:$0xff]
    %v2549 = vld [vmem:[%s4 + $0xf0] sm:$0xff]
    %v2550 = vld [vmem:[%s4 + $0xf8] sm:$0xff]
    %v2551 = vld [vmem:[%s4 + $0x100] sm:$0xff]
    %v2552 = vld [vmem:[%s4 + $0x108] sm:$0xff]
    %v2553 = vld [vmem:[%s4 + $0x110] sm:$0xff]
    %v2554 = vld [vmem:[%s4 + $0x118] sm:$0xff]
    %v2555 = vld [vmem:[%s4 + $0x120] sm:$0xff]
    %v2556 = vld [vmem:[%s4 + $0x128] sm:$0xff]
    %v2557 = vld [vmem:[%s4 + $0x130] sm:$0xff]
    %v2558 = vld [vmem:[%s4 + $0x138] sm:$0xff]
    %v2559 = vld [vmem:[%s4 + $0x140] sm:$0xff]
    %v2560 = vld [vmem:[%s4 + $0x148] sm:$0xff]
    %v2561 = vld [vmem:[%s4 + $0x150] sm:$0xff]
    %v2562 = vld [vmem:[%s4 + $0x158] sm:$0xff]
    %v2563 = vld [vmem:[%s4 + $0x160] sm:$0xff]
    %v2564 = vld [vmem:[%s4 + $0x168] sm:$0xff]
    %v2565 = vld [vmem:[%s4 + $0x170] sm:$0xff]
    %v2566 = vld [vmem:[%s4 + $0x178] sm:$0xff]
    %v2567 = vld [vmem:[%s4 + $0x180] sm:$0xff]
    %v2568 = vld [vmem:[%s4 + $0x188] sm:$0xff]
    %v2569 = vld [vmem:[%s4 + $0x190] sm:$0xff]
    %v2570 = vld [vmem:[%s4 + $0x198] sm:$0xff]
    %v2571 = vld [vmem:[%s4 + $0x1a0] sm:$0xff]
    %v2572 = vld [vmem:[%s4 + $0x1a8] sm:$0xff]
    %v2573 = vld [vmem:[%s4 + $0x1b0] sm:$0xff]
    %v2574 = vld [vmem:[%s4 + $0x1b8] sm:$0xff]
    %v2575 = vld [vmem:[%s4 + $0x1c0] sm:$0xff]
    %v2576 = vld [vmem:[%s4 + $0x1c8] sm:$0xff]
    %v2577 = vld [vmem:[%s4 + $0x1d0] sm:$0xff]
    %v2578 = vld [vmem:[%s4 + $0x1d8] sm:$0xff]
    %v2579 = vand.u32 %v2550, 4294901760
    %2580 = vmatprep.subr.mxu0 %v2579
    %v2581 = vand.u32 %v2549, 4294901760
    %2582 = vmatpush1.msra.mxu0 %v2581
    %v2583 = vand.u32 %v2548, 4294901760
    %2584 = vmatprep.subr.mxu0 %v2583
    %v2585 = vand.u32 %v2547, 4294901760
    %2586 = vmatpush1.msra.mxu0 %v2585
    %v2587 = vand.u32 %v2546, 4294901760
    %2588 = vmatprep.subr.mxu0 %v2587
    %v2589 = vand.u32 %v2545, 4294901760
    %2590 = vmatpush1.msra.mxu0 %v2589
    %v2591 = vand.u32 %v2544, 4294901760
    %2592 = vmatprep.subr.mxu0 %v2591
    %v2593 = vand.u32 %v2543, 4294901760
    %2594 = vmatpush1.msra.mxu0 %v2593
    %v2595 = vand.u32 %v2542, 4294901760
    %2596 = vmatprep.subr.mxu0 %v2595
    %v2597 = vand.u32 %v2541, 4294901760
    %2598 = vmatpush1.msra.mxu0 %v2597
    %v2599 = vand.u32 %v2540, 4294901760
    %2600 = vmatprep.subr.mxu0 %v2599
    %v2601 = vand.u32 %v2539, 4294901760
    %2602 = vmatpush1.msra.mxu0 %v2601
    %v2603 = vand.u32 %v2538, 4294901760
    %2604 = vmatprep.subr.mxu0 %v2603
    %v2605 = vand.u32 %v2537, 4294901760
    %2606 = vmatpush1.msra.mxu0 %v2605
    %v2607 = vand.u32 %v2536, 4294901760
    %2608 = vmatprep.subr.mxu0 %v2607
    %v2609 = vand.u32 %v2535, 4294901760
    %2610 = vmatpush1.msra.mxu0 %v2609
    %v2611 = vand.u32 %v2534, 4294901760
    %2612 = vmatprep.subr.mxu0 %v2611
    %v2613 = vand.u32 %v2533, 4294901760
    %2614 = vmatpush1.msra.mxu0 %v2613
    %v2615 = vand.u32 %v2532, 4294901760
    %2616 = vmatprep.subr.mxu0 %v2615
    %v2617 = vand.u32 %v2531, 4294901760
    %2618 = vmatpush1.msra.mxu0 %v2617
    %v2619 = vand.u32 %v2530, 4294901760
    %2620 = vmatprep.subr.mxu0 %v2619
    %v2621 = vand.u32 %v2529, 4294901760
    %2622 = vmatpush1.msra.mxu0 %v2621
    %v2623 = vand.u32 %v2528, 4294901760
    %2624 = vmatprep.subr.mxu0 %v2623
    %v2625 = vand.u32 %v2527, 4294901760
    %2626 = vmatpush1.msra.mxu0 %v2625
    %v2627 = vand.u32 %v2526, 4294901760
    %2628 = vmatprep.subr.mxu0 %v2627
    %v2629 = vand.u32 %v2525, 4294901760
    %2630 = vmatpush1.msra.mxu0 %v2629
    %v2631 = vand.u32 %v2524, 4294901760
    %2632 = vmatprep.subr.mxu0 %v2631
    %v2633 = vand.u32 %v2523, 4294901760
    %2634 = vmatpush1.msra.mxu0 %v2633
    %v2635 = vand.u32 %v2522, 4294901760
    %2636 = vmatprep.subr.mxu0 %v2635
    %v2637 = vand.u32 %v2521, 4294901760
    %2638 = vmatpush1.msra.mxu0 %v2637
    %v2639 = vand.u32 %v2520, 4294901760
    %2640 = vmatprep.subr.mxu0 %v2639
    %v2641 = vand.u32 %v2519, 4294901760
    %2642 = vmatpush1.msra.mxu0 %v2641
    %2643 = vmatprep.subr.mxu0 0.0
    %2644 = vmatpush2.msra.mxu0 0.0
    %2645 = vmatprep.subr.mxu0 0.0
    %2646 = vmatpush2.msra.mxu0 0.0
    %v2647 = vand.u32 %v2578, 4294901760
    %2648 = vmatprep.subr.mxu0 %v2647
    %v2649 = vand.u32 %v2577, 4294901760
    %2650 = vmatpush2.msra.mxu0 %v2649
    %v2651 = vand.u32 %v2576, 4294901760
    %2652 = vmatprep.subr.mxu0 %v2651
    %v2653 = vand.u32 %v2575, 4294901760
    %2654 = vmatpush2.msra.mxu0 %v2653
    %v2655 = vand.u32 %v2574, 4294901760
    %2656 = vmatprep.subr.mxu0 %v2655
    %v2657 = vand.u32 %v2573, 4294901760
    %2658 = vmatpush2.msra.mxu0 %v2657
    %v2659 = vand.u32 %v2572, 4294901760
    %2660 = vmatprep.subr.mxu0 %v2659
    %v2661 = vand.u32 %v2571, 4294901760
    %2662 = vmatpush2.msra.mxu0 %v2661
    %v2663 = vand.u32 %v2570, 4294901760
    %2664 = vmatprep.subr.mxu0 %v2663
    %v2665 = vand.u32 %v2569, 4294901760
    %2666 = vmatpush2.msra.mxu0 %v2665
    %v2667 = vand.u32 %v2568, 4294901760
    %2668 = vmatprep.subr.mxu0 %v2667
    %v2669 = vand.u32 %v2567, 4294901760
    %2670 = vmatpush2.msra.mxu0 %v2669
    %v2671 = vand.u32 %v2566, 4294901760
    %2672 = vmatprep.subr.mxu0 %v2671
    %v2673 = vand.u32 %v2565, 4294901760
    %2674 = vmatpush2.msra.mxu0 %v2673
    %v2675 = vand.u32 %v2564, 4294901760
    %2676 = vmatprep.subr.mxu0 %v2675
    %v2677 = vand.u32 %v2563, 4294901760
    %2678 = vmatpush2.msra.mxu0 %v2677
    %v2679 = vand.u32 %v2562, 4294901760
    %2680 = vmatprep.subr.mxu0 %v2679
    %v2681 = vand.u32 %v2561, 4294901760
    %2682 = vmatpush2.msra.mxu0 %v2681
    %v2683 = vand.u32 %v2560, 4294901760
    %2684 = vmatprep.subr.mxu0 %v2683
    %v2685 = vand.u32 %v2559, 4294901760
    %2686 = vmatpush2.msra.mxu0 %v2685
    %v2687 = vand.u32 %v2558, 4294901760
    %2688 = vmatprep.subr.mxu0 %v2687
    %v2689 = vand.u32 %v2557, 4294901760
    %2690 = vmatpush2.msra.mxu0 %v2689
    %v2691 = vand.u32 %v2556, 4294901760
    %2692 = vmatprep.subr.mxu0 %v2691
    %v2693 = vand.u32 %v2555, 4294901760
    %2694 = vmatpush2.msra.mxu0 %v2693
    %v2695 = vand.u32 %v2554, 4294901760
    %2696 = vmatprep.subr.mxu0 %v2695
    %v2697 = vand.u32 %v2553, 4294901760
    %2698 = vmatpush2.msra.mxu0 %v2697
    %v2699 = vand.u32 %v2552, 4294901760
    %2700 = vmatprep.subr.mxu0 %v2699
    %v2701 = vand.u32 %v2551, 4294901760
    %2702 = vmatpush2.msra.mxu0 %v2701
    %v2703 = vand.u32 %v1285, 4294901760
    %v2704 = vsub.f32 %v1285, %v2703
    %v2705 = vand.u32 %v2704, 4294901760
    %v2706 = vsub.f32 %v2704, %v2705
    %v2707 = vand.u32 %v2706, 4294901760
    %2708 = vmatprep.mubr.f32.mxu0 %v2707
    %v2709 = vand.u32 %v1221, 4294901760
    %v2710 = vsub.f32 %v1221, %v2709
    %v2711 = vand.u32 %v2710, 4294901760
    %v2712 = vsub.f32 %v2710, %v2711
    %v2713 = vand.u32 %v2712, 4294901760
    %2714 = vmatmul.mubr.f32.gmra.mxu0 %v2713
    %v2715 = vpop.f32.mrf.mxu0
    %v2716 = vadd.f32 0.0, %v2715
    %v2717 = vpop.f32.mrf.mxu0
    %v2718 = vadd.f32 0.0, %v2717
    %2719 = vdwg.mxu0
    %v2720 = vand.u32 %v2550, 4294901760
    %v2721 = vsub.f32 %v2550, %v2720
    %v2722 = vand.u32 %v2721, 4294901760
    %v2723 = vsub.f32 %v2721, %v2722
    %v2724 = vand.u32 %v2723, 4294901760
    %2725 = vmatprep.subr.mxu0 %v2724
    %v2726 = vand.u32 %v2549, 4294901760
    %v2727 = vsub.f32 %v2549, %v2726
    %v2728 = vand.u32 %v2727, 4294901760
    %v2729 = vsub.f32 %v2727, %v2728
    %v2730 = vand.u32 %v2729, 4294901760
    %2731 = vmatpush1.msra.mxu0 %v2730
    %v2732 = vand.u32 %v2548, 4294901760
    %v2733 = vsub.f32 %v2548, %v2732
    %v2734 = vand.u32 %v2733, 4294901760
    %v2735 = vsub.f32 %v2733, %v2734
    %v2736 = vand.u32 %v2735, 4294901760
    %2737 = vmatprep.subr.mxu0 %v2736
    %v2738 = vand.u32 %v2547, 4294901760
    %v2739 = vsub.f32 %v2547, %v2738
    %v2740 = vand.u32 %v2739, 4294901760
    %v2741 = vsub.f32 %v2739, %v2740
    %v2742 = vand.u32 %v2741, 4294901760
    %2743 = vmatpush1.msra.mxu0 %v2742
    %v2744 = vand.u32 %v2546, 4294901760
    %v2745 = vsub.f32 %v2546, %v2744
    %v2746 = vand.u32 %v2745, 4294901760
    %v2747 = vsub.f32 %v2745, %v2746
    %v2748 = vand.u32 %v2747, 4294901760
    %2749 = vmatprep.subr.mxu0 %v2748
    %v2750 = vand.u32 %v2545, 4294901760
    %v2751 = vsub.f32 %v2545, %v2750
    %v2752 = vand.u32 %v2751, 4294901760
    %v2753 = vsub.f32 %v2751, %v2752
    %v2754 = vand.u32 %v2753, 4294901760
    %2755 = vmatpush1.msra.mxu0 %v2754
    %v2756 = vand.u32 %v2544, 4294901760
    %v2757 = vsub.f32 %v2544, %v2756
    %v2758 = vand.u32 %v2757, 4294901760
    %v2759 = vsub.f32 %v2757, %v2758
    %v2760 = vand.u32 %v2759, 4294901760
    %2761 = vmatprep.subr.mxu0 %v2760
    %v2762 = vand.u32 %v2543, 4294901760
    %v2763 = vsub.f32 %v2543, %v2762
    %v2764 = vand.u32 %v2763, 4294901760
    %v2765 = vsub.f32 %v2763, %v2764
    %v2766 = vand.u32 %v2765, 4294901760
    %2767 = vmatpush1.msra.mxu0 %v2766
    %v2768 = vand.u32 %v2542, 4294901760
    %v2769 = vsub.f32 %v2542, %v2768
    %v2770 = vand.u32 %v2769, 4294901760
    %v2771 = vsub.f32 %v2769, %v2770
    %v2772 = vand.u32 %v2771, 4294901760
    %2773 = vmatprep.subr.mxu0 %v2772
    %v2774 = vand.u32 %v2541, 4294901760
    %v2775 = vsub.f32 %v2541, %v2774
    %v2776 = vand.u32 %v2775, 4294901760
    %v2777 = vsub.f32 %v2775, %v2776
    %v2778 = vand.u32 %v2777, 4294901760
    %2779 = vmatpush1.msra.mxu0 %v2778
    %v2780 = vand.u32 %v2540, 4294901760
    %v2781 = vsub.f32 %v2540, %v2780
    %v2782 = vand.u32 %v2781, 4294901760
    %v2783 = vsub.f32 %v2781, %v2782
    %v2784 = vand.u32 %v2783, 4294901760
    %2785 = vmatprep.subr.mxu0 %v2784
    %v2786 = vand.u32 %v2539, 4294901760
    %v2787 = vsub.f32 %v2539, %v2786
    %v2788 = vand.u32 %v2787, 4294901760
    %v2789 = vsub.f32 %v2787, %v2788
    %v2790 = vand.u32 %v2789, 4294901760
    %2791 = vmatpush1.msra.mxu0 %v2790
    %v2792 = vand.u32 %v2538, 4294901760
    %v2793 = vsub.f32 %v2538, %v2792
    %v2794 = vand.u32 %v2793, 4294901760
    %v2795 = vsub.f32 %v2793, %v2794
    %v2796 = vand.u32 %v2795, 4294901760
    %2797 = vmatprep.subr.mxu0 %v2796
    %v2798 = vand.u32 %v2537, 4294901760
    %v2799 = vsub.f32 %v2537, %v2798
    %v2800 = vand.u32 %v2799, 4294901760
    %v2801 = vsub.f32 %v2799, %v2800
    %v2802 = vand.u32 %v2801, 4294901760
    %2803 = vmatpush1.msra.mxu0 %v2802
    %v2804 = vand.u32 %v2536, 4294901760
    %v2805 = vsub.f32 %v2536, %v2804
    %v2806 = vand.u32 %v2805, 4294901760
    %v2807 = vsub.f32 %v2805, %v2806
    %v2808 = vand.u32 %v2807, 4294901760
    %2809 = vmatprep.subr.mxu0 %v2808
    %v2810 = vand.u32 %v2535, 4294901760
    %v2811 = vsub.f32 %v2535, %v2810
    %v2812 = vand.u32 %v2811, 4294901760
    %v2813 = vsub.f32 %v2811, %v2812
    %v2814 = vand.u32 %v2813, 4294901760
    %2815 = vmatpush1.msra.mxu0 %v2814
    %v2816 = vand.u32 %v2534, 4294901760
    %v2817 = vsub.f32 %v2534, %v2816
    %v2818 = vand.u32 %v2817, 4294901760
    %v2819 = vsub.f32 %v2817, %v2818
    %v2820 = vand.u32 %v2819, 4294901760
    %2821 = vmatprep.subr.mxu0 %v2820
    %v2822 = vand.u32 %v2533, 4294901760
    %v2823 = vsub.f32 %v2533, %v2822
    %v2824 = vand.u32 %v2823, 4294901760
    %v2825 = vsub.f32 %v2823, %v2824
    %v2826 = vand.u32 %v2825, 4294901760
    %2827 = vmatpush1.msra.mxu0 %v2826
    %v2828 = vand.u32 %v2532, 4294901760
    %v2829 = vsub.f32 %v2532, %v2828
    %v2830 = vand.u32 %v2829, 4294901760
    %v2831 = vsub.f32 %v2829, %v2830
    %v2832 = vand.u32 %v2831, 4294901760
    %2833 = vmatprep.subr.mxu0 %v2832
    %v2834 = vand.u32 %v2531, 4294901760
    %v2835 = vsub.f32 %v2531, %v2834
    %v2836 = vand.u32 %v2835, 4294901760
    %v2837 = vsub.f32 %v2835, %v2836
    %v2838 = vand.u32 %v2837, 4294901760
    %2839 = vmatpush1.msra.mxu0 %v2838
    %v2840 = vand.u32 %v2530, 4294901760
    %v2841 = vsub.f32 %v2530, %v2840
    %v2842 = vand.u32 %v2841, 4294901760
    %v2843 = vsub.f32 %v2841, %v2842
    %v2844 = vand.u32 %v2843, 4294901760
    %2845 = vmatprep.subr.mxu0 %v2844
    %v2846 = vand.u32 %v2529, 4294901760
    %v2847 = vsub.f32 %v2529, %v2846
    %v2848 = vand.u32 %v2847, 4294901760
    %v2849 = vsub.f32 %v2847, %v2848
    %v2850 = vand.u32 %v2849, 4294901760
    %2851 = vmatpush1.msra.mxu0 %v2850
    %v2852 = vand.u32 %v2528, 4294901760
    %v2853 = vsub.f32 %v2528, %v2852
    %v2854 = vand.u32 %v2853, 4294901760
    %v2855 = vsub.f32 %v2853, %v2854
    %v2856 = vand.u32 %v2855, 4294901760
    %2857 = vmatprep.subr.mxu0 %v2856
    %v2858 = vand.u32 %v2527, 4294901760
    %v2859 = vsub.f32 %v2527, %v2858
    %v2860 = vand.u32 %v2859, 4294901760
    %v2861 = vsub.f32 %v2859, %v2860
    %v2862 = vand.u32 %v2861, 4294901760
    %2863 = vmatpush1.msra.mxu0 %v2862
    %v2864 = vand.u32 %v2526, 4294901760
    %v2865 = vsub.f32 %v2526, %v2864
    %v2866 = vand.u32 %v2865, 4294901760
    %v2867 = vsub.f32 %v2865, %v2866
    %v2868 = vand.u32 %v2867, 4294901760
    %2869 = vmatprep.subr.mxu0 %v2868
    %v2870 = vand.u32 %v2525, 4294901760
    %v2871 = vsub.f32 %v2525, %v2870
    %v2872 = vand.u32 %v2871, 4294901760
    %v2873 = vsub.f32 %v2871, %v2872
    %v2874 = vand.u32 %v2873, 4294901760
    %2875 = vmatpush1.msra.mxu0 %v2874
    %v2876 = vand.u32 %v2524, 4294901760
    %v2877 = vsub.f32 %v2524, %v2876
    %v2878 = vand.u32 %v2877, 4294901760
    %v2879 = vsub.f32 %v2877, %v2878
    %v2880 = vand.u32 %v2879, 4294901760
    %2881 = vmatprep.subr.mxu0 %v2880
    %v2882 = vand.u32 %v2523, 4294901760
    %v2883 = vsub.f32 %v2523, %v2882
    %v2884 = vand.u32 %v2883, 4294901760
    %v2885 = vsub.f32 %v2883, %v2884
    %v2886 = vand.u32 %v2885, 4294901760
    %2887 = vmatpush1.msra.mxu0 %v2886
    %v2888 = vand.u32 %v2522, 4294901760
    %v2889 = vsub.f32 %v2522, %v2888
    %v2890 = vand.u32 %v2889, 4294901760
    %v2891 = vsub.f32 %v2889, %v2890
    %v2892 = vand.u32 %v2891, 4294901760
    %2893 = vmatprep.subr.mxu0 %v2892
    %v2894 = vand.u32 %v2521, 4294901760
    %v2895 = vsub.f32 %v2521, %v2894
    %v2896 = vand.u32 %v2895, 4294901760
    %v2897 = vsub.f32 %v2895, %v2896
    %v2898 = vand.u32 %v2897, 4294901760
    %2899 = vmatpush1.msra.mxu0 %v2898
    %v2900 = vand.u32 %v2520, 4294901760
    %v2901 = vsub.f32 %v2520, %v2900
    %v2902 = vand.u32 %v2901, 4294901760
    %v2903 = vsub.f32 %v2901, %v2902
    %v2904 = vand.u32 %v2903, 4294901760
    %2905 = vmatprep.subr.mxu0 %v2904
    %v2906 = vand.u32 %v2519, 4294901760
    %v2907 = vsub.f32 %v2519, %v2906
    %v2908 = vand.u32 %v2907, 4294901760
    %v2909 = vsub.f32 %v2907, %v2908
    %v2910 = vand.u32 %v2909, 4294901760
    %2911 = vmatpush1.msra.mxu0 %v2910
    %2912 = vmatprep.subr.mxu0 0.0
    %2913 = vmatpush2.msra.mxu0 0.0
    %2914 = vmatprep.subr.mxu0 0.0
    %2915 = vmatpush2.msra.mxu0 0.0
    %v2916 = vand.u32 %v2578, 4294901760
    %v2917 = vsub.f32 %v2578, %v2916
    %v2918 = vand.u32 %v2917, 4294901760
    %v2919 = vsub.f32 %v2917, %v2918
    %v2920 = vand.u32 %v2919, 4294901760
    %2921 = vmatprep.subr.mxu0 %v2920
    %v2922 = vand.u32 %v2577, 4294901760
    %v2923 = vsub.f32 %v2577, %v2922
    %v2924 = vand.u32 %v2923, 4294901760
    %v2925 = vsub.f32 %v2923, %v2924
    %v2926 = vand.u32 %v2925, 4294901760
    %2927 = vmatpush2.msra.mxu0 %v2926
    %v2928 = vand.u32 %v2576, 4294901760
    %v2929 = vsub.f32 %v2576, %v2928
    %v2930 = vand.u32 %v2929, 4294901760
    %v2931 = vsub.f32 %v2929, %v2930
    %v2932 = vand.u32 %v2931, 4294901760
    %2933 = vmatprep.subr.mxu0 %v2932
    %v2934 = vand.u32 %v2575, 4294901760
    %v2935 = vsub.f32 %v2575, %v2934
    %v2936 = vand.u32 %v2935, 4294901760
    %v2937 = vsub.f32 %v2935, %v2936
    %v2938 = vand.u32 %v2937, 4294901760
    %2939 = vmatpush2.msra.mxu0 %v2938
    %v2940 = vand.u32 %v2574, 4294901760
    %v2941 = vsub.f32 %v2574, %v2940
    %v2942 = vand.u32 %v2941, 4294901760
    %v2943 = vsub.f32 %v2941, %v2942
    %v2944 = vand.u32 %v2943, 4294901760
    %2945 = vmatprep.subr.mxu0 %v2944
    %v2946 = vand.u32 %v2573, 4294901760
    %v2947 = vsub.f32 %v2573, %v2946
    %v2948 = vand.u32 %v2947, 4294901760
    %v2949 = vsub.f32 %v2947, %v2948
    %v2950 = vand.u32 %v2949, 4294901760
    %2951 = vmatpush2.msra.mxu0 %v2950
    %v2952 = vand.u32 %v2572, 4294901760
    %v2953 = vsub.f32 %v2572, %v2952
    %v2954 = vand.u32 %v2953, 4294901760
    %v2955 = vsub.f32 %v2953, %v2954
    %v2956 = vand.u32 %v2955, 4294901760
    %2957 = vmatprep.subr.mxu0 %v2956
    %v2958 = vand.u32 %v2571, 4294901760
    %v2959 = vsub.f32 %v2571, %v2958
    %v2960 = vand.u32 %v2959, 4294901760
    %v2961 = vsub.f32 %v2959, %v2960
    %v2962 = vand.u32 %v2961, 4294901760
    %2963 = vmatpush2.msra.mxu0 %v2962
    %v2964 = vand.u32 %v2570, 4294901760
    %v2965 = vsub.f32 %v2570, %v2964
    %v2966 = vand.u32 %v2965, 4294901760
    %v2967 = vsub.f32 %v2965, %v2966
    %v2968 = vand.u32 %v2967, 4294901760
    %2969 = vmatprep.subr.mxu0 %v2968
    %v2970 = vand.u32 %v2569, 4294901760
    %v2971 = vsub.f32 %v2569, %v2970
    %v2972 = vand.u32 %v2971, 4294901760
    %v2973 = vsub.f32 %v2971, %v2972
    %v2974 = vand.u32 %v2973, 4294901760
    %2975 = vmatpush2.msra.mxu0 %v2974
    %v2976 = vand.u32 %v2568, 4294901760
    %v2977 = vsub.f32 %v2568, %v2976
    %v2978 = vand.u32 %v2977, 4294901760
    %v2979 = vsub.f32 %v2977, %v2978
    %v2980 = vand.u32 %v2979, 4294901760
    %2981 = vmatprep.subr.mxu0 %v2980
    %v2982 = vand.u32 %v2567, 4294901760
    %v2983 = vsub.f32 %v2567, %v2982
    %v2984 = vand.u32 %v2983, 4294901760
    %v2985 = vsub.f32 %v2983, %v2984
    %v2986 = vand.u32 %v2985, 4294901760
    %2987 = vmatpush2.msra.mxu0 %v2986
    %v2988 = vand.u32 %v2566, 4294901760
    %v2989 = vsub.f32 %v2566, %v2988
    %v2990 = vand.u32 %v2989, 4294901760
    %v2991 = vsub.f32 %v2989, %v2990
    %v2992 = vand.u32 %v2991, 4294901760
    %2993 = vmatprep.subr.mxu0 %v2992
    %v2994 = vand.u32 %v2565, 4294901760
    %v2995 = vsub.f32 %v2565, %v2994
    %v2996 = vand.u32 %v2995, 4294901760
    %v2997 = vsub.f32 %v2995, %v2996
    %v2998 = vand.u32 %v2997, 4294901760
    %2999 = vmatpush2.msra.mxu0 %v2998
    %v3000 = vand.u32 %v2564, 4294901760
    %v3001 = vsub.f32 %v2564, %v3000
    %v3002 = vand.u32 %v3001, 4294901760
    %v3003 = vsub.f32 %v3001, %v3002
    %v3004 = vand.u32 %v3003, 4294901760
    %3005 = vmatprep.subr.mxu0 %v3004
    %v3006 = vand.u32 %v2563, 4294901760
    %v3007 = vsub.f32 %v2563, %v3006
    %v3008 = vand.u32 %v3007, 4294901760
    %v3009 = vsub.f32 %v3007, %v3008
    %v3010 = vand.u32 %v3009, 4294901760
    %3011 = vmatpush2.msra.mxu0 %v3010
    %v3012 = vand.u32 %v2562, 4294901760
    %v3013 = vsub.f32 %v2562, %v3012
    %v3014 = vand.u32 %v3013, 4294901760
    %v3015 = vsub.f32 %v3013, %v3014
    %v3016 = vand.u32 %v3015, 4294901760
    %3017 = vmatprep.subr.mxu0 %v3016
    %v3018 = vand.u32 %v2561, 4294901760
    %v3019 = vsub.f32 %v2561, %v3018
    %v3020 = vand.u32 %v3019, 4294901760
    %v3021 = vsub.f32 %v3019, %v3020
    %v3022 = vand.u32 %v3021, 4294901760
    %3023 = vmatpush2.msra.mxu0 %v3022
    %v3024 = vand.u32 %v2560, 4294901760
    %v3025 = vsub.f32 %v2560, %v3024
    %v3026 = vand.u32 %v3025, 4294901760
    %v3027 = vsub.f32 %v3025, %v3026
    %v3028 = vand.u32 %v3027, 4294901760
    %3029 = vmatprep.subr.mxu0 %v3028
    %v3030 = vand.u32 %v2559, 4294901760
    %v3031 = vsub.f32 %v2559, %v3030
    %v3032 = vand.u32 %v3031, 4294901760
    %v3033 = vsub.f32 %v3031, %v3032
    %v3034 = vand.u32 %v3033, 4294901760
    %3035 = vmatpush2.msra.mxu0 %v3034
    %v3036 = vand.u32 %v2558, 4294901760
    %v3037 = vsub.f32 %v2558, %v3036
    %v3038 = vand.u32 %v3037, 4294901760
    %v3039 = vsub.f32 %v3037, %v3038
    %v3040 = vand.u32 %v3039, 4294901760
    %3041 = vmatprep.subr.mxu0 %v3040
    %v3042 = vand.u32 %v2557, 4294901760
    %v3043 = vsub.f32 %v2557, %v3042
    %v3044 = vand.u32 %v3043, 4294901760
    %v3045 = vsub.f32 %v3043, %v3044
    %v3046 = vand.u32 %v3045, 4294901760
    %3047 = vmatpush2.msra.mxu0 %v3046
    %v3048 = vand.u32 %v2556, 4294901760
    %v3049 = vsub.f32 %v2556, %v3048
    %v3050 = vand.u32 %v3049, 4294901760
    %v3051 = vsub.f32 %v3049, %v3050
    %v3052 = vand.u32 %v3051, 4294901760
    %3053 = vmatprep.subr.mxu0 %v3052
    %v3054 = vand.u32 %v2555, 4294901760
    %v3055 = vsub.f32 %v2555, %v3054
    %v3056 = vand.u32 %v3055, 4294901760
    %v3057 = vsub.f32 %v3055, %v3056
    %v3058 = vand.u32 %v3057, 4294901760
    %3059 = vmatpush2.msra.mxu0 %v3058
    %v3060 = vand.u32 %v2554, 4294901760
    %v3061 = vsub.f32 %v2554, %v3060
    %v3062 = vand.u32 %v3061, 4294901760
    %v3063 = vsub.f32 %v3061, %v3062
    %v3064 = vand.u32 %v3063, 4294901760
    %3065 = vmatprep.subr.mxu0 %v3064
    %v3066 = vand.u32 %v2553, 4294901760
    %v3067 = vsub.f32 %v2553, %v3066
    %v3068 = vand.u32 %v3067, 4294901760
    %v3069 = vsub.f32 %v3067, %v3068
    %v3070 = vand.u32 %v3069, 4294901760
    %3071 = vmatpush2.msra.mxu0 %v3070
    %v3072 = vand.u32 %v2552, 4294901760
    %v3073 = vsub.f32 %v2552, %v3072
    %v3074 = vand.u32 %v3073, 4294901760
    %v3075 = vsub.f32 %v3073, %v3074
    %v3076 = vand.u32 %v3075, 4294901760
    %3077 = vmatprep.subr.mxu0 %v3076
    %v3078 = vand.u32 %v2551, 4294901760
    %v3079 = vsub.f32 %v2551, %v3078
    %v3080 = vand.u32 %v3079, 4294901760
    %v3081 = vsub.f32 %v3079, %v3080
    %v3082 = vand.u32 %v3081, 4294901760
    %3083 = vmatpush2.msra.mxu0 %v3082
    %v3084 = vand.u32 %v1285, 4294901760
    %3085 = vmatprep.mubr.f32.mxu0 %v3084
    %v3086 = vand.u32 %v1221, 4294901760
    %3087 = vmatmul.mubr.f32.gmra.mxu0 %v3086
    %v3088 = vpop.f32.mrf.mxu0
    %v3089 = vadd.f32 %v2716, %v3088
    %v3090 = vpop.f32.mrf.mxu0
    %v3091 = vadd.f32 %v2718, %v3090
    %3092 = vdwg.mxu0
    %v3093 = vand.u32 %v2550, 4294901760
    %v3094 = vsub.f32 %v2550, %v3093
    %3095 = vmatprep.subr.mxu0 %v3094
    %v3096 = vand.u32 %v2549, 4294901760
    %v3097 = vsub.f32 %v2549, %v3096
    %3098 = vmatpush1.msra.mxu0 %v3097
    %v3099 = vand.u32 %v2548, 4294901760
    %v3100 = vsub.f32 %v2548, %v3099
    %3101 = vmatprep.subr.mxu0 %v3100
    %v3102 = vand.u32 %v2547, 4294901760
    %v3103 = vsub.f32 %v2547, %v3102
    %3104 = vmatpush1.msra.mxu0 %v3103
    %v3105 = vand.u32 %v2546, 4294901760
    %v3106 = vsub.f32 %v2546, %v3105
    %3107 = vmatprep.subr.mxu0 %v3106
    %v3108 = vand.u32 %v2545, 4294901760
    %v3109 = vsub.f32 %v2545, %v3108
    %3110 = vmatpush1.msra.mxu0 %v3109
    %v3111 = vand.u32 %v2544, 4294901760
    %v3112 = vsub.f32 %v2544, %v3111
    %3113 = vmatprep.subr.mxu0 %v3112
    %v3114 = vand.u32 %v2543, 4294901760
    %v3115 = vsub.f32 %v2543, %v3114
    %3116 = vmatpush1.msra.mxu0 %v3115
    %v3117 = vand.u32 %v2542, 4294901760
    %v3118 = vsub.f32 %v2542, %v3117
    %3119 = vmatprep.subr.mxu0 %v3118
    %v3120 = vand.u32 %v2541, 4294901760
    %v3121 = vsub.f32 %v2541, %v3120
    %3122 = vmatpush1.msra.mxu0 %v3121
    %v3123 = vand.u32 %v2540, 4294901760
    %v3124 = vsub.f32 %v2540, %v3123
    %3125 = vmatprep.subr.mxu0 %v3124
    %v3126 = vand.u32 %v2539, 4294901760
    %v3127 = vsub.f32 %v2539, %v3126
    %3128 = vmatpush1.msra.mxu0 %v3127
    %v3129 = vand.u32 %v2538, 4294901760
    %v3130 = vsub.f32 %v2538, %v3129
    %3131 = vmatprep.subr.mxu0 %v3130
    %v3132 = vand.u32 %v2537, 4294901760
    %v3133 = vsub.f32 %v2537, %v3132
    %3134 = vmatpush1.msra.mxu0 %v3133
    %v3135 = vand.u32 %v2536, 4294901760
    %v3136 = vsub.f32 %v2536, %v3135
    %3137 = vmatprep.subr.mxu0 %v3136
    %v3138 = vand.u32 %v2535, 4294901760
    %v3139 = vsub.f32 %v2535, %v3138
    %3140 = vmatpush1.msra.mxu0 %v3139
    %v3141 = vand.u32 %v2534, 4294901760
    %v3142 = vsub.f32 %v2534, %v3141
    %3143 = vmatprep.subr.mxu0 %v3142
    %v3144 = vand.u32 %v2533, 4294901760
    %v3145 = vsub.f32 %v2533, %v3144
    %3146 = vmatpush1.msra.mxu0 %v3145
    %v3147 = vand.u32 %v2532, 4294901760
    %v3148 = vsub.f32 %v2532, %v3147
    %3149 = vmatprep.subr.mxu0 %v3148
    %v3150 = vand.u32 %v2531, 4294901760
    %v3151 = vsub.f32 %v2531, %v3150
    %3152 = vmatpush1.msra.mxu0 %v3151
    %v3153 = vand.u32 %v2530, 4294901760
    %v3154 = vsub.f32 %v2530, %v3153
    %3155 = vmatprep.subr.mxu0 %v3154
    %v3156 = vand.u32 %v2529, 4294901760
    %v3157 = vsub.f32 %v2529, %v3156
    %3158 = vmatpush1.msra.mxu0 %v3157
    %v3159 = vand.u32 %v2528, 4294901760
    %v3160 = vsub.f32 %v2528, %v3159
    %3161 = vmatprep.subr.mxu0 %v3160
    %v3162 = vand.u32 %v2527, 4294901760
    %v3163 = vsub.f32 %v2527, %v3162
    %3164 = vmatpush1.msra.mxu0 %v3163
    %v3165 = vand.u32 %v2526, 4294901760
    %v3166 = vsub.f32 %v2526, %v3165
    %3167 = vmatprep.subr.mxu0 %v3166
    %v3168 = vand.u32 %v2525, 4294901760
    %v3169 = vsub.f32 %v2525, %v3168
    %3170 = vmatpush1.msra.mxu0 %v3169
    %v3171 = vand.u32 %v2524, 4294901760
    %v3172 = vsub.f32 %v2524, %v3171
    %3173 = vmatprep.subr.mxu0 %v3172
    %v3174 = vand.u32 %v2523, 4294901760
    %v3175 = vsub.f32 %v2523, %v3174
    %3176 = vmatpush1.msra.mxu0 %v3175
    %v3177 = vand.u32 %v2522, 4294901760
    %v3178 = vsub.f32 %v2522, %v3177
    %3179 = vmatprep.subr.mxu0 %v3178
    %v3180 = vand.u32 %v2521, 4294901760
    %v3181 = vsub.f32 %v2521, %v3180
    %3182 = vmatpush1.msra.mxu0 %v3181
    %v3183 = vand.u32 %v2520, 4294901760
    %v3184 = vsub.f32 %v2520, %v3183
    %3185 = vmatprep.subr.mxu0 %v3184
    %v3186 = vand.u32 %v2519, 4294901760
    %v3187 = vsub.f32 %v2519, %v3186
    %3188 = vmatpush1.msra.mxu0 %v3187
    %3189 = vmatprep.subr.mxu0 0.0
    %3190 = vmatpush2.msra.mxu0 0.0
    %3191 = vmatprep.subr.mxu0 0.0
    %3192 = vmatpush2.msra.mxu0 0.0
    %v3193 = vand.u32 %v2578, 4294901760
    %v3194 = vsub.f32 %v2578, %v3193
    %3195 = vmatprep.subr.mxu0 %v3194
    %v3196 = vand.u32 %v2577, 4294901760
    %v3197 = vsub.f32 %v2577, %v3196
    %3198 = vmatpush2.msra.mxu0 %v3197
    %v3199 = vand.u32 %v2576, 4294901760
    %v3200 = vsub.f32 %v2576, %v3199
    %3201 = vmatprep.subr.mxu0 %v3200
    %v3202 = vand.u32 %v2575, 4294901760
    %v3203 = vsub.f32 %v2575, %v3202
    %3204 = vmatpush2.msra.mxu0 %v3203
    %v3205 = vand.u32 %v2574, 4294901760
    %v3206 = vsub.f32 %v2574, %v3205
    %3207 = vmatprep.subr.mxu0 %v3206
    %v3208 = vand.u32 %v2573, 4294901760
    %v3209 = vsub.f32 %v2573, %v3208
    %3210 = vmatpush2.msra.mxu0 %v3209
    %v3211 = vand.u32 %v2572, 4294901760
    %v3212 = vsub.f32 %v2572, %v3211
    %3213 = vmatprep.subr.mxu0 %v3212
    %v3214 = vand.u32 %v2571, 4294901760
    %v3215 = vsub.f32 %v2571, %v3214
    %3216 = vmatpush2.msra.mxu0 %v3215
    %v3217 = vand.u32 %v2570, 4294901760
    %v3218 = vsub.f32 %v2570, %v3217
    %3219 = vmatprep.subr.mxu0 %v3218
    %v3220 = vand.u32 %v2569, 4294901760
    %v3221 = vsub.f32 %v2569, %v3220
    %3222 = vmatpush2.msra.mxu0 %v3221
    %v3223 = vand.u32 %v2568, 4294901760
    %v3224 = vsub.f32 %v2568, %v3223
    %3225 = vmatprep.subr.mxu0 %v3224
    %v3226 = vand.u32 %v2567, 4294901760
    %v3227 = vsub.f32 %v2567, %v3226
    %3228 = vmatpush2.msra.mxu0 %v3227
    %v3229 = vand.u32 %v2566, 4294901760
    %v3230 = vsub.f32 %v2566, %v3229
    %3231 = vmatprep.subr.mxu0 %v3230
    %v3232 = vand.u32 %v2565, 4294901760
    %v3233 = vsub.f32 %v2565, %v3232
    %3234 = vmatpush2.msra.mxu0 %v3233
    %v3235 = vand.u32 %v2564, 4294901760
    %v3236 = vsub.f32 %v2564, %v3235
    %3237 = vmatprep.subr.mxu0 %v3236
    %v3238 = vand.u32 %v2563, 4294901760
    %v3239 = vsub.f32 %v2563, %v3238
    %3240 = vmatpush2.msra.mxu0 %v3239
    %v3241 = vand.u32 %v2562, 4294901760
    %v3242 = vsub.f32 %v2562, %v3241
    %3243 = vmatprep.subr.mxu0 %v3242
    %v3244 = vand.u32 %v2561, 4294901760
    %v3245 = vsub.f32 %v2561, %v3244
    %3246 = vmatpush2.msra.mxu0 %v3245
    %v3247 = vand.u32 %v2560, 4294901760
    %v3248 = vsub.f32 %v2560, %v3247
    %3249 = vmatprep.subr.mxu0 %v3248
    %v3250 = vand.u32 %v2559, 4294901760
    %v3251 = vsub.f32 %v2559, %v3250
    %3252 = vmatpush2.msra.mxu0 %v3251
    %v3253 = vand.u32 %v2558, 4294901760
    %v3254 = vsub.f32 %v2558, %v3253
    %3255 = vmatprep.subr.mxu0 %v3254
    %v3256 = vand.u32 %v2557, 4294901760
    %v3257 = vsub.f32 %v2557, %v3256
    %3258 = vmatpush2.msra.mxu0 %v3257
    %v3259 = vand.u32 %v2556, 4294901760
    %v3260 = vsub.f32 %v2556, %v3259
    %3261 = vmatprep.subr.mxu0 %v3260
    %v3262 = vand.u32 %v2555, 4294901760
    %v3263 = vsub.f32 %v2555, %v3262
    %3264 = vmatpush2.msra.mxu0 %v3263
    %v3265 = vand.u32 %v2554, 4294901760
    %v3266 = vsub.f32 %v2554, %v3265
    %3267 = vmatprep.subr.mxu0 %v3266
    %v3268 = vand.u32 %v2553, 4294901760
    %v3269 = vsub.f32 %v2553, %v3268
    %3270 = vmatpush2.msra.mxu0 %v3269
    %v3271 = vand.u32 %v2552, 4294901760
    %v3272 = vsub.f32 %v2552, %v3271
    %3273 = vmatprep.subr.mxu0 %v3272
    %v3274 = vand.u32 %v2551, 4294901760
    %v3275 = vsub.f32 %v2551, %v3274
    %3276 = vmatpush2.msra.mxu0 %v3275
    %v3277 = vand.u32 %v1285, 4294901760
    %v3278 = vsub.f32 %v1285, %v3277
    %3279 = vmatprep.mubr.f32.mxu0 %v3278
    %v3280 = vand.u32 %v1221, 4294901760
    %v3281 = vsub.f32 %v1221, %v3280
    %3282 = vmatmul.mubr.f32.gmra.mxu0 %v3281
    %v3283 = vpop.f32.mrf.mxu0
    %v3284 = vadd.f32 %v3089, %v3283
    %v3285 = vpop.f32.mrf.mxu0
    %v3286 = vadd.f32 %v3091, %v3285
    %3287 = vdwg.mxu0
    %v3288 = vand.u32 %v2550, 4294901760
    %3289 = vmatprep.subr.mxu0 %v3288
    %v3290 = vand.u32 %v2549, 4294901760
    %3291 = vmatpush1.msra.mxu0 %v3290
    %v3292 = vand.u32 %v2548, 4294901760
    %3293 = vmatprep.subr.mxu0 %v3292
    %v3294 = vand.u32 %v2547, 4294901760
    %3295 = vmatpush1.msra.mxu0 %v3294
    %v3296 = vand.u32 %v2546, 4294901760
    %3297 = vmatprep.subr.mxu0 %v3296
    %v3298 = vand.u32 %v2545, 4294901760
    %3299 = vmatpush1.msra.mxu0 %v3298
    %v3300 = vand.u32 %v2544, 4294901760
    %3301 = vmatprep.subr.mxu0 %v3300
    %v3302 = vand.u32 %v2543, 4294901760
    %3303 = vmatpush1.msra.mxu0 %v3302
    %v3304 = vand.u32 %v2542, 4294901760
    %3305 = vmatprep.subr.mxu0 %v3304
    %v3306 = vand.u32 %v2541, 4294901760
    %3307 = vmatpush1.msra.mxu0 %v3306
    %v3308 = vand.u32 %v2540, 4294901760
    %3309 = vmatprep.subr.mxu0 %v3308
    %v3310 = vand.u32 %v2539, 4294901760
    %3311 = vmatpush1.msra.mxu0 %v3310
    %v3312 = vand.u32 %v2538, 4294901760
    %3313 = vmatprep.subr.mxu0 %v3312
    %v3314 = vand.u32 %v2537, 4294901760
    %3315 = vmatpush1.msra.mxu0 %v3314
    %v3316 = vand.u32 %v2536, 4294901760
    %3317 = vmatprep.subr.mxu0 %v3316
    %v3318 = vand.u32 %v2535, 4294901760
    %3319 = vmatpush1.msra.mxu0 %v3318
    %v3320 = vand.u32 %v2534, 4294901760
    %3321 = vmatprep.subr.mxu0 %v3320
    %v3322 = vand.u32 %v2533, 4294901760
    %3323 = vmatpush1.msra.mxu0 %v3322
    %v3324 = vand.u32 %v2532, 4294901760
    %3325 = vmatprep.subr.mxu0 %v3324
    %v3326 = vand.u32 %v2531, 4294901760
    %3327 = vmatpush1.msra.mxu0 %v3326
    %v3328 = vand.u32 %v2530, 4294901760
    %3329 = vmatprep.subr.mxu0 %v3328
    %v3330 = vand.u32 %v2529, 4294901760
    %3331 = vmatpush1.msra.mxu0 %v3330
    %v3332 = vand.u32 %v2528, 4294901760
    %3333 = vmatprep.subr.mxu0 %v3332
    %v3334 = vand.u32 %v2527, 4294901760
    %3335 = vmatpush1.msra.mxu0 %v3334
    %v3336 = vand.u32 %v2526, 4294901760
    %3337 = vmatprep.subr.mxu0 %v3336
    %v3338 = vand.u32 %v2525, 4294901760
    %3339 = vmatpush1.msra.mxu0 %v3338
    %v3340 = vand.u32 %v2524, 4294901760
    %3341 = vmatprep.subr.mxu0 %v3340
    %v3342 = vand.u32 %v2523, 4294901760
    %3343 = vmatpush1.msra.mxu0 %v3342
    %v3344 = vand.u32 %v2522, 4294901760
    %3345 = vmatprep.subr.mxu0 %v3344
    %v3346 = vand.u32 %v2521, 4294901760
    %3347 = vmatpush1.msra.mxu0 %v3346
    %v3348 = vand.u32 %v2520, 4294901760
    %3349 = vmatprep.subr.mxu0 %v3348
    %v3350 = vand.u32 %v2519, 4294901760
    %3351 = vmatpush1.msra.mxu0 %v3350
    %3352 = vmatprep.subr.mxu0 0.0
    %3353 = vmatpush2.msra.mxu0 0.0
    %3354 = vmatprep.subr.mxu0 0.0
    %3355 = vmatpush2.msra.mxu0 0.0
    %v3356 = vand.u32 %v2578, 4294901760
    %3357 = vmatprep.subr.mxu0 %v3356
    %v3358 = vand.u32 %v2577, 4294901760
    %3359 = vmatpush2.msra.mxu0 %v3358
    %v3360 = vand.u32 %v2576, 4294901760
    %3361 = vmatprep.subr.mxu0 %v3360
    %v3362 = vand.u32 %v2575, 4294901760
    %3363 = vmatpush2.msra.mxu0 %v3362
    %v3364 = vand.u32 %v2574, 4294901760
    %3365 = vmatprep.subr.mxu0 %v3364
    %v3366 = vand.u32 %v2573, 4294901760
    %3367 = vmatpush2.msra.mxu0 %v3366
    %v3368 = vand.u32 %v2572, 4294901760
    %3369 = vmatprep.subr.mxu0 %v3368
    %v3370 = vand.u32 %v2571, 4294901760
    %3371 = vmatpush2.msra.mxu0 %v3370
    %v3372 = vand.u32 %v2570, 4294901760
    %3373 = vmatprep.subr.mxu0 %v3372
    %v3374 = vand.u32 %v2569, 4294901760
    %3375 = vmatpush2.msra.mxu0 %v3374
    %v3376 = vand.u32 %v2568, 4294901760
    %3377 = vmatprep.subr.mxu0 %v3376
    %v3378 = vand.u32 %v2567, 4294901760
    %3379 = vmatpush2.msra.mxu0 %v3378
    %v3380 = vand.u32 %v2566, 4294901760
    %3381 = vmatprep.subr.mxu0 %v3380
    %v3382 = vand.u32 %v2565, 4294901760
    %3383 = vmatpush2.msra.mxu0 %v3382
    %v3384 = vand.u32 %v2564, 4294901760
    %3385 = vmatprep.subr.mxu0 %v3384
    %v3386 = vand.u32 %v2563, 4294901760
    %3387 = vmatpush2.msra.mxu0 %v3386
    %v3388 = vand.u32 %v2562, 4294901760
    %3389 = vmatprep.subr.mxu0 %v3388
    %v3390 = vand.u32 %v2561, 4294901760
    %3391 = vmatpush2.msra.mxu0 %v3390
    %v3392 = vand.u32 %v2560, 4294901760
    %3393 = vmatprep.subr.mxu0 %v3392
    %v3394 = vand.u32 %v2559, 4294901760
    %3395 = vmatpush2.msra.mxu0 %v3394
    %v3396 = vand.u32 %v2558, 4294901760
    %3397 = vmatprep.subr.mxu0 %v3396
    %v3398 = vand.u32 %v2557, 4294901760
    %3399 = vmatpush2.msra.mxu0 %v3398
    %v3400 = vand.u32 %v2556, 4294901760
    %3401 = vmatprep.subr.mxu0 %v3400
    %v3402 = vand.u32 %v2555, 4294901760
    %3403 = vmatpush2.msra.mxu0 %v3402
    %v3404 = vand.u32 %v2554, 4294901760
    %3405 = vmatprep.subr.mxu0 %v3404
    %v3406 = vand.u32 %v2553, 4294901760
    %3407 = vmatpush2.msra.mxu0 %v3406
    %v3408 = vand.u32 %v2552, 4294901760
    %3409 = vmatprep.subr.mxu0 %v3408
    %v3410 = vand.u32 %v2551, 4294901760
    %3411 = vmatpush2.msra.mxu0 %v3410
    %v3412 = vand.u32 %v1285, 4294901760
    %v3413 = vsub.f32 %v1285, %v3412
    %v3414 = vand.u32 %v3413, 4294901760
    %3415 = vmatprep.mubr.f32.mxu0 %v3414
    %v3416 = vand.u32 %v1221, 4294901760
    %v3417 = vsub.f32 %v1221, %v3416
    %v3418 = vand.u32 %v3417, 4294901760
    %3419 = vmatmul.mubr.f32.gmra.mxu0 %v3418
    %v3420 = vpop.f32.mrf.mxu0
    %v3421 = vadd.f32 %v3284, %v3420
    %v3422 = vpop.f32.mrf.mxu0
    %v3423 = vadd.f32 %v3286, %v3422
    %3424 = vdwg.mxu0
    %v3425 = vand.u32 %v2550, 4294901760
    %v3426 = vsub.f32 %v2550, %v3425
    %v3427 = vand.u32 %v3426, 4294901760
    %3428 = vmatprep.subr.mxu0 %v3427
    %v3429 = vand.u32 %v2549, 4294901760
    %v3430 = vsub.f32 %v2549, %v3429
    %v3431 = vand.u32 %v3430, 4294901760
    %3432 = vmatpush1.msra.mxu0 %v3431
    %v3433 = vand.u32 %v2548, 4294901760
    %v3434 = vsub.f32 %v2548, %v3433
    %v3435 = vand.u32 %v3434, 4294901760
    %3436 = vmatprep.subr.mxu0 %v3435
    %v3437 = vand.u32 %v2547, 4294901760
    %v3438 = vsub.f32 %v2547, %v3437
    %v3439 = vand.u32 %v3438, 4294901760
    %3440 = vmatpush1.msra.mxu0 %v3439
    %v3441 = vand.u32 %v2546, 4294901760
    %v3442 = vsub.f32 %v2546, %v3441
    %v3443 = vand.u32 %v3442, 4294901760
    %3444 = vmatprep.subr.mxu0 %v3443
    %v3445 = vand.u32 %v2545, 4294901760
    %v3446 = vsub.f32 %v2545, %v3445
    %v3447 = vand.u32 %v3446, 4294901760
    %3448 = vmatpush1.msra.mxu0 %v3447
    %v3449 = vand.u32 %v2544, 4294901760
    %v3450 = vsub.f32 %v2544, %v3449
    %v3451 = vand.u32 %v3450, 4294901760
    %3452 = vmatprep.subr.mxu0 %v3451
    %v3453 = vand.u32 %v2543, 4294901760
    %v3454 = vsub.f32 %v2543, %v3453
    %v3455 = vand.u32 %v3454, 4294901760
    %3456 = vmatpush1.msra.mxu0 %v3455
    %v3457 = vand.u32 %v2542, 4294901760
    %v3458 = vsub.f32 %v2542, %v3457
    %v3459 = vand.u32 %v3458, 4294901760
    %3460 = vmatprep.subr.mxu0 %v3459
    %v3461 = vand.u32 %v2541, 4294901760
    %v3462 = vsub.f32 %v2541, %v3461
    %v3463 = vand.u32 %v3462, 4294901760
    %3464 = vmatpush1.msra.mxu0 %v3463
    %v3465 = vand.u32 %v2540, 4294901760
    %v3466 = vsub.f32 %v2540, %v3465
    %v3467 = vand.u32 %v3466, 4294901760
    %3468 = vmatprep.subr.mxu0 %v3467
    %v3469 = vand.u32 %v2539, 4294901760
    %v3470 = vsub.f32 %v2539, %v3469
    %v3471 = vand.u32 %v3470, 4294901760
    %3472 = vmatpush1.msra.mxu0 %v3471
    %v3473 = vand.u32 %v2538, 4294901760
    %v3474 = vsub.f32 %v2538, %v3473
    %v3475 = vand.u32 %v3474, 4294901760
    %3476 = vmatprep.subr.mxu0 %v3475
    %v3477 = vand.u32 %v2537, 4294901760
    %v3478 = vsub.f32 %v2537, %v3477
    %v3479 = vand.u32 %v3478, 4294901760
    %3480 = vmatpush1.msra.mxu0 %v3479
    %v3481 = vand.u32 %v2536, 4294901760
    %v3482 = vsub.f32 %v2536, %v3481
    %v3483 = vand.u32 %v3482, 4294901760
    %3484 = vmatprep.subr.mxu0 %v3483
    %v3485 = vand.u32 %v2535, 4294901760
    %v3486 = vsub.f32 %v2535, %v3485
    %v3487 = vand.u32 %v3486, 4294901760
    %3488 = vmatpush1.msra.mxu0 %v3487
    %v3489 = vand.u32 %v2534, 4294901760
    %v3490 = vsub.f32 %v2534, %v3489
    %v3491 = vand.u32 %v3490, 4294901760
    %3492 = vmatprep.subr.mxu0 %v3491
    %v3493 = vand.u32 %v2533, 4294901760
    %v3494 = vsub.f32 %v2533, %v3493
    %v3495 = vand.u32 %v3494, 4294901760
    %3496 = vmatpush1.msra.mxu0 %v3495
    %v3497 = vand.u32 %v2532, 4294901760
    %v3498 = vsub.f32 %v2532, %v3497
    %v3499 = vand.u32 %v3498, 4294901760
    %3500 = vmatprep.subr.mxu0 %v3499
    %v3501 = vand.u32 %v2531, 4294901760
    %v3502 = vsub.f32 %v2531, %v3501
    %v3503 = vand.u32 %v3502, 4294901760
    %3504 = vmatpush1.msra.mxu0 %v3503
    %v3505 = vand.u32 %v2530, 4294901760
    %v3506 = vsub.f32 %v2530, %v3505
    %v3507 = vand.u32 %v3506, 4294901760
    %3508 = vmatprep.subr.mxu0 %v3507
    %v3509 = vand.u32 %v2529, 4294901760
    %v3510 = vsub.f32 %v2529, %v3509
    %v3511 = vand.u32 %v3510, 4294901760
    %3512 = vmatpush1.msra.mxu0 %v3511
    %v3513 = vand.u32 %v2528, 4294901760
    %v3514 = vsub.f32 %v2528, %v3513
    %v3515 = vand.u32 %v3514, 4294901760
    %3516 = vmatprep.subr.mxu0 %v3515
    %v3517 = vand.u32 %v2527, 4294901760
    %v3518 = vsub.f32 %v2527, %v3517
    %v3519 = vand.u32 %v3518, 4294901760
    %3520 = vmatpush1.msra.mxu0 %v3519
    %v3521 = vand.u32 %v2526, 4294901760
    %v3522 = vsub.f32 %v2526, %v3521
    %v3523 = vand.u32 %v3522, 4294901760
    %3524 = vmatprep.subr.mxu0 %v3523
    %v3525 = vand.u32 %v2525, 4294901760
    %v3526 = vsub.f32 %v2525, %v3525
    %v3527 = vand.u32 %v3526, 4294901760
    %3528 = vmatpush1.msra.mxu0 %v3527
    %v3529 = vand.u32 %v2524, 4294901760
    %v3530 = vsub.f32 %v2524, %v3529
    %v3531 = vand.u32 %v3530, 4294901760
    %3532 = vmatprep.subr.mxu0 %v3531
    %v3533 = vand.u32 %v2523, 4294901760
    %v3534 = vsub.f32 %v2523, %v3533
    %v3535 = vand.u32 %v3534, 4294901760
    %3536 = vmatpush1.msra.mxu0 %v3535
    %v3537 = vand.u32 %v2522, 4294901760
    %v3538 = vsub.f32 %v2522, %v3537
    %v3539 = vand.u32 %v3538, 4294901760
    %3540 = vmatprep.subr.mxu0 %v3539
    %v3541 = vand.u32 %v2521, 4294901760
    %v3542 = vsub.f32 %v2521, %v3541
    %v3543 = vand.u32 %v3542, 4294901760
    %3544 = vmatpush1.msra.mxu0 %v3543
    %v3545 = vand.u32 %v2520, 4294901760
    %v3546 = vsub.f32 %v2520, %v3545
    %v3547 = vand.u32 %v3546, 4294901760
    %3548 = vmatprep.subr.mxu0 %v3547
    %v3549 = vand.u32 %v2519, 4294901760
    %v3550 = vsub.f32 %v2519, %v3549
    %v3551 = vand.u32 %v3550, 4294901760
    %3552 = vmatpush1.msra.mxu0 %v3551
    %3553 = vmatprep.subr.mxu0 0.0
    %3554 = vmatpush2.msra.mxu0 0.0
    %3555 = vmatprep.subr.mxu0 0.0
    %3556 = vmatpush2.msra.mxu0 0.0
    %v3557 = vand.u32 %v2578, 4294901760
    %v3558 = vsub.f32 %v2578, %v3557
    %v3559 = vand.u32 %v3558, 4294901760
    %3560 = vmatprep.subr.mxu0 %v3559
    %v3561 = vand.u32 %v2577, 4294901760
    %v3562 = vsub.f32 %v2577, %v3561
    %v3563 = vand.u32 %v3562, 4294901760
    %3564 = vmatpush2.msra.mxu0 %v3563
    %v3565 = vand.u32 %v2576, 4294901760
    %v3566 = vsub.f32 %v2576, %v3565
    %v3567 = vand.u32 %v3566, 4294901760
    %3568 = vmatprep.subr.mxu0 %v3567
    %v3569 = vand.u32 %v2575, 4294901760
    %v3570 = vsub.f32 %v2575, %v3569
    %v3571 = vand.u32 %v3570, 4294901760
    %3572 = vmatpush2.msra.mxu0 %v3571
    %v3573 = vand.u32 %v2574, 4294901760
    %v3574 = vsub.f32 %v2574, %v3573
    %v3575 = vand.u32 %v3574, 4294901760
    %3576 = vmatprep.subr.mxu0 %v3575
    %v3577 = vand.u32 %v2573, 4294901760
    %v3578 = vsub.f32 %v2573, %v3577
    %v3579 = vand.u32 %v3578, 4294901760
    %3580 = vmatpush2.msra.mxu0 %v3579
    %v3581 = vand.u32 %v2572, 4294901760
    %v3582 = vsub.f32 %v2572, %v3581
    %v3583 = vand.u32 %v3582, 4294901760
    %3584 = vmatprep.subr.mxu0 %v3583
    %v3585 = vand.u32 %v2571, 4294901760
    %v3586 = vsub.f32 %v2571, %v3585
    %v3587 = vand.u32 %v3586, 4294901760
    %3588 = vmatpush2.msra.mxu0 %v3587
    %v3589 = vand.u32 %v2570, 4294901760
    %v3590 = vsub.f32 %v2570, %v3589
    %v3591 = vand.u32 %v3590, 4294901760
    %3592 = vmatprep.subr.mxu0 %v3591
    %v3593 = vand.u32 %v2569, 4294901760
    %v3594 = vsub.f32 %v2569, %v3593
    %v3595 = vand.u32 %v3594, 4294901760
    %3596 = vmatpush2.msra.mxu0 %v3595
    %v3597 = vand.u32 %v2568, 4294901760
    %v3598 = vsub.f32 %v2568, %v3597
    %v3599 = vand.u32 %v3598, 4294901760
    %3600 = vmatprep.subr.mxu0 %v3599
    %v3601 = vand.u32 %v2567, 4294901760
    %v3602 = vsub.f32 %v2567, %v3601
    %v3603 = vand.u32 %v3602, 4294901760
    %3604 = vmatpush2.msra.mxu0 %v3603
    %v3605 = vand.u32 %v2566, 4294901760
    %v3606 = vsub.f32 %v2566, %v3605
    %v3607 = vand.u32 %v3606, 4294901760
    %3608 = vmatprep.subr.mxu0 %v3607
    %v3609 = vand.u32 %v2565, 4294901760
    %v3610 = vsub.f32 %v2565, %v3609
    %v3611 = vand.u32 %v3610, 4294901760
    %3612 = vmatpush2.msra.mxu0 %v3611
    %v3613 = vand.u32 %v2564, 4294901760
    %v3614 = vsub.f32 %v2564, %v3613
    %v3615 = vand.u32 %v3614, 4294901760
    %3616 = vmatprep.subr.mxu0 %v3615
    %v3617 = vand.u32 %v2563, 4294901760
    %v3618 = vsub.f32 %v2563, %v3617
    %v3619 = vand.u32 %v3618, 4294901760
    %3620 = vmatpush2.msra.mxu0 %v3619
    %v3621 = vand.u32 %v2562, 4294901760
    %v3622 = vsub.f32 %v2562, %v3621
    %v3623 = vand.u32 %v3622, 4294901760
    %3624 = vmatprep.subr.mxu0 %v3623
    %v3625 = vand.u32 %v2561, 4294901760
    %v3626 = vsub.f32 %v2561, %v3625
    %v3627 = vand.u32 %v3626, 4294901760
    %3628 = vmatpush2.msra.mxu0 %v3627
    %v3629 = vand.u32 %v2560, 4294901760
    %v3630 = vsub.f32 %v2560, %v3629
    %v3631 = vand.u32 %v3630, 4294901760
    %3632 = vmatprep.subr.mxu0 %v3631
    %v3633 = vand.u32 %v2559, 4294901760
    %v3634 = vsub.f32 %v2559, %v3633
    %v3635 = vand.u32 %v3634, 4294901760
    %3636 = vmatpush2.msra.mxu0 %v3635
    %v3637 = vand.u32 %v2558, 4294901760
    %v3638 = vsub.f32 %v2558, %v3637
    %v3639 = vand.u32 %v3638, 4294901760
    %3640 = vmatprep.subr.mxu0 %v3639
    %v3641 = vand.u32 %v2557, 4294901760
    %v3642 = vsub.f32 %v2557, %v3641
    %v3643 = vand.u32 %v3642, 4294901760
    %3644 = vmatpush2.msra.mxu0 %v3643
    %v3645 = vand.u32 %v2556, 4294901760
    %v3646 = vsub.f32 %v2556, %v3645
    %v3647 = vand.u32 %v3646, 4294901760
    %3648 = vmatprep.subr.mxu0 %v3647
    %v3649 = vand.u32 %v2555, 4294901760
    %v3650 = vsub.f32 %v2555, %v3649
    %v3651 = vand.u32 %v3650, 4294901760
    %3652 = vmatpush2.msra.mxu0 %v3651
    %v3653 = vand.u32 %v2554, 4294901760
    %v3654 = vsub.f32 %v2554, %v3653
    %v3655 = vand.u32 %v3654, 4294901760
    %3656 = vmatprep.subr.mxu0 %v3655
    %v3657 = vand.u32 %v2553, 4294901760
    %v3658 = vsub.f32 %v2553, %v3657
    %v3659 = vand.u32 %v3658, 4294901760
    %3660 = vmatpush2.msra.mxu0 %v3659
    %v3661 = vand.u32 %v2552, 4294901760
    %v3662 = vsub.f32 %v2552, %v3661
    %v3663 = vand.u32 %v3662, 4294901760
    %3664 = vmatprep.subr.mxu0 %v3663
    %v3665 = vand.u32 %v2551, 4294901760
    %v3666 = vsub.f32 %v2551, %v3665
    %v3667 = vand.u32 %v3666, 4294901760
    %3668 = vmatpush2.msra.mxu0 %v3667
    %v3669 = vand.u32 %v1285, 4294901760
    %3670 = vmatprep.mubr.f32.mxu0 %v3669
    %v3671 = vand.u32 %v1221, 4294901760
    %3672 = vmatmul.mubr.f32.gmra.mxu0 %v3671
    %v3673 = vpop.f32.mrf.mxu0
    %v3674 = vadd.f32 %v3421, %v3673
    %v3675 = vpop.f32.mrf.mxu0
    %v3676 = vadd.f32 %v3423, %v3675
    %3677 = vdwg.mxu0
    %v3678 = vand.u32 %v2550, 4294901760
    %3679 = vmatprep.subr.mxu0 %v3678
    %v3680 = vand.u32 %v2549, 4294901760
    %3681 = vmatpush1.msra.mxu0 %v3680
    %v3682 = vand.u32 %v2548, 4294901760
    %3683 = vmatprep.subr.mxu0 %v3682
    %v3684 = vand.u32 %v2547, 4294901760
    %3685 = vmatpush1.msra.mxu0 %v3684
    %v3686 = vand.u32 %v2546, 4294901760
    %3687 = vmatprep.subr.mxu0 %v3686
    %v3688 = vand.u32 %v2545, 4294901760
    %3689 = vmatpush1.msra.mxu0 %v3688
    %v3690 = vand.u32 %v2544, 4294901760
    %3691 = vmatprep.subr.mxu0 %v3690
    %v3692 = vand.u32 %v2543, 4294901760
    %3693 = vmatpush1.msra.mxu0 %v3692
    %v3694 = vand.u32 %v2542, 4294901760
    %3695 = vmatprep.subr.mxu0 %v3694
    %v3696 = vand.u32 %v2541, 4294901760
    %3697 = vmatpush1.msra.mxu0 %v3696
    %v3698 = vand.u32 %v2540, 4294901760
    %3699 = vmatprep.subr.mxu0 %v3698
    %v3700 = vand.u32 %v2539, 4294901760
    %3701 = vmatpush1.msra.mxu0 %v3700
    %v3702 = vand.u32 %v2538, 4294901760
    %3703 = vmatprep.subr.mxu0 %v3702
    %v3704 = vand.u32 %v2537, 4294901760
    %3705 = vmatpush1.msra.mxu0 %v3704
    %v3706 = vand.u32 %v2536, 4294901760
    %3707 = vmatprep.subr.mxu0 %v3706
    %v3708 = vand.u32 %v2535, 4294901760
    %3709 = vmatpush1.msra.mxu0 %v3708
    %v3710 = vand.u32 %v2534, 4294901760
    %3711 = vmatprep.subr.mxu0 %v3710
    %v3712 = vand.u32 %v2533, 4294901760
    %3713 = vmatpush1.msra.mxu0 %v3712
    %v3714 = vand.u32 %v2532, 4294901760
    %3715 = vmatprep.subr.mxu0 %v3714
    %v3716 = vand.u32 %v2531, 4294901760
    %3717 = vmatpush1.msra.mxu0 %v3716
    %v3718 = vand.u32 %v2530, 4294901760
    %3719 = vmatprep.subr.mxu0 %v3718
    %v3720 = vand.u32 %v2529, 4294901760
    %3721 = vmatpush1.msra.mxu0 %v3720
    %v3722 = vand.u32 %v2528, 4294901760
    %3723 = vmatprep.subr.mxu0 %v3722
    %v3724 = vand.u32 %v2527, 4294901760
    %3725 = vmatpush1.msra.mxu0 %v3724
    %v3726 = vand.u32 %v2526, 4294901760
    %3727 = vmatprep.subr.mxu0 %v3726
    %v3728 = vand.u32 %v2525, 4294901760
    %3729 = vmatpush1.msra.mxu0 %v3728
    %v3730 = vand.u32 %v2524, 4294901760
    %3731 = vmatprep.subr.mxu0 %v3730
    %v3732 = vand.u32 %v2523, 4294901760
    %3733 = vmatpush1.msra.mxu0 %v3732
    %v3734 = vand.u32 %v2522, 4294901760
    %3735 = vmatprep.subr.mxu0 %v3734
    %v3736 = vand.u32 %v2521, 4294901760
    %3737 = vmatpush1.msra.mxu0 %v3736
    %v3738 = vand.u32 %v2520, 4294901760
    %3739 = vmatprep.subr.mxu0 %v3738
    %v3740 = vand.u32 %v2519, 4294901760
    %3741 = vmatpush1.msra.mxu0 %v3740
    %3742 = vmatprep.subr.mxu0 0.0
    %3743 = vmatpush2.msra.mxu0 0.0
    %3744 = vmatprep.subr.mxu0 0.0
    %3745 = vmatpush2.msra.mxu0 0.0
    %v3746 = vand.u32 %v2578, 4294901760
    %3747 = vmatprep.subr.mxu0 %v3746
    %v3748 = vand.u32 %v2577, 4294901760
    %3749 = vmatpush2.msra.mxu0 %v3748
    %v3750 = vand.u32 %v2576, 4294901760
    %3751 = vmatprep.subr.mxu0 %v3750
    %v3752 = vand.u32 %v2575, 4294901760
    %3753 = vmatpush2.msra.mxu0 %v3752
    %v3754 = vand.u32 %v2574, 4294901760
    %3755 = vmatprep.subr.mxu0 %v3754
    %v3756 = vand.u32 %v2573, 4294901760
    %3757 = vmatpush2.msra.mxu0 %v3756
    %v3758 = vand.u32 %v2572, 4294901760
    %3759 = vmatprep.subr.mxu0 %v3758
    %v3760 = vand.u32 %v2571, 4294901760
    %3761 = vmatpush2.msra.mxu0 %v3760
    %v3762 = vand.u32 %v2570, 4294901760
    %3763 = vmatprep.subr.mxu0 %v3762
    %v3764 = vand.u32 %v2569, 4294901760
    %3765 = vmatpush2.msra.mxu0 %v3764
    %v3766 = vand.u32 %v2568, 4294901760
    %3767 = vmatprep.subr.mxu0 %v3766
    %v3768 = vand.u32 %v2567, 4294901760
    %3769 = vmatpush2.msra.mxu0 %v3768
    %v3770 = vand.u32 %v2566, 4294901760
    %3771 = vmatprep.subr.mxu0 %v3770
    %v3772 = vand.u32 %v2565, 4294901760
    %3773 = vmatpush2.msra.mxu0 %v3772
    %v3774 = vand.u32 %v2564, 4294901760
    %3775 = vmatprep.subr.mxu0 %v3774
    %v3776 = vand.u32 %v2563, 4294901760
    %3777 = vmatpush2.msra.mxu0 %v3776
    %v3778 = vand.u32 %v2562, 4294901760
    %3779 = vmatprep.subr.mxu0 %v3778
    %v3780 = vand.u32 %v2561, 4294901760
    %3781 = vmatpush2.msra.mxu0 %v3780
    %v3782 = vand.u32 %v2560, 4294901760
    %3783 = vmatprep.subr.mxu0 %v3782
    %v3784 = vand.u32 %v2559, 4294901760
    %3785 = vmatpush2.msra.mxu0 %v3784
    %v3786 = vand.u32 %v2558, 4294901760
    %3787 = vmatprep.subr.mxu0 %v3786
    %v3788 = vand.u32 %v2557, 4294901760
    %3789 = vmatpush2.msra.mxu0 %v3788
    %v3790 = vand.u32 %v2556, 4294901760
    %3791 = vmatprep.subr.mxu0 %v3790
    %v3792 = vand.u32 %v2555, 4294901760
    %3793 = vmatpush2.msra.mxu0 %v3792
    %v3794 = vand.u32 %v2554, 4294901760
    %3795 = vmatprep.subr.mxu0 %v3794
    %v3796 = vand.u32 %v2553, 4294901760
    %3797 = vmatpush2.msra.mxu0 %v3796
    %v3798 = vand.u32 %v2552, 4294901760
    %3799 = vmatprep.subr.mxu0 %v3798
    %v3800 = vand.u32 %v2551, 4294901760
    %3801 = vmatpush2.msra.mxu0 %v3800
    %v3802 = vand.u32 %v1285, 4294901760
    %3803 = vmatprep.mubr.f32.mxu0 %v3802
    %v3804 = vand.u32 %v1221, 4294901760
    %3805 = vmatmul.mubr.f32.gmra.mxu0 %v3804
    %v3806 = vpop.f32.mrf.mxu0
    %v3807 = vadd.f32 %v3674, %v3806
    %v3808 = vpop.f32.mrf.mxu0
    %v3809 = vadd.f32 %v3676, %v3808
    %3810 = vdwg.mxu0
    %v3811 = vmax.f32 %v2515, %v3807
    %v3812 = vmax.f32 %v2517, %v3809
    %v3813 = vlaneseq
    %v3814 = vshrl.u32 %v3813, 7
    %v3815 = vsub.s32 1, %v3814
    %v3816 = vrot.slane %v31, %v3815
    %v3817 = vlaneseq
    %v3818 = vshrl.u32 %v3817, 7
    %v3819 = vsub.s32 1, %v3818
    %v3820 = vrot.slane %v32, %v3819
    %v3821 = vadd.f32 %v3811, %v3816
    %v3822 = vadd.f32 %v3812, %v3820
    %v3823 = vmax.f32 %v3821, 0.0
    %v3824 = vmax.f32 %v3822, 0.0
    %v3825 = vld [vmem:[%s5] sm:$0xff]
    %v3826 = vld [vmem:[%s5 + $0x8] sm:$0xff]
    %v3827 = vld [vmem:[%s5 + $0x10] sm:$0xff]
    %v3828 = vld [vmem:[%s5 + $0x18] sm:$0xff]
    %v3829 = vld [vmem:[%s5 + $0x20] sm:$0xff]
    %v3830 = vld [vmem:[%s5 + $0x28] sm:$0xff]
    %v3831 = vld [vmem:[%s5 + $0x30] sm:$0xff]
    %v3832 = vld [vmem:[%s5 + $0x38] sm:$0xff]
    %v3833 = vld [vmem:[%s5 + $0x40] sm:$0xff]
    %v3834 = vld [vmem:[%s5 + $0x48] sm:$0xff]
    %v3835 = vld [vmem:[%s5 + $0x50] sm:$0xff]
    %v3836 = vld [vmem:[%s5 + $0x58] sm:$0xff]
    %v3837 = vld [vmem:[%s5 + $0x60] sm:$0xff]
    %v3838 = vld [vmem:[%s5 + $0x68] sm:$0xff]
    %v3839 = vld [vmem:[%s5 + $0x70] sm:$0xff]
    %v3840 = vld [vmem:[%s5 + $0x78] sm:$0xff]
    %v3841 = vld [vmem:[%s5 + $0x80] sm:$0xff]
    %v3842 = vld [vmem:[%s5 + $0x88] sm:$0xff]
    %v3843 = vld [vmem:[%s5 + $0x90] sm:$0xff]
    %v3844 = vld [vmem:[%s5 + $0x98] sm:$0xff]
    %v3845 = vld [vmem:[%s5 + $0xa0] sm:$0xff]
    %v3846 = vld [vmem:[%s5 + $0xa8] sm:$0xff]
    %v3847 = vld [vmem:[%s5 + $0xb0] sm:$0xff]
    %v3848 = vld [vmem:[%s5 + $0xb8] sm:$0xff]
    %v3849 = vld [vmem:[%s5 + $0xc0] sm:$0xff]
    %v3850 = vld [vmem:[%s5 + $0xc8] sm:$0xff]
    %v3851 = vld [vmem:[%s5 + $0xd0] sm:$0xff]
    %v3852 = vld [vmem:[%s5 + $0xd8] sm:$0xff]
    %v3853 = vld [vmem:[%s5 + $0xe0] sm:$0xff]
    %v3854 = vld [vmem:[%s5 + $0xe8] sm:$0xff]
    %v3855 = vld [vmem:[%s5 + $0xf0] sm:$0xff]
    %v3856 = vld [vmem:[%s5 + $0xf8] sm:$0xff]
    %v3857 = vld [vmem:[%s5 + $0x100] sm:$0xff]
    %v3858 = vld [vmem:[%s5 + $0x108] sm:$0xff]
    %v3859 = vld [vmem:[%s5 + $0x110] sm:$0xff]
    %v3860 = vld [vmem:[%s5 + $0x118] sm:$0xff]
    %v3861 = vld [vmem:[%s5 + $0x120] sm:$0xff]
    %v3862 = vld [vmem:[%s5 + $0x128] sm:$0xff]
    %v3863 = vld [vmem:[%s5 + $0x130] sm:$0xff]
    %v3864 = vld [vmem:[%s5 + $0x138] sm:$0xff]
    %v3865 = vld [vmem:[%s5 + $0x140] sm:$0xff]
    %v3866 = vld [vmem:[%s5 + $0x148] sm:$0xff]
    %v3867 = vld [vmem:[%s5 + $0x150] sm:$0xff]
    %v3868 = vld [vmem:[%s5 + $0x158] sm:$0xff]
    %v3869 = vld [vmem:[%s5 + $0x160] sm:$0xff]
    %v3870 = vld [vmem:[%s5 + $0x168] sm:$0xff]
    %v3871 = vld [vmem:[%s5 + $0x170] sm:$0xff]
    %v3872 = vld [vmem:[%s5 + $0x178] sm:$0xff]
    %v3873 = vld [vmem:[%s5 + $0x180] sm:$0xff]
    %v3874 = vld [vmem:[%s5 + $0x188] sm:$0xff]
    %v3875 = vld [vmem:[%s5 + $0x190] sm:$0xff]
    %v3876 = vld [vmem:[%s5 + $0x198] sm:$0xff]
    %v3877 = vld [vmem:[%s5 + $0x1a0] sm:$0xff]
    %v3878 = vld [vmem:[%s5 + $0x1a8] sm:$0xff]
    %v3879 = vld [vmem:[%s5 + $0x1b0] sm:$0xff]
    %v3880 = vld [vmem:[%s5 + $0x1b8] sm:$0xff]
    %v3881 = vld [vmem:[%s5 + $0x1c0] sm:$0xff]
    %v3882 = vld [vmem:[%s5 + $0x1c8] sm:$0xff]
    %v3883 = vld [vmem:[%s5 + $0x1d0] sm:$0xff]
    %v3884 = vld [vmem:[%s5 + $0x1d8] sm:$0xff]
    %v3885 = vlaneseq
    %v3886 = vshrl.u32 %v3885, 7
    %v3887 = vsub.s32 2, %v3886
    %v3888 = vrot.slane %v31, %v3887
    %v3889 = vlaneseq
    %v3890 = vshrl.u32 %v3889, 7
    %v3891 = vsub.s32 2, %v3890
    %v3892 = vrot.slane %v32, %v3891
    %v3893 = vlaneseq
    %v3894 = vshrl.u32 %v3893, 7
    %v3895 = vsub.s32 2, %v3894
    %v3896 = vrot.slane %v33, %v3895
    %vm3897 = vcmask 261120
    %v3899 = vsel %vm3897, %v3824, 0
    %v3901 = vand.u32 %v3871, 4294901760
    %3902 = vmatprep.subr.mxu0 %v3901
    %v3903 = vand.u32 %v3870, 4294901760
    %3904 = vmatpush1.msra.mxu0 %v3903
    %v3905 = vand.u32 %v3868, 4294901760
    %3906 = vmatprep.subr.mxu0 %v3905
    %v3907 = vand.u32 %v3867, 4294901760
    %3908 = vmatpush1.msra.mxu0 %v3907
    %v3909 = vand.u32 %v3865, 4294901760
    %3910 = vmatprep.subr.mxu0 %v3909
    %v3911 = vand.u32 %v3864, 4294901760
    %3912 = vmatpush1.msra.mxu0 %v3911
    %v3913 = vand.u32 %v3862, 4294901760
    %3914 = vmatprep.subr.mxu0 %v3913
    %v3915 = vand.u32 %v3861, 4294901760
    %3916 = vmatpush1.msra.mxu0 %v3915
    %v3917 = vand.u32 %v3859, 4294901760
    %3918 = vmatprep.subr.mxu0 %v3917
    %v3919 = vand.u32 %v3858, 4294901760
    %3920 = vmatpush1.msra.mxu0 %v3919
    %v3921 = vand.u32 %v3856, 4294901760
    %3922 = vmatprep.subr.mxu0 %v3921
    %v3923 = vand.u32 %v3855, 4294901760
    %3924 = vmatpush1.msra.mxu0 %v3923
    %v3925 = vand.u32 %v3853, 4294901760
    %3926 = vmatprep.subr.mxu0 %v3925
    %v3927 = vand.u32 %v3852, 4294901760
    %3928 = vmatpush1.msra.mxu0 %v3927
    %v3929 = vand.u32 %v3850, 4294901760
    %3930 = vmatprep.subr.mxu0 %v3929
    %v3931 = vand.u32 %v3849, 4294901760
    %3932 = vmatpush1.msra.mxu0 %v3931
    %v3933 = vand.u32 %v3847, 4294901760
    %3934 = vmatprep.subr.mxu0 %v3933
    %v3935 = vand.u32 %v3846, 4294901760
    %3936 = vmatpush1.msra.mxu0 %v3935
    %v3937 = vand.u32 %v3844, 4294901760
    %3938 = vmatprep.subr.mxu0 %v3937
    %v3939 = vand.u32 %v3843, 4294901760
    %3940 = vmatpush1.msra.mxu0 %v3939
    %v3941 = vand.u32 %v3841, 4294901760
    %3942 = vmatprep.subr.mxu0 %v3941
    %v3943 = vand.u32 %v3840, 4294901760
    %3944 = vmatpush1.msra.mxu0 %v3943
    %v3945 = vand.u32 %v3838, 4294901760
    %3946 = vmatprep.subr.mxu0 %v3945
    %v3947 = vand.u32 %v3837, 4294901760
    %3948 = vmatpush1.msra.mxu0 %v3947
    %v3949 = vand.u32 %v3835, 4294901760
    %3950 = vmatprep.subr.mxu0 %v3949
    %v3951 = vand.u32 %v3834, 4294901760
    %3952 = vmatpush1.msra.mxu0 %v3951
    %v3953 = vand.u32 %v3832, 4294901760
    %3954 = vmatprep.subr.mxu0 %v3953
    %v3955 = vand.u32 %v3831, 4294901760
    %3956 = vmatpush1.msra.mxu0 %v3955
    %v3957 = vand.u32 %v3829, 4294901760
    %3958 = vmatprep.subr.mxu0 %v3957
    %v3959 = vand.u32 %v3828, 4294901760
    %3960 = vmatpush1.msra.mxu0 %v3959
    %v3961 = vand.u32 %v3826, 4294901760
    %3962 = vmatprep.subr.mxu0 %v3961
    %v3963 = vand.u32 %v3825, 4294901760
    %3964 = vmatpush1.msra.mxu0 %v3963
    %3965 = vmatprep.subr.mxu0 0.0
    %3966 = vmatpush2.msra.mxu0 0.0
    %3967 = vmatprep.subr.mxu0 0.0
    %3968 = vmatpush2.msra.mxu0 0.0
    %3969 = vmatprep.subr.mxu0 0.0
    %3970 = vmatpush2.msra.mxu0 0.0
    %3971 = vmatprep.subr.mxu0 0.0
    %3972 = vmatpush2.msra.mxu0 0.0
    %3973 = vmatprep.subr.mxu0 0.0
    %3974 = vmatpush2.msra.mxu0 0.0
    %3975 = vmatprep.subr.mxu0 0.0
    %3976 = vmatpush2.msra.mxu0 0.0
    %3977 = vmatprep.subr.mxu0 0.0
    %3978 = vmatpush2.msra.mxu0 0.0
    %3979 = vmatprep.subr.mxu0 0.0
    %3980 = vmatpush2.msra.mxu0 0.0
    %3981 = vmatprep.subr.mxu0 0.0
    %3982 = vmatpush2.msra.mxu0 0.0
    %3983 = vmatprep.subr.mxu0 0.0
    %3984 = vmatpush2.msra.mxu0 0.0
    %3985 = vmatprep.subr.mxu0 0.0
    %3986 = vmatpush2.msra.mxu0 0.0
    %3987 = vmatprep.subr.mxu0 0.0
    %3988 = vmatpush2.msra.mxu0 0.0
    %v3989 = vand.u32 %v3883, 4294901760
    %3990 = vmatprep.subr.mxu0 %v3989
    %v3991 = vand.u32 %v3882, 4294901760
    %3992 = vmatpush2.msra.mxu0 %v3991
    %v3993 = vand.u32 %v3880, 4294901760
    %3994 = vmatprep.subr.mxu0 %v3993
    %v3995 = vand.u32 %v3879, 4294901760
    %3996 = vmatpush2.msra.mxu0 %v3995
    %v3997 = vand.u32 %v3877, 4294901760
    %3998 = vmatprep.subr.mxu0 %v3997
    %v3999 = vand.u32 %v3876, 4294901760
    %4000 = vmatpush2.msra.mxu0 %v3999
    %v4001 = vand.u32 %v3874, 4294901760
    %4002 = vmatprep.subr.mxu0 %v4001
    %v4003 = vand.u32 %v3873, 4294901760
    %4004 = vmatpush2.msra.mxu0 %v4003
    %v4005 = vand.u32 %v3899, 4294901760
    %v4006 = vsub.f32 %v3899, %v4005
    %v4007 = vand.u32 %v4006, 4294901760
    %v4008 = vsub.f32 %v4006, %v4007
    %v4009 = vand.u32 %v4008, 4294901760
    %4010 = vmatprep.mubr.f32.mxu0 %v4009
    %v4011 = vand.u32 %v3823, 4294901760
    %v4012 = vsub.f32 %v3823, %v4011
    %v4013 = vand.u32 %v4012, 4294901760
    %v4014 = vsub.f32 %v4012, %v4013
    %v4015 = vand.u32 %v4014, 4294901760
    %4016 = vmatmul.mubr.f32.gmra.mxu0 %v4015
    %v4017 = vpop.f32.mrf.mxu0
    %v4018 = vadd.f32 %v3888, %v4017
    %v4019 = vpop.f32.mrf.mxu0
    %v4020 = vadd.f32 %v3892, %v4019
    %4021 = vdwg.mxu0
    %v4022 = vand.u32 %v3871, 4294901760
    %v4023 = vsub.f32 %v3871, %v4022
    %v4024 = vand.u32 %v4023, 4294901760
    %v4025 = vsub.f32 %v4023, %v4024
    %v4026 = vand.u32 %v4025, 4294901760
    %4027 = vmatprep.subr.mxu0 %v4026
    %v4028 = vand.u32 %v3870, 4294901760
    %v4029 = vsub.f32 %v3870, %v4028
    %v4030 = vand.u32 %v4029, 4294901760
    %v4031 = vsub.f32 %v4029, %v4030
    %v4032 = vand.u32 %v4031, 4294901760
    %4033 = vmatpush1.msra.mxu0 %v4032
    %v4034 = vand.u32 %v3868, 4294901760
    %v4035 = vsub.f32 %v3868, %v4034
    %v4036 = vand.u32 %v4035, 4294901760
    %v4037 = vsub.f32 %v4035, %v4036
    %v4038 = vand.u32 %v4037, 4294901760
    %4039 = vmatprep.subr.mxu0 %v4038
    %v4040 = vand.u32 %v3867, 4294901760
    %v4041 = vsub.f32 %v3867, %v4040
    %v4042 = vand.u32 %v4041, 4294901760
    %v4043 = vsub.f32 %v4041, %v4042
    %v4044 = vand.u32 %v4043, 4294901760
    %4045 = vmatpush1.msra.mxu0 %v4044
    %v4046 = vand.u32 %v3865, 4294901760
    %v4047 = vsub.f32 %v3865, %v4046
    %v4048 = vand.u32 %v4047, 4294901760
    %v4049 = vsub.f32 %v4047, %v4048
    %v4050 = vand.u32 %v4049, 4294901760
    %4051 = vmatprep.subr.mxu0 %v4050
    %v4052 = vand.u32 %v3864, 4294901760
    %v4053 = vsub.f32 %v3864, %v4052
    %v4054 = vand.u32 %v4053, 4294901760
    %v4055 = vsub.f32 %v4053, %v4054
    %v4056 = vand.u32 %v4055, 4294901760
    %4057 = vmatpush1.msra.mxu0 %v4056
    %v4058 = vand.u32 %v3862, 4294901760
    %v4059 = vsub.f32 %v3862, %v4058
    %v4060 = vand.u32 %v4059, 4294901760
    %v4061 = vsub.f32 %v4059, %v4060
    %v4062 = vand.u32 %v4061, 4294901760
    %4063 = vmatprep.subr.mxu0 %v4062
    %v4064 = vand.u32 %v3861, 4294901760
    %v4065 = vsub.f32 %v3861, %v4064
    %v4066 = vand.u32 %v4065, 4294901760
    %v4067 = vsub.f32 %v4065, %v4066
    %v4068 = vand.u32 %v4067, 4294901760
    %4069 = vmatpush1.msra.mxu0 %v4068
    %v4070 = vand.u32 %v3859, 4294901760
    %v4071 = vsub.f32 %v3859, %v4070
    %v4072 = vand.u32 %v4071, 4294901760
    %v4073 = vsub.f32 %v4071, %v4072
    %v4074 = vand.u32 %v4073, 4294901760
    %4075 = vmatprep.subr.mxu0 %v4074
    %v4076 = vand.u32 %v3858, 4294901760
    %v4077 = vsub.f32 %v3858, %v4076
    %v4078 = vand.u32 %v4077, 4294901760
    %v4079 = vsub.f32 %v4077, %v4078
    %v4080 = vand.u32 %v4079, 4294901760
    %4081 = vmatpush1.msra.mxu0 %v4080
    %v4082 = vand.u32 %v3856, 4294901760
    %v4083 = vsub.f32 %v3856, %v4082
    %v4084 = vand.u32 %v4083, 4294901760
    %v4085 = vsub.f32 %v4083, %v4084
    %v4086 = vand.u32 %v4085, 4294901760
    %4087 = vmatprep.subr.mxu0 %v4086
    %v4088 = vand.u32 %v3855, 4294901760
    %v4089 = vsub.f32 %v3855, %v4088
    %v4090 = vand.u32 %v4089, 4294901760
    %v4091 = vsub.f32 %v4089, %v4090
    %v4092 = vand.u32 %v4091, 4294901760
    %4093 = vmatpush1.msra.mxu0 %v4092
    %v4094 = vand.u32 %v3853, 4294901760
    %v4095 = vsub.f32 %v3853, %v4094
    %v4096 = vand.u32 %v4095, 4294901760
    %v4097 = vsub.f32 %v4095, %v4096
    %v4098 = vand.u32 %v4097, 4294901760
    %4099 = vmatprep.subr.mxu0 %v4098
    %v4100 = vand.u32 %v3852, 4294901760
    %v4101 = vsub.f32 %v3852, %v4100
    %v4102 = vand.u32 %v4101, 4294901760
    %v4103 = vsub.f32 %v4101, %v4102
    %v4104 = vand.u32 %v4103, 4294901760
    %4105 = vmatpush1.msra.mxu0 %v4104
    %v4106 = vand.u32 %v3850, 4294901760
    %v4107 = vsub.f32 %v3850, %v4106
    %v4108 = vand.u32 %v4107, 4294901760
    %v4109 = vsub.f32 %v4107, %v4108
    %v4110 = vand.u32 %v4109, 4294901760
    %4111 = vmatprep.subr.mxu0 %v4110
    %v4112 = vand.u32 %v3849, 4294901760
    %v4113 = vsub.f32 %v3849, %v4112
    %v4114 = vand.u32 %v4113, 4294901760
    %v4115 = vsub.f32 %v4113, %v4114
    %v4116 = vand.u32 %v4115, 4294901760
    %4117 = vmatpush1.msra.mxu0 %v4116
    %v4118 = vand.u32 %v3847, 4294901760
    %v4119 = vsub.f32 %v3847, %v4118
    %v4120 = vand.u32 %v4119, 4294901760
    %v4121 = vsub.f32 %v4119, %v4120
    %v4122 = vand.u32 %v4121, 4294901760
    %4123 = vmatprep.subr.mxu0 %v4122
    %v4124 = vand.u32 %v3846, 4294901760
    %v4125 = vsub.f32 %v3846, %v4124
    %v4126 = vand.u32 %v4125, 4294901760
    %v4127 = vsub.f32 %v4125, %v4126
    %v4128 = vand.u32 %v4127, 4294901760
    %4129 = vmatpush1.msra.mxu0 %v4128
    %v4130 = vand.u32 %v3844, 4294901760
    %v4131 = vsub.f32 %v3844, %v4130
    %v4132 = vand.u32 %v4131, 4294901760
    %v4133 = vsub.f32 %v4131, %v4132
    %v4134 = vand.u32 %v4133, 4294901760
    %4135 = vmatprep.subr.mxu0 %v4134
    %v4136 = vand.u32 %v3843, 4294901760
    %v4137 = vsub.f32 %v3843, %v4136
    %v4138 = vand.u32 %v4137, 4294901760
    %v4139 = vsub.f32 %v4137, %v4138
    %v4140 = vand.u32 %v4139, 4294901760
    %4141 = vmatpush1.msra.mxu0 %v4140
    %v4142 = vand.u32 %v3841, 4294901760
    %v4143 = vsub.f32 %v3841, %v4142
    %v4144 = vand.u32 %v4143, 4294901760
    %v4145 = vsub.f32 %v4143, %v4144
    %v4146 = vand.u32 %v4145, 4294901760
    %4147 = vmatprep.subr.mxu0 %v4146
    %v4148 = vand.u32 %v3840, 4294901760
    %v4149 = vsub.f32 %v3840, %v4148
    %v4150 = vand.u32 %v4149, 4294901760
    %v4151 = vsub.f32 %v4149, %v4150
    %v4152 = vand.u32 %v4151, 4294901760
    %4153 = vmatpush1.msra.mxu0 %v4152
    %v4154 = vand.u32 %v3838, 4294901760
    %v4155 = vsub.f32 %v3838, %v4154
    %v4156 = vand.u32 %v4155, 4294901760
    %v4157 = vsub.f32 %v4155, %v4156
    %v4158 = vand.u32 %v4157, 4294901760
    %4159 = vmatprep.subr.mxu0 %v4158
    %v4160 = vand.u32 %v3837, 4294901760
    %v4161 = vsub.f32 %v3837, %v4160
    %v4162 = vand.u32 %v4161, 4294901760
    %v4163 = vsub.f32 %v4161, %v4162
    %v4164 = vand.u32 %v4163, 4294901760
    %4165 = vmatpush1.msra.mxu0 %v4164
    %v4166 = vand.u32 %v3835, 4294901760
    %v4167 = vsub.f32 %v3835, %v4166
    %v4168 = vand.u32 %v4167, 4294901760
    %v4169 = vsub.f32 %v4167, %v4168
    %v4170 = vand.u32 %v4169, 4294901760
    %4171 = vmatprep.subr.mxu0 %v4170
    %v4172 = vand.u32 %v3834, 4294901760
    %v4173 = vsub.f32 %v3834, %v4172
    %v4174 = vand.u32 %v4173, 4294901760
    %v4175 = vsub.f32 %v4173, %v4174
    %v4176 = vand.u32 %v4175, 4294901760
    %4177 = vmatpush1.msra.mxu0 %v4176
    %v4178 = vand.u32 %v3832, 4294901760
    %v4179 = vsub.f32 %v3832, %v4178
    %v4180 = vand.u32 %v4179, 4294901760
    %v4181 = vsub.f32 %v4179, %v4180
    %v4182 = vand.u32 %v4181, 4294901760
    %4183 = vmatprep.subr.mxu0 %v4182
    %v4184 = vand.u32 %v3831, 4294901760
    %v4185 = vsub.f32 %v3831, %v4184
    %v4186 = vand.u32 %v4185, 4294901760
    %v4187 = vsub.f32 %v4185, %v4186
    %v4188 = vand.u32 %v4187, 4294901760
    %4189 = vmatpush1.msra.mxu0 %v4188
    %v4190 = vand.u32 %v3829, 4294901760
    %v4191 = vsub.f32 %v3829, %v4190
    %v4192 = vand.u32 %v4191, 4294901760
    %v4193 = vsub.f32 %v4191, %v4192
    %v4194 = vand.u32 %v4193, 4294901760
    %4195 = vmatprep.subr.mxu0 %v4194
    %v4196 = vand.u32 %v3828, 4294901760
    %v4197 = vsub.f32 %v3828, %v4196
    %v4198 = vand.u32 %v4197, 4294901760
    %v4199 = vsub.f32 %v4197, %v4198
    %v4200 = vand.u32 %v4199, 4294901760
    %4201 = vmatpush1.msra.mxu0 %v4200
    %v4202 = vand.u32 %v3826, 4294901760
    %v4203 = vsub.f32 %v3826, %v4202
    %v4204 = vand.u32 %v4203, 4294901760
    %v4205 = vsub.f32 %v4203, %v4204
    %v4206 = vand.u32 %v4205, 4294901760
    %4207 = vmatprep.subr.mxu0 %v4206
    %v4208 = vand.u32 %v3825, 4294901760
    %v4209 = vsub.f32 %v3825, %v4208
    %v4210 = vand.u32 %v4209, 4294901760
    %v4211 = vsub.f32 %v4209, %v4210
    %v4212 = vand.u32 %v4211, 4294901760
    %4213 = vmatpush1.msra.mxu0 %v4212
    %4214 = vmatprep.subr.mxu0 0.0
    %4215 = vmatpush2.msra.mxu0 0.0
    %4216 = vmatprep.subr.mxu0 0.0
    %4217 = vmatpush2.msra.mxu0 0.0
    %4218 = vmatprep.subr.mxu0 0.0
    %4219 = vmatpush2.msra.mxu0 0.0
    %4220 = vmatprep.subr.mxu0 0.0
    %4221 = vmatpush2.msra.mxu0 0.0
    %4222 = vmatprep.subr.mxu0 0.0
    %4223 = vmatpush2.msra.mxu0 0.0
    %4224 = vmatprep.subr.mxu0 0.0
    %4225 = vmatpush2.msra.mxu0 0.0
    %4226 = vmatprep.subr.mxu0 0.0
    %4227 = vmatpush2.msra.mxu0 0.0
    %4228 = vmatprep.subr.mxu0 0.0
    %4229 = vmatpush2.msra.mxu0 0.0
    %4230 = vmatprep.subr.mxu0 0.0
    %4231 = vmatpush2.msra.mxu0 0.0
    %4232 = vmatprep.subr.mxu0 0.0
    %4233 = vmatpush2.msra.mxu0 0.0
    %4234 = vmatprep.subr.mxu0 0.0
    %4235 = vmatpush2.msra.mxu0 0.0
    %4236 = vmatprep.subr.mxu0 0.0
    %4237 = vmatpush2.msra.mxu0 0.0
    %v4238 = vand.u32 %v3883, 4294901760
    %v4239 = vsub.f32 %v3883, %v4238
    %v4240 = vand.u32 %v4239, 4294901760
    %v4241 = vsub.f32 %v4239, %v4240
    %v4242 = vand.u32 %v4241, 4294901760
    %4243 = vmatprep.subr.mxu0 %v4242
    %v4244 = vand.u32 %v3882, 4294901760
    %v4245 = vsub.f32 %v3882, %v4244
    %v4246 = vand.u32 %v4245, 4294901760
    %v4247 = vsub.f32 %v4245, %v4246
    %v4248 = vand.u32 %v4247, 4294901760
    %4249 = vmatpush2.msra.mxu0 %v4248
    %v4250 = vand.u32 %v3880, 4294901760
    %v4251 = vsub.f32 %v3880, %v4250
    %v4252 = vand.u32 %v4251, 4294901760
    %v4253 = vsub.f32 %v4251, %v4252
    %v4254 = vand.u32 %v4253, 4294901760
    %4255 = vmatprep.subr.mxu0 %v4254
    %v4256 = vand.u32 %v3879, 4294901760
    %v4257 = vsub.f32 %v3879, %v4256
    %v4258 = vand.u32 %v4257, 4294901760
    %v4259 = vsub.f32 %v4257, %v4258
    %v4260 = vand.u32 %v4259, 4294901760
    %4261 = vmatpush2.msra.mxu0 %v4260
    %v4262 = vand.u32 %v3877, 4294901760
    %v4263 = vsub.f32 %v3877, %v4262
    %v4264 = vand.u32 %v4263, 4294901760
    %v4265 = vsub.f32 %v4263, %v4264
    %v4266 = vand.u32 %v4265, 4294901760
    %4267 = vmatprep.subr.mxu0 %v4266
    %v4268 = vand.u32 %v3876, 4294901760
    %v4269 = vsub.f32 %v3876, %v4268
    %v4270 = vand.u32 %v4269, 4294901760
    %v4271 = vsub.f32 %v4269, %v4270
    %v4272 = vand.u32 %v4271, 4294901760
    %4273 = vmatpush2.msra.mxu0 %v4272
    %v4274 = vand.u32 %v3874, 4294901760
    %v4275 = vsub.f32 %v3874, %v4274
    %v4276 = vand.u32 %v4275, 4294901760
    %v4277 = vsub.f32 %v4275, %v4276
    %v4278 = vand.u32 %v4277, 4294901760
    %4279 = vmatprep.subr.mxu0 %v4278
    %v4280 = vand.u32 %v3873, 4294901760
    %v4281 = vsub.f32 %v3873, %v4280
    %v4282 = vand.u32 %v4281, 4294901760
    %v4283 = vsub.f32 %v4281, %v4282
    %v4284 = vand.u32 %v4283, 4294901760
    %4285 = vmatpush2.msra.mxu0 %v4284
    %v4286 = vand.u32 %v3899, 4294901760
    %4287 = vmatprep.mubr.f32.mxu0 %v4286
    %v4288 = vand.u32 %v3823, 4294901760
    %4289 = vmatmul.mubr.f32.gmra.mxu0 %v4288
    %v4290 = vpop.f32.mrf.mxu0
    %v4291 = vadd.f32 %v4018, %v4290
    %v4292 = vpop.f32.mrf.mxu0
    %v4293 = vadd.f32 %v4020, %v4292
    %4294 = vdwg.mxu0
    %v4295 = vand.u32 %v3871, 4294901760
    %v4296 = vsub.f32 %v3871, %v4295
    %4297 = vmatprep.subr.mxu0 %v4296
    %v4298 = vand.u32 %v3870, 4294901760
    %v4299 = vsub.f32 %v3870, %v4298
    %4300 = vmatpush1.msra.mxu0 %v4299
    %v4301 = vand.u32 %v3868, 4294901760
    %v4302 = vsub.f32 %v3868, %v4301
    %4303 = vmatprep.subr.mxu0 %v4302
    %v4304 = vand.u32 %v3867, 4294901760
    %v4305 = vsub.f32 %v3867, %v4304
    %4306 = vmatpush1.msra.mxu0 %v4305
    %v4307 = vand.u32 %v3865, 4294901760
    %v4308 = vsub.f32 %v3865, %v4307
    %4309 = vmatprep.subr.mxu0 %v4308
    %v4310 = vand.u32 %v3864, 4294901760
    %v4311 = vsub.f32 %v3864, %v4310
    %4312 = vmatpush1.msra.mxu0 %v4311
    %v4313 = vand.u32 %v3862, 4294901760
    %v4314 = vsub.f32 %v3862, %v4313
    %4315 = vmatprep.subr.mxu0 %v4314
    %v4316 = vand.u32 %v3861, 4294901760
    %v4317 = vsub.f32 %v3861, %v4316
    %4318 = vmatpush1.msra.mxu0 %v4317
    %v4319 = vand.u32 %v3859, 4294901760
    %v4320 = vsub.f32 %v3859, %v4319
    %4321 = vmatprep.subr.mxu0 %v4320
    %v4322 = vand.u32 %v3858, 4294901760
    %v4323 = vsub.f32 %v3858, %v4322
    %4324 = vmatpush1.msra.mxu0 %v4323
    %v4325 = vand.u32 %v3856, 4294901760
    %v4326 = vsub.f32 %v3856, %v4325
    %4327 = vmatprep.subr.mxu0 %v4326
    %v4328 = vand.u32 %v3855, 4294901760
    %v4329 = vsub.f32 %v3855, %v4328
    %4330 = vmatpush1.msra.mxu0 %v4329
    %v4331 = vand.u32 %v3853, 4294901760
    %v4332 = vsub.f32 %v3853, %v4331
    %4333 = vmatprep.subr.mxu0 %v4332
    %v4334 = vand.u32 %v3852, 4294901760
    %v4335 = vsub.f32 %v3852, %v4334
    %4336 = vmatpush1.msra.mxu0 %v4335
    %v4337 = vand.u32 %v3850, 4294901760
    %v4338 = vsub.f32 %v3850, %v4337
    %4339 = vmatprep.subr.mxu0 %v4338
    %v4340 = vand.u32 %v3849, 4294901760
    %v4341 = vsub.f32 %v3849, %v4340
    %4342 = vmatpush1.msra.mxu0 %v4341
    %v4343 = vand.u32 %v3847, 4294901760
    %v4344 = vsub.f32 %v3847, %v4343
    %4345 = vmatprep.subr.mxu0 %v4344
    %v4346 = vand.u32 %v3846, 4294901760
    %v4347 = vsub.f32 %v3846, %v4346
    %4348 = vmatpush1.msra.mxu0 %v4347
    %v4349 = vand.u32 %v3844, 4294901760
    %v4350 = vsub.f32 %v3844, %v4349
    %4351 = vmatprep.subr.mxu0 %v4350
    %v4352 = vand.u32 %v3843, 4294901760
    %v4353 = vsub.f32 %v3843, %v4352
    %4354 = vmatpush1.msra.mxu0 %v4353
    %v4355 = vand.u32 %v3841, 4294901760
    %v4356 = vsub.f32 %v3841, %v4355
    %4357 = vmatprep.subr.mxu0 %v4356
    %v4358 = vand.u32 %v3840, 4294901760
    %v4359 = vsub.f32 %v3840, %v4358
    %4360 = vmatpush1.msra.mxu0 %v4359
    %v4361 = vand.u32 %v3838, 4294901760
    %v4362 = vsub.f32 %v3838, %v4361
    %4363 = vmatprep.subr.mxu0 %v4362
    %v4364 = vand.u32 %v3837, 4294901760
    %v4365 = vsub.f32 %v3837, %v4364
    %4366 = vmatpush1.msra.mxu0 %v4365
    %v4367 = vand.u32 %v3835, 4294901760
    %v4368 = vsub.f32 %v3835, %v4367
    %4369 = vmatprep.subr.mxu0 %v4368
    %v4370 = vand.u32 %v3834, 4294901760
    %v4371 = vsub.f32 %v3834, %v4370
    %4372 = vmatpush1.msra.mxu0 %v4371
    %v4373 = vand.u32 %v3832, 4294901760
    %v4374 = vsub.f32 %v3832, %v4373
    %4375 = vmatprep.subr.mxu0 %v4374
    %v4376 = vand.u32 %v3831, 4294901760
    %v4377 = vsub.f32 %v3831, %v4376
    %4378 = vmatpush1.msra.mxu0 %v4377
    %v4379 = vand.u32 %v3829, 4294901760
    %v4380 = vsub.f32 %v3829, %v4379
    %4381 = vmatprep.subr.mxu0 %v4380
    %v4382 = vand.u32 %v3828, 4294901760
    %v4383 = vsub.f32 %v3828, %v4382
    %4384 = vmatpush1.msra.mxu0 %v4383
    %v4385 = vand.u32 %v3826, 4294901760
    %v4386 = vsub.f32 %v3826, %v4385
    %4387 = vmatprep.subr.mxu0 %v4386
    %v4388 = vand.u32 %v3825, 4294901760
    %v4389 = vsub.f32 %v3825, %v4388
    %4390 = vmatpush1.msra.mxu0 %v4389
    %4391 = vmatprep.subr.mxu0 0.0
    %4392 = vmatpush2.msra.mxu0 0.0
    %4393 = vmatprep.subr.mxu0 0.0
    %4394 = vmatpush2.msra.mxu0 0.0
    %4395 = vmatprep.subr.mxu0 0.0
    %4396 = vmatpush2.msra.mxu0 0.0
    %4397 = vmatprep.subr.mxu0 0.0
    %4398 = vmatpush2.msra.mxu0 0.0
    %4399 = vmatprep.subr.mxu0 0.0
    %4400 = vmatpush2.msra.mxu0 0.0
    %4401 = vmatprep.subr.mxu0 0.0
    %4402 = vmatpush2.msra.mxu0 0.0
    %4403 = vmatprep.subr.mxu0 0.0
    %4404 = vmatpush2.msra.mxu0 0.0
    %4405 = vmatprep.subr.mxu0 0.0
    %4406 = vmatpush2.msra.mxu0 0.0
    %4407 = vmatprep.subr.mxu0 0.0
    %4408 = vmatpush2.msra.mxu0 0.0
    %4409 = vmatprep.subr.mxu0 0.0
    %4410 = vmatpush2.msra.mxu0 0.0
    %4411 = vmatprep.subr.mxu0 0.0
    %4412 = vmatpush2.msra.mxu0 0.0
    %4413 = vmatprep.subr.mxu0 0.0
    %4414 = vmatpush2.msra.mxu0 0.0
    %v4415 = vand.u32 %v3883, 4294901760
    %v4416 = vsub.f32 %v3883, %v4415
    %4417 = vmatprep.subr.mxu0 %v4416
    %v4418 = vand.u32 %v3882, 4294901760
    %v4419 = vsub.f32 %v3882, %v4418
    %4420 = vmatpush2.msra.mxu0 %v4419
    %v4421 = vand.u32 %v3880, 4294901760
    %v4422 = vsub.f32 %v3880, %v4421
    %4423 = vmatprep.subr.mxu0 %v4422
    %v4424 = vand.u32 %v3879, 4294901760
    %v4425 = vsub.f32 %v3879, %v4424
    %4426 = vmatpush2.msra.mxu0 %v4425
    %v4427 = vand.u32 %v3877, 4294901760
    %v4428 = vsub.f32 %v3877, %v4427
    %4429 = vmatprep.subr.mxu0 %v4428
    %v4430 = vand.u32 %v3876, 4294901760
    %v4431 = vsub.f32 %v3876, %v4430
    %4432 = vmatpush2.msra.mxu0 %v4431
    %v4433 = vand.u32 %v3874, 4294901760
    %v4434 = vsub.f32 %v3874, %v4433
    %4435 = vmatprep.subr.mxu0 %v4434
    %v4436 = vand.u32 %v3873, 4294901760
    %v4437 = vsub.f32 %v3873, %v4436
    %4438 = vmatpush2.msra.mxu0 %v4437
    %v4439 = vand.u32 %v3899, 4294901760
    %v4440 = vsub.f32 %v3899, %v4439
    %4441 = vmatprep.mubr.f32.mxu0 %v4440
    %v4442 = vand.u32 %v3823, 4294901760
    %v4443 = vsub.f32 %v3823, %v4442
    %4444 = vmatmul.mubr.f32.gmra.mxu0 %v4443
    %v4445 = vpop.f32.mrf.mxu0
    %v4446 = vadd.f32 %v4291, %v4445
    %v4447 = vpop.f32.mrf.mxu0
    %v4448 = vadd.f32 %v4293, %v4447
    %4449 = vdwg.mxu0
    %v4450 = vand.u32 %v3871, 4294901760
    %4451 = vmatprep.subr.mxu0 %v4450
    %v4452 = vand.u32 %v3870, 4294901760
    %4453 = vmatpush1.msra.mxu0 %v4452
    %v4454 = vand.u32 %v3868, 4294901760
    %4455 = vmatprep.subr.mxu0 %v4454
    %v4456 = vand.u32 %v3867, 4294901760
    %4457 = vmatpush1.msra.mxu0 %v4456
    %v4458 = vand.u32 %v3865, 4294901760
    %4459 = vmatprep.subr.mxu0 %v4458
    %v4460 = vand.u32 %v3864, 4294901760
    %4461 = vmatpush1.msra.mxu0 %v4460
    %v4462 = vand.u32 %v3862, 4294901760
    %4463 = vmatprep.subr.mxu0 %v4462
    %v4464 = vand.u32 %v3861, 4294901760
    %4465 = vmatpush1.msra.mxu0 %v4464
    %v4466 = vand.u32 %v3859, 4294901760
    %4467 = vmatprep.subr.mxu0 %v4466
    %v4468 = vand.u32 %v3858, 4294901760
    %4469 = vmatpush1.msra.mxu0 %v4468
    %v4470 = vand.u32 %v3856, 4294901760
    %4471 = vmatprep.subr.mxu0 %v4470
    %v4472 = vand.u32 %v3855, 4294901760
    %4473 = vmatpush1.msra.mxu0 %v4472
    %v4474 = vand.u32 %v3853, 4294901760
    %4475 = vmatprep.subr.mxu0 %v4474
    %v4476 = vand.u32 %v3852, 4294901760
    %4477 = vmatpush1.msra.mxu0 %v4476
    %v4478 = vand.u32 %v3850, 4294901760
    %4479 = vmatprep.subr.mxu0 %v4478
    %v4480 = vand.u32 %v3849, 4294901760
    %4481 = vmatpush1.msra.mxu0 %v4480
    %v4482 = vand.u32 %v3847, 4294901760
    %4483 = vmatprep.subr.mxu0 %v4482
    %v4484 = vand.u32 %v3846, 4294901760
    %4485 = vmatpush1.msra.mxu0 %v4484
    %v4486 = vand.u32 %v3844, 4294901760
    %4487 = vmatprep.subr.mxu0 %v4486
    %v4488 = vand.u32 %v3843, 4294901760
    %4489 = vmatpush1.msra.mxu0 %v4488
    %v4490 = vand.u32 %v3841, 4294901760
    %4491 = vmatprep.subr.mxu0 %v4490
    %v4492 = vand.u32 %v3840, 4294901760
    %4493 = vmatpush1.msra.mxu0 %v4492
    %v4494 = vand.u32 %v3838, 4294901760
    %4495 = vmatprep.subr.mxu0 %v4494
    %v4496 = vand.u32 %v3837, 4294901760
    %4497 = vmatpush1.msra.mxu0 %v4496
    %v4498 = vand.u32 %v3835, 4294901760
    %4499 = vmatprep.subr.mxu0 %v4498
    %v4500 = vand.u32 %v3834, 4294901760
    %4501 = vmatpush1.msra.mxu0 %v4500
    %v4502 = vand.u32 %v3832, 4294901760
    %4503 = vmatprep.subr.mxu0 %v4502
    %v4504 = vand.u32 %v3831, 4294901760
    %4505 = vmatpush1.msra.mxu0 %v4504
    %v4506 = vand.u32 %v3829, 4294901760
    %4507 = vmatprep.subr.mxu0 %v4506
    %v4508 = vand.u32 %v3828, 4294901760
    %4509 = vmatpush1.msra.mxu0 %v4508
    %v4510 = vand.u32 %v3826, 4294901760
    %4511 = vmatprep.subr.mxu0 %v4510
    %v4512 = vand.u32 %v3825, 4294901760
    %4513 = vmatpush1.msra.mxu0 %v4512
    %4514 = vmatprep.subr.mxu0 0.0
    %4515 = vmatpush2.msra.mxu0 0.0
    %4516 = vmatprep.subr.mxu0 0.0
    %4517 = vmatpush2.msra.mxu0 0.0
    %4518 = vmatprep.subr.mxu0 0.0
    %4519 = vmatpush2.msra.mxu0 0.0
    %4520 = vmatprep.subr.mxu0 0.0
    %4521 = vmatpush2.msra.mxu0 0.0
    %4522 = vmatprep.subr.mxu0 0.0
    %4523 = vmatpush2.msra.mxu0 0.0
    %4524 = vmatprep.subr.mxu0 0.0
    %4525 = vmatpush2.msra.mxu0 0.0
    %4526 = vmatprep.subr.mxu0 0.0
    %4527 = vmatpush2.msra.mxu0 0.0
    %4528 = vmatprep.subr.mxu0 0.0
    %4529 = vmatpush2.msra.mxu0 0.0
    %4530 = vmatprep.subr.mxu0 0.0
    %4531 = vmatpush2.msra.mxu0 0.0
    %4532 = vmatprep.subr.mxu0 0.0
    %4533 = vmatpush2.msra.mxu0 0.0
    %4534 = vmatprep.subr.mxu0 0.0
    %4535 = vmatpush2.msra.mxu0 0.0
    %4536 = vmatprep.subr.mxu0 0.0
    %4537 = vmatpush2.msra.mxu0 0.0
    %v4538 = vand.u32 %v3883, 4294901760
    %4539 = vmatprep.subr.mxu0 %v4538
    %v4540 = vand.u32 %v3882, 4294901760
    %4541 = vmatpush2.msra.mxu0 %v4540
    %v4542 = vand.u32 %v3880, 4294901760
    %4543 = vmatprep.subr.mxu0 %v4542
    %v4544 = vand.u32 %v3879, 4294901760
    %4545 = vmatpush2.msra.mxu0 %v4544
    %v4546 = vand.u32 %v3877, 4294901760
    %4547 = vmatprep.subr.mxu0 %v4546
    %v4548 = vand.u32 %v3876, 4294901760
    %4549 = vmatpush2.msra.mxu0 %v4548
    %v4550 = vand.u32 %v3874, 4294901760
    %4551 = vmatprep.subr.mxu0 %v4550
    %v4552 = vand.u32 %v3873, 4294901760
    %4553 = vmatpush2.msra.mxu0 %v4552
    %v4554 = vand.u32 %v3899, 4294901760
    %v4555 = vsub.f32 %v3899, %v4554
    %v4556 = vand.u32 %v4555, 4294901760
    %4557 = vmatprep.mubr.f32.mxu0 %v4556
    %v4558 = vand.u32 %v3823, 4294901760
    %v4559 = vsub.f32 %v3823, %v4558
    %v4560 = vand.u32 %v4559, 4294901760
    %4561 = vmatmul.mubr.f32.gmra.mxu0 %v4560
    %v4562 = vpop.f32.mrf.mxu0
    %v4563 = vadd.f32 %v4446, %v4562
    %v4564 = vpop.f32.mrf.mxu0
    %v4565 = vadd.f32 %v4448, %v4564
    %4566 = vdwg.mxu0
    %v4567 = vand.u32 %v3871, 4294901760
    %v4568 = vsub.f32 %v3871, %v4567
    %v4569 = vand.u32 %v4568, 4294901760
    %4570 = vmatprep.subr.mxu0 %v4569
    %v4571 = vand.u32 %v3870, 4294901760
    %v4572 = vsub.f32 %v3870, %v4571
    %v4573 = vand.u32 %v4572, 4294901760
    %4574 = vmatpush1.msra.mxu0 %v4573
    %v4575 = vand.u32 %v3868, 4294901760
    %v4576 = vsub.f32 %v3868, %v4575
    %v4577 = vand.u32 %v4576, 4294901760
    %4578 = vmatprep.subr.mxu0 %v4577
    %v4579 = vand.u32 %v3867, 4294901760
    %v4580 = vsub.f32 %v3867, %v4579
    %v4581 = vand.u32 %v4580, 4294901760
    %4582 = vmatpush1.msra.mxu0 %v4581
    %v4583 = vand.u32 %v3865, 4294901760
    %v4584 = vsub.f32 %v3865, %v4583
    %v4585 = vand.u32 %v4584, 4294901760
    %4586 = vmatprep.subr.mxu0 %v4585
    %v4587 = vand.u32 %v3864, 4294901760
    %v4588 = vsub.f32 %v3864, %v4587
    %v4589 = vand.u32 %v4588, 4294901760
    %4590 = vmatpush1.msra.mxu0 %v4589
    %v4591 = vand.u32 %v3862, 4294901760
    %v4592 = vsub.f32 %v3862, %v4591
    %v4593 = vand.u32 %v4592, 4294901760
    %4594 = vmatprep.subr.mxu0 %v4593
    %v4595 = vand.u32 %v3861, 4294901760
    %v4596 = vsub.f32 %v3861, %v4595
    %v4597 = vand.u32 %v4596, 4294901760
    %4598 = vmatpush1.msra.mxu0 %v4597
    %v4599 = vand.u32 %v3859, 4294901760
    %v4600 = vsub.f32 %v3859, %v4599
    %v4601 = vand.u32 %v4600, 4294901760
    %4602 = vmatprep.subr.mxu0 %v4601
    %v4603 = vand.u32 %v3858, 4294901760
    %v4604 = vsub.f32 %v3858, %v4603
    %v4605 = vand.u32 %v4604, 4294901760
    %4606 = vmatpush1.msra.mxu0 %v4605
    %v4607 = vand.u32 %v3856, 4294901760
    %v4608 = vsub.f32 %v3856, %v4607
    %v4609 = vand.u32 %v4608, 4294901760
    %4610 = vmatprep.subr.mxu0 %v4609
    %v4611 = vand.u32 %v3855, 4294901760
    %v4612 = vsub.f32 %v3855, %v4611
    %v4613 = vand.u32 %v4612, 4294901760
    %4614 = vmatpush1.msra.mxu0 %v4613
    %v4615 = vand.u32 %v3853, 4294901760
    %v4616 = vsub.f32 %v3853, %v4615
    %v4617 = vand.u32 %v4616, 4294901760
    %4618 = vmatprep.subr.mxu0 %v4617
    %v4619 = vand.u32 %v3852, 4294901760
    %v4620 = vsub.f32 %v3852, %v4619
    %v4621 = vand.u32 %v4620, 4294901760
    %4622 = vmatpush1.msra.mxu0 %v4621
    %v4623 = vand.u32 %v3850, 4294901760
    %v4624 = vsub.f32 %v3850, %v4623
    %v4625 = vand.u32 %v4624, 4294901760
    %4626 = vmatprep.subr.mxu0 %v4625
    %v4627 = vand.u32 %v3849, 4294901760
    %v4628 = vsub.f32 %v3849, %v4627
    %v4629 = vand.u32 %v4628, 4294901760
    %4630 = vmatpush1.msra.mxu0 %v4629
    %v4631 = vand.u32 %v3847, 4294901760
    %v4632 = vsub.f32 %v3847, %v4631
    %v4633 = vand.u32 %v4632, 4294901760
    %4634 = vmatprep.subr.mxu0 %v4633
    %v4635 = vand.u32 %v3846, 4294901760
    %v4636 = vsub.f32 %v3846, %v4635
    %v4637 = vand.u32 %v4636, 4294901760
    %4638 = vmatpush1.msra.mxu0 %v4637
    %v4639 = vand.u32 %v3844, 4294901760
    %v4640 = vsub.f32 %v3844, %v4639
    %v4641 = vand.u32 %v4640, 4294901760
    %4642 = vmatprep.subr.mxu0 %v4641
    %v4643 = vand.u32 %v3843, 4294901760
    %v4644 = vsub.f32 %v3843, %v4643
    %v4645 = vand.u32 %v4644, 4294901760
    %4646 = vmatpush1.msra.mxu0 %v4645
    %v4647 = vand.u32 %v3841, 4294901760
    %v4648 = vsub.f32 %v3841, %v4647
    %v4649 = vand.u32 %v4648, 4294901760
    %4650 = vmatprep.subr.mxu0 %v4649
    %v4651 = vand.u32 %v3840, 4294901760
    %v4652 = vsub.f32 %v3840, %v4651
    %v4653 = vand.u32 %v4652, 4294901760
    %4654 = vmatpush1.msra.mxu0 %v4653
    %v4655 = vand.u32 %v3838, 4294901760
    %v4656 = vsub.f32 %v3838, %v4655
    %v4657 = vand.u32 %v4656, 4294901760
    %4658 = vmatprep.subr.mxu0 %v4657
    %v4659 = vand.u32 %v3837, 4294901760
    %v4660 = vsub.f32 %v3837, %v4659
    %v4661 = vand.u32 %v4660, 4294901760
    %4662 = vmatpush1.msra.mxu0 %v4661
    %v4663 = vand.u32 %v3835, 4294901760
    %v4664 = vsub.f32 %v3835, %v4663
    %v4665 = vand.u32 %v4664, 4294901760
    %4666 = vmatprep.subr.mxu0 %v4665
    %v4667 = vand.u32 %v3834, 4294901760
    %v4668 = vsub.f32 %v3834, %v4667
    %v4669 = vand.u32 %v4668, 4294901760
    %4670 = vmatpush1.msra.mxu0 %v4669
    %v4671 = vand.u32 %v3832, 4294901760
    %v4672 = vsub.f32 %v3832, %v4671
    %v4673 = vand.u32 %v4672, 4294901760
    %4674 = vmatprep.subr.mxu0 %v4673
    %v4675 = vand.u32 %v3831, 4294901760
    %v4676 = vsub.f32 %v3831, %v4675
    %v4677 = vand.u32 %v4676, 4294901760
    %4678 = vmatpush1.msra.mxu0 %v4677
    %v4679 = vand.u32 %v3829, 4294901760
    %v4680 = vsub.f32 %v3829, %v4679
    %v4681 = vand.u32 %v4680, 4294901760
    %4682 = vmatprep.subr.mxu0 %v4681
    %v4683 = vand.u32 %v3828, 4294901760
    %v4684 = vsub.f32 %v3828, %v4683
    %v4685 = vand.u32 %v4684, 4294901760
    %4686 = vmatpush1.msra.mxu0 %v4685
    %v4687 = vand.u32 %v3826, 4294901760
    %v4688 = vsub.f32 %v3826, %v4687
    %v4689 = vand.u32 %v4688, 4294901760
    %4690 = vmatprep.subr.mxu0 %v4689
    %v4691 = vand.u32 %v3825, 4294901760
    %v4692 = vsub.f32 %v3825, %v4691
    %v4693 = vand.u32 %v4692, 4294901760
    %4694 = vmatpush1.msra.mxu0 %v4693
    %4695 = vmatprep.subr.mxu0 0.0
    %4696 = vmatpush2.msra.mxu0 0.0
    %4697 = vmatprep.subr.mxu0 0.0
    %4698 = vmatpush2.msra.mxu0 0.0
    %4699 = vmatprep.subr.mxu0 0.0
    %4700 = vmatpush2.msra.mxu0 0.0
    %4701 = vmatprep.subr.mxu0 0.0
    %4702 = vmatpush2.msra.mxu0 0.0
    %4703 = vmatprep.subr.mxu0 0.0
    %4704 = vmatpush2.msra.mxu0 0.0
    %4705 = vmatprep.subr.mxu0 0.0
    %4706 = vmatpush2.msra.mxu0 0.0
    %4707 = vmatprep.subr.mxu0 0.0
    %4708 = vmatpush2.msra.mxu0 0.0
    %4709 = vmatprep.subr.mxu0 0.0
    %4710 = vmatpush2.msra.mxu0 0.0
    %4711 = vmatprep.subr.mxu0 0.0
    %4712 = vmatpush2.msra.mxu0 0.0
    %4713 = vmatprep.subr.mxu0 0.0
    %4714 = vmatpush2.msra.mxu0 0.0
    %4715 = vmatprep.subr.mxu0 0.0
    %4716 = vmatpush2.msra.mxu0 0.0
    %4717 = vmatprep.subr.mxu0 0.0
    %4718 = vmatpush2.msra.mxu0 0.0
    %v4719 = vand.u32 %v3883, 4294901760
    %v4720 = vsub.f32 %v3883, %v4719
    %v4721 = vand.u32 %v4720, 4294901760
    %4722 = vmatprep.subr.mxu0 %v4721
    %v4723 = vand.u32 %v3882, 4294901760
    %v4724 = vsub.f32 %v3882, %v4723
    %v4725 = vand.u32 %v4724, 4294901760
    %4726 = vmatpush2.msra.mxu0 %v4725
    %v4727 = vand.u32 %v3880, 4294901760
    %v4728 = vsub.f32 %v3880, %v4727
    %v4729 = vand.u32 %v4728, 4294901760
    %4730 = vmatprep.subr.mxu0 %v4729
    %v4731 = vand.u32 %v3879, 4294901760
    %v4732 = vsub.f32 %v3879, %v4731
    %v4733 = vand.u32 %v4732, 4294901760
    %4734 = vmatpush2.msra.mxu0 %v4733
    %v4735 = vand.u32 %v3877, 4294901760
    %v4736 = vsub.f32 %v3877, %v4735
    %v4737 = vand.u32 %v4736, 4294901760
    %4738 = vmatprep.subr.mxu0 %v4737
    %v4739 = vand.u32 %v3876, 4294901760
    %v4740 = vsub.f32 %v3876, %v4739
    %v4741 = vand.u32 %v4740, 4294901760
    %4742 = vmatpush2.msra.mxu0 %v4741
    %v4743 = vand.u32 %v3874, 4294901760
    %v4744 = vsub.f32 %v3874, %v4743
    %v4745 = vand.u32 %v4744, 4294901760
    %4746 = vmatprep.subr.mxu0 %v4745
    %v4747 = vand.u32 %v3873, 4294901760
    %v4748 = vsub.f32 %v3873, %v4747
    %v4749 = vand.u32 %v4748, 4294901760
    %4750 = vmatpush2.msra.mxu0 %v4749
    %v4751 = vand.u32 %v3899, 4294901760
    %4752 = vmatprep.mubr.f32.mxu0 %v4751
    %v4753 = vand.u32 %v3823, 4294901760
    %4754 = vmatmul.mubr.f32.gmra.mxu0 %v4753
    %v4755 = vpop.f32.mrf.mxu0
    %v4756 = vadd.f32 %v4563, %v4755
    %v4757 = vpop.f32.mrf.mxu0
    %v4758 = vadd.f32 %v4565, %v4757
    %4759 = vdwg.mxu0
    %v4760 = vand.u32 %v3871, 4294901760
    %4761 = vmatprep.subr.mxu0 %v4760
    %v4762 = vand.u32 %v3870, 4294901760
    %4763 = vmatpush1.msra.mxu0 %v4762
    %v4764 = vand.u32 %v3868, 4294901760
    %4765 = vmatprep.subr.mxu0 %v4764
    %v4766 = vand.u32 %v3867, 4294901760
    %4767 = vmatpush1.msra.mxu0 %v4766
    %v4768 = vand.u32 %v3865, 4294901760
    %4769 = vmatprep.subr.mxu0 %v4768
    %v4770 = vand.u32 %v3864, 4294901760
    %4771 = vmatpush1.msra.mxu0 %v4770
    %v4772 = vand.u32 %v3862, 4294901760
    %4773 = vmatprep.subr.mxu0 %v4772
    %v4774 = vand.u32 %v3861, 4294901760
    %4775 = vmatpush1.msra.mxu0 %v4774
    %v4776 = vand.u32 %v3859, 4294901760
    %4777 = vmatprep.subr.mxu0 %v4776
    %v4778 = vand.u32 %v3858, 4294901760
    %4779 = vmatpush1.msra.mxu0 %v4778
    %v4780 = vand.u32 %v3856, 4294901760
    %4781 = vmatprep.subr.mxu0 %v4780
    %v4782 = vand.u32 %v3855, 4294901760
    %4783 = vmatpush1.msra.mxu0 %v4782
    %v4784 = vand.u32 %v3853, 4294901760
    %4785 = vmatprep.subr.mxu0 %v4784
    %v4786 = vand.u32 %v3852, 4294901760
    %4787 = vmatpush1.msra.mxu0 %v4786
    %v4788 = vand.u32 %v3850, 4294901760
    %4789 = vmatprep.subr.mxu0 %v4788
    %v4790 = vand.u32 %v3849, 4294901760
    %4791 = vmatpush1.msra.mxu0 %v4790
    %v4792 = vand.u32 %v3847, 4294901760
    %4793 = vmatprep.subr.mxu0 %v4792
    %v4794 = vand.u32 %v3846, 4294901760
    %4795 = vmatpush1.msra.mxu0 %v4794
    %v4796 = vand.u32 %v3844, 4294901760
    %4797 = vmatprep.subr.mxu0 %v4796
    %v4798 = vand.u32 %v3843, 4294901760
    %4799 = vmatpush1.msra.mxu0 %v4798
    %v4800 = vand.u32 %v3841, 4294901760
    %4801 = vmatprep.subr.mxu0 %v4800
    %v4802 = vand.u32 %v3840, 4294901760
    %4803 = vmatpush1.msra.mxu0 %v4802
    %v4804 = vand.u32 %v3838, 4294901760
    %4805 = vmatprep.subr.mxu0 %v4804
    %v4806 = vand.u32 %v3837, 4294901760
    %4807 = vmatpush1.msra.mxu0 %v4806
    %v4808 = vand.u32 %v3835, 4294901760
    %4809 = vmatprep.subr.mxu0 %v4808
    %v4810 = vand.u32 %v3834, 4294901760
    %4811 = vmatpush1.msra.mxu0 %v4810
    %v4812 = vand.u32 %v3832, 4294901760
    %4813 = vmatprep.subr.mxu0 %v4812
    %v4814 = vand.u32 %v3831, 4294901760
    %4815 = vmatpush1.msra.mxu0 %v4814
    %v4816 = vand.u32 %v3829, 4294901760
    %4817 = vmatprep.subr.mxu0 %v4816
    %v4818 = vand.u32 %v3828, 4294901760
    %4819 = vmatpush1.msra.mxu0 %v4818
    %v4820 = vand.u32 %v3826, 4294901760
    %4821 = vmatprep.subr.mxu0 %v4820
    %v4822 = vand.u32 %v3825, 4294901760
    %4823 = vmatpush1.msra.mxu0 %v4822
    %4824 = vmatprep.subr.mxu0 0.0
    %4825 = vmatpush2.msra.mxu0 0.0
    %4826 = vmatprep.subr.mxu0 0.0
    %4827 = vmatpush2.msra.mxu0 0.0
    %4828 = vmatprep.subr.mxu0 0.0
    %4829 = vmatpush2.msra.mxu0 0.0
    %4830 = vmatprep.subr.mxu0 0.0
    %4831 = vmatpush2.msra.mxu0 0.0
    %4832 = vmatprep.subr.mxu0 0.0
    %4833 = vmatpush2.msra.mxu0 0.0
    %4834 = vmatprep.subr.mxu0 0.0
    %4835 = vmatpush2.msra.mxu0 0.0
    %4836 = vmatprep.subr.mxu0 0.0
    %4837 = vmatpush2.msra.mxu0 0.0
    %4838 = vmatprep.subr.mxu0 0.0
    %4839 = vmatpush2.msra.mxu0 0.0
    %4840 = vmatprep.subr.mxu0 0.0
    %4841 = vmatpush2.msra.mxu0 0.0
    %4842 = vmatprep.subr.mxu0 0.0
    %4843 = vmatpush2.msra.mxu0 0.0
    %4844 = vmatprep.subr.mxu0 0.0
    %4845 = vmatpush2.msra.mxu0 0.0
    %4846 = vmatprep.subr.mxu0 0.0
    %4847 = vmatpush2.msra.mxu0 0.0
    %v4848 = vand.u32 %v3883, 4294901760
    %4849 = vmatprep.subr.mxu0 %v4848
    %v4850 = vand.u32 %v3882, 4294901760
    %4851 = vmatpush2.msra.mxu0 %v4850
    %v4852 = vand.u32 %v3880, 4294901760
    %4853 = vmatprep.subr.mxu0 %v4852
    %v4854 = vand.u32 %v3879, 4294901760
    %4855 = vmatpush2.msra.mxu0 %v4854
    %v4856 = vand.u32 %v3877, 4294901760
    %4857 = vmatprep.subr.mxu0 %v4856
    %v4858 = vand.u32 %v3876, 4294901760
    %4859 = vmatpush2.msra.mxu0 %v4858
    %v4860 = vand.u32 %v3874, 4294901760
    %4861 = vmatprep.subr.mxu0 %v4860
    %v4862 = vand.u32 %v3873, 4294901760
    %4863 = vmatpush2.msra.mxu0 %v4862
    %v4864 = vand.u32 %v3899, 4294901760
    %4865 = vmatprep.mubr.f32.mxu0 %v4864
    %v4866 = vand.u32 %v3823, 4294901760
    %4867 = vmatmul.mubr.f32.gmra.mxu0 %v4866
    %v4868 = vpop.f32.mrf.mxu0
    %v4869 = vadd.f32 %v4756, %v4868
    %v4870 = vpop.f32.mrf.mxu0
    %v4871 = vadd.f32 %v4758, %v4870
    %4872 = vdwg.mxu0
    %4873 = vmatprep.subr.mxu0 0.0
    %v4874 = vand.u32 %v3872, 4294901760
    %4875 = vmatpush1.msra.mxu0 %v4874
    %4876 = vmatprep.subr.mxu0 0.0
    %v4877 = vand.u32 %v3869, 4294901760
    %4878 = vmatpush1.msra.mxu0 %v4877
    %4879 = vmatprep.subr.mxu0 0.0
    %v4880 = vand.u32 %v3866, 4294901760
    %4881 = vmatpush1.msra.mxu0 %v4880
    %4882 = vmatprep.subr.mxu0 0.0
    %v4883 = vand.u32 %v3863, 4294901760
    %4884 = vmatpush1.msra.mxu0 %v4883
    %4885 = vmatprep.subr.mxu0 0.0
    %v4886 = vand.u32 %v3860, 4294901760
    %4887 = vmatpush1.msra.mxu0 %v4886
    %4888 = vmatprep.subr.mxu0 0.0
    %v4889 = vand.u32 %v3857, 4294901760
    %4890 = vmatpush1.msra.mxu0 %v4889
    %4891 = vmatprep.subr.mxu0 0.0
    %v4892 = vand.u32 %v3854, 4294901760
    %4893 = vmatpush1.msra.mxu0 %v4892
    %4894 = vmatprep.subr.mxu0 0.0
    %v4895 = vand.u32 %v3851, 4294901760
    %4896 = vmatpush1.msra.mxu0 %v4895
    %4897 = vmatprep.subr.mxu0 0.0
    %v4898 = vand.u32 %v3848, 4294901760
    %4899 = vmatpush1.msra.mxu0 %v4898
    %4900 = vmatprep.subr.mxu0 0.0
    %v4901 = vand.u32 %v3845, 4294901760
    %4902 = vmatpush1.msra.mxu0 %v4901
    %4903 = vmatprep.subr.mxu0 0.0
    %v4904 = vand.u32 %v3842, 4294901760
    %4905 = vmatpush1.msra.mxu0 %v4904
    %4906 = vmatprep.subr.mxu0 0.0
    %v4907 = vand.u32 %v3839, 4294901760
    %4908 = vmatpush1.msra.mxu0 %v4907
    %4909 = vmatprep.subr.mxu0 0.0
    %v4910 = vand.u32 %v3836, 4294901760
    %4911 = vmatpush1.msra.mxu0 %v4910
    %4912 = vmatprep.subr.mxu0 0.0
    %v4913 = vand.u32 %v3833, 4294901760
    %4914 = vmatpush1.msra.mxu0 %v4913
    %4915 = vmatprep.subr.mxu0 0.0
    %v4916 = vand.u32 %v3830, 4294901760
    %4917 = vmatpush1.msra.mxu0 %v4916
    %4918 = vmatprep.subr.mxu0 0.0
    %v4919 = vand.u32 %v3827, 4294901760
    %4920 = vmatpush1.msra.mxu0 %v4919
    %4921 = vmatprep.subr.mxu0 0.0
    %4922 = vmatpush2.msra.mxu0 0.0
    %4923 = vmatprep.subr.mxu0 0.0
    %4924 = vmatpush2.msra.mxu0 0.0
    %4925 = vmatprep.subr.mxu0 0.0
    %4926 = vmatpush2.msra.mxu0 0.0
    %4927 = vmatprep.subr.mxu0 0.0
    %4928 = vmatpush2.msra.mxu0 0.0
    %4929 = vmatprep.subr.mxu0 0.0
    %4930 = vmatpush2.msra.mxu0 0.0
    %4931 = vmatprep.subr.mxu0 0.0
    %4932 = vmatpush2.msra.mxu0 0.0
    %4933 = vmatprep.subr.mxu0 0.0
    %4934 = vmatpush2.msra.mxu0 0.0
    %4935 = vmatprep.subr.mxu0 0.0
    %4936 = vmatpush2.msra.mxu0 0.0
    %4937 = vmatprep.subr.mxu0 0.0
    %4938 = vmatpush2.msra.mxu0 0.0
    %4939 = vmatprep.subr.mxu0 0.0
    %4940 = vmatpush2.msra.mxu0 0.0
    %4941 = vmatprep.subr.mxu0 0.0
    %4942 = vmatpush2.msra.mxu0 0.0
    %4943 = vmatprep.subr.mxu0 0.0
    %4944 = vmatpush2.msra.mxu0 0.0
    %4945 = vmatprep.subr.mxu0 0.0
    %v4946 = vand.u32 %v3884, 4294901760
    %4947 = vmatpush2.msra.mxu0 %v4946
    %4948 = vmatprep.subr.mxu0 0.0
    %v4949 = vand.u32 %v3881, 4294901760
    %4950 = vmatpush2.msra.mxu0 %v4949
    %4951 = vmatprep.subr.mxu0 0.0
    %v4952 = vand.u32 %v3878, 4294901760
    %4953 = vmatpush2.msra.mxu0 %v4952
    %4954 = vmatprep.subr.mxu0 0.0
    %v4955 = vand.u32 %v3875, 4294901760
    %4956 = vmatpush2.msra.mxu0 %v4955
    %v4957 = vand.u32 %v3899, 4294901760
    %v4958 = vsub.f32 %v3899, %v4957
    %v4959 = vand.u32 %v4958, 4294901760
    %v4960 = vsub.f32 %v4958, %v4959
    %v4961 = vand.u32 %v4960, 4294901760
    %4962 = vmatprep.mubr.f32.mxu0 %v4961
    %v4963 = vand.u32 %v3823, 4294901760
    %v4964 = vsub.f32 %v3823, %v4963
    %v4965 = vand.u32 %v4964, 4294901760
    %v4966 = vsub.f32 %v4964, %v4965
    %v4967 = vand.u32 %v4966, 4294901760
    %4968 = vmatmul.mubr.f32.gmra.mxu0 %v4967
    %v4969 = vpop.f32.mrf.mxu0
    %v4970 = vadd.f32 %v3896, %v4969
    %v4971 = vpop.f32.mrf.mxu0
    %4972 = vdwg.mxu0
    %4973 = vmatprep.subr.mxu0 0.0
    %v4974 = vand.u32 %v3872, 4294901760
    %v4975 = vsub.f32 %v3872, %v4974
    %v4976 = vand.u32 %v4975, 4294901760
    %v4977 = vsub.f32 %v4975, %v4976
    %v4978 = vand.u32 %v4977, 4294901760
    %4979 = vmatpush1.msra.mxu0 %v4978
    %4980 = vmatprep.subr.mxu0 0.0
    %v4981 = vand.u32 %v3869, 4294901760
    %v4982 = vsub.f32 %v3869, %v4981
    %v4983 = vand.u32 %v4982, 4294901760
    %v4984 = vsub.f32 %v4982, %v4983
    %v4985 = vand.u32 %v4984, 4294901760
    %4986 = vmatpush1.msra.mxu0 %v4985
    %4987 = vmatprep.subr.mxu0 0.0
    %v4988 = vand.u32 %v3866, 4294901760
    %v4989 = vsub.f32 %v3866, %v4988
    %v4990 = vand.u32 %v4989, 4294901760
    %v4991 = vsub.f32 %v4989, %v4990
    %v4992 = vand.u32 %v4991, 4294901760
    %4993 = vmatpush1.msra.mxu0 %v4992
    %4994 = vmatprep.subr.mxu0 0.0
    %v4995 = vand.u32 %v3863, 4294901760
    %v4996 = vsub.f32 %v3863, %v4995
    %v4997 = vand.u32 %v4996, 4294901760
    %v4998 = vsub.f32 %v4996, %v4997
    %v4999 = vand.u32 %v4998, 4294901760
    %5000 = vmatpush1.msra.mxu0 %v4999
    %5001 = vmatprep.subr.mxu0 0.0
    %v5002 = vand.u32 %v3860, 4294901760
    %v5003 = vsub.f32 %v3860, %v5002
    %v5004 = vand.u32 %v5003, 4294901760
    %v5005 = vsub.f32 %v5003, %v5004
    %v5006 = vand.u32 %v5005, 4294901760
    %5007 = vmatpush1.msra.mxu0 %v5006
    %5008 = vmatprep.subr.mxu0 0.0
    %v5009 = vand.u32 %v3857, 4294901760
    %v5010 = vsub.f32 %v3857, %v5009
    %v5011 = vand.u32 %v5010, 4294901760
    %v5012 = vsub.f32 %v5010, %v5011
    %v5013 = vand.u32 %v5012, 4294901760
    %5014 = vmatpush1.msra.mxu0 %v5013
    %5015 = vmatprep.subr.mxu0 0.0
    %v5016 = vand.u32 %v3854, 4294901760
    %v5017 = vsub.f32 %v3854, %v5016
    %v5018 = vand.u32 %v5017, 4294901760
    %v5019 = vsub.f32 %v5017, %v5018
    %v5020 = vand.u32 %v5019, 4294901760
    %5021 = vmatpush1.msra.mxu0 %v5020
    %5022 = vmatprep.subr.mxu0 0.0
    %v5023 = vand.u32 %v3851, 4294901760
    %v5024 = vsub.f32 %v3851, %v5023
    %v5025 = vand.u32 %v5024, 4294901760
    %v5026 = vsub.f32 %v5024, %v5025
    %v5027 = vand.u32 %v5026, 4294901760
    %5028 = vmatpush1.msra.mxu0 %v5027
    %5029 = vmatprep.subr.mxu0 0.0
    %v5030 = vand.u32 %v3848, 4294901760
    %v5031 = vsub.f32 %v3848, %v5030
    %v5032 = vand.u32 %v5031, 4294901760
    %v5033 = vsub.f32 %v5031, %v5032
    %v5034 = vand.u32 %v5033, 4294901760
    %5035 = vmatpush1.msra.mxu0 %v5034
    %5036 = vmatprep.subr.mxu0 0.0
    %v5037 = vand.u32 %v3845, 4294901760
    %v5038 = vsub.f32 %v3845, %v5037
    %v5039 = vand.u32 %v5038, 4294901760
    %v5040 = vsub.f32 %v5038, %v5039
    %v5041 = vand.u32 %v5040, 4294901760
    %5042 = vmatpush1.msra.mxu0 %v5041
    %5043 = vmatprep.subr.mxu0 0.0
    %v5044 = vand.u32 %v3842, 4294901760
    %v5045 = vsub.f32 %v3842, %v5044
    %v5046 = vand.u32 %v5045, 4294901760
    %v5047 = vsub.f32 %v5045, %v5046
    %v5048 = vand.u32 %v5047, 4294901760
    %5049 = vmatpush1.msra.mxu0 %v5048
    %5050 = vmatprep.subr.mxu0 0.0
    %v5051 = vand.u32 %v3839, 4294901760
    %v5052 = vsub.f32 %v3839, %v5051
    %v5053 = vand.u32 %v5052, 4294901760
    %v5054 = vsub.f32 %v5052, %v5053
    %v5055 = vand.u32 %v5054, 4294901760
    %5056 = vmatpush1.msra.mxu0 %v5055
    %5057 = vmatprep.subr.mxu0 0.0
    %v5058 = vand.u32 %v3836, 4294901760
    %v5059 = vsub.f32 %v3836, %v5058
    %v5060 = vand.u32 %v5059, 4294901760
    %v5061 = vsub.f32 %v5059, %v5060
    %v5062 = vand.u32 %v5061, 4294901760
    %5063 = vmatpush1.msra.mxu0 %v5062
    %5064 = vmatprep.subr.mxu0 0.0
    %v5065 = vand.u32 %v3833, 4294901760
    %v5066 = vsub.f32 %v3833, %v5065
    %v5067 = vand.u32 %v5066, 4294901760
    %v5068 = vsub.f32 %v5066, %v5067
    %v5069 = vand.u32 %v5068, 4294901760
    %5070 = vmatpush1.msra.mxu0 %v5069
    %5071 = vmatprep.subr.mxu0 0.0
    %v5072 = vand.u32 %v3830, 4294901760
    %v5073 = vsub.f32 %v3830, %v5072
    %v5074 = vand.u32 %v5073, 4294901760
    %v5075 = vsub.f32 %v5073, %v5074
    %v5076 = vand.u32 %v5075, 4294901760
    %5077 = vmatpush1.msra.mxu0 %v5076
    %5078 = vmatprep.subr.mxu0 0.0
    %v5079 = vand.u32 %v3827, 4294901760
    %v5080 = vsub.f32 %v3827, %v5079
    %v5081 = vand.u32 %v5080, 4294901760
    %v5082 = vsub.f32 %v5080, %v5081
    %v5083 = vand.u32 %v5082, 4294901760
    %5084 = vmatpush1.msra.mxu0 %v5083
    %5085 = vmatprep.subr.mxu0 0.0
    %5086 = vmatpush2.msra.mxu0 0.0
    %5087 = vmatprep.subr.mxu0 0.0
    %5088 = vmatpush2.msra.mxu0 0.0
    %5089 = vmatprep.subr.mxu0 0.0
    %5090 = vmatpush2.msra.mxu0 0.0
    %5091 = vmatprep.subr.mxu0 0.0
    %5092 = vmatpush2.msra.mxu0 0.0
    %5093 = vmatprep.subr.mxu0 0.0
    %5094 = vmatpush2.msra.mxu0 0.0
    %5095 = vmatprep.subr.mxu0 0.0
    %5096 = vmatpush2.msra.mxu0 0.0
    %5097 = vmatprep.subr.mxu0 0.0
    %5098 = vmatpush2.msra.mxu0 0.0
    %5099 = vmatprep.subr.mxu0 0.0
    %5100 = vmatpush2.msra.mxu0 0.0
    %5101 = vmatprep.subr.mxu0 0.0
    %5102 = vmatpush2.msra.mxu0 0.0
    %5103 = vmatprep.subr.mxu0 0.0
    %5104 = vmatpush2.msra.mxu0 0.0
    %5105 = vmatprep.subr.mxu0 0.0
    %5106 = vmatpush2.msra.mxu0 0.0
    %5107 = vmatprep.subr.mxu0 0.0
    %5108 = vmatpush2.msra.mxu0 0.0
    %5109 = vmatprep.subr.mxu0 0.0
    %v5110 = vand.u32 %v3884, 4294901760
    %v5111 = vsub.f32 %v3884, %v5110
    %v5112 = vand.u32 %v5111, 4294901760
    %v5113 = vsub.f32 %v5111, %v5112
    %v5114 = vand.u32 %v5113, 4294901760
    %5115 = vmatpush2.msra.mxu0 %v5114
    %5116 = vmatprep.subr.mxu0 0.0
    %v5117 = vand.u32 %v3881, 4294901760
    %v5118 = vsub.f32 %v3881, %v5117
    %v5119 = vand.u32 %v5118, 4294901760
    %v5120 = vsub.f32 %v5118, %v5119
    %v5121 = vand.u32 %v5120, 4294901760
    %5122 = vmatpush2.msra.mxu0 %v5121
    %5123 = vmatprep.subr.mxu0 0.0
    %v5124 = vand.u32 %v3878, 4294901760
    %v5125 = vsub.f32 %v3878, %v5124
    %v5126 = vand.u32 %v5125, 4294901760
    %v5127 = vsub.f32 %v5125, %v5126
    %v5128 = vand.u32 %v5127, 4294901760
    %5129 = vmatpush2.msra.mxu0 %v5128
    %5130 = vmatprep.subr.mxu0 0.0
    %v5131 = vand.u32 %v3875, 4294901760
    %v5132 = vsub.f32 %v3875, %v5131
    %v5133 = vand.u32 %v5132, 4294901760
    %v5134 = vsub.f32 %v5132, %v5133
    %v5135 = vand.u32 %v5134, 4294901760
    %5136 = vmatpush2.msra.mxu0 %v5135
    %v5137 = vand.u32 %v3899, 4294901760
    %5138 = vmatprep.mubr.f32.mxu0 %v5137
    %v5139 = vand.u32 %v3823, 4294901760
    %5140 = vmatmul.mubr.f32.gmra.mxu0 %v5139
    %v5141 = vpop.f32.mrf.mxu0
    %v5142 = vadd.f32 %v4970, %v5141
    %v5143 = vpop.f32.mrf.mxu0
    %5144 = vdwg.mxu0
    %5145 = vmatprep.subr.mxu0 0.0
    %v5146 = vand.u32 %v3872, 4294901760
    %v5147 = vsub.f32 %v3872, %v5146
    %5148 = vmatpush1.msra.mxu0 %v5147
    %5149 = vmatprep.subr.mxu0 0.0
    %v5150 = vand.u32 %v3869, 4294901760
    %v5151 = vsub.f32 %v3869, %v5150
    %5152 = vmatpush1.msra.mxu0 %v5151
    %5153 = vmatprep.subr.mxu0 0.0
    %v5154 = vand.u32 %v3866, 4294901760
    %v5155 = vsub.f32 %v3866, %v5154
    %5156 = vmatpush1.msra.mxu0 %v5155
    %5157 = vmatprep.subr.mxu0 0.0
    %v5158 = vand.u32 %v3863, 4294901760
    %v5159 = vsub.f32 %v3863, %v5158
    %5160 = vmatpush1.msra.mxu0 %v5159
    %5161 = vmatprep.subr.mxu0 0.0
    %v5162 = vand.u32 %v3860, 4294901760
    %v5163 = vsub.f32 %v3860, %v5162
    %5164 = vmatpush1.msra.mxu0 %v5163
    %5165 = vmatprep.subr.mxu0 0.0
    %v5166 = vand.u32 %v3857, 4294901760
    %v5167 = vsub.f32 %v3857, %v5166
    %5168 = vmatpush1.msra.mxu0 %v5167
    %5169 = vmatprep.subr.mxu0 0.0
    %v5170 = vand.u32 %v3854, 4294901760
    %v5171 = vsub.f32 %v3854, %v5170
    %5172 = vmatpush1.msra.mxu0 %v5171
    %5173 = vmatprep.subr.mxu0 0.0
    %v5174 = vand.u32 %v3851, 4294901760
    %v5175 = vsub.f32 %v3851, %v5174
    %5176 = vmatpush1.msra.mxu0 %v5175
    %5177 = vmatprep.subr.mxu0 0.0
    %v5178 = vand.u32 %v3848, 4294901760
    %v5179 = vsub.f32 %v3848, %v5178
    %5180 = vmatpush1.msra.mxu0 %v5179
    %5181 = vmatprep.subr.mxu0 0.0
    %v5182 = vand.u32 %v3845, 4294901760
    %v5183 = vsub.f32 %v3845, %v5182
    %5184 = vmatpush1.msra.mxu0 %v5183
    %5185 = vmatprep.subr.mxu0 0.0
    %v5186 = vand.u32 %v3842, 4294901760
    %v5187 = vsub.f32 %v3842, %v5186
    %5188 = vmatpush1.msra.mxu0 %v5187
    %5189 = vmatprep.subr.mxu0 0.0
    %v5190 = vand.u32 %v3839, 4294901760
    %v5191 = vsub.f32 %v3839, %v5190
    %5192 = vmatpush1.msra.mxu0 %v5191
    %5193 = vmatprep.subr.mxu0 0.0
    %v5194 = vand.u32 %v3836, 4294901760
    %v5195 = vsub.f32 %v3836, %v5194
    %5196 = vmatpush1.msra.mxu0 %v5195
    %5197 = vmatprep.subr.mxu0 0.0
    %v5198 = vand.u32 %v3833, 4294901760
    %v5199 = vsub.f32 %v3833, %v5198
    %5200 = vmatpush1.msra.mxu0 %v5199
    %5201 = vmatprep.subr.mxu0 0.0
    %v5202 = vand.u32 %v3830, 4294901760
    %v5203 = vsub.f32 %v3830, %v5202
    %5204 = vmatpush1.msra.mxu0 %v5203
    %5205 = vmatprep.subr.mxu0 0.0
    %v5206 = vand.u32 %v3827, 4294901760
    %v5207 = vsub.f32 %v3827, %v5206
    %5208 = vmatpush1.msra.mxu0 %v5207
    %5209 = vmatprep.subr.mxu0 0.0
    %5210 = vmatpush2.msra.mxu0 0.0
    %5211 = vmatprep.subr.mxu0 0.0
    %5212 = vmatpush2.msra.mxu0 0.0
    %5213 = vmatprep.subr.mxu0 0.0
    %5214 = vmatpush2.msra.mxu0 0.0
    %5215 = vmatprep.subr.mxu0 0.0
    %5216 = vmatpush2.msra.mxu0 0.0
    %5217 = vmatprep.subr.mxu0 0.0
    %5218 = vmatpush2.msra.mxu0 0.0
    %5219 = vmatprep.subr.mxu0 0.0
    %5220 = vmatpush2.msra.mxu0 0.0
    %5221 = vmatprep.subr.mxu0 0.0
    %5222 = vmatpush2.msra.mxu0 0.0
    %5223 = vmatprep.subr.mxu0 0.0
    %5224 = vmatpush2.msra.mxu0 0.0
    %5225 = vmatprep.subr.mxu0 0.0
    %5226 = vmatpush2.msra.mxu0 0.0
    %5227 = vmatprep.subr.mxu0 0.0
    %5228 = vmatpush2.msra.mxu0 0.0
    %5229 = vmatprep.subr.mxu0 0.0
    %5230 = vmatpush2.msra.mxu0 0.0
    %5231 = vmatprep.subr.mxu0 0.0
    %5232 = vmatpush2.msra.mxu0 0.0
    %5233 = vmatprep.subr.mxu0 0.0
    %v5234 = vand.u32 %v3884, 4294901760
    %v5235 = vsub.f32 %v3884, %v5234
    %5236 = vmatpush2.msra.mxu0 %v5235
    %5237 = vmatprep.subr.mxu0 0.0
    %v5238 = vand.u32 %v3881, 4294901760
    %v5239 = vsub.f32 %v3881, %v5238
    %5240 = vmatpush2.msra.mxu0 %v5239
    %5241 = vmatprep.subr.mxu0 0.0
    %v5242 = vand.u32 %v3878, 4294901760
    %v5243 = vsub.f32 %v3878, %v5242
    %5244 = vmatpush2.msra.mxu0 %v5243
    %5245 = vmatprep.subr.mxu0 0.0
    %v5246 = vand.u32 %v3875, 4294901760
    %v5247 = vsub.f32 %v3875, %v5246
    %5248 = vmatpush2.msra.mxu0 %v5247
    %v5249 = vand.u32 %v3899, 4294901760
    %v5250 = vsub.f32 %v3899, %v5249
    %5251 = vmatprep.mubr.f32.mxu0 %v5250
    %v5252 = vand.u32 %v3823, 4294901760
    %v5253 = vsub.f32 %v3823, %v5252
    %5254 = vmatmul.mubr.f32.gmra.mxu0 %v5253
    %v5255 = vpop.f32.mrf.mxu0
    %v5256 = vadd.f32 %v5142, %v5255
    %v5257 = vpop.f32.mrf.mxu0
    %5258 = vdwg.mxu0
    %5259 = vmatprep.subr.mxu0 0.0
    %v5260 = vand.u32 %v3872, 4294901760
    %5261 = vmatpush1.msra.mxu0 %v5260
    %5262 = vmatprep.subr.mxu0 0.0
    %v5263 = vand.u32 %v3869, 4294901760
    %5264 = vmatpush1.msra.mxu0 %v5263
    %5265 = vmatprep.subr.mxu0 0.0
    %v5266 = vand.u32 %v3866, 4294901760
    %5267 = vmatpush1.msra.mxu0 %v5266
    %5268 = vmatprep.subr.mxu0 0.0
    %v5269 = vand.u32 %v3863, 4294901760
    %5270 = vmatpush1.msra.mxu0 %v5269
    %5271 = vmatprep.subr.mxu0 0.0
    %v5272 = vand.u32 %v3860, 4294901760
    %5273 = vmatpush1.msra.mxu0 %v5272
    %5274 = vmatprep.subr.mxu0 0.0
    %v5275 = vand.u32 %v3857, 4294901760
    %5276 = vmatpush1.msra.mxu0 %v5275
    %5277 = vmatprep.subr.mxu0 0.0
    %v5278 = vand.u32 %v3854, 4294901760
    %5279 = vmatpush1.msra.mxu0 %v5278
    %5280 = vmatprep.subr.mxu0 0.0
    %v5281 = vand.u32 %v3851, 4294901760
    %5282 = vmatpush1.msra.mxu0 %v5281
    %5283 = vmatprep.subr.mxu0 0.0
    %v5284 = vand.u32 %v3848, 4294901760
    %5285 = vmatpush1.msra.mxu0 %v5284
    %5286 = vmatprep.subr.mxu0 0.0
    %v5287 = vand.u32 %v3845, 4294901760
    %5288 = vmatpush1.msra.mxu0 %v5287
    %5289 = vmatprep.subr.mxu0 0.0
    %v5290 = vand.u32 %v3842, 4294901760
    %5291 = vmatpush1.msra.mxu0 %v5290
    %5292 = vmatprep.subr.mxu0 0.0
    %v5293 = vand.u32 %v3839, 4294901760
    %5294 = vmatpush1.msra.mxu0 %v5293
    %5295 = vmatprep.subr.mxu0 0.0
    %v5296 = vand.u32 %v3836, 4294901760
    %5297 = vmatpush1.msra.mxu0 %v5296
    %5298 = vmatprep.subr.mxu0 0.0
    %v5299 = vand.u32 %v3833, 4294901760
    %5300 = vmatpush1.msra.mxu0 %v5299
    %5301 = vmatprep.subr.mxu0 0.0
    %v5302 = vand.u32 %v3830, 4294901760
    %5303 = vmatpush1.msra.mxu0 %v5302
    %5304 = vmatprep.subr.mxu0 0.0
    %v5305 = vand.u32 %v3827, 4294901760
    %5306 = vmatpush1.msra.mxu0 %v5305
    %5307 = vmatprep.subr.mxu0 0.0
    %5308 = vmatpush2.msra.mxu0 0.0
    %5309 = vmatprep.subr.mxu0 0.0
    %5310 = vmatpush2.msra.mxu0 0.0
    %5311 = vmatprep.subr.mxu0 0.0
    %5312 = vmatpush2.msra.mxu0 0.0
    %5313 = vmatprep.subr.mxu0 0.0
    %5314 = vmatpush2.msra.mxu0 0.0
    %5315 = vmatprep.subr.mxu0 0.0
    %5316 = vmatpush2.msra.mxu0 0.0
    %5317 = vmatprep.subr.mxu0 0.0
    %5318 = vmatpush2.msra.mxu0 0.0
    %5319 = vmatprep.subr.mxu0 0.0
    %5320 = vmatpush2.msra.mxu0 0.0
    %5321 = vmatprep.subr.mxu0 0.0
    %5322 = vmatpush2.msra.mxu0 0.0
    %5323 = vmatprep.subr.mxu0 0.0
    %5324 = vmatpush2.msra.mxu0 0.0
    %5325 = vmatprep.subr.mxu0 0.0
    %5326 = vmatpush2.msra.mxu0 0.0
    %5327 = vmatprep.subr.mxu0 0.0
    %5328 = vmatpush2.msra.mxu0 0.0
    %5329 = vmatprep.subr.mxu0 0.0
    %5330 = vmatpush2.msra.mxu0 0.0
    %5331 = vmatprep.subr.mxu0 0.0
    %v5332 = vand.u32 %v3884, 4294901760
    %5333 = vmatpush2.msra.mxu0 %v5332
    %5334 = vmatprep.subr.mxu0 0.0
    %v5335 = vand.u32 %v3881, 4294901760
    %5336 = vmatpush2.msra.mxu0 %v5335
    %5337 = vmatprep.subr.mxu0 0.0
    %v5338 = vand.u32 %v3878, 4294901760
    %5339 = vmatpush2.msra.mxu0 %v5338
    %5340 = vmatprep.subr.mxu0 0.0
    %v5341 = vand.u32 %v3875, 4294901760
    %5342 = vmatpush2.msra.mxu0 %v5341
    %v5343 = vand.u32 %v3899, 4294901760
    %v5344 = vsub.f32 %v3899, %v5343
    %v5345 = vand.u32 %v5344, 4294901760
    %5346 = vmatprep.mubr.f32.mxu0 %v5345
    %v5347 = vand.u32 %v3823, 4294901760
    %v5348 = vsub.f32 %v3823, %v5347
    %v5349 = vand.u32 %v5348, 4294901760
    %5350 = vmatmul.mubr.f32.gmra.mxu0 %v5349
    %v5351 = vpop.f32.mrf.mxu0
    %v5352 = vadd.f32 %v5256, %v5351
    %v5353 = vpop.f32.mrf.mxu0
    %5354 = vdwg.mxu0
    %5355 = vmatprep.subr.mxu0 0.0
    %v5356 = vand.u32 %v3872, 4294901760
    %v5357 = vsub.f32 %v3872, %v5356
    %v5358 = vand.u32 %v5357, 4294901760
    %5359 = vmatpush1.msra.mxu0 %v5358
    %5360 = vmatprep.subr.mxu0 0.0
    %v5361 = vand.u32 %v3869, 4294901760
    %v5362 = vsub.f32 %v3869, %v5361
    %v5363 = vand.u32 %v5362, 4294901760
    %5364 = vmatpush1.msra.mxu0 %v5363
    %5365 = vmatprep.subr.mxu0 0.0
    %v5366 = vand.u32 %v3866, 4294901760
    %v5367 = vsub.f32 %v3866, %v5366
    %v5368 = vand.u32 %v5367, 4294901760
    %5369 = vmatpush1.msra.mxu0 %v5368
    %5370 = vmatprep.subr.mxu0 0.0
    %v5371 = vand.u32 %v3863, 4294901760
    %v5372 = vsub.f32 %v3863, %v5371
    %v5373 = vand.u32 %v5372, 4294901760
    %5374 = vmatpush1.msra.mxu0 %v5373
    %5375 = vmatprep.subr.mxu0 0.0
    %v5376 = vand.u32 %v3860, 4294901760
    %v5377 = vsub.f32 %v3860, %v5376
    %v5378 = vand.u32 %v5377, 4294901760
    %5379 = vmatpush1.msra.mxu0 %v5378
    %5380 = vmatprep.subr.mxu0 0.0
    %v5381 = vand.u32 %v3857, 4294901760
    %v5382 = vsub.f32 %v3857, %v5381
    %v5383 = vand.u32 %v5382, 4294901760
    %5384 = vmatpush1.msra.mxu0 %v5383
    %5385 = vmatprep.subr.mxu0 0.0
    %v5386 = vand.u32 %v3854, 4294901760
    %v5387 = vsub.f32 %v3854, %v5386
    %v5388 = vand.u32 %v5387, 4294901760
    %5389 = vmatpush1.msra.mxu0 %v5388
    %5390 = vmatprep.subr.mxu0 0.0
    %v5391 = vand.u32 %v3851, 4294901760
    %v5392 = vsub.f32 %v3851, %v5391
    %v5393 = vand.u32 %v5392, 4294901760
    %5394 = vmatpush1.msra.mxu0 %v5393
    %5395 = vmatprep.subr.mxu0 0.0
    %v5396 = vand.u32 %v3848, 4294901760
    %v5397 = vsub.f32 %v3848, %v5396
    %v5398 = vand.u32 %v5397, 4294901760
    %5399 = vmatpush1.msra.mxu0 %v5398
    %5400 = vmatprep.subr.mxu0 0.0
    %v5401 = vand.u32 %v3845, 4294901760
    %v5402 = vsub.f32 %v3845, %v5401
    %v5403 = vand.u32 %v5402, 4294901760
    %5404 = vmatpush1.msra.mxu0 %v5403
    %5405 = vmatprep.subr.mxu0 0.0
    %v5406 = vand.u32 %v3842, 4294901760
    %v5407 = vsub.f32 %v3842, %v5406
    %v5408 = vand.u32 %v5407, 4294901760
    %5409 = vmatpush1.msra.mxu0 %v5408
    %5410 = vmatprep.subr.mxu0 0.0
    %v5411 = vand.u32 %v3839, 4294901760
    %v5412 = vsub.f32 %v3839, %v5411
    %v5413 = vand.u32 %v5412, 4294901760
    %5414 = vmatpush1.msra.mxu0 %v5413
    %5415 = vmatprep.subr.mxu0 0.0
    %v5416 = vand.u32 %v3836, 4294901760
    %v5417 = vsub.f32 %v3836, %v5416
    %v5418 = vand.u32 %v5417, 4294901760
    %5419 = vmatpush1.msra.mxu0 %v5418
    %5420 = vmatprep.subr.mxu0 0.0
    %v5421 = vand.u32 %v3833, 4294901760
    %v5422 = vsub.f32 %v3833, %v5421
    %v5423 = vand.u32 %v5422, 4294901760
    %5424 = vmatpush1.msra.mxu0 %v5423
    %5425 = vmatprep.subr.mxu0 0.0
    %v5426 = vand.u32 %v3830, 4294901760
    %v5427 = vsub.f32 %v3830, %v5426
    %v5428 = vand.u32 %v5427, 4294901760
    %5429 = vmatpush1.msra.mxu0 %v5428
    %5430 = vmatprep.subr.mxu0 0.0
    %v5431 = vand.u32 %v3827, 4294901760
    %v5432 = vsub.f32 %v3827, %v5431
    %v5433 = vand.u32 %v5432, 4294901760
    %5434 = vmatpush1.msra.mxu0 %v5433
    %5435 = vmatprep.subr.mxu0 0.0
    %5436 = vmatpush2.msra.mxu0 0.0
    %5437 = vmatprep.subr.mxu0 0.0
    %5438 = vmatpush2.msra.mxu0 0.0
    %5439 = vmatprep.subr.mxu0 0.0
    %5440 = vmatpush2.msra.mxu0 0.0
    %5441 = vmatprep.subr.mxu0 0.0
    %5442 = vmatpush2.msra.mxu0 0.0
    %5443 = vmatprep.subr.mxu0 0.0
    %5444 = vmatpush2.msra.mxu0 0.0
    %5445 = vmatprep.subr.mxu0 0.0
    %5446 = vmatpush2.msra.mxu0 0.0
    %5447 = vmatprep.subr.mxu0 0.0
    %5448 = vmatpush2.msra.mxu0 0.0
    %5449 = vmatprep.subr.mxu0 0.0
    %5450 = vmatpush2.msra.mxu0 0.0
    %5451 = vmatprep.subr.mxu0 0.0
    %5452 = vmatpush2.msra.mxu0 0.0
    %5453 = vmatprep.subr.mxu0 0.0
    %5454 = vmatpush2.msra.mxu0 0.0
    %5455 = vmatprep.subr.mxu0 0.0
    %5456 = vmatpush2.msra.mxu0 0.0
    %5457 = vmatprep.subr.mxu0 0.0
    %5458 = vmatpush2.msra.mxu0 0.0
    %5459 = vmatprep.subr.mxu0 0.0
    %v5460 = vand.u32 %v3884, 4294901760
    %v5461 = vsub.f32 %v3884, %v5460
    %v5462 = vand.u32 %v5461, 4294901760
    %5463 = vmatpush2.msra.mxu0 %v5462
    %5464 = vmatprep.subr.mxu0 0.0
    %v5465 = vand.u32 %v3881, 4294901760
    %v5466 = vsub.f32 %v3881, %v5465
    %v5467 = vand.u32 %v5466, 4294901760
    %5468 = vmatpush2.msra.mxu0 %v5467
    %5469 = vmatprep.subr.mxu0 0.0
    %v5470 = vand.u32 %v3878, 4294901760
    %v5471 = vsub.f32 %v3878, %v5470
    %v5472 = vand.u32 %v5471, 4294901760
    %5473 = vmatpush2.msra.mxu0 %v5472
    %5474 = vmatprep.subr.mxu0 0.0
    %v5475 = vand.u32 %v3875, 4294901760
    %v5476 = vsub.f32 %v3875, %v5475
    %v5477 = vand.u32 %v5476, 4294901760
    %5478 = vmatpush2.msra.mxu0 %v5477
    %v5479 = vand.u32 %v3899, 4294901760
    %5480 = vmatprep.mubr.f32.mxu0 %v5479
    %v5481 = vand.u32 %v3823, 4294901760
    %5482 = vmatmul.mubr.f32.gmra.mxu0 %v5481
    %v5483 = vpop.f32.mrf.mxu0
    %v5484 = vadd.f32 %v5352, %v5483
    %v5485 = vpop.f32.mrf.mxu0
    %5486 = vdwg.mxu0
    %5487 = vmatprep.subr.mxu0 0.0
    %v5488 = vand.u32 %v3872, 4294901760
    %5489 = vmatpush1.msra.mxu0 %v5488
    %5490 = vmatprep.subr.mxu0 0.0
    %v5491 = vand.u32 %v3869, 4294901760
    %5492 = vmatpush1.msra.mxu0 %v5491
    %5493 = vmatprep.subr.mxu0 0.0
    %v5494 = vand.u32 %v3866, 4294901760
    %5495 = vmatpush1.msra.mxu0 %v5494
    %5496 = vmatprep.subr.mxu0 0.0
    %v5497 = vand.u32 %v3863, 4294901760
    %5498 = vmatpush1.msra.mxu0 %v5497
    %5499 = vmatprep.subr.mxu0 0.0
    %v5500 = vand.u32 %v3860, 4294901760
    %5501 = vmatpush1.msra.mxu0 %v5500
    %5502 = vmatprep.subr.mxu0 0.0
    %v5503 = vand.u32 %v3857, 4294901760
    %5504 = vmatpush1.msra.mxu0 %v5503
    %5505 = vmatprep.subr.mxu0 0.0
    %v5506 = vand.u32 %v3854, 4294901760
    %5507 = vmatpush1.msra.mxu0 %v5506
    %5508 = vmatprep.subr.mxu0 0.0
    %v5509 = vand.u32 %v3851, 4294901760
    %5510 = vmatpush1.msra.mxu0 %v5509
    %5511 = vmatprep.subr.mxu0 0.0
    %v5512 = vand.u32 %v3848, 4294901760
    %5513 = vmatpush1.msra.mxu0 %v5512
    %5514 = vmatprep.subr.mxu0 0.0
    %v5515 = vand.u32 %v3845, 4294901760
    %5516 = vmatpush1.msra.mxu0 %v5515
    %5517 = vmatprep.subr.mxu0 0.0
    %v5518 = vand.u32 %v3842, 4294901760
    %5519 = vmatpush1.msra.mxu0 %v5518
    %5520 = vmatprep.subr.mxu0 0.0
    %v5521 = vand.u32 %v3839, 4294901760
    %5522 = vmatpush1.msra.mxu0 %v5521
    %5523 = vmatprep.subr.mxu0 0.0
    %v5524 = vand.u32 %v3836, 4294901760
    %5525 = vmatpush1.msra.mxu0 %v5524
    %5526 = vmatprep.subr.mxu0 0.0
    %v5527 = vand.u32 %v3833, 4294901760
    %5528 = vmatpush1.msra.mxu0 %v5527
    %5529 = vmatprep.subr.mxu0 0.0
    %v5530 = vand.u32 %v3830, 4294901760
    %5531 = vmatpush1.msra.mxu0 %v5530
    %5532 = vmatprep.subr.mxu0 0.0
    %v5533 = vand.u32 %v3827, 4294901760
    %5534 = vmatpush1.msra.mxu0 %v5533
    %5535 = vmatprep.subr.mxu0 0.0
    %5536 = vmatpush2.msra.mxu0 0.0
    %5537 = vmatprep.subr.mxu0 0.0
    %5538 = vmatpush2.msra.mxu0 0.0
    %5539 = vmatprep.subr.mxu0 0.0
    %5540 = vmatpush2.msra.mxu0 0.0
    %5541 = vmatprep.subr.mxu0 0.0
    %5542 = vmatpush2.msra.mxu0 0.0
    %5543 = vmatprep.subr.mxu0 0.0
    %5544 = vmatpush2.msra.mxu0 0.0
    %5545 = vmatprep.subr.mxu0 0.0
    %5546 = vmatpush2.msra.mxu0 0.0
    %5547 = vmatprep.subr.mxu0 0.0
    %5548 = vmatpush2.msra.mxu0 0.0
    %5549 = vmatprep.subr.mxu0 0.0
    %5550 = vmatpush2.msra.mxu0 0.0
    %5551 = vmatprep.subr.mxu0 0.0
    %5552 = vmatpush2.msra.mxu0 0.0
    %5553 = vmatprep.subr.mxu0 0.0
    %5554 = vmatpush2.msra.mxu0 0.0
    %5555 = vmatprep.subr.mxu0 0.0
    %5556 = vmatpush2.msra.mxu0 0.0
    %5557 = vmatprep.subr.mxu0 0.0
    %5558 = vmatpush2.msra.mxu0 0.0
    %5559 = vmatprep.subr.mxu0 0.0
    %v5560 = vand.u32 %v3884, 4294901760
    %5561 = vmatpush2.msra.mxu0 %v5560
    %5562 = vmatprep.subr.mxu0 0.0
    %v5563 = vand.u32 %v3881, 4294901760
    %5564 = vmatpush2.msra.mxu0 %v5563
    %5565 = vmatprep.subr.mxu0 0.0
    %v5566 = vand.u32 %v3878, 4294901760
    %5567 = vmatpush2.msra.mxu0 %v5566
    %5568 = vmatprep.subr.mxu0 0.0
    %v5569 = vand.u32 %v3875, 4294901760
    %5570 = vmatpush2.msra.mxu0 %v5569
    %v5571 = vand.u32 %v3899, 4294901760
    %5572 = vmatprep.mubr.f32.mxu0 %v5571
    %v5573 = vand.u32 %v3823, 4294901760
    %5574 = vmatmul.mubr.f32.gmra.mxu0 %v5573
    %v5575 = vpop.f32.mrf.mxu0
    %v5576 = vadd.f32 %v5484, %v5575
    %v5577 = vpop.f32.mrf.mxu0
    %5578 = vdwg.mxu0
    %v5579 = vmax.f32 %v4871, 0.0
    %v5580 = vmax.f32 %v5576, 0.0
    %v5581 = vld [vmem:[%s6] sm:$0xff]
    %v5582 = vld [vmem:[%s6 + $0x8] sm:$0xff]
    %v5583 = vld [vmem:[%s6 + $0x10] sm:$0xff]
    %v5584 = vld [vmem:[%s6 + $0x18] sm:$0xff]
    %v5585 = vld [vmem:[%s6 + $0x20] sm:$0xff]
    %v5586 = vld [vmem:[%s6 + $0x28] sm:$0xff]
    %v5587 = vld [vmem:[%s6 + $0x30] sm:$0xff]
    %v5588 = vld [vmem:[%s6 + $0x38] sm:$0xff]
    %v5589 = vld [vmem:[%s6 + $0x40] sm:$0xff]
    %v5590 = vld [vmem:[%s6 + $0x48] sm:$0xff]
    %v5591 = vld [vmem:[%s6 + $0x50] sm:$0xff]
    %v5592 = vld [vmem:[%s6 + $0x58] sm:$0xff]
    %v5593 = vld [vmem:[%s6 + $0x60] sm:$0xff]
    %v5594 = vld [vmem:[%s6 + $0x68] sm:$0xff]
    %v5595 = vld [vmem:[%s6 + $0x70] sm:$0xff]
    %v5596 = vld [vmem:[%s6 + $0x78] sm:$0xff]
    %v5597 = vld [vmem:[%s6 + $0x80] sm:$0xff]
    %v5598 = vld [vmem:[%s6 + $0x88] sm:$0xff]
    %v5599 = vld [vmem:[%s6 + $0x90] sm:$0xff]
    %v5600 = vld [vmem:[%s6 + $0x98] sm:$0xff]
    %v5601 = vlaneseq
    %v5602 = vshrl.u32 %v5601, 7
    %v5603 = vsub.s32 3, %v5602
    %v5604 = vrot.slane %v31, %v5603
    %v5606 = vsel %vm3897, %v5580, 0
    %5608 = vmatprep.subr.mxu0 0.0
    %v5609 = vand.u32 %v5596, 4294901760
    %5610 = vmatpush1.msra.mxu0 %v5609
    %5611 = vmatprep.subr.mxu0 0.0
    %v5612 = vand.u32 %v5595, 4294901760
    %5613 = vmatpush1.msra.mxu0 %v5612
    %5614 = vmatprep.subr.mxu0 0.0
    %v5615 = vand.u32 %v5594, 4294901760
    %5616 = vmatpush1.msra.mxu0 %v5615
    %5617 = vmatprep.subr.mxu0 0.0
    %v5618 = vand.u32 %v5593, 4294901760
    %5619 = vmatpush1.msra.mxu0 %v5618
    %5620 = vmatprep.subr.mxu0 0.0
    %v5621 = vand.u32 %v5592, 4294901760
    %5622 = vmatpush1.msra.mxu0 %v5621
    %5623 = vmatprep.subr.mxu0 0.0
    %v5624 = vand.u32 %v5591, 4294901760
    %5625 = vmatpush1.msra.mxu0 %v5624
    %5626 = vmatprep.subr.mxu0 0.0
    %v5627 = vand.u32 %v5590, 4294901760
    %5628 = vmatpush1.msra.mxu0 %v5627
    %5629 = vmatprep.subr.mxu0 0.0
    %v5630 = vand.u32 %v5589, 4294901760
    %5631 = vmatpush1.msra.mxu0 %v5630
    %5632 = vmatprep.subr.mxu0 0.0
    %v5633 = vand.u32 %v5588, 4294901760
    %5634 = vmatpush1.msra.mxu0 %v5633
    %5635 = vmatprep.subr.mxu0 0.0
    %v5636 = vand.u32 %v5587, 4294901760
    %5637 = vmatpush1.msra.mxu0 %v5636
    %5638 = vmatprep.subr.mxu0 0.0
    %v5639 = vand.u32 %v5586, 4294901760
    %5640 = vmatpush1.msra.mxu0 %v5639
    %5641 = vmatprep.subr.mxu0 0.0
    %v5642 = vand.u32 %v5585, 4294901760
    %5643 = vmatpush1.msra.mxu0 %v5642
    %5644 = vmatprep.subr.mxu0 0.0
    %v5645 = vand.u32 %v5584, 4294901760
    %5646 = vmatpush1.msra.mxu0 %v5645
    %5647 = vmatprep.subr.mxu0 0.0
    %v5648 = vand.u32 %v5583, 4294901760
    %5649 = vmatpush1.msra.mxu0 %v5648
    %5650 = vmatprep.subr.mxu0 0.0
    %v5651 = vand.u32 %v5582, 4294901760
    %5652 = vmatpush1.msra.mxu0 %v5651
    %5653 = vmatprep.subr.mxu0 0.0
    %v5654 = vand.u32 %v5581, 4294901760
    %5655 = vmatpush1.msra.mxu0 %v5654
    %5656 = vmatprep.subr.mxu0 0.0
    %5657 = vmatpush2.msra.mxu0 0.0
    %5658 = vmatprep.subr.mxu0 0.0
    %5659 = vmatpush2.msra.mxu0 0.0
    %5660 = vmatprep.subr.mxu0 0.0
    %5661 = vmatpush2.msra.mxu0 0.0
    %5662 = vmatprep.subr.mxu0 0.0
    %5663 = vmatpush2.msra.mxu0 0.0
    %5664 = vmatprep.subr.mxu0 0.0
    %5665 = vmatpush2.msra.mxu0 0.0
    %5666 = vmatprep.subr.mxu0 0.0
    %5667 = vmatpush2.msra.mxu0 0.0
    %5668 = vmatprep.subr.mxu0 0.0
    %5669 = vmatpush2.msra.mxu0 0.0
    %5670 = vmatprep.subr.mxu0 0.0
    %5671 = vmatpush2.msra.mxu0 0.0
    %5672 = vmatprep.subr.mxu0 0.0
    %5673 = vmatpush2.msra.mxu0 0.0
    %5674 = vmatprep.subr.mxu0 0.0
    %5675 = vmatpush2.msra.mxu0 0.0
    %5676 = vmatprep.subr.mxu0 0.0
    %5677 = vmatpush2.msra.mxu0 0.0
    %5678 = vmatprep.subr.mxu0 0.0
    %5679 = vmatpush2.msra.mxu0 0.0
    %5680 = vmatprep.subr.mxu0 0.0
    %v5681 = vand.u32 %v5600, 4294901760
    %5682 = vmatpush2.msra.mxu0 %v5681
    %5683 = vmatprep.subr.mxu0 0.0
    %v5684 = vand.u32 %v5599, 4294901760
    %5685 = vmatpush2.msra.mxu0 %v5684
    %5686 = vmatprep.subr.mxu0 0.0
    %v5687 = vand.u32 %v5598, 4294901760
    %5688 = vmatpush2.msra.mxu0 %v5687
    %5689 = vmatprep.subr.mxu0 0.0
    %v5690 = vand.u32 %v5597, 4294901760
    %5691 = vmatpush2.msra.mxu0 %v5690
    %v5692 = vand.u32 %v5606, 4294901760
    %v5693 = vsub.f32 %v5606, %v5692
    %v5694 = vand.u32 %v5693, 4294901760
    %v5695 = vsub.f32 %v5693, %v5694
    %v5696 = vand.u32 %v5695, 4294901760
    %5697 = vmatprep.mubr.f32.mxu0 %v5696
    %v5698 = vand.u32 %v5579, 4294901760
    %v5699 = vsub.f32 %v5579, %v5698
    %v5700 = vand.u32 %v5699, 4294901760
    %v5701 = vsub.f32 %v5699, %v5700
    %v5702 = vand.u32 %v5701, 4294901760
    %5703 = vmatmul.mubr.f32.gmra.mxu0 %v5702
    %v5704 = vpop.f32.mrf.mxu0
    %v5705 = vadd.f32 %v5604, %v5704
    %v5706 = vpop.f32.mrf.mxu0
    %5707 = vdwg.mxu0
    %5708 = vmatprep.subr.mxu0 0.0
    %v5709 = vand.u32 %v5596, 4294901760
    %v5710 = vsub.f32 %v5596, %v5709
    %v5711 = vand.u32 %v5710, 4294901760
    %v5712 = vsub.f32 %v5710, %v5711
    %v5713 = vand.u32 %v5712, 4294901760
    %5714 = vmatpush1.msra.mxu0 %v5713
    %5715 = vmatprep.subr.mxu0 0.0
    %v5716 = vand.u32 %v5595, 4294901760
    %v5717 = vsub.f32 %v5595, %v5716
    %v5718 = vand.u32 %v5717, 4294901760
    %v5719 = vsub.f32 %v5717, %v5718
    %v5720 = vand.u32 %v5719, 4294901760
    %5721 = vmatpush1.msra.mxu0 %v5720
    %5722 = vmatprep.subr.mxu0 0.0
    %v5723 = vand.u32 %v5594, 4294901760
    %v5724 = vsub.f32 %v5594, %v5723
    %v5725 = vand.u32 %v5724, 4294901760
    %v5726 = vsub.f32 %v5724, %v5725
    %v5727 = vand.u32 %v5726, 4294901760
    %5728 = vmatpush1.msra.mxu0 %v5727
    %5729 = vmatprep.subr.mxu0 0.0
    %v5730 = vand.u32 %v5593, 4294901760
    %v5731 = vsub.f32 %v5593, %v5730
    %v5732 = vand.u32 %v5731, 4294901760
    %v5733 = vsub.f32 %v5731, %v5732
    %v5734 = vand.u32 %v5733, 4294901760
    %5735 = vmatpush1.msra.mxu0 %v5734
    %5736 = vmatprep.subr.mxu0 0.0
    %v5737 = vand.u32 %v5592, 4294901760
    %v5738 = vsub.f32 %v5592, %v5737
    %v5739 = vand.u32 %v5738, 4294901760
    %v5740 = vsub.f32 %v5738, %v5739
    %v5741 = vand.u32 %v5740, 4294901760
    %5742 = vmatpush1.msra.mxu0 %v5741
    %5743 = vmatprep.subr.mxu0 0.0
    %v5744 = vand.u32 %v5591, 4294901760
    %v5745 = vsub.f32 %v5591, %v5744
    %v5746 = vand.u32 %v5745, 4294901760
    %v5747 = vsub.f32 %v5745, %v5746
    %v5748 = vand.u32 %v5747, 4294901760
    %5749 = vmatpush1.msra.mxu0 %v5748
    %5750 = vmatprep.subr.mxu0 0.0
    %v5751 = vand.u32 %v5590, 4294901760
    %v5752 = vsub.f32 %v5590, %v5751
    %v5753 = vand.u32 %v5752, 4294901760
    %v5754 = vsub.f32 %v5752, %v5753
    %v5755 = vand.u32 %v5754, 4294901760
    %5756 = vmatpush1.msra.mxu0 %v5755
    %5757 = vmatprep.subr.mxu0 0.0
    %v5758 = vand.u32 %v5589, 4294901760
    %v5759 = vsub.f32 %v5589, %v5758
    %v5760 = vand.u32 %v5759, 4294901760
    %v5761 = vsub.f32 %v5759, %v5760
    %v5762 = vand.u32 %v5761, 4294901760
    %5763 = vmatpush1.msra.mxu0 %v5762
    %5764 = vmatprep.subr.mxu0 0.0
    %v5765 = vand.u32 %v5588, 4294901760
    %v5766 = vsub.f32 %v5588, %v5765
    %v5767 = vand.u32 %v5766, 4294901760
    %v5768 = vsub.f32 %v5766, %v5767
    %v5769 = vand.u32 %v5768, 4294901760
    %5770 = vmatpush1.msra.mxu0 %v5769
    %5771 = vmatprep.subr.mxu0 0.0
    %v5772 = vand.u32 %v5587, 4294901760
    %v5773 = vsub.f32 %v5587, %v5772
    %v5774 = vand.u32 %v5773, 4294901760
    %v5775 = vsub.f32 %v5773, %v5774
    %v5776 = vand.u32 %v5775, 4294901760
    %5777 = vmatpush1.msra.mxu0 %v5776
    %5778 = vmatprep.subr.mxu0 0.0
    %v5779 = vand.u32 %v5586, 4294901760
    %v5780 = vsub.f32 %v5586, %v5779
    %v5781 = vand.u32 %v5780, 4294901760
    %v5782 = vsub.f32 %v5780, %v5781
    %v5783 = vand.u32 %v5782, 4294901760
    %5784 = vmatpush1.msra.mxu0 %v5783
    %5785 = vmatprep.subr.mxu0 0.0
    %v5786 = vand.u32 %v5585, 4294901760
    %v5787 = vsub.f32 %v5585, %v5786
    %v5788 = vand.u32 %v5787, 4294901760
    %v5789 = vsub.f32 %v5787, %v5788
    %v5790 = vand.u32 %v5789, 4294901760
    %5791 = vmatpush1.msra.mxu0 %v5790
    %5792 = vmatprep.subr.mxu0 0.0
    %v5793 = vand.u32 %v5584, 4294901760
    %v5794 = vsub.f32 %v5584, %v5793
    %v5795 = vand.u32 %v5794, 4294901760
    %v5796 = vsub.f32 %v5794, %v5795
    %v5797 = vand.u32 %v5796, 4294901760
    %5798 = vmatpush1.msra.mxu0 %v5797
    %5799 = vmatprep.subr.mxu0 0.0
    %v5800 = vand.u32 %v5583, 4294901760
    %v5801 = vsub.f32 %v5583, %v5800
    %v5802 = vand.u32 %v5801, 4294901760
    %v5803 = vsub.f32 %v5801, %v5802
    %v5804 = vand.u32 %v5803, 4294901760
    %5805 = vmatpush1.msra.mxu0 %v5804
    %5806 = vmatprep.subr.mxu0 0.0
    %v5807 = vand.u32 %v5582, 4294901760
    %v5808 = vsub.f32 %v5582, %v5807
    %v5809 = vand.u32 %v5808, 4294901760
    %v5810 = vsub.f32 %v5808, %v5809
    %v5811 = vand.u32 %v5810, 4294901760
    %5812 = vmatpush1.msra.mxu0 %v5811
    %5813 = vmatprep.subr.mxu0 0.0
    %v5814 = vand.u32 %v5581, 4294901760
    %v5815 = vsub.f32 %v5581, %v5814
    %v5816 = vand.u32 %v5815, 4294901760
    %v5817 = vsub.f32 %v5815, %v5816
    %v5818 = vand.u32 %v5817, 4294901760
    %5819 = vmatpush1.msra.mxu0 %v5818
    %5820 = vmatprep.subr.mxu0 0.0
    %5821 = vmatpush2.msra.mxu0 0.0
    %5822 = vmatprep.subr.mxu0 0.0
    %5823 = vmatpush2.msra.mxu0 0.0
    %5824 = vmatprep.subr.mxu0 0.0
    %5825 = vmatpush2.msra.mxu0 0.0
    %5826 = vmatprep.subr.mxu0 0.0
    %5827 = vmatpush2.msra.mxu0 0.0
    %5828 = vmatprep.subr.mxu0 0.0
    %5829 = vmatpush2.msra.mxu0 0.0
    %5830 = vmatprep.subr.mxu0 0.0
    %5831 = vmatpush2.msra.mxu0 0.0
    %5832 = vmatprep.subr.mxu0 0.0
    %5833 = vmatpush2.msra.mxu0 0.0
    %5834 = vmatprep.subr.mxu0 0.0
    %5835 = vmatpush2.msra.mxu0 0.0
    %5836 = vmatprep.subr.mxu0 0.0
    %5837 = vmatpush2.msra.mxu0 0.0
    %5838 = vmatprep.subr.mxu0 0.0
    %5839 = vmatpush2.msra.mxu0 0.0
    %5840 = vmatprep.subr.mxu0 0.0
    %5841 = vmatpush2.msra.mxu0 0.0
    %5842 = vmatprep.subr.mxu0 0.0
    %5843 = vmatpush2.msra.mxu0 0.0
    %5844 = vmatprep.subr.mxu0 0.0
    %v5845 = vand.u32 %v5600, 4294901760
    %v5846 = vsub.f32 %v5600, %v5845
    %v5847 = vand.u32 %v5846, 4294901760
    %v5848 = vsub.f32 %v5846, %v5847
    %v5849 = vand.u32 %v5848, 4294901760
    %5850 = vmatpush2.msra.mxu0 %v5849
    %5851 = vmatprep.subr.mxu0 0.0
    %v5852 = vand.u32 %v5599, 4294901760
    %v5853 = vsub.f32 %v5599, %v5852
    %v5854 = vand.u32 %v5853, 4294901760
    %v5855 = vsub.f32 %v5853, %v5854
    %v5856 = vand.u32 %v5855, 4294901760
    %5857 = vmatpush2.msra.mxu0 %v5856
    %5858 = vmatprep.subr.mxu0 0.0
    %v5859 = vand.u32 %v5598, 4294901760
    %v5860 = vsub.f32 %v5598, %v5859
    %v5861 = vand.u32 %v5860, 4294901760
    %v5862 = vsub.f32 %v5860, %v5861
    %v5863 = vand.u32 %v5862, 4294901760
    %5864 = vmatpush2.msra.mxu0 %v5863
    %5865 = vmatprep.subr.mxu0 0.0
    %v5866 = vand.u32 %v5597, 4294901760
    %v5867 = vsub.f32 %v5597, %v5866
    %v5868 = vand.u32 %v5867, 4294901760
    %v5869 = vsub.f32 %v5867, %v5868
    %v5870 = vand.u32 %v5869, 4294901760
    %5871 = vmatpush2.msra.mxu0 %v5870
    %v5872 = vand.u32 %v5606, 4294901760
    %5873 = vmatprep.mubr.f32.mxu0 %v5872
    %v5874 = vand.u32 %v5579, 4294901760
    %5875 = vmatmul.mubr.f32.gmra.mxu0 %v5874
    %v5876 = vpop.f32.mrf.mxu0
    %v5877 = vadd.f32 %v5705, %v5876
    %v5878 = vpop.f32.mrf.mxu0
    %5879 = vdwg.mxu0
    %5880 = vmatprep.subr.mxu0 0.0
    %v5881 = vand.u32 %v5596, 4294901760
    %v5882 = vsub.f32 %v5596, %v5881
    %5883 = vmatpush1.msra.mxu0 %v5882
    %5884 = vmatprep.subr.mxu0 0.0
    %v5885 = vand.u32 %v5595, 4294901760
    %v5886 = vsub.f32 %v5595, %v5885
    %5887 = vmatpush1.msra.mxu0 %v5886
    %5888 = vmatprep.subr.mxu0 0.0
    %v5889 = vand.u32 %v5594, 4294901760
    %v5890 = vsub.f32 %v5594, %v5889
    %5891 = vmatpush1.msra.mxu0 %v5890
    %5892 = vmatprep.subr.mxu0 0.0
    %v5893 = vand.u32 %v5593, 4294901760
    %v5894 = vsub.f32 %v5593, %v5893
    %5895 = vmatpush1.msra.mxu0 %v5894
    %5896 = vmatprep.subr.mxu0 0.0
    %v5897 = vand.u32 %v5592, 4294901760
    %v5898 = vsub.f32 %v5592, %v5897
    %5899 = vmatpush1.msra.mxu0 %v5898
    %5900 = vmatprep.subr.mxu0 0.0
    %v5901 = vand.u32 %v5591, 4294901760
    %v5902 = vsub.f32 %v5591, %v5901
    %5903 = vmatpush1.msra.mxu0 %v5902
    %5904 = vmatprep.subr.mxu0 0.0
    %v5905 = vand.u32 %v5590, 4294901760
    %v5906 = vsub.f32 %v5590, %v5905
    %5907 = vmatpush1.msra.mxu0 %v5906
    %5908 = vmatprep.subr.mxu0 0.0
    %v5909 = vand.u32 %v5589, 4294901760
    %v5910 = vsub.f32 %v5589, %v5909
    %5911 = vmatpush1.msra.mxu0 %v5910
    %5912 = vmatprep.subr.mxu0 0.0
    %v5913 = vand.u32 %v5588, 4294901760
    %v5914 = vsub.f32 %v5588, %v5913
    %5915 = vmatpush1.msra.mxu0 %v5914
    %5916 = vmatprep.subr.mxu0 0.0
    %v5917 = vand.u32 %v5587, 4294901760
    %v5918 = vsub.f32 %v5587, %v5917
    %5919 = vmatpush1.msra.mxu0 %v5918
    %5920 = vmatprep.subr.mxu0 0.0
    %v5921 = vand.u32 %v5586, 4294901760
    %v5922 = vsub.f32 %v5586, %v5921
    %5923 = vmatpush1.msra.mxu0 %v5922
    %5924 = vmatprep.subr.mxu0 0.0
    %v5925 = vand.u32 %v5585, 4294901760
    %v5926 = vsub.f32 %v5585, %v5925
    %5927 = vmatpush1.msra.mxu0 %v5926
    %5928 = vmatprep.subr.mxu0 0.0
    %v5929 = vand.u32 %v5584, 4294901760
    %v5930 = vsub.f32 %v5584, %v5929
    %5931 = vmatpush1.msra.mxu0 %v5930
    %5932 = vmatprep.subr.mxu0 0.0
    %v5933 = vand.u32 %v5583, 4294901760
    %v5934 = vsub.f32 %v5583, %v5933
    %5935 = vmatpush1.msra.mxu0 %v5934
    %5936 = vmatprep.subr.mxu0 0.0
    %v5937 = vand.u32 %v5582, 4294901760
    %v5938 = vsub.f32 %v5582, %v5937
    %5939 = vmatpush1.msra.mxu0 %v5938
    %5940 = vmatprep.subr.mxu0 0.0
    %v5941 = vand.u32 %v5581, 4294901760
    %v5942 = vsub.f32 %v5581, %v5941
    %5943 = vmatpush1.msra.mxu0 %v5942
    %5944 = vmatprep.subr.mxu0 0.0
    %5945 = vmatpush2.msra.mxu0 0.0
    %5946 = vmatprep.subr.mxu0 0.0
    %5947 = vmatpush2.msra.mxu0 0.0
    %5948 = vmatprep.subr.mxu0 0.0
    %5949 = vmatpush2.msra.mxu0 0.0
    %5950 = vmatprep.subr.mxu0 0.0
    %5951 = vmatpush2.msra.mxu0 0.0
    %5952 = vmatprep.subr.mxu0 0.0
    %5953 = vmatpush2.msra.mxu0 0.0
    %5954 = vmatprep.subr.mxu0 0.0
    %5955 = vmatpush2.msra.mxu0 0.0
    %5956 = vmatprep.subr.mxu0 0.0
    %5957 = vmatpush2.msra.mxu0 0.0
    %5958 = vmatprep.subr.mxu0 0.0
    %5959 = vmatpush2.msra.mxu0 0.0
    %5960 = vmatprep.subr.mxu0 0.0
    %5961 = vmatpush2.msra.mxu0 0.0
    %5962 = vmatprep.subr.mxu0 0.0
    %5963 = vmatpush2.msra.mxu0 0.0
    %5964 = vmatprep.subr.mxu0 0.0
    %5965 = vmatpush2.msra.mxu0 0.0
    %5966 = vmatprep.subr.mxu0 0.0
    %5967 = vmatpush2.msra.mxu0 0.0
    %5968 = vmatprep.subr.mxu0 0.0
    %v5969 = vand.u32 %v5600, 4294901760
    %v5970 = vsub.f32 %v5600, %v5969
    %5971 = vmatpush2.msra.mxu0 %v5970
    %5972 = vmatprep.subr.mxu0 0.0
    %v5973 = vand.u32 %v5599, 4294901760
    %v5974 = vsub.f32 %v5599, %v5973
    %5975 = vmatpush2.msra.mxu0 %v5974
    %5976 = vmatprep.subr.mxu0 0.0
    %v5977 = vand.u32 %v5598, 4294901760
    %v5978 = vsub.f32 %v5598, %v5977
    %5979 = vmatpush2.msra.mxu0 %v5978
    %5980 = vmatprep.subr.mxu0 0.0
    %v5981 = vand.u32 %v5597, 4294901760
    %v5982 = vsub.f32 %v5597, %v5981
    %5983 = vmatpush2.msra.mxu0 %v5982
    %v5984 = vand.u32 %v5606, 4294901760
    %v5985 = vsub.f32 %v5606, %v5984
    %5986 = vmatprep.mubr.f32.mxu0 %v5985
    %v5987 = vand.u32 %v5579, 4294901760
    %v5988 = vsub.f32 %v5579, %v5987
    %5989 = vmatmul.mubr.f32.gmra.mxu0 %v5988
    %v5990 = vpop.f32.mrf.mxu0
    %v5991 = vadd.f32 %v5877, %v5990
    %v5992 = vpop.f32.mrf.mxu0
    %5993 = vdwg.mxu0
    %5994 = vmatprep.subr.mxu0 0.0
    %v5995 = vand.u32 %v5596, 4294901760
    %5996 = vmatpush1.msra.mxu0 %v5995
    %5997 = vmatprep.subr.mxu0 0.0
    %v5998 = vand.u32 %v5595, 4294901760
    %5999 = vmatpush1.msra.mxu0 %v5998
    %6000 = vmatprep.subr.mxu0 0.0
    %v6001 = vand.u32 %v5594, 4294901760
    %6002 = vmatpush1.msra.mxu0 %v6001
    %6003 = vmatprep.subr.mxu0 0.0
    %v6004 = vand.u32 %v5593, 4294901760
    %6005 = vmatpush1.msra.mxu0 %v6004
    %6006 = vmatprep.subr.mxu0 0.0
    %v6007 = vand.u32 %v5592, 4294901760
    %6008 = vmatpush1.msra.mxu0 %v6007
    %6009 = vmatprep.subr.mxu0 0.0
    %v6010 = vand.u32 %v5591, 4294901760
    %6011 = vmatpush1.msra.mxu0 %v6010
    %6012 = vmatprep.subr.mxu0 0.0
    %v6013 = vand.u32 %v5590, 4294901760
    %6014 = vmatpush1.msra.mxu0 %v6013
    %6015 = vmatprep.subr.mxu0 0.0
    %v6016 = vand.u32 %v5589, 4294901760
    %6017 = vmatpush1.msra.mxu0 %v6016
    %6018 = vmatprep.subr.mxu0 0.0
    %v6019 = vand.u32 %v5588, 4294901760
    %6020 = vmatpush1.msra.mxu0 %v6019
    %6021 = vmatprep.subr.mxu0 0.0
    %v6022 = vand.u32 %v5587, 4294901760
    %6023 = vmatpush1.msra.mxu0 %v6022
    %6024 = vmatprep.subr.mxu0 0.0
    %v6025 = vand.u32 %v5586, 4294901760
    %6026 = vmatpush1.msra.mxu0 %v6025
    %6027 = vmatprep.subr.mxu0 0.0
    %v6028 = vand.u32 %v5585, 4294901760
    %6029 = vmatpush1.msra.mxu0 %v6028
    %6030 = vmatprep.subr.mxu0 0.0
    %v6031 = vand.u32 %v5584, 4294901760
    %6032 = vmatpush1.msra.mxu0 %v6031
    %6033 = vmatprep.subr.mxu0 0.0
    %v6034 = vand.u32 %v5583, 4294901760
    %6035 = vmatpush1.msra.mxu0 %v6034
    %6036 = vmatprep.subr.mxu0 0.0
    %v6037 = vand.u32 %v5582, 4294901760
    %6038 = vmatpush1.msra.mxu0 %v6037
    %6039 = vmatprep.subr.mxu0 0.0
    %v6040 = vand.u32 %v5581, 4294901760
    %6041 = vmatpush1.msra.mxu0 %v6040
    %6042 = vmatprep.subr.mxu0 0.0
    %6043 = vmatpush2.msra.mxu0 0.0
    %6044 = vmatprep.subr.mxu0 0.0
    %6045 = vmatpush2.msra.mxu0 0.0
    %6046 = vmatprep.subr.mxu0 0.0
    %6047 = vmatpush2.msra.mxu0 0.0
    %6048 = vmatprep.subr.mxu0 0.0
    %6049 = vmatpush2.msra.mxu0 0.0
    %6050 = vmatprep.subr.mxu0 0.0
    %6051 = vmatpush2.msra.mxu0 0.0
    %6052 = vmatprep.subr.mxu0 0.0
    %6053 = vmatpush2.msra.mxu0 0.0
    %6054 = vmatprep.subr.mxu0 0.0
    %6055 = vmatpush2.msra.mxu0 0.0
    %6056 = vmatprep.subr.mxu0 0.0
    %6057 = vmatpush2.msra.mxu0 0.0
    %6058 = vmatprep.subr.mxu0 0.0
    %6059 = vmatpush2.msra.mxu0 0.0
    %6060 = vmatprep.subr.mxu0 0.0
    %6061 = vmatpush2.msra.mxu0 0.0
    %6062 = vmatprep.subr.mxu0 0.0
    %6063 = vmatpush2.msra.mxu0 0.0
    %6064 = vmatprep.subr.mxu0 0.0
    %6065 = vmatpush2.msra.mxu0 0.0
    %6066 = vmatprep.subr.mxu0 0.0
    %v6067 = vand.u32 %v5600, 4294901760
    %6068 = vmatpush2.msra.mxu0 %v6067
    %6069 = vmatprep.subr.mxu0 0.0
    %v6070 = vand.u32 %v5599, 4294901760
    %6071 = vmatpush2.msra.mxu0 %v6070
    %6072 = vmatprep.subr.mxu0 0.0
    %v6073 = vand.u32 %v5598, 4294901760
    %6074 = vmatpush2.msra.mxu0 %v6073
    %6075 = vmatprep.subr.mxu0 0.0
    %v6076 = vand.u32 %v5597, 4294901760
    %6077 = vmatpush2.msra.mxu0 %v6076
    %v6078 = vand.u32 %v5606, 4294901760
    %v6079 = vsub.f32 %v5606, %v6078
    %v6080 = vand.u32 %v6079, 4294901760
    %6081 = vmatprep.mubr.f32.mxu0 %v6080
    %v6082 = vand.u32 %v5579, 4294901760
    %v6083 = vsub.f32 %v5579, %v6082
    %v6084 = vand.u32 %v6083, 4294901760
    %6085 = vmatmul.mubr.f32.gmra.mxu0 %v6084
    %v6086 = vpop.f32.mrf.mxu0
    %v6087 = vadd.f32 %v5991, %v6086
    %v6088 = vpop.f32.mrf.mxu0
    %6089 = vdwg.mxu0
    %6090 = vmatprep.subr.mxu0 0.0
    %v6091 = vand.u32 %v5596, 4294901760
    %v6092 = vsub.f32 %v5596, %v6091
    %v6093 = vand.u32 %v6092, 4294901760
    %6094 = vmatpush1.msra.mxu0 %v6093
    %6095 = vmatprep.subr.mxu0 0.0
    %v6096 = vand.u32 %v5595, 4294901760
    %v6097 = vsub.f32 %v5595, %v6096
    %v6098 = vand.u32 %v6097, 4294901760
    %6099 = vmatpush1.msra.mxu0 %v6098
    %6100 = vmatprep.subr.mxu0 0.0
    %v6101 = vand.u32 %v5594, 4294901760
    %v6102 = vsub.f32 %v5594, %v6101
    %v6103 = vand.u32 %v6102, 4294901760
    %6104 = vmatpush1.msra.mxu0 %v6103
    %6105 = vmatprep.subr.mxu0 0.0
    %v6106 = vand.u32 %v5593, 4294901760
    %v6107 = vsub.f32 %v5593, %v6106
    %v6108 = vand.u32 %v6107, 4294901760
    %6109 = vmatpush1.msra.mxu0 %v6108
    %6110 = vmatprep.subr.mxu0 0.0
    %v6111 = vand.u32 %v5592, 4294901760
    %v6112 = vsub.f32 %v5592, %v6111
    %v6113 = vand.u32 %v6112, 4294901760
    %6114 = vmatpush1.msra.mxu0 %v6113
    %6115 = vmatprep.subr.mxu0 0.0
    %v6116 = vand.u32 %v5591, 4294901760
    %v6117 = vsub.f32 %v5591, %v6116
    %v6118 = vand.u32 %v6117, 4294901760
    %6119 = vmatpush1.msra.mxu0 %v6118
    %6120 = vmatprep.subr.mxu0 0.0
    %v6121 = vand.u32 %v5590, 4294901760
    %v6122 = vsub.f32 %v5590, %v6121
    %v6123 = vand.u32 %v6122, 4294901760
    %6124 = vmatpush1.msra.mxu0 %v6123
    %6125 = vmatprep.subr.mxu0 0.0
    %v6126 = vand.u32 %v5589, 4294901760
    %v6127 = vsub.f32 %v5589, %v6126
    %v6128 = vand.u32 %v6127, 4294901760
    %6129 = vmatpush1.msra.mxu0 %v6128
    %6130 = vmatprep.subr.mxu0 0.0
    %v6131 = vand.u32 %v5588, 4294901760
    %v6132 = vsub.f32 %v5588, %v6131
    %v6133 = vand.u32 %v6132, 4294901760
    %6134 = vmatpush1.msra.mxu0 %v6133
    %6135 = vmatprep.subr.mxu0 0.0
    %v6136 = vand.u32 %v5587, 4294901760
    %v6137 = vsub.f32 %v5587, %v6136
    %v6138 = vand.u32 %v6137, 4294901760
    %6139 = vmatpush1.msra.mxu0 %v6138
    %6140 = vmatprep.subr.mxu0 0.0
    %v6141 = vand.u32 %v5586, 4294901760
    %v6142 = vsub.f32 %v5586, %v6141
    %v6143 = vand.u32 %v6142, 4294901760
    %6144 = vmatpush1.msra.mxu0 %v6143
    %6145 = vmatprep.subr.mxu0 0.0
    %v6146 = vand.u32 %v5585, 4294901760
    %v6147 = vsub.f32 %v5585, %v6146
    %v6148 = vand.u32 %v6147, 4294901760
    %6149 = vmatpush1.msra.mxu0 %v6148
    %6150 = vmatprep.subr.mxu0 0.0
    %v6151 = vand.u32 %v5584, 4294901760
    %v6152 = vsub.f32 %v5584, %v6151
    %v6153 = vand.u32 %v6152, 4294901760
    %6154 = vmatpush1.msra.mxu0 %v6153
    %6155 = vmatprep.subr.mxu0 0.0
    %v6156 = vand.u32 %v5583, 4294901760
    %v6157 = vsub.f32 %v5583, %v6156
    %v6158 = vand.u32 %v6157, 4294901760
    %6159 = vmatpush1.msra.mxu0 %v6158
    %6160 = vmatprep.subr.mxu0 0.0
    %v6161 = vand.u32 %v5582, 4294901760
    %v6162 = vsub.f32 %v5582, %v6161
    %v6163 = vand.u32 %v6162, 4294901760
    %6164 = vmatpush1.msra.mxu0 %v6163
    %6165 = vmatprep.subr.mxu0 0.0
    %v6166 = vand.u32 %v5581, 4294901760
    %v6167 = vsub.f32 %v5581, %v6166
    %v6168 = vand.u32 %v6167, 4294901760
    %6169 = vmatpush1.msra.mxu0 %v6168
    %6170 = vmatprep.subr.mxu0 0.0
    %6171 = vmatpush2.msra.mxu0 0.0
    %6172 = vmatprep.subr.mxu0 0.0
    %6173 = vmatpush2.msra.mxu0 0.0
    %6174 = vmatprep.subr.mxu0 0.0
    %6175 = vmatpush2.msra.mxu0 0.0
    %6176 = vmatprep.subr.mxu0 0.0
    %6177 = vmatpush2.msra.mxu0 0.0
    %6178 = vmatprep.subr.mxu0 0.0
    %6179 = vmatpush2.msra.mxu0 0.0
    %6180 = vmatprep.subr.mxu0 0.0
    %6181 = vmatpush2.msra.mxu0 0.0
    %6182 = vmatprep.subr.mxu0 0.0
    %6183 = vmatpush2.msra.mxu0 0.0
    %6184 = vmatprep.subr.mxu0 0.0
    %6185 = vmatpush2.msra.mxu0 0.0
    %6186 = vmatprep.subr.mxu0 0.0
    %6187 = vmatpush2.msra.mxu0 0.0
    %6188 = vmatprep.subr.mxu0 0.0
    %6189 = vmatpush2.msra.mxu0 0.0
    %6190 = vmatprep.subr.mxu0 0.0
    %6191 = vmatpush2.msra.mxu0 0.0
    %6192 = vmatprep.subr.mxu0 0.0
    %6193 = vmatpush2.msra.mxu0 0.0
    %6194 = vmatprep.subr.mxu0 0.0
    %v6195 = vand.u32 %v5600, 4294901760
    %v6196 = vsub.f32 %v5600, %v6195
    %v6197 = vand.u32 %v6196, 4294901760
    %6198 = vmatpush2.msra.mxu0 %v6197
    %6199 = vmatprep.subr.mxu0 0.0
    %v6200 = vand.u32 %v5599, 4294901760
    %v6201 = vsub.f32 %v5599, %v6200
    %v6202 = vand.u32 %v6201, 4294901760
    %6203 = vmatpush2.msra.mxu0 %v6202
    %6204 = vmatprep.subr.mxu0 0.0
    %v6205 = vand.u32 %v5598, 4294901760
    %v6206 = vsub.f32 %v5598, %v6205
    %v6207 = vand.u32 %v6206, 4294901760
    %6208 = vmatpush2.msra.mxu0 %v6207
    %6209 = vmatprep.subr.mxu0 0.0
    %v6210 = vand.u32 %v5597, 4294901760
    %v6211 = vsub.f32 %v5597, %v6210
    %v6212 = vand.u32 %v6211, 4294901760
    %6213 = vmatpush2.msra.mxu0 %v6212
    %v6214 = vand.u32 %v5606, 4294901760
    %6215 = vmatprep.mubr.f32.mxu0 %v6214
    %v6216 = vand.u32 %v5579, 4294901760
    %6217 = vmatmul.mubr.f32.gmra.mxu0 %v6216
    %v6218 = vpop.f32.mrf.mxu0
    %v6219 = vadd.f32 %v6087, %v6218
    %v6220 = vpop.f32.mrf.mxu0
    %6221 = vdwg.mxu0
    %6222 = vmatprep.subr.mxu0 0.0
    %v6223 = vand.u32 %v5596, 4294901760
    %6224 = vmatpush1.msra.mxu0 %v6223
    %6225 = vmatprep.subr.mxu0 0.0
    %v6226 = vand.u32 %v5595, 4294901760
    %6227 = vmatpush1.msra.mxu0 %v6226
    %6228 = vmatprep.subr.mxu0 0.0
    %v6229 = vand.u32 %v5594, 4294901760
    %6230 = vmatpush1.msra.mxu0 %v6229
    %6231 = vmatprep.subr.mxu0 0.0
    %v6232 = vand.u32 %v5593, 4294901760
    %6233 = vmatpush1.msra.mxu0 %v6232
    %6234 = vmatprep.subr.mxu0 0.0
    %v6235 = vand.u32 %v5592, 4294901760
    %6236 = vmatpush1.msra.mxu0 %v6235
    %6237 = vmatprep.subr.mxu0 0.0
    %v6238 = vand.u32 %v5591, 4294901760
    %6239 = vmatpush1.msra.mxu0 %v6238
    %6240 = vmatprep.subr.mxu0 0.0
    %v6241 = vand.u32 %v5590, 4294901760
    %6242 = vmatpush1.msra.mxu0 %v6241
    %6243 = vmatprep.subr.mxu0 0.0
    %v6244 = vand.u32 %v5589, 4294901760
    %6245 = vmatpush1.msra.mxu0 %v6244
    %6246 = vmatprep.subr.mxu0 0.0
    %v6247 = vand.u32 %v5588, 4294901760
    %6248 = vmatpush1.msra.mxu0 %v6247
    %6249 = vmatprep.subr.mxu0 0.0
    %v6250 = vand.u32 %v5587, 4294901760
    %6251 = vmatpush1.msra.mxu0 %v6250
    %6252 = vmatprep.subr.mxu0 0.0
    %v6253 = vand.u32 %v5586, 4294901760
    %6254 = vmatpush1.msra.mxu0 %v6253
    %6255 = vmatprep.subr.mxu0 0.0
    %v6256 = vand.u32 %v5585, 4294901760
    %6257 = vmatpush1.msra.mxu0 %v6256
    %6258 = vmatprep.subr.mxu0 0.0
    %v6259 = vand.u32 %v5584, 4294901760
    %6260 = vmatpush1.msra.mxu0 %v6259
    %6261 = vmatprep.subr.mxu0 0.0
    %v6262 = vand.u32 %v5583, 4294901760
    %6263 = vmatpush1.msra.mxu0 %v6262
    %6264 = vmatprep.subr.mxu0 0.0
    %v6265 = vand.u32 %v5582, 4294901760
    %6266 = vmatpush1.msra.mxu0 %v6265
    %6267 = vmatprep.subr.mxu0 0.0
    %v6268 = vand.u32 %v5581, 4294901760
    %6269 = vmatpush1.msra.mxu0 %v6268
    %6270 = vmatprep.subr.mxu0 0.0
    %6271 = vmatpush2.msra.mxu0 0.0
    %6272 = vmatprep.subr.mxu0 0.0
    %6273 = vmatpush2.msra.mxu0 0.0
    %6274 = vmatprep.subr.mxu0 0.0
    %6275 = vmatpush2.msra.mxu0 0.0
    %6276 = vmatprep.subr.mxu0 0.0
    %6277 = vmatpush2.msra.mxu0 0.0
    %6278 = vmatprep.subr.mxu0 0.0
    %6279 = vmatpush2.msra.mxu0 0.0
    %6280 = vmatprep.subr.mxu0 0.0
    %6281 = vmatpush2.msra.mxu0 0.0
    %6282 = vmatprep.subr.mxu0 0.0
    %6283 = vmatpush2.msra.mxu0 0.0
    %6284 = vmatprep.subr.mxu0 0.0
    %6285 = vmatpush2.msra.mxu0 0.0
    %6286 = vmatprep.subr.mxu0 0.0
    %6287 = vmatpush2.msra.mxu0 0.0
    %6288 = vmatprep.subr.mxu0 0.0
    %6289 = vmatpush2.msra.mxu0 0.0
    %6290 = vmatprep.subr.mxu0 0.0
    %6291 = vmatpush2.msra.mxu0 0.0
    %6292 = vmatprep.subr.mxu0 0.0
    %6293 = vmatpush2.msra.mxu0 0.0
    %6294 = vmatprep.subr.mxu0 0.0
    %v6295 = vand.u32 %v5600, 4294901760
    %6296 = vmatpush2.msra.mxu0 %v6295
    %6297 = vmatprep.subr.mxu0 0.0
    %v6298 = vand.u32 %v5599, 4294901760
    %6299 = vmatpush2.msra.mxu0 %v6298
    %6300 = vmatprep.subr.mxu0 0.0
    %v6301 = vand.u32 %v5598, 4294901760
    %6302 = vmatpush2.msra.mxu0 %v6301
    %6303 = vmatprep.subr.mxu0 0.0
    %v6304 = vand.u32 %v5597, 4294901760
    %6305 = vmatpush2.msra.mxu0 %v6304
    %v6306 = vand.u32 %v5606, 4294901760
    %6307 = vmatprep.mubr.f32.mxu0 %v6306
    %v6308 = vand.u32 %v5579, 4294901760
    %6309 = vmatmul.mubr.f32.gmra.mxu0 %v6308
    %v6310 = vpop.f32.mrf.mxu0
    %v6311 = vadd.f32 %v6219, %v6310
    %v6312 = vpop.f32.mrf.mxu0
    %6313 = vdwg.mxu0
    %v6314 = vsub.f32 0.0, %v6311
    %v6315 = vmul.f32 %v6314, 1.442695
    %v6316 = vpow.pop %v6315
    %v6317 = vadd.f32 %v6316, 1.0
    %v6318 = vrcp.pop %v6317
    %v6319 = vmul.f32 1.0, %v6318
    %v6320 = vlaneseq
    %v6321 = vshrl.u32 %v6320, 7
    %v6322 = vsub.s32 4, %v6321
    %v6323 = vrot.slane %v31, %v6322
    %v6324 = vmul.f32 %v6323, %v6319
    %v6325 = vadd.f32 %v4869, %v6324
    %6326 = vst [vmem:[#allocation2] sm:$0xff] %v6325
    // Predicated region
    $region34: #{tpu_custom_call.1} parent=1 // pred_check
      _
    $region35: #{tpu_custom_call.1} parent=1 // pred_check_branch
      %6328 = sbr.rel (0) target = $region37
    $region36: #{tpu_custom_call.1} parent=1 // pred_region
      %s6330 = ssub.s32 128, 128
      %6331 = vsyncadd [#allocation3], %s6330
      %s6333 = sshll.u32 [#allocation2], 4
      %s6334 = int_to_ptr.vmem [resolvable:$true] %s6333
      %6336 = dma.vmem_to_hbm [thread:$0]  %s6334, 128, %s8, [#allocation3]
    $region37: #{tpu_custom_call.1} parent=1 // pred_fallthru
      _
    // Predicated region
    $region38: #{tpu_custom_call.1} parent=1 // pred_check
      _
    $region39: #{tpu_custom_call.1} parent=1 // pred_check_branch
      %6338 = sbr.rel (0) target = $region41
    $region40: #{tpu_custom_call.1} parent=1 // pred_region
      %6339 = dma.done [#allocation3], 128
    $region41: #{tpu_custom_call.1} parent=1 // pred_fallthru
      _
    %6340 = vsyncpa [#allocation3], 1

</llo_original>
